<compile_context>
chip_gen: v7x
topology: tpu7x:2x2x1
jax: 0.10.0
libtpu: 0.0.40
codegen_flags: <defaults>
</compile_context>

<pallas_src>
import functools

import jax
import jax.numpy as jnp
from jax.experimental import pallas as pl
from jax.experimental.pallas import tpu as pltpu


# Scoped-VMEM allowance.  Per-step usage is well under 1 MiB (pad scratch + a few
# [HW, planes] f32 values), so 32 MiB is safe on v7x (64 MiB physical) as well as
# v5e/v6e (128 MiB).
_VMEM_LIMIT = 32 * 1024 * 1024


# --------------------------------------------------------------------------- #
# Fused EPSABlock kernel (one grid step = one batch image)
# --------------------------------------------------------------------------- #
def _epsa_kernel(x_ref, w1_ref, bn1s_ref, bn1b_ref,
                 dww0_ref, dww1_ref, dww2_ref, dww3_ref, dwb_ref,
                 wpw_ref, pwb_ref,
                 sew1_ref, seb1_ref, sew2_ref, seb2_ref,
                 bn2s_ref, bn2b_ref,
                 wf_ref, bfu_ref,
                 o_ref,
                 pad_scr,
                 *, H, W, ks, pmax):
    planes = bn1s_ref.shape[-1]
    HW = H * W
    Cin = x_ref.shape[1]
    x_cin_hw = x_ref[0]                                   # [Cin, HW]  (NCHW layout, f32)

    # ---- conv1 (1x1, no bias) + bn1 + relu ------------------------------------
    # NCHW -> spatial-row layout via one tiny in-VMEM transpose (no wrapper HBM
    # transpose kernel any more).
    # TODO(synk): for larger batches, block several images per grid step and reshape
    #             to (Bb*HW, Cin) here to raise MXU M and amortize per-step overhead.
    x_rows = x_cin_hw.T                                   # [HW, Cin]
    out1 = jnp.dot(x_rows.astype(jnp.bfloat16), w1_ref[...],
                   preferred_element_type=jnp.float32)    # [HW, planes]
    out1 = jnp.maximum(out1 * bn1s_ref[...] + bn1b_ref[...], 0.0)

    # ---- 'same' padding into a zeroed VMEM scratch ----------------------------
    # NOTE: re-zeroed every step.  Zero-once-per-grid (@pl.when(program_id==0)) is
    # unsafe under megacore sharding of the parallel batch axis (each core's scratch
    # starts uninitialized at an arbitrary program id), and at these shapes the halo
    # is ~half the buffer so the saving would be nil anyway.
    pad_scr[...] = jnp.zeros_like(pad_scr)
    pad_scr[pmax:pmax + H, pmax:pmax + W, :] = out1.reshape(H, W, planes)

    # ---- 4 depthwise convs (k = 3/5/7/9) --------------------------------------
    # Unaligned column (sublane) shift hoisted out of the inner tap loop:
    # one shifted view per (branch, j) instead of per (branch, i, j).
    # TODO(synk): on v6e/v7x the tap multiply-adds could run in bf16 (2x VALU
    #             throughput); kept f32 for a single v5e-safe code path.
    dw_refs = (dww0_ref, dww1_ref, dww2_ref, dww3_ref)
    feats = []
    pooled = []
    inv_hw = 1.0 / HW
    for bi, k in enumerate(ks):
        d = pmax - k // 2
        acc = jnp.zeros((H, W, planes), jnp.float32)
        for j in range(k):
            col = pad_scr[:, d + j:d + j + W, :]          # [Hp, W, planes], one shift
            for i in range(k):
                acc = acc + col[d + i:d + i + H] * dw_refs[bi][i * k + j, :]
        acc = acc + dwb_ref[bi, :]
        dw = acc.reshape(HW, planes)

        # grouped pointwise (per-branch dense matrix; no 4-branch block diagonal,
        # no lane concat).  TODO(synk): the within-branch group structure
        # (conv_groups up to 16) is still materialized densely; tile by group if
        # this block is scaled to ResNet widths.
        fg = jnp.dot(dw.astype(jnp.bfloat16), wpw_ref[bi],
                     preferred_element_type=jnp.float32) + pwb_ref[bi, :]    # [HW, S]
        feats.append(fg)
        # SE global average pool while the branch is resident (f32, same values the
        # attention multiplies below).
        pooled.append(jnp.sum(fg, axis=0, keepdims=True) * inv_hw)           # [1, S]

    # ---- shared SE module + branch softmax (in-register; no extra pallas_call) -
    m = jnp.concatenate(pooled, axis=0)                                       # [4, S]
    h = jnp.maximum(jnp.dot(m, sew1_ref[...],
                            preferred_element_type=jnp.float32) + seb1_ref[...], 0.0)
    a = jnp.dot(h, sew2_ref[...],
                preferred_element_type=jnp.float32) + seb2_ref[...]
    a = 1.0 / (1.0 + jnp.exp(-a))                                             # sigmoid
    a0, a1, a2, a3 = a[0:1, :], a[1:2, :], a[2:3, :], a[3:4, :]
    mx = jnp.maximum(jnp.maximum(a0, a1), jnp.maximum(a2, a3))
    e0, e1, e2, e3 = (jnp.exp(a0 - mx), jnp.exp(a1 - mx),
                      jnp.exp(a2 - mx), jnp.exp(a3 - mx))
    inv = 1.0 / (e0 + e1 + e2 + e3)                      # softmax over the 4 branches
    att = (e0 * inv, e1 * inv, e2 * inv, e3 * inv)       # 4 x [1, S]

    # ---- attention * bn2 + relu + fused(conv3 * bn3 * t_downsample) ------------
    acc_o = jnp.zeros((HW, Cin), jnp.float32)
    for bi in range(4):
        y = feats[bi] * att[bi]                                               # [HW, S]
        y = jnp.maximum(y * bn2s_ref[bi, :] + bn2b_ref[bi, :], 0.0)           # bn2+relu
        acc_o = acc_o + jnp.dot(y.astype(jnp.bfloat16), wf_ref[bi],
                                preferred_element_type=jnp.float32)           # [HW, Cin]
    o_rows = acc_o + bfu_ref[...]                         # fused bn3/t_downsample bias

    # ---- identity residual + relu, stored lane-dense in NCHW layout ------------
    o_ref[0] = jnp.maximum(o_rows.T + x_cin_hw, 0.0)                          # [Cin, HW]


def epsa_block_forward(x_nchw, params):
    """x_nchw: [B, Cin, H, W] f32 (PyTorch layout).  Returns [B, Cin, H, W] f32."""
    B, Cin, H, W = x_nchw.shape
    HW = H * W
    planes = params["bn1_scale"].shape[-1]
    ks = params["conv_kernels"]
    pmax = max(ks) // 2
    Hp, Wp = H + 2 * pmax, W + 2 * pmax

    # TODO(synk): for large H*W (v7x: 64 MiB VMEM), add a spatial tile axis with a
    #             pmax-row halo and a two-pass pooling scheme; whole-image-resident
    #             is the right trade at these sizes (< 1 MiB per step).
    x_flat = x_nchw.reshape(B, Cin, HW)                   # NCHW, free reshape
    kernel = functools.partial(_epsa_kernel, H=H, W=W, ks=ks, pmax=pmax)
    full = lambda a: pl.BlockSpec(a.shape, lambda b: (0,) * a.ndim)

    out = pl.pallas_call(
        kernel,
        out_shape=jax.ShapeDtypeStruct((B, Cin, HW), jnp.float32),
        grid=(B,),
        in_specs=[
            pl.BlockSpec((1, Cin, HW), lambda b: (b, 0, 0)),
            full(params["W1"]), full(params["bn1_scale"]), full(params["bn1_shift"]),
            full(params["dw_w0"]), full(params["dw_w1"]),
            full(params["dw_w2"]), full(params["dw_w3"]),
            full(params["dw_b"]),
            full(params["Wpw"]), full(params["pw_b"]),
            full(params["se_w1"]), full(params["se_b1"]),
            full(params["se_w2"]), full(params["se_b2"]),
            full(params["bn2_scale"]), full(params["bn2_shift"]),
            full(params["Wfused"]), full(params["bias_fused"]),
        ],
        out_specs=pl.BlockSpec((1, Cin, HW), lambda b: (b, 0, 0)),
        scratch_shapes=[pltpu.VMEM((Hp, Wp, planes), jnp.float32)],
        compiler_params=pltpu.CompilerParams(
            dimension_semantics=("parallel",),
            vmem_limit_bytes=_VMEM_LIMIT),
    )(x_flat, params["W1"], params["bn1_scale"], params["bn1_shift"],
      params["dw_w0"], params["dw_w1"], params["dw_w2"], params["dw_w3"],
      params["dw_b"], params["Wpw"], params["pw_b"],
      params["se_w1"], params["se_b1"], params["se_w2"], params["se_b2"],
      params["bn2_scale"], params["bn2_shift"],
      params["Wfused"], params["bias_fused"])
    return out.reshape(B, Cin, H, W)


# --------------------------------------------------------------------------- #
# Parameter construction (deterministic, synthetic)
# --------------------------------------------------------------------------- #
def _make_bn(key, c, eps=1e-5):
    k1, k2, k3, k4 = jax.random.split(key, 4)
    gamma = 1.0 + 0.1 * jax.random.normal(k1, (c,), jnp.float32)
    beta = 0.1 * jax.random.normal(k2, (c,), jnp.float32)
    mean = 0.1 * jax.random.normal(k3, (c,), jnp.float32)
    var = jax.random.uniform(k4, (c,), jnp.float32, minval=0.5, maxval=1.5)
    scale = gamma / jnp.sqrt(var + eps)
    shift = beta - mean * scale
    return scale[None, :], shift[None, :]


def _grouped_pointwise_dense(key, cin, cout, groups, scale=0.1):
    # Exact block-diagonal expansion of Conv2d(cin, cout, 1, groups=groups).
    w = jnp.zeros((cin, cout), jnp.float32)
    cin_g, cout_g = cin // groups, cout // groups
    keys = jax.random.split(key, groups)
    for g in range(groups):
        blk = jax.random.normal(keys[g], (cin_g, cout_g), jnp.float32) * scale
        w = w.at[g * cin_g:(g + 1) * cin_g, g * cout_g:(g + 1) * cout_g].set(blk)
    return w


def _to_natural(v, S):
    # torch reversed-branch concat (x4,x3,x2,x1) channel order -> natural [4(branch), S, ...]
    return jnp.stack([v[(3 - g) * S:(4 - g) * S] for g in range(4)], axis=0)


def init_params(key, inplanes, planes,
                conv_kernels=(3, 5, 7, 9), conv_groups=(1, 4, 8, 16), se_reduction=4):
    S = planes // 4
    r = max(1, S // se_reduction)
    keys = iter(jax.random.split(key, 48))
    rn = lambda shape, s=0.1: jax.random.normal(next(keys), shape, jnp.float32) * s

    p = {"conv_kernels": tuple(conv_kernels)}

    # conv1 (1x1, no bias) + bn1.  MXU operands stored in bf16 (f32 accumulation).
    p["W1"] = rn((inplanes, planes)).astype(jnp.bfloat16)
    p["bn1_scale"], p["bn1_shift"] = _make_bn(next(keys), planes)

    # PSA branches: depthwise kxk (groups=planes, bias) + grouped pointwise (1x1, bias).
    # dw_w{bi}[i*k+j, c] == torch_weight[c, 0, i, j]; pointwise weights kept per-branch
    # (no 4-branch block-diagonal packing).
    wpw, dwb, pwb = [], [], []
    for bi in range(4):
        k = conv_kernels[bi]
        p[f"dw_w{bi}"] = rn((k * k, planes))               # f32: VPU tap weights
        dwb.append(rn((planes,)))
        wpw.append(_grouped_pointwise_dense(next(keys), planes, S, conv_groups[bi]))
        pwb.append(rn((S,)))
    p["dw_b"] = jnp.stack(dwb, axis=0)                     # [4, planes]
    p["Wpw"] = jnp.stack(wpw, axis=0).astype(jnp.bfloat16) # [4, planes, S]
    p["pw_b"] = jnp.stack(pwb, axis=0)                     # [4, S]

    # shared SE module (tiny, kept f32)
    p["se_w1"] = rn((S, r)); p["se_b1"] = rn((1, r))
    p["se_w2"] = rn((r, S)); p["se_b2"] = rn((1, S))

    # bn2 / conv3 / bn3 / t_downsample.  bn2 and conv3 are defined (as in PyTorch) over
    # the REVERSED-branch concat (x4,x3,x2,x1).  conv3 -> bn3 -> t_downsample is a
    # purely linear chain, so it is folded here IN F32 (single final bf16 cast) into
    # one [S, inplanes] matrix per branch plus one bias vector, and re-grouped to
    # natural branch order so the kernel never shuffles channels.
    bn2_scale, bn2_shift = _make_bn(next(keys), planes)
    W3 = rn((planes, planes * 4))                          # conv3 (no bias), torch row order
    bn3_scale, bn3_shift = _make_bn(next(keys), planes * 4)
    Wt = rn((planes * 4, inplanes))                        # t_downsample weight
    t_b = rn((inplanes,))                                  # t_downsample bias

    w_fused = (W3 * bn3_scale) @ Wt                        # [planes, inplanes], f32
    p["Wfused"] = _to_natural(w_fused, S).astype(jnp.bfloat16)   # [4, S, inplanes]
    p["bias_fused"] = bn3_shift @ Wt + t_b[None, :]               # [1, inplanes]
    p["bn2_scale"] = _to_natural(bn2_scale[0], S)                 # [4, S]
    p["bn2_shift"] = _to_natural(bn2_shift[0], S)
    return p


# --------------------------------------------------------------------------- #
if __name__ == "__main__":
    key = jax.random.PRNGKey(0)
    k_in, k_par = jax.random.split(key)

    B, inplanes, planes, H, W = 2, 16, 64, 8, 8
    x = jax.random.normal(k_in, (B, inplanes, H, W), jnp.float32)   # NCHW like PyTorch
    params = init_params(k_par, inplanes, planes)

    out = epsa_block_forward(x, params)
    out = jax.block_until_ready(out)
    assert out.shape == (B, inplanes, H, W)
    assert bool(jnp.all(jnp.isfinite(out)))
    print("KERNEL_OK")
</pallas_src>

<mosaic_0001>
module attributes {stable_mosaic.version = 11 : i64} {
  func.func @_epsa_kernel(%arg0: i32, %arg1: memref<1x16x64xf32, #tpu.memory_space<vmem>>, %arg2: memref<16x64xbf16, #tpu.memory_space<vmem>>, %arg3: memref<1x64xf32, #tpu.memory_space<vmem>>, %arg4: memref<1x64xf32, #tpu.memory_space<vmem>>, %arg5: memref<9x64xf32, #tpu.memory_space<vmem>>, %arg6: memref<25x64xf32, #tpu.memory_space<vmem>>, %arg7: memref<49x64xf32, #tpu.memory_space<vmem>>, %arg8: memref<81x64xf32, #tpu.memory_space<vmem>>, %arg9: memref<4x64xf32, #tpu.memory_space<vmem>>, %arg10: memref<4x64x16xbf16, #tpu.memory_space<vmem>>, %arg11: memref<4x16xf32, #tpu.memory_space<vmem>>, %arg12: memref<16x4xf32, #tpu.memory_space<vmem>>, %arg13: memref<1x4xf32, #tpu.memory_space<vmem>>, %arg14: memref<4x16xf32, #tpu.memory_space<vmem>>, %arg15: memref<1x16xf32, #tpu.memory_space<vmem>>, %arg16: memref<4x16xf32, #tpu.memory_space<vmem>>, %arg17: memref<4x16xf32, #tpu.memory_space<vmem>>, %arg18: memref<4x16x16xbf16, #tpu.memory_space<vmem>>, %arg19: memref<1x16xf32, #tpu.memory_space<vmem>>, %arg20: memref<1x16x64xf32, #tpu.memory_space<vmem>>, %arg21: memref<16x16x64xf32, #tpu.memory_space<vmem>>) attributes {dimension_semantics = [#tpu.dimension_semantics<parallel>], iteration_bounds = array<i64: 2>, scalar_prefetch = 0 : i64, scratch_operands = 1 : i64, tpu.core_type = #tpu.core_type<tc>, window_params = [{transform_indices = @transform_0, window_bounds = array<i64: 1, 16, 64>}, {pipeline_mode = #tpu.pipeline_mode<synchronous>, transform_indices = @transform_1, window_bounds = array<i64: 16, 64>}, {pipeline_mode = #tpu.pipeline_mode<synchronous>, transform_indices = @transform_2, window_bounds = array<i64: 1, 64>}, {pipeline_mode = #tpu.pipeline_mode<synchronous>, transform_indices = @transform_3, window_bounds = array<i64: 1, 64>}, {pipeline_mode = #tpu.pipeline_mode<synchronous>, transform_indices = @transform_4, window_bounds = array<i64: 9, 64>}, {pipeline_mode = #tpu.pipeline_mode<synchronous>, transform_indices = @transform_5, window_bounds = array<i64: 25, 64>}, {pipeline_mode = #tpu.pipeline_mode<synchronous>, transform_indices = @transform_6, window_bounds = array<i64: 49, 64>}, {pipeline_mode = #tpu.pipeline_mode<synchronous>, transform_indices = @transform_7, window_bounds = array<i64: 81, 64>}, {pipeline_mode = #tpu.pipeline_mode<synchronous>, transform_indices = @transform_8, window_bounds = array<i64: 4, 64>}, {pipeline_mode = #tpu.pipeline_mode<synchronous>, transform_indices = @transform_9, window_bounds = array<i64: 4, 64, 16>}, {pipeline_mode = #tpu.pipeline_mode<synchronous>, transform_indices = @transform_10, window_bounds = array<i64: 4, 16>}, {pipeline_mode = #tpu.pipeline_mode<synchronous>, transform_indices = @transform_11, window_bounds = array<i64: 16, 4>}, {pipeline_mode = #tpu.pipeline_mode<synchronous>, transform_indices = @transform_12, window_bounds = array<i64: 1, 4>}, {pipeline_mode = #tpu.pipeline_mode<synchronous>, transform_indices = @transform_13, window_bounds = array<i64: 4, 16>}, {pipeline_mode = #tpu.pipeline_mode<synchronous>, transform_indices = @transform_14, window_bounds = array<i64: 1, 16>}, {pipeline_mode = #tpu.pipeline_mode<synchronous>, transform_indices = @transform_15, window_bounds = array<i64: 4, 16>}, {pipeline_mode = #tpu.pipeline_mode<synchronous>, transform_indices = @transform_16, window_bounds = array<i64: 4, 16>}, {pipeline_mode = #tpu.pipeline_mode<synchronous>, transform_indices = @transform_17, window_bounds = array<i64: 4, 16, 16>}, {pipeline_mode = #tpu.pipeline_mode<synchronous>, transform_indices = @transform_18, window_bounds = array<i64: 1, 16>}, {transform_indices = @transform_19, window_bounds = array<i64: 1, 16, 64>}]} {
    %c0 = arith.constant 0 : index
    %c0_0 = arith.constant 0 : index
    %c0_1 = arith.constant 0 : index
    %0 = vector.load %arg1[%c0, %c0_0, %c0_1] : memref<1x16x64xf32, #tpu.memory_space<vmem>>, vector<1x16x64xf32>
    %1 = vector.shape_cast %0 : vector<1x16x64xf32> to vector<16x64xf32>
    %2 = tpu.transpose %1, [1, 0] : vector<16x64xf32> -> vector<64x16xf32>
    %3 = arith.truncf %2 : vector<64x16xf32> to vector<64x16xbf16>
    %c0_2 = arith.constant 0 : index
    %c0_3 = arith.constant 0 : index
    %4 = vector.load %arg2[%c0_2, %c0_3] : memref<16x64xbf16, #tpu.memory_space<vmem>>, vector<16x64xbf16>
    %cst = arith.constant dense<0.000000e+00> : vector<64x64xf32>
    %5 = tpu.matmul %3, %4, %cst {dimension_numbers = #tpu.dot_dimension_numbers<[1], [0], [0], [1], [0, 0, 1, 1], [], []>} : vector<64x16xbf16>, vector<16x64xbf16>, vector<64x64xf32> -> vector<64x64xf32>
    %c0_4 = arith.constant 0 : index
    %c0_5 = arith.constant 0 : index
    %6 = vector.load %arg3[%c0_4, %c0_5] : memref<1x64xf32, #tpu.memory_space<vmem>>, vector<1x64xf32>
    %7 = vector.broadcast %6 : vector<1x64xf32> to vector<64x64xf32>
    %8 = arith.mulf %5, %7 : vector<64x64xf32>
    %c0_6 = arith.constant 0 : index
    %c0_7 = arith.constant 0 : index
    %9 = vector.load %arg4[%c0_6, %c0_7] : memref<1x64xf32, #tpu.memory_space<vmem>>, vector<1x64xf32>
    %10 = vector.broadcast %9 : vector<1x64xf32> to vector<64x64xf32>
    %11 = arith.addf %8, %10 : vector<64x64xf32>
    %cst_8 = arith.constant 0.000000e+00 : f32
    %12 = vector.broadcast %cst_8 : f32 to vector<64x64xf32>
    %13 = arith.maximumf %11, %12 : vector<64x64xf32>
    %cst_9 = arith.constant 0.000000e+00 : f32
    %14 = vector.broadcast %cst_9 : f32 to vector<16x16x64xf32>
    %c0_10 = arith.constant 0 : index
    %c0_11 = arith.constant 0 : index
    %c0_12 = arith.constant 0 : index
    %15 = vector.load %arg21[%c0_10, %c0_11, %c0_12] : memref<16x16x64xf32, #tpu.memory_space<vmem>>, vector<16x16x64xf32>
    tpu.vector_store %arg21[%c0_10, %c0_11, %c0_12], %14 {strides = array<i32>} : memref<16x16x64xf32, #tpu.memory_space<vmem>>, vector<16x16x64xf32>,
    %16 = vector.shape_cast %13 : vector<64x64xf32> to vector<8x8x64xf32>
    %c4 = arith.constant 4 : index
    %c4_13 = arith.constant 4 : index
    %c0_14 = arith.constant 0 : index
    %17 = vector.load %arg21[%c4, %c4_13, %c0_14] : memref<16x16x64xf32, #tpu.memory_space<vmem>>, vector<8x8x64xf32>
    tpu.vector_store %arg21[%c4, %c4_13, %c0_14], %16 {strides = array<i32>} : memref<16x16x64xf32, #tpu.memory_space<vmem>>, vector<8x8x64xf32>,
    %cst_15 = arith.constant 0.000000e+00 : f32
    %18 = vector.broadcast %cst_15 : f32 to vector<8x8x64xf32>
    %c0_16 = arith.constant 0 : index
    %c3 = arith.constant 3 : index
    %c0_17 = arith.constant 0 : index
    %19 = vector.load %arg21[%c0_16, %c3, %c0_17] : memref<16x16x64xf32, #tpu.memory_space<vmem>>, vector<16x8x64xf32>
    %20 = vector.extract_strided_slice %19 {offsets = [3, 0, 0], sizes = [8, 8, 64], strides = [1, 1, 1]} : vector<16x8x64xf32> to vector<8x8x64xf32>
    %c0_18 = arith.constant 0 : index
    %c0_19 = arith.constant 0 : index
    %21 = vector.load %arg5[%c0_18, %c0_19] : memref<9x64xf32, #tpu.memory_space<vmem>>, vector<1x64xf32>
    %22 = vector.shape_cast %21 : vector<1x64xf32> to vector<64xf32>
    %23 = vector.shape_cast %22 : vector<64xf32> to vector<1x1x64xf32>
    %24 = vector.broadcast %23 : vector<1x1x64xf32> to vector<8x8x64xf32>
    %25 = arith.mulf %20, %24 : vector<8x8x64xf32>
    %26 = arith.addf %18, %25 : vector<8x8x64xf32>
    %27 = vector.extract_strided_slice %19 {offsets = [4, 0, 0], sizes = [8, 8, 64], strides = [1, 1, 1]} : vector<16x8x64xf32> to vector<8x8x64xf32>
    %c3_20 = arith.constant 3 : index
    %c0_21 = arith.constant 0 : index
    %28 = vector.load %arg5[%c3_20, %c0_21] : memref<9x64xf32, #tpu.memory_space<vmem>>, vector<1x64xf32>
    %29 = vector.shape_cast %28 : vector<1x64xf32> to vector<64xf32>
    %30 = vector.shape_cast %29 : vector<64xf32> to vector<1x1x64xf32>
    %31 = vector.broadcast %30 : vector<1x1x64xf32> to vector<8x8x64xf32>
    %32 = arith.mulf %27, %31 : vector<8x8x64xf32>
    %33 = arith.addf %26, %32 : vector<8x8x64xf32>
    %34 = vector.extract_strided_slice %19 {offsets = [5, 0, 0], sizes = [8, 8, 64], strides = [1, 1, 1]} : vector<16x8x64xf32> to vector<8x8x64xf32>
    %c6 = arith.constant 6 : index
    %c0_22 = arith.constant 0 : index
    %35 = vector.load %arg5[%c6, %c0_22] : memref<9x64xf32, #tpu.memory_space<vmem>>, vector<1x64xf32>
    %36 = vector.shape_cast %35 : vector<1x64xf32> to vector<64xf32>
    %37 = vector.shape_cast %36 : vector<64xf32> to vector<1x1x64xf32>
    %38 = vector.broadcast %37 : vector<1x1x64xf32> to vector<8x8x64xf32>
    %39 = arith.mulf %34, %38 : vector<8x8x64xf32>
    %40 = arith.addf %33, %39 : vector<8x8x64xf32>
    %c0_23 = arith.constant 0 : index
    %c4_24 = arith.constant 4 : index
    %c0_25 = arith.constant 0 : index
    %41 = vector.load %arg21[%c0_23, %c4_24, %c0_25] : memref<16x16x64xf32, #tpu.memory_space<vmem>>, vector<16x8x64xf32>
    %42 = vector.extract_strided_slice %41 {offsets = [3, 0, 0], sizes = [8, 8, 64], strides = [1, 1, 1]} : vector<16x8x64xf32> to vector<8x8x64xf32>
    %c1 = arith.constant 1 : index
    %c0_26 = arith.constant 0 : index
    %43 = vector.load %arg5[%c1, %c0_26] : memref<9x64xf32, #tpu.memory_space<vmem>>, vector<1x64xf32>
    %44 = vector.shape_cast %43 : vector<1x64xf32> to vector<64xf32>
    %45 = vector.shape_cast %44 : vector<64xf32> to vector<1x1x64xf32>
    %46 = vector.broadcast %45 : vector<1x1x64xf32> to vector<8x8x64xf32>
    %47 = arith.mulf %42, %46 : vector<8x8x64xf32>
    %48 = arith.addf %40, %47 : vector<8x8x64xf32>
    %49 = vector.extract_strided_slice %41 {offsets = [4, 0, 0], sizes = [8, 8, 64], strides = [1, 1, 1]} : vector<16x8x64xf32> to vector<8x8x64xf32>
    %c4_27 = arith.constant 4 : index
    %c0_28 = arith.constant 0 : index
    %50 = vector.load %arg5[%c4_27, %c0_28] : memref<9x64xf32, #tpu.memory_space<vmem>>, vector<1x64xf32>
    %51 = vector.shape_cast %50 : vector<1x64xf32> to vector<64xf32>
    %52 = vector.shape_cast %51 : vector<64xf32> to vector<1x1x64xf32>
    %53 = vector.broadcast %52 : vector<1x1x64xf32> to vector<8x8x64xf32>
    %54 = arith.mulf %49, %53 : vector<8x8x64xf32>
    %55 = arith.addf %48, %54 : vector<8x8x64xf32>
    %56 = vector.extract_strided_slice %41 {offsets = [5, 0, 0], sizes = [8, 8, 64], strides = [1, 1, 1]} : vector<16x8x64xf32> to vector<8x8x64xf32>
    %c7 = arith.constant 7 : index
    %c0_29 = arith.constant 0 : index
    %57 = vector.load %arg5[%c7, %c0_29] : memref<9x64xf32, #tpu.memory_space<vmem>>, vector<1x64xf32>
    %58 = vector.shape_cast %57 : vector<1x64xf32> to vector<64xf32>
    %59 = vector.shape_cast %58 : vector<64xf32> to vector<1x1x64xf32>
    %60 = vector.broadcast %59 : vector<1x1x64xf32> to vector<8x8x64xf32>
    %61 = arith.mulf %56, %60 : vector<8x8x64xf32>
    %62 = arith.addf %55, %61 : vector<8x8x64xf32>
    %c0_30 = arith.constant 0 : index
    %c5 = arith.constant 5 : index
    %c0_31 = arith.constant 0 : index
    %63 = vector.load %arg21[%c0_30, %c5, %c0_31] : memref<16x16x64xf32, #tpu.memory_space<vmem>>, vector<16x8x64xf32>
    %64 = vector.extract_strided_slice %63 {offsets = [3, 0, 0], sizes = [8, 8, 64], strides = [1, 1, 1]} : vector<16x8x64xf32> to vector<8x8x64xf32>
    %c2 = arith.constant 2 : index
    %c0_32 = arith.constant 0 : index
    %65 = vector.load %arg5[%c2, %c0_32] : memref<9x64xf32, #tpu.memory_space<vmem>>, vector<1x64xf32>
    %66 = vector.shape_cast %65 : vector<1x64xf32> to vector<64xf32>
    %67 = vector.shape_cast %66 : vector<64xf32> to vector<1x1x64xf32>
    %68 = vector.broadcast %67 : vector<1x1x64xf32> to vector<8x8x64xf32>
    %69 = arith.mulf %64, %68 : vector<8x8x64xf32>
    %70 = arith.addf %62, %69 : vector<8x8x64xf32>
    %71 = vector.extract_strided_slice %63 {offsets = [4, 0, 0], sizes = [8, 8, 64], strides = [1, 1, 1]} : vector<16x8x64xf32> to vector<8x8x64xf32>
    %c5_33 = arith.constant 5 : index
    %c0_34 = arith.constant 0 : index
    %72 = vector.load %arg5[%c5_33, %c0_34] : memref<9x64xf32, #tpu.memory_space<vmem>>, vector<1x64xf32>
    %73 = vector.shape_cast %72 : vector<1x64xf32> to vector<64xf32>
    %74 = vector.shape_cast %73 : vector<64xf32> to vector<1x1x64xf32>
    %75 = vector.broadcast %74 : vector<1x1x64xf32> to vector<8x8x64xf32>
    %76 = arith.mulf %71, %75 : vector<8x8x64xf32>
    %77 = arith.addf %70, %76 : vector<8x8x64xf32>
    %78 = vector.extract_strided_slice %63 {offsets = [5, 0, 0], sizes = [8, 8, 64], strides = [1, 1, 1]} : vector<16x8x64xf32> to vector<8x8x64xf32>
    %c8 = arith.constant 8 : index
    %c0_35 = arith.constant 0 : index
    %79 = vector.load %arg5[%c8, %c0_35] : memref<9x64xf32, #tpu.memory_space<vmem>>, vector<1x64xf32>
    %80 = vector.shape_cast %79 : vector<1x64xf32> to vector<64xf32>
    %81 = vector.shape_cast %80 : vector<64xf32> to vector<1x1x64xf32>
    %82 = vector.broadcast %81 : vector<1x1x64xf32> to vector<8x8x64xf32>
    %83 = arith.mulf %78, %82 : vector<8x8x64xf32>
    %84 = arith.addf %77, %83 : vector<8x8x64xf32>
    %c0_36 = arith.constant 0 : index
    %c0_37 = arith.constant 0 : index
    %85 = vector.load %arg9[%c0_36, %c0_37] : memref<4x64xf32, #tpu.memory_space<vmem>>, vector<1x64xf32>
    %86 = vector.shape_cast %85 : vector<1x64xf32> to vector<64xf32>
    %87 = vector.shape_cast %86 : vector<64xf32> to vector<1x1x64xf32>
    %88 = vector.broadcast %87 : vector<1x1x64xf32> to vector<8x8x64xf32>
    %89 = arith.addf %84, %88 : vector<8x8x64xf32>
    %90 = vector.shape_cast %89 : vector<8x8x64xf32> to vector<64x64xf32>
    %91 = arith.truncf %90 : vector<64x64xf32> to vector<64x64xbf16>
    %c0_38 = arith.constant 0 : index
    %c0_39 = arith.constant 0 : index
    %c0_40 = arith.constant 0 : index
    %92 = vector.load %arg10[%c0_38, %c0_39, %c0_40] : memref<4x64x16xbf16, #tpu.memory_space<vmem>>, vector<1x64x16xbf16>
    %93 = vector.shape_cast %92 : vector<1x64x16xbf16> to vector<64x16xbf16>
    %cst_41 = arith.constant dense<0.000000e+00> : vector<64x16xf32>
    %94 = tpu.matmul %91, %93, %cst_41 {dimension_numbers = #tpu.dot_dimension_numbers<[1], [0], [0], [1], [0, 0, 1, 1], [], []>} : vector<64x64xbf16>, vector<64x16xbf16>, vector<64x16xf32> -> vector<64x16xf32>
    %c0_42 = arith.constant 0 : index
    %c0_43 = arith.constant 0 : index
    %95 = vector.load %arg11[%c0_42, %c0_43] : memref<4x16xf32, #tpu.memory_space<vmem>>, vector<1x16xf32>
    %96 = vector.shape_cast %95 : vector<1x16xf32> to vector<16xf32>
    %97 = vector.shape_cast %96 : vector<16xf32> to vector<1x16xf32>
    %98 = vector.broadcast %97 : vector<1x16xf32> to vector<64x16xf32>
    %99 = arith.addf %94, %98 : vector<64x16xf32>
    %cst_44 = arith.constant dense<0.000000e+00> : vector<16xf32>
    %100 = vector.multi_reduction <add>, %99, %cst_44 [0] : vector<64x16xf32> to vector<16xf32>
    %101 = vector.shape_cast %100 : vector<16xf32> to vector<1x16xf32>
    %cst_45 = arith.constant 1.562500e-02 : f32
    %102 = vector.broadcast %cst_45 : f32 to vector<1x16xf32>
    %103 = arith.mulf %101, %102 : vector<1x16xf32>
    %cst_46 = arith.constant 0.000000e+00 : f32
    %104 = vector.broadcast %cst_46 : f32 to vector<8x8x64xf32>
    %c0_47 = arith.constant 0 : index
    %c2_48 = arith.constant 2 : index
    %c0_49 = arith.constant 0 : index
    %105 = vector.load %arg21[%c0_47, %c2_48, %c0_49] : memref<16x16x64xf32, #tpu.memory_space<vmem>>, vector<16x8x64xf32>
    %106 = vector.extract_strided_slice %105 {offsets = [2, 0, 0], sizes = [8, 8, 64], strides = [1, 1, 1]} : vector<16x8x64xf32> to vector<8x8x64xf32>
    %c0_50 = arith.constant 0 : index
    %c0_51 = arith.constant 0 : index
    %107 = vector.load %arg6[%c0_50, %c0_51] : memref<25x64xf32, #tpu.memory_space<vmem>>, vector<1x64xf32>
    %108 = vector.shape_cast %107 : vector<1x64xf32> to vector<64xf32>
    %109 = vector.shape_cast %108 : vector<64xf32> to vector<1x1x64xf32>
    %110 = vector.broadcast %109 : vector<1x1x64xf32> to vector<8x8x64xf32>
    %111 = arith.mulf %106, %110 : vector<8x8x64xf32>
    %112 = arith.addf %104, %111 : vector<8x8x64xf32>
    %113 = vector.extract_strided_slice %105 {offsets = [3, 0, 0], sizes = [8, 8, 64], strides = [1, 1, 1]} : vector<16x8x64xf32> to vector<8x8x64xf32>
    %c5_52 = arith.constant 5 : index
    %c0_53 = arith.constant 0 : index
    %114 = vector.load %arg6[%c5_52, %c0_53] : memref<25x64xf32, #tpu.memory_space<vmem>>, vector<1x64xf32>
    %115 = vector.shape_cast %114 : vector<1x64xf32> to vector<64xf32>
    %116 = vector.shape_cast %115 : vector<64xf32> to vector<1x1x64xf32>
    %117 = vector.broadcast %116 : vector<1x1x64xf32> to vector<8x8x64xf32>
    %118 = arith.mulf %113, %117 : vector<8x8x64xf32>
    %119 = arith.addf %112, %118 : vector<8x8x64xf32>
    %120 = vector.extract_strided_slice %105 {offsets = [4, 0, 0], sizes = [8, 8, 64], strides = [1, 1, 1]} : vector<16x8x64xf32> to vector<8x8x64xf32>
    %c10 = arith.constant 10 : index
    %c0_54 = arith.constant 0 : index
    %121 = vector.load %arg6[%c10, %c0_54] : memref<25x64xf32, #tpu.memory_space<vmem>>, vector<1x64xf32>
    %122 = vector.shape_cast %121 : vector<1x64xf32> to vector<64xf32>
    %123 = vector.shape_cast %122 : vector<64xf32> to vector<1x1x64xf32>
    %124 = vector.broadcast %123 : vector<1x1x64xf32> to vector<8x8x64xf32>
    %125 = arith.mulf %120, %124 : vector<8x8x64xf32>
    %126 = arith.addf %119, %125 : vector<8x8x64xf32>
    %127 = vector.extract_strided_slice %105 {offsets = [5, 0, 0], sizes = [8, 8, 64], strides = [1, 1, 1]} : vector<16x8x64xf32> to vector<8x8x64xf32>
    %c15 = arith.constant 15 : index
    %c0_55 = arith.constant 0 : index
    %128 = vector.load %arg6[%c15, %c0_55] : memref<25x64xf32, #tpu.memory_space<vmem>>, vector<1x64xf32>
    %129 = vector.shape_cast %128 : vector<1x64xf32> to vector<64xf32>
    %130 = vector.shape_cast %129 : vector<64xf32> to vector<1x1x64xf32>
    %131 = vector.broadcast %130 : vector<1x1x64xf32> to vector<8x8x64xf32>
    %132 = arith.mulf %127, %131 : vector<8x8x64xf32>
    %133 = arith.addf %126, %132 : vector<8x8x64xf32>
    %134 = vector.extract_strided_slice %105 {offsets = [6, 0, 0], sizes = [8, 8, 64], strides = [1, 1, 1]} : vector<16x8x64xf32> to vector<8x8x64xf32>
    %c20 = arith.constant 20 : index
    %c0_56 = arith.constant 0 : index
    %135 = vector.load %arg6[%c20, %c0_56] : memref<25x64xf32, #tpu.memory_space<vmem>>, vector<1x64xf32>
    %136 = vector.shape_cast %135 : vector<1x64xf32> to vector<64xf32>
    %137 = vector.shape_cast %136 : vector<64xf32> to vector<1x1x64xf32>
    %138 = vector.broadcast %137 : vector<1x1x64xf32> to vector<8x8x64xf32>
    %139 = arith.mulf %134, %138 : vector<8x8x64xf32>
    %140 = arith.addf %133, %139 : vector<8x8x64xf32>
    %c0_57 = arith.constant 0 : index
    %c3_58 = arith.constant 3 : index
    %c0_59 = arith.constant 0 : index
    %141 = vector.load %arg21[%c0_57, %c3_58, %c0_59] : memref<16x16x64xf32, #tpu.memory_space<vmem>>, vector<16x8x64xf32>
    %142 = vector.extract_strided_slice %141 {offsets = [2, 0, 0], sizes = [8, 8, 64], strides = [1, 1, 1]} : vector<16x8x64xf32> to vector<8x8x64xf32>
    %c1_60 = arith.constant 1 : index
    %c0_61 = arith.constant 0 : index
    %143 = vector.load %arg6[%c1_60, %c0_61] : memref<25x64xf32, #tpu.memory_space<vmem>>, vector<1x64xf32>
    %144 = vector.shape_cast %143 : vector<1x64xf32> to vector<64xf32>
    %145 = vector.shape_cast %144 : vector<64xf32> to vector<1x1x64xf32>
    %146 = vector.broadcast %145 : vector<1x1x64xf32> to vector<8x8x64xf32>
    %147 = arith.mulf %142, %146 : vector<8x8x64xf32>
    %148 = arith.addf %140, %147 : vector<8x8x64xf32>
    %149 = vector.extract_strided_slice %141 {offsets = [3, 0, 0], sizes = [8, 8, 64], strides = [1, 1, 1]} : vector<16x8x64xf32> to vector<8x8x64xf32>
    %c6_62 = arith.constant 6 : index
    %c0_63 = arith.constant 0 : index
    %150 = vector.load %arg6[%c6_62, %c0_63] : memref<25x64xf32, #tpu.memory_space<vmem>>, vector<1x64xf32>
    %151 = vector.shape_cast %150 : vector<1x64xf32> to vector<64xf32>
    %152 = vector.shape_cast %151 : vector<64xf32> to vector<1x1x64xf32>
    %153 = vector.broadcast %152 : vector<1x1x64xf32> to vector<8x8x64xf32>
    %154 = arith.mulf %149, %153 : vector<8x8x64xf32>
    %155 = arith.addf %148, %154 : vector<8x8x64xf32>
    %156 = vector.extract_strided_slice %141 {offsets = [4, 0, 0], sizes = [8, 8, 64], strides = [1, 1, 1]} : vector<16x8x64xf32> to vector<8x8x64xf32>
    %c11 = arith.constant 11 : index
    %c0_64 = arith.constant 0 : index
    %157 = vector.load %arg6[%c11, %c0_64] : memref<25x64xf32, #tpu.memory_space<vmem>>, vector<1x64xf32>
    %158 = vector.shape_cast %157 : vector<1x64xf32> to vector<64xf32>
    %159 = vector.shape_cast %158 : vector<64xf32> to vector<1x1x64xf32>
    %160 = vector.broadcast %159 : vector<1x1x64xf32> to vector<8x8x64xf32>
    %161 = arith.mulf %156, %160 : vector<8x8x64xf32>
    %162 = arith.addf %155, %161 : vector<8x8x64xf32>
    %163 = vector.extract_strided_slice %141 {offsets = [5, 0, 0], sizes = [8, 8, 64], strides = [1, 1, 1]} : vector<16x8x64xf32> to vector<8x8x64xf32>
    %c16 = arith.constant 16 : index
    %c0_65 = arith.constant 0 : index
    %164 = vector.load %arg6[%c16, %c0_65] : memref<25x64xf32, #tpu.memory_space<vmem>>, vector<1x64xf32>
    %165 = vector.shape_cast %164 : vector<1x64xf32> to vector<64xf32>
    %166 = vector.shape_cast %165 : vector<64xf32> to vector<1x1x64xf32>
    %167 = vector.broadcast %166 : vector<1x1x64xf32> to vector<8x8x64xf32>
    %168 = arith.mulf %163, %167 : vector<8x8x64xf32>
    %169 = arith.addf %162, %168 : vector<8x8x64xf32>
    %170 = vector.extract_strided_slice %141 {offsets = [6, 0, 0], sizes = [8, 8, 64], strides = [1, 1, 1]} : vector<16x8x64xf32> to vector<8x8x64xf32>
    %c21 = arith.constant 21 : index
    %c0_66 = arith.constant 0 : index
    %171 = vector.load %arg6[%c21, %c0_66] : memref<25x64xf32, #tpu.memory_space<vmem>>, vector<1x64xf32>
    %172 = vector.shape_cast %171 : vector<1x64xf32> to vector<64xf32>
    %173 = vector.shape_cast %172 : vector<64xf32> to vector<1x1x64xf32>
    %174 = vector.broadcast %173 : vector<1x1x64xf32> to vector<8x8x64xf32>
    %175 = arith.mulf %170, %174 : vector<8x8x64xf32>
    %176 = arith.addf %169, %175 : vector<8x8x64xf32>
    %c0_67 = arith.constant 0 : index
    %c4_68 = arith.constant 4 : index
    %c0_69 = arith.constant 0 : index
    %177 = vector.load %arg21[%c0_67, %c4_68, %c0_69] : memref<16x16x64xf32, #tpu.memory_space<vmem>>, vector<16x8x64xf32>
    %178 = vector.extract_strided_slice %177 {offsets = [2, 0, 0], sizes = [8, 8, 64], strides = [1, 1, 1]} : vector<16x8x64xf32> to vector<8x8x64xf32>
    %c2_70 = arith.constant 2 : index
    %c0_71 = arith.constant 0 : index
    %179 = vector.load %arg6[%c2_70, %c0_71] : memref<25x64xf32, #tpu.memory_space<vmem>>, vector<1x64xf32>
    %180 = vector.shape_cast %179 : vector<1x64xf32> to vector<64xf32>
    %181 = vector.shape_cast %180 : vector<64xf32> to vector<1x1x64xf32>
    %182 = vector.broadcast %181 : vector<1x1x64xf32> to vector<8x8x64xf32>
    %183 = arith.mulf %178, %182 : vector<8x8x64xf32>
    %184 = arith.addf %176, %183 : vector<8x8x64xf32>
    %185 = vector.extract_strided_slice %177 {offsets = [3, 0, 0], sizes = [8, 8, 64], strides = [1, 1, 1]} : vector<16x8x64xf32> to vector<8x8x64xf32>
    %c7_72 = arith.constant 7 : index
    %c0_73 = arith.constant 0 : index
    %186 = vector.load %arg6[%c7_72, %c0_73] : memref<25x64xf32, #tpu.memory_space<vmem>>, vector<1x64xf32>
    %187 = vector.shape_cast %186 : vector<1x64xf32> to vector<64xf32>
    %188 = vector.shape_cast %187 : vector<64xf32> to vector<1x1x64xf32>
    %189 = vector.broadcast %188 : vector<1x1x64xf32> to vector<8x8x64xf32>
    %190 = arith.mulf %185, %189 : vector<8x8x64xf32>
    %191 = arith.addf %184, %190 : vector<8x8x64xf32>
    %192 = vector.extract_strided_slice %177 {offsets = [4, 0, 0], sizes = [8, 8, 64], strides = [1, 1, 1]} : vector<16x8x64xf32> to vector<8x8x64xf32>
    %c12 = arith.constant 12 : index
    %c0_74 = arith.constant 0 : index
    %193 = vector.load %arg6[%c12, %c0_74] : memref<25x64xf32, #tpu.memory_space<vmem>>, vector<1x64xf32>
    %194 = vector.shape_cast %193 : vector<1x64xf32> to vector<64xf32>
    %195 = vector.shape_cast %194 : vector<64xf32> to vector<1x1x64xf32>
    %196 = vector.broadcast %195 : vector<1x1x64xf32> to vector<8x8x64xf32>
    %197 = arith.mulf %192, %196 : vector<8x8x64xf32>
    %198 = arith.addf %191, %197 : vector<8x8x64xf32>
    %199 = vector.extract_strided_slice %177 {offsets = [5, 0, 0], sizes = [8, 8, 64], strides = [1, 1, 1]} : vector<16x8x64xf32> to vector<8x8x64xf32>
    %c17 = arith.constant 17 : index
    %c0_75 = arith.constant 0 : index
    %200 = vector.load %arg6[%c17, %c0_75] : memref<25x64xf32, #tpu.memory_space<vmem>>, vector<1x64xf32>
    %201 = vector.shape_cast %200 : vector<1x64xf32> to vector<64xf32>
    %202 = vector.shape_cast %201 : vector<64xf32> to vector<1x1x64xf32>
    %203 = vector.broadcast %202 : vector<1x1x64xf32> to vector<8x8x64xf32>
    %204 = arith.mulf %199, %203 : vector<8x8x64xf32>
    %205 = arith.addf %198, %204 : vector<8x8x64xf32>
    %206 = vector.extract_strided_slice %177 {offsets = [6, 0, 0], sizes = [8, 8, 64], strides = [1, 1, 1]} : vector<16x8x64xf32> to vector<8x8x64xf32>
    %c22 = arith.constant 22 : index
    %c0_76 = arith.constant 0 : index
    %207 = vector.load %arg6[%c22, %c0_76] : memref<25x64xf32, #tpu.memory_space<vmem>>, vector<1x64xf32>
    %208 = vector.shape_cast %207 : vector<1x64xf32> to vector<64xf32>
    %209 = vector.shape_cast %208 : vector<64xf32> to vector<1x1x64xf32>
    %210 = vector.broadcast %209 : vector<1x1x64xf32> to vector<8x8x64xf32>
    %211 = arith.mulf %206, %210 : vector<8x8x64xf32>
    %212 = arith.addf %205, %211 : vector<8x8x64xf32>
    %c0_77 = arith.constant 0 : index
    %c5_78 = arith.constant 5 : index
    %c0_79 = arith.constant 0 : index
    %213 = vector.load %arg21[%c0_77, %c5_78, %c0_79] : memref<16x16x64xf32, #tpu.memory_space<vmem>>, vector<16x8x64xf32>
    %214 = vector.extract_strided_slice %213 {offsets = [2, 0, 0], sizes = [8, 8, 64], strides = [1, 1, 1]} : vector<16x8x64xf32> to vector<8x8x64xf32>
    %c3_80 = arith.constant 3 : index
    %c0_81 = arith.constant 0 : index
    %215 = vector.load %arg6[%c3_80, %c0_81] : memref<25x64xf32, #tpu.memory_space<vmem>>, vector<1x64xf32>
    %216 = vector.shape_cast %215 : vector<1x64xf32> to vector<64xf32>
    %217 = vector.shape_cast %216 : vector<64xf32> to vector<1x1x64xf32>
    %218 = vector.broadcast %217 : vector<1x1x64xf32> to vector<8x8x64xf32>
    %219 = arith.mulf %214, %218 : vector<8x8x64xf32>
    %220 = arith.addf %212, %219 : vector<8x8x64xf32>
    %221 = vector.extract_strided_slice %213 {offsets = [3, 0, 0], sizes = [8, 8, 64], strides = [1, 1, 1]} : vector<16x8x64xf32> to vector<8x8x64xf32>
    %c8_82 = arith.constant 8 : index
    %c0_83 = arith.constant 0 : index
    %222 = vector.load %arg6[%c8_82, %c0_83] : memref<25x64xf32, #tpu.memory_space<vmem>>, vector<1x64xf32>
    %223 = vector.shape_cast %222 : vector<1x64xf32> to vector<64xf32>
    %224 = vector.shape_cast %223 : vector<64xf32> to vector<1x1x64xf32>
    %225 = vector.broadcast %224 : vector<1x1x64xf32> to vector<8x8x64xf32>
    %226 = arith.mulf %221, %225 : vector<8x8x64xf32>
    %227 = arith.addf %220, %226 : vector<8x8x64xf32>
    %228 = vector.extract_strided_slice %213 {offsets = [4, 0, 0], sizes = [8, 8, 64], strides = [1, 1, 1]} : vector<16x8x64xf32> to vector<8x8x64xf32>
    %c13 = arith.constant 13 : index
    %c0_84 = arith.constant 0 : index
    %229 = vector.load %arg6[%c13, %c0_84] : memref<25x64xf32, #tpu.memory_space<vmem>>, vector<1x64xf32>
    %230 = vector.shape_cast %229 : vector<1x64xf32> to vector<64xf32>
    %231 = vector.shape_cast %230 : vector<64xf32> to vector<1x1x64xf32>
    %232 = vector.broadcast %231 : vector<1x1x64xf32> to vector<8x8x64xf32>
    %233 = arith.mulf %228, %232 : vector<8x8x64xf32>
    %234 = arith.addf %227, %233 : vector<8x8x64xf32>
    %235 = vector.extract_strided_slice %213 {offsets = [5, 0, 0], sizes = [8, 8, 64], strides = [1, 1, 1]} : vector<16x8x64xf32> to vector<8x8x64xf32>
    %c18 = arith.constant 18 : index
    %c0_85 = arith.constant 0 : index
    %236 = vector.load %arg6[%c18, %c0_85] : memref<25x64xf32, #tpu.memory_space<vmem>>, vector<1x64xf32>
    %237 = vector.shape_cast %236 : vector<1x64xf32> to vector<64xf32>
    %238 = vector.shape_cast %237 : vector<64xf32> to vector<1x1x64xf32>
    %239 = vector.broadcast %238 : vector<1x1x64xf32> to vector<8x8x64xf32>
    %240 = arith.mulf %235, %239 : vector<8x8x64xf32>
    %241 = arith.addf %234, %240 : vector<8x8x64xf32>
    %242 = vector.extract_strided_slice %213 {offsets = [6, 0, 0], sizes = [8, 8, 64], strides = [1, 1, 1]} : vector<16x8x64xf32> to vector<8x8x64xf32>
    %c23 = arith.constant 23 : index
    %c0_86 = arith.constant 0 : index
    %243 = vector.load %arg6[%c23, %c0_86] : memref<25x64xf32, #tpu.memory_space<vmem>>, vector<1x64xf32>
    %244 = vector.shape_cast %243 : vector<1x64xf32> to vector<64xf32>
    %245 = vector.shape_cast %244 : vector<64xf32> to vector<1x1x64xf32>
    %246 = vector.broadcast %245 : vector<1x1x64xf32> to vector<8x8x64xf32>
    %247 = arith.mulf %242, %246 : vector<8x8x64xf32>
    %248 = arith.addf %241, %247 : vector<8x8x64xf32>
    %c0_87 = arith.constant 0 : index
    %c6_88 = arith.constant 6 : index
    %c0_89 = arith.constant 0 : index
    %249 = vector.load %arg21[%c0_87, %c6_88, %c0_89] : memref<16x16x64xf32, #tpu.memory_space<vmem>>, vector<16x8x64xf32>
    %250 = vector.extract_strided_slice %249 {offsets = [2, 0, 0], sizes = [8, 8, 64], strides = [1, 1, 1]} : vector<16x8x64xf32> to vector<8x8x64xf32>
    %c4_90 = arith.constant 4 : index
    %c0_91 = arith.constant 0 : index
    %251 = vector.load %arg6[%c4_90, %c0_91] : memref<25x64xf32, #tpu.memory_space<vmem>>, vector<1x64xf32>
    %252 = vector.shape_cast %251 : vector<1x64xf32> to vector<64xf32>
    %253 = vector.shape_cast %252 : vector<64xf32> to vector<1x1x64xf32>
    %254 = vector.broadcast %253 : vector<1x1x64xf32> to vector<8x8x64xf32>
    %255 = arith.mulf %250, %254 : vector<8x8x64xf32>
    %256 = arith.addf %248, %255 : vector<8x8x64xf32>
    %257 = vector.extract_strided_slice %249 {offsets = [3, 0, 0], sizes = [8, 8, 64], strides = [1, 1, 1]} : vector<16x8x64xf32> to vector<8x8x64xf32>
    %c9 = arith.constant 9 : index
    %c0_92 = arith.constant 0 : index
    %258 = vector.load %arg6[%c9, %c0_92] : memref<25x64xf32, #tpu.memory_space<vmem>>, vector<1x64xf32>
    %259 = vector.shape_cast %258 : vector<1x64xf32> to vector<64xf32>
    %260 = vector.shape_cast %259 : vector<64xf32> to vector<1x1x64xf32>
    %261 = vector.broadcast %260 : vector<1x1x64xf32> to vector<8x8x64xf32>
    %262 = arith.mulf %257, %261 : vector<8x8x64xf32>
    %263 = arith.addf %256, %262 : vector<8x8x64xf32>
    %264 = vector.extract_strided_slice %249 {offsets = [4, 0, 0], sizes = [8, 8, 64], strides = [1, 1, 1]} : vector<16x8x64xf32> to vector<8x8x64xf32>
    %c14 = arith.constant 14 : index
    %c0_93 = arith.constant 0 : index
    %265 = vector.load %arg6[%c14, %c0_93] : memref<25x64xf32, #tpu.memory_space<vmem>>, vector<1x64xf32>
    %266 = vector.shape_cast %265 : vector<1x64xf32> to vector<64xf32>
    %267 = vector.shape_cast %266 : vector<64xf32> to vector<1x1x64xf32>
    %268 = vector.broadcast %267 : vector<1x1x64xf32> to vector<8x8x64xf32>
    %269 = arith.mulf %264, %268 : vector<8x8x64xf32>
    %270 = arith.addf %263, %269 : vector<8x8x64xf32>
    %271 = vector.extract_strided_slice %249 {offsets = [5, 0, 0], sizes = [8, 8, 64], strides = [1, 1, 1]} : vector<16x8x64xf32> to vector<8x8x64xf32>
    %c19 = arith.constant 19 : index
    %c0_94 = arith.constant 0 : index
    %272 = vector.load %arg6[%c19, %c0_94] : memref<25x64xf32, #tpu.memory_space<vmem>>, vector<1x64xf32>
    %273 = vector.shape_cast %272 : vector<1x64xf32> to vector<64xf32>
    %274 = vector.shape_cast %273 : vector<64xf32> to vector<1x1x64xf32>
    %275 = vector.broadcast %274 : vector<1x1x64xf32> to vector<8x8x64xf32>
    %276 = arith.mulf %271, %275 : vector<8x8x64xf32>
    %277 = arith.addf %270, %276 : vector<8x8x64xf32>
    %278 = vector.extract_strided_slice %249 {offsets = [6, 0, 0], sizes = [8, 8, 64], strides = [1, 1, 1]} : vector<16x8x64xf32> to vector<8x8x64xf32>
    %c24 = arith.constant 24 : index
    %c0_95 = arith.constant 0 : index
    %279 = vector.load %arg6[%c24, %c0_95] : memref<25x64xf32, #tpu.memory_space<vmem>>, vector<1x64xf32>
    %280 = vector.shape_cast %279 : vector<1x64xf32> to vector<64xf32>
    %281 = vector.shape_cast %280 : vector<64xf32> to vector<1x1x64xf32>
    %282 = vector.broadcast %281 : vector<1x1x64xf32> to vector<8x8x64xf32>
    %283 = arith.mulf %278, %282 : vector<8x8x64xf32>
    %284 = arith.addf %277, %283 : vector<8x8x64xf32>
    %c1_96 = arith.constant 1 : index
    %c0_97 = arith.constant 0 : index
    %285 = vector.load %arg9[%c1_96, %c0_97] : memref<4x64xf32, #tpu.memory_space<vmem>>, vector<1x64xf32>
    %286 = vector.shape_cast %285 : vector<1x64xf32> to vector<64xf32>
    %287 = vector.shape_cast %286 : vector<64xf32> to vector<1x1x64xf32>
    %288 = vector.broadcast %287 : vector<1x1x64xf32> to vector<8x8x64xf32>
    %289 = arith.addf %284, %288 : vector<8x8x64xf32>
    %290 = vector.shape_cast %289 : vector<8x8x64xf32> to vector<64x64xf32>
    %291 = arith.truncf %290 : vector<64x64xf32> to vector<64x64xbf16>
    %c1_98 = arith.constant 1 : index
    %c0_99 = arith.constant 0 : index
    %c0_100 = arith.constant 0 : index
    %292 = vector.load %arg10[%c1_98, %c0_99, %c0_100] : memref<4x64x16xbf16, #tpu.memory_space<vmem>>, vector<1x64x16xbf16>
    %293 = vector.shape_cast %292 : vector<1x64x16xbf16> to vector<64x16xbf16>
    %cst_101 = arith.constant dense<0.000000e+00> : vector<64x16xf32>
    %294 = tpu.matmul %291, %293, %cst_101 {dimension_numbers = #tpu.dot_dimension_numbers<[1], [0], [0], [1], [0, 0, 1, 1], [], []>} : vector<64x64xbf16>, vector<64x16xbf16>, vector<64x16xf32> -> vector<64x16xf32>
    %c1_102 = arith.constant 1 : index
    %c0_103 = arith.constant 0 : index
    %295 = vector.load %arg11[%c1_102, %c0_103] : memref<4x16xf32, #tpu.memory_space<vmem>>, vector<1x16xf32>
    %296 = vector.shape_cast %295 : vector<1x16xf32> to vector<16xf32>
    %297 = vector.shape_cast %296 : vector<16xf32> to vector<1x16xf32>
    %298 = vector.broadcast %297 : vector<1x16xf32> to vector<64x16xf32>
    %299 = arith.addf %294, %298 : vector<64x16xf32>
    %cst_104 = arith.constant dense<0.000000e+00> : vector<16xf32>
    %300 = vector.multi_reduction <add>, %299, %cst_104 [0] : vector<64x16xf32> to vector<16xf32>
    %301 = vector.shape_cast %300 : vector<16xf32> to vector<1x16xf32>
    %cst_105 = arith.constant 1.562500e-02 : f32
    %302 = vector.broadcast %cst_105 : f32 to vector<1x16xf32>
    %303 = arith.mulf %301, %302 : vector<1x16xf32>
    %cst_106 = arith.constant 0.000000e+00 : f32
    %304 = vector.broadcast %cst_106 : f32 to vector<8x8x64xf32>
    %c0_107 = arith.constant 0 : index
    %c1_108 = arith.constant 1 : index
    %c0_109 = arith.constant 0 : index
    %305 = vector.load %arg21[%c0_107, %c1_108, %c0_109] : memref<16x16x64xf32, #tpu.memory_space<vmem>>, vector<16x8x64xf32>
    %306 = vector.extract_strided_slice %305 {offsets = [1, 0, 0], sizes = [8, 8, 64], strides = [1, 1, 1]} : vector<16x8x64xf32> to vector<8x8x64xf32>
    %c0_110 = arith.constant 0 : index
    %c0_111 = arith.constant 0 : index
    %307 = vector.load %arg7[%c0_110, %c0_111] : memref<49x64xf32, #tpu.memory_space<vmem>>, vector<1x64xf32>
    %308 = vector.shape_cast %307 : vector<1x64xf32> to vector<64xf32>
    %309 = vector.shape_cast %308 : vector<64xf32> to vector<1x1x64xf32>
    %310 = vector.broadcast %309 : vector<1x1x64xf32> to vector<8x8x64xf32>
    %311 = arith.mulf %306, %310 : vector<8x8x64xf32>
    %312 = arith.addf %304, %311 : vector<8x8x64xf32>
    %313 = vector.extract_strided_slice %305 {offsets = [2, 0, 0], sizes = [8, 8, 64], strides = [1, 1, 1]} : vector<16x8x64xf32> to vector<8x8x64xf32>
    %c7_112 = arith.constant 7 : index
    %c0_113 = arith.constant 0 : index
    %314 = vector.load %arg7[%c7_112, %c0_113] : memref<49x64xf32, #tpu.memory_space<vmem>>, vector<1x64xf32>
    %315 = vector.shape_cast %314 : vector<1x64xf32> to vector<64xf32>
    %316 = vector.shape_cast %315 : vector<64xf32> to vector<1x1x64xf32>
    %317 = vector.broadcast %316 : vector<1x1x64xf32> to vector<8x8x64xf32>
    %318 = arith.mulf %313, %317 : vector<8x8x64xf32>
    %319 = arith.addf %312, %318 : vector<8x8x64xf32>
    %320 = vector.extract_strided_slice %305 {offsets = [3, 0, 0], sizes = [8, 8, 64], strides = [1, 1, 1]} : vector<16x8x64xf32> to vector<8x8x64xf32>
    %c14_114 = arith.constant 14 : index
    %c0_115 = arith.constant 0 : index
    %321 = vector.load %arg7[%c14_114, %c0_115] : memref<49x64xf32, #tpu.memory_space<vmem>>, vector<1x64xf32>
    %322 = vector.shape_cast %321 : vector<1x64xf32> to vector<64xf32>
    %323 = vector.shape_cast %322 : vector<64xf32> to vector<1x1x64xf32>
    %324 = vector.broadcast %323 : vector<1x1x64xf32> to vector<8x8x64xf32>
    %325 = arith.mulf %320, %324 : vector<8x8x64xf32>
    %326 = arith.addf %319, %325 : vector<8x8x64xf32>
    %327 = vector.extract_strided_slice %305 {offsets = [4, 0, 0], sizes = [8, 8, 64], strides = [1, 1, 1]} : vector<16x8x64xf32> to vector<8x8x64xf32>
    %c21_116 = arith.constant 21 : index
    %c0_117 = arith.constant 0 : index
    %328 = vector.load %arg7[%c21_116, %c0_117] : memref<49x64xf32, #tpu.memory_space<vmem>>, vector<1x64xf32>
    %329 = vector.shape_cast %328 : vector<1x64xf32> to vector<64xf32>
    %330 = vector.shape_cast %329 : vector<64xf32> to vector<1x1x64xf32>
    %331 = vector.broadcast %330 : vector<1x1x64xf32> to vector<8x8x64xf32>
    %332 = arith.mulf %327, %331 : vector<8x8x64xf32>
    %333 = arith.addf %326, %332 : vector<8x8x64xf32>
    %334 = vector.extract_strided_slice %305 {offsets = [5, 0, 0], sizes = [8, 8, 64], strides = [1, 1, 1]} : vector<16x8x64xf32> to vector<8x8x64xf32>
    %c28 = arith.constant 28 : index
    %c0_118 = arith.constant 0 : index
    %335 = vector.load %arg7[%c28, %c0_118] : memref<49x64xf32, #tpu.memory_space<vmem>>, vector<1x64xf32>
    %336 = vector.shape_cast %335 : vector<1x64xf32> to vector<64xf32>
    %337 = vector.shape_cast %336 : vector<64xf32> to vector<1x1x64xf32>
    %338 = vector.broadcast %337 : vector<1x1x64xf32> to vector<8x8x64xf32>
    %339 = arith.mulf %334, %338 : vector<8x8x64xf32>
    %340 = arith.addf %333, %339 : vector<8x8x64xf32>
    %341 = vector.extract_strided_slice %305 {offsets = [6, 0, 0], sizes = [8, 8, 64], strides = [1, 1, 1]} : vector<16x8x64xf32> to vector<8x8x64xf32>
    %c35 = arith.constant 35 : index
    %c0_119 = arith.constant 0 : index
    %342 = vector.load %arg7[%c35, %c0_119] : memref<49x64xf32, #tpu.memory_space<vmem>>, vector<1x64xf32>
    %343 = vector.shape_cast %342 : vector<1x64xf32> to vector<64xf32>
    %344 = vector.shape_cast %343 : vector<64xf32> to vector<1x1x64xf32>
    %345 = vector.broadcast %344 : vector<1x1x64xf32> to vector<8x8x64xf32>
    %346 = arith.mulf %341, %345 : vector<8x8x64xf32>
    %347 = arith.addf %340, %346 : vector<8x8x64xf32>
    %348 = vector.extract_strided_slice %305 {offsets = [7, 0, 0], sizes = [8, 8, 64], strides = [1, 1, 1]} : vector<16x8x64xf32> to vector<8x8x64xf32>
    %c42 = arith.constant 42 : index
    %c0_120 = arith.constant 0 : index
    %349 = vector.load %arg7[%c42, %c0_120] : memref<49x64xf32, #tpu.memory_space<vmem>>, vector<1x64xf32>
    %350 = vector.shape_cast %349 : vector<1x64xf32> to vector<64xf32>
    %351 = vector.shape_cast %350 : vector<64xf32> to vector<1x1x64xf32>
    %352 = vector.broadcast %351 : vector<1x1x64xf32> to vector<8x8x64xf32>
    %353 = arith.mulf %348, %352 : vector<8x8x64xf32>
    %354 = arith.addf %347, %353 : vector<8x8x64xf32>
    %c0_121 = arith.constant 0 : index
    %c2_122 = arith.constant 2 : index
    %c0_123 = arith.constant 0 : index
    %355 = vector.load %arg21[%c0_121, %c2_122, %c0_123] : memref<16x16x64xf32, #tpu.memory_space<vmem>>, vector<16x8x64xf32>
    %356 = vector.extract_strided_slice %355 {offsets = [1, 0, 0], sizes = [8, 8, 64], strides = [1, 1, 1]} : vector<16x8x64xf32> to vector<8x8x64xf32>
    %c1_124 = arith.constant 1 : index
    %c0_125 = arith.constant 0 : index
    %357 = vector.load %arg7[%c1_124, %c0_125] : memref<49x64xf32, #tpu.memory_space<vmem>>, vector<1x64xf32>
    %358 = vector.shape_cast %357 : vector<1x64xf32> to vector<64xf32>
    %359 = vector.shape_cast %358 : vector<64xf32> to vector<1x1x64xf32>
    %360 = vector.broadcast %359 : vector<1x1x64xf32> to vector<8x8x64xf32>
    %361 = arith.mulf %356, %360 : vector<8x8x64xf32>
    %362 = arith.addf %354, %361 : vector<8x8x64xf32>
    %363 = vector.extract_strided_slice %355 {offsets = [2, 0, 0], sizes = [8, 8, 64], strides = [1, 1, 1]} : vector<16x8x64xf32> to vector<8x8x64xf32>
    %c8_126 = arith.constant 8 : index
    %c0_127 = arith.constant 0 : index
    %364 = vector.load %arg7[%c8_126, %c0_127] : memref<49x64xf32, #tpu.memory_space<vmem>>, vector<1x64xf32>
    %365 = vector.shape_cast %364 : vector<1x64xf32> to vector<64xf32>
    %366 = vector.shape_cast %365 : vector<64xf32> to vector<1x1x64xf32>
    %367 = vector.broadcast %366 : vector<1x1x64xf32> to vector<8x8x64xf32>
    %368 = arith.mulf %363, %367 : vector<8x8x64xf32>
    %369 = arith.addf %362, %368 : vector<8x8x64xf32>
    %370 = vector.extract_strided_slice %355 {offsets = [3, 0, 0], sizes = [8, 8, 64], strides = [1, 1, 1]} : vector<16x8x64xf32> to vector<8x8x64xf32>
    %c15_128 = arith.constant 15 : index
    %c0_129 = arith.constant 0 : index
    %371 = vector.load %arg7[%c15_128, %c0_129] : memref<49x64xf32, #tpu.memory_space<vmem>>, vector<1x64xf32>
    %372 = vector.shape_cast %371 : vector<1x64xf32> to vector<64xf32>
    %373 = vector.shape_cast %372 : vector<64xf32> to vector<1x1x64xf32>
    %374 = vector.broadcast %373 : vector<1x1x64xf32> to vector<8x8x64xf32>
    %375 = arith.mulf %370, %374 : vector<8x8x64xf32>
    %376 = arith.addf %369, %375 : vector<8x8x64xf32>
    %377 = vector.extract_strided_slice %355 {offsets = [4, 0, 0], sizes = [8, 8, 64], strides = [1, 1, 1]} : vector<16x8x64xf32> to vector<8x8x64xf32>
    %c22_130 = arith.constant 22 : index
    %c0_131 = arith.constant 0 : index
    %378 = vector.load %arg7[%c22_130, %c0_131] : memref<49x64xf32, #tpu.memory_space<vmem>>, vector<1x64xf32>
    %379 = vector.shape_cast %378 : vector<1x64xf32> to vector<64xf32>
    %380 = vector.shape_cast %379 : vector<64xf32> to vector<1x1x64xf32>
    %381 = vector.broadcast %380 : vector<1x1x64xf32> to vector<8x8x64xf32>
    %382 = arith.mulf %377, %381 : vector<8x8x64xf32>
    %383 = arith.addf %376, %382 : vector<8x8x64xf32>
    %384 = vector.extract_strided_slice %355 {offsets = [5, 0, 0], sizes = [8, 8, 64], strides = [1, 1, 1]} : vector<16x8x64xf32> to vector<8x8x64xf32>
    %c29 = arith.constant 29 : index
    %c0_132 = arith.constant 0 : index
    %385 = vector.load %arg7[%c29, %c0_132] : memref<49x64xf32, #tpu.memory_space<vmem>>, vector<1x64xf32>
    %386 = vector.shape_cast %385 : vector<1x64xf32> to vector<64xf32>
    %387 = vector.shape_cast %386 : vector<64xf32> to vector<1x1x64xf32>
    %388 = vector.broadcast %387 : vector<1x1x64xf32> to vector<8x8x64xf32>
    %389 = arith.mulf %384, %388 : vector<8x8x64xf32>
    %390 = arith.addf %383, %389 : vector<8x8x64xf32>
    %391 = vector.extract_strided_slice %355 {offsets = [6, 0, 0], sizes = [8, 8, 64], strides = [1, 1, 1]} : vector<16x8x64xf32> to vector<8x8x64xf32>
    %c36 = arith.constant 36 : index
    %c0_133 = arith.constant 0 : index
    %392 = vector.load %arg7[%c36, %c0_133] : memref<49x64xf32, #tpu.memory_space<vmem>>, vector<1x64xf32>
    %393 = vector.shape_cast %392 : vector<1x64xf32> to vector<64xf32>
    %394 = vector.shape_cast %393 : vector<64xf32> to vector<1x1x64xf32>
    %395 = vector.broadcast %394 : vector<1x1x64xf32> to vector<8x8x64xf32>
    %396 = arith.mulf %391, %395 : vector<8x8x64xf32>
    %397 = arith.addf %390, %396 : vector<8x8x64xf32>
    %398 = vector.extract_strided_slice %355 {offsets = [7, 0, 0], sizes = [8, 8, 64], strides = [1, 1, 1]} : vector<16x8x64xf32> to vector<8x8x64xf32>
    %c43 = arith.constant 43 : index
    %c0_134 = arith.constant 0 : index
    %399 = vector.load %arg7[%c43, %c0_134] : memref<49x64xf32, #tpu.memory_space<vmem>>, vector<1x64xf32>
    %400 = vector.shape_cast %399 : vector<1x64xf32> to vector<64xf32>
    %401 = vector.shape_cast %400 : vector<64xf32> to vector<1x1x64xf32>
    %402 = vector.broadcast %401 : vector<1x1x64xf32> to vector<8x8x64xf32>
    %403 = arith.mulf %398, %402 : vector<8x8x64xf32>
    %404 = arith.addf %397, %403 : vector<8x8x64xf32>
    %c0_135 = arith.constant 0 : index
    %c3_136 = arith.constant 3 : index
    %c0_137 = arith.constant 0 : index
    %405 = vector.load %arg21[%c0_135, %c3_136, %c0_137] : memref<16x16x64xf32, #tpu.memory_space<vmem>>, vector<16x8x64xf32>
    %406 = vector.extract_strided_slice %405 {offsets = [1, 0, 0], sizes = [8, 8, 64], strides = [1, 1, 1]} : vector<16x8x64xf32> to vector<8x8x64xf32>
    %c2_138 = arith.constant 2 : index
    %c0_139 = arith.constant 0 : index
    %407 = vector.load %arg7[%c2_138, %c0_139] : memref<49x64xf32, #tpu.memory_space<vmem>>, vector<1x64xf32>
    %408 = vector.shape_cast %407 : vector<1x64xf32> to vector<64xf32>
    %409 = vector.shape_cast %408 : vector<64xf32> to vector<1x1x64xf32>
    %410 = vector.broadcast %409 : vector<1x1x64xf32> to vector<8x8x64xf32>
    %411 = arith.mulf %406, %410 : vector<8x8x64xf32>
    %412 = arith.addf %404, %411 : vector<8x8x64xf32>
    %413 = vector.extract_strided_slice %405 {offsets = [2, 0, 0], sizes = [8, 8, 64], strides = [1, 1, 1]} : vector<16x8x64xf32> to vector<8x8x64xf32>
    %c9_140 = arith.constant 9 : index
    %c0_141 = arith.constant 0 : index
    %414 = vector.load %arg7[%c9_140, %c0_141] : memref<49x64xf32, #tpu.memory_space<vmem>>, vector<1x64xf32>
    %415 = vector.shape_cast %414 : vector<1x64xf32> to vector<64xf32>
    %416 = vector.shape_cast %415 : vector<64xf32> to vector<1x1x64xf32>
    %417 = vector.broadcast %416 : vector<1x1x64xf32> to vector<8x8x64xf32>
    %418 = arith.mulf %413, %417 : vector<8x8x64xf32>
    %419 = arith.addf %412, %418 : vector<8x8x64xf32>
    %420 = vector.extract_strided_slice %405 {offsets = [3, 0, 0], sizes = [8, 8, 64], strides = [1, 1, 1]} : vector<16x8x64xf32> to vector<8x8x64xf32>
    %c16_142 = arith.constant 16 : index
    %c0_143 = arith.constant 0 : index
    %421 = vector.load %arg7[%c16_142, %c0_143] : memref<49x64xf32, #tpu.memory_space<vmem>>, vector<1x64xf32>
    %422 = vector.shape_cast %421 : vector<1x64xf32> to vector<64xf32>
    %423 = vector.shape_cast %422 : vector<64xf32> to vector<1x1x64xf32>
    %424 = vector.broadcast %423 : vector<1x1x64xf32> to vector<8x8x64xf32>
    %425 = arith.mulf %420, %424 : vector<8x8x64xf32>
    %426 = arith.addf %419, %425 : vector<8x8x64xf32>
    %427 = vector.extract_strided_slice %405 {offsets = [4, 0, 0], sizes = [8, 8, 64], strides = [1, 1, 1]} : vector<16x8x64xf32> to vector<8x8x64xf32>
    %c23_144 = arith.constant 23 : index
    %c0_145 = arith.constant 0 : index
    %428 = vector.load %arg7[%c23_144, %c0_145] : memref<49x64xf32, #tpu.memory_space<vmem>>, vector<1x64xf32>
    %429 = vector.shape_cast %428 : vector<1x64xf32> to vector<64xf32>
    %430 = vector.shape_cast %429 : vector<64xf32> to vector<1x1x64xf32>
    %431 = vector.broadcast %430 : vector<1x1x64xf32> to vector<8x8x64xf32>
    %432 = arith.mulf %427, %431 : vector<8x8x64xf32>
    %433 = arith.addf %426, %432 : vector<8x8x64xf32>
    %434 = vector.extract_strided_slice %405 {offsets = [5, 0, 0], sizes = [8, 8, 64], strides = [1, 1, 1]} : vector<16x8x64xf32> to vector<8x8x64xf32>
    %c30 = arith.constant 30 : index
    %c0_146 = arith.constant 0 : index
    %435 = vector.load %arg7[%c30, %c0_146] : memref<49x64xf32, #tpu.memory_space<vmem>>, vector<1x64xf32>
    %436 = vector.shape_cast %435 : vector<1x64xf32> to vector<64xf32>
    %437 = vector.shape_cast %436 : vector<64xf32> to vector<1x1x64xf32>
    %438 = vector.broadcast %437 : vector<1x1x64xf32> to vector<8x8x64xf32>
    %439 = arith.mulf %434, %438 : vector<8x8x64xf32>
    %440 = arith.addf %433, %439 : vector<8x8x64xf32>
    %441 = vector.extract_strided_slice %405 {offsets = [6, 0, 0], sizes = [8, 8, 64], strides = [1, 1, 1]} : vector<16x8x64xf32> to vector<8x8x64xf32>
    %c37 = arith.constant 37 : index
    %c0_147 = arith.constant 0 : index
    %442 = vector.load %arg7[%c37, %c0_147] : memref<49x64xf32, #tpu.memory_space<vmem>>, vector<1x64xf32>
    %443 = vector.shape_cast %442 : vector<1x64xf32> to vector<64xf32>
    %444 = vector.shape_cast %443 : vector<64xf32> to vector<1x1x64xf32>
    %445 = vector.broadcast %444 : vector<1x1x64xf32> to vector<8x8x64xf32>
    %446 = arith.mulf %441, %445 : vector<8x8x64xf32>
    %447 = arith.addf %440, %446 : vector<8x8x64xf32>
    %448 = vector.extract_strided_slice %405 {offsets = [7, 0, 0], sizes = [8, 8, 64], strides = [1, 1, 1]} : vector<16x8x64xf32> to vector<8x8x64xf32>
    %c44 = arith.constant 44 : index
    %c0_148 = arith.constant 0 : index
    %449 = vector.load %arg7[%c44, %c0_148] : memref<49x64xf32, #tpu.memory_space<vmem>>, vector<1x64xf32>
    %450 = vector.shape_cast %449 : vector<1x64xf32> to vector<64xf32>
    %451 = vector.shape_cast %450 : vector<64xf32> to vector<1x1x64xf32>
    %452 = vector.broadcast %451 : vector<1x1x64xf32> to vector<8x8x64xf32>
    %453 = arith.mulf %448, %452 : vector<8x8x64xf32>
    %454 = arith.addf %447, %453 : vector<8x8x64xf32>
    %c0_149 = arith.constant 0 : index
    %c4_150 = arith.constant 4 : index
    %c0_151 = arith.constant 0 : index
    %455 = vector.load %arg21[%c0_149, %c4_150, %c0_151] : memref<16x16x64xf32, #tpu.memory_space<vmem>>, vector<16x8x64xf32>
    %456 = vector.extract_strided_slice %455 {offsets = [1, 0, 0], sizes = [8, 8, 64], strides = [1, 1, 1]} : vector<16x8x64xf32> to vector<8x8x64xf32>
    %c3_152 = arith.constant 3 : index
    %c0_153 = arith.constant 0 : index
    %457 = vector.load %arg7[%c3_152, %c0_153] : memref<49x64xf32, #tpu.memory_space<vmem>>, vector<1x64xf32>
    %458 = vector.shape_cast %457 : vector<1x64xf32> to vector<64xf32>
    %459 = vector.shape_cast %458 : vector<64xf32> to vector<1x1x64xf32>
    %460 = vector.broadcast %459 : vector<1x1x64xf32> to vector<8x8x64xf32>
    %461 = arith.mulf %456, %460 : vector<8x8x64xf32>
    %462 = arith.addf %454, %461 : vector<8x8x64xf32>
    %463 = vector.extract_strided_slice %455 {offsets = [2, 0, 0], sizes = [8, 8, 64], strides = [1, 1, 1]} : vector<16x8x64xf32> to vector<8x8x64xf32>
    %c10_154 = arith.constant 10 : index
    %c0_155 = arith.constant 0 : index
    %464 = vector.load %arg7[%c10_154, %c0_155] : memref<49x64xf32, #tpu.memory_space<vmem>>, vector<1x64xf32>
    %465 = vector.shape_cast %464 : vector<1x64xf32> to vector<64xf32>
    %466 = vector.shape_cast %465 : vector<64xf32> to vector<1x1x64xf32>
    %467 = vector.broadcast %466 : vector<1x1x64xf32> to vector<8x8x64xf32>
    %468 = arith.mulf %463, %467 : vector<8x8x64xf32>
    %469 = arith.addf %462, %468 : vector<8x8x64xf32>
    %470 = vector.extract_strided_slice %455 {offsets = [3, 0, 0], sizes = [8, 8, 64], strides = [1, 1, 1]} : vector<16x8x64xf32> to vector<8x8x64xf32>
    %c17_156 = arith.constant 17 : index
    %c0_157 = arith.constant 0 : index
    %471 = vector.load %arg7[%c17_156, %c0_157] : memref<49x64xf32, #tpu.memory_space<vmem>>, vector<1x64xf32>
    %472 = vector.shape_cast %471 : vector<1x64xf32> to vector<64xf32>
    %473 = vector.shape_cast %472 : vector<64xf32> to vector<1x1x64xf32>
    %474 = vector.broadcast %473 : vector<1x1x64xf32> to vector<8x8x64xf32>
    %475 = arith.mulf %470, %474 : vector<8x8x64xf32>
    %476 = arith.addf %469, %475 : vector<8x8x64xf32>
    %477 = vector.extract_strided_slice %455 {offsets = [4, 0, 0], sizes = [8, 8, 64], strides = [1, 1, 1]} : vector<16x8x64xf32> to vector<8x8x64xf32>
    %c24_158 = arith.constant 24 : index
    %c0_159 = arith.constant 0 : index
    %478 = vector.load %arg7[%c24_158, %c0_159] : memref<49x64xf32, #tpu.memory_space<vmem>>, vector<1x64xf32>
    %479 = vector.shape_cast %478 : vector<1x64xf32> to vector<64xf32>
    %480 = vector.shape_cast %479 : vector<64xf32> to vector<1x1x64xf32>
    %481 = vector.broadcast %480 : vector<1x1x64xf32> to vector<8x8x64xf32>
    %482 = arith.mulf %477, %481 : vector<8x8x64xf32>
    %483 = arith.addf %476, %482 : vector<8x8x64xf32>
    %484 = vector.extract_strided_slice %455 {offsets = [5, 0, 0], sizes = [8, 8, 64], strides = [1, 1, 1]} : vector<16x8x64xf32> to vector<8x8x64xf32>
    %c31 = arith.constant 31 : index
    %c0_160 = arith.constant 0 : index
    %485 = vector.load %arg7[%c31, %c0_160] : memref<49x64xf32, #tpu.memory_space<vmem>>, vector<1x64xf32>
    %486 = vector.shape_cast %485 : vector<1x64xf32> to vector<64xf32>
    %487 = vector.shape_cast %486 : vector<64xf32> to vector<1x1x64xf32>
    %488 = vector.broadcast %487 : vector<1x1x64xf32> to vector<8x8x64xf32>
    %489 = arith.mulf %484, %488 : vector<8x8x64xf32>
    %490 = arith.addf %483, %489 : vector<8x8x64xf32>
    %491 = vector.extract_strided_slice %455 {offsets = [6, 0, 0], sizes = [8, 8, 64], strides = [1, 1, 1]} : vector<16x8x64xf32> to vector<8x8x64xf32>
    %c38 = arith.constant 38 : index
    %c0_161 = arith.constant 0 : index
    %492 = vector.load %arg7[%c38, %c0_161] : memref<49x64xf32, #tpu.memory_space<vmem>>, vector<1x64xf32>
    %493 = vector.shape_cast %492 : vector<1x64xf32> to vector<64xf32>
    %494 = vector.shape_cast %493 : vector<64xf32> to vector<1x1x64xf32>
    %495 = vector.broadcast %494 : vector<1x1x64xf32> to vector<8x8x64xf32>
    %496 = arith.mulf %491, %495 : vector<8x8x64xf32>
    %497 = arith.addf %490, %496 : vector<8x8x64xf32>
    %498 = vector.extract_strided_slice %455 {offsets = [7, 0, 0], sizes = [8, 8, 64], strides = [1, 1, 1]} : vector<16x8x64xf32> to vector<8x8x64xf32>
    %c45 = arith.constant 45 : index
    %c0_162 = arith.constant 0 : index
    %499 = vector.load %arg7[%c45, %c0_162] : memref<49x64xf32, #tpu.memory_space<vmem>>, vector<1x64xf32>
    %500 = vector.shape_cast %499 : vector<1x64xf32> to vector<64xf32>
    %501 = vector.shape_cast %500 : vector<64xf32> to vector<1x1x64xf32>
    %502 = vector.broadcast %501 : vector<1x1x64xf32> to vector<8x8x64xf32>
    %503 = arith.mulf %498, %502 : vector<8x8x64xf32>
    %504 = arith.addf %497, %503 : vector<8x8x64xf32>
    %c0_163 = arith.constant 0 : index
    %c5_164 = arith.constant 5 : index
    %c0_165 = arith.constant 0 : index
    %505 = vector.load %arg21[%c0_163, %c5_164, %c0_165] : memref<16x16x64xf32, #tpu.memory_space<vmem>>, vector<16x8x64xf32>
    %506 = vector.extract_strided_slice %505 {offsets = [1, 0, 0], sizes = [8, 8, 64], strides = [1, 1, 1]} : vector<16x8x64xf32> to vector<8x8x64xf32>
    %c4_166 = arith.constant 4 : index
    %c0_167 = arith.constant 0 : index
    %507 = vector.load %arg7[%c4_166, %c0_167] : memref<49x64xf32, #tpu.memory_space<vmem>>, vector<1x64xf32>
    %508 = vector.shape_cast %507 : vector<1x64xf32> to vector<64xf32>
    %509 = vector.shape_cast %508 : vector<64xf32> to vector<1x1x64xf32>
    %510 = vector.broadcast %509 : vector<1x1x64xf32> to vector<8x8x64xf32>
    %511 = arith.mulf %506, %510 : vector<8x8x64xf32>
    %512 = arith.addf %504, %511 : vector<8x8x64xf32>
    %513 = vector.extract_strided_slice %505 {offsets = [2, 0, 0], sizes = [8, 8, 64], strides = [1, 1, 1]} : vector<16x8x64xf32> to vector<8x8x64xf32>
    %c11_168 = arith.constant 11 : index
    %c0_169 = arith.constant 0 : index
    %514 = vector.load %arg7[%c11_168, %c0_169] : memref<49x64xf32, #tpu.memory_space<vmem>>, vector<1x64xf32>
    %515 = vector.shape_cast %514 : vector<1x64xf32> to vector<64xf32>
    %516 = vector.shape_cast %515 : vector<64xf32> to vector<1x1x64xf32>
    %517 = vector.broadcast %516 : vector<1x1x64xf32> to vector<8x8x64xf32>
    %518 = arith.mulf %513, %517 : vector<8x8x64xf32>
    %519 = arith.addf %512, %518 : vector<8x8x64xf32>
    %520 = vector.extract_strided_slice %505 {offsets = [3, 0, 0], sizes = [8, 8, 64], strides = [1, 1, 1]} : vector<16x8x64xf32> to vector<8x8x64xf32>
    %c18_170 = arith.constant 18 : index
    %c0_171 = arith.constant 0 : index
    %521 = vector.load %arg7[%c18_170, %c0_171] : memref<49x64xf32, #tpu.memory_space<vmem>>, vector<1x64xf32>
    %522 = vector.shape_cast %521 : vector<1x64xf32> to vector<64xf32>
    %523 = vector.shape_cast %522 : vector<64xf32> to vector<1x1x64xf32>
    %524 = vector.broadcast %523 : vector<1x1x64xf32> to vector<8x8x64xf32>
    %525 = arith.mulf %520, %524 : vector<8x8x64xf32>
    %526 = arith.addf %519, %525 : vector<8x8x64xf32>
    %527 = vector.extract_strided_slice %505 {offsets = [4, 0, 0], sizes = [8, 8, 64], strides = [1, 1, 1]} : vector<16x8x64xf32> to vector<8x8x64xf32>
    %c25 = arith.constant 25 : index
    %c0_172 = arith.constant 0 : index
    %528 = vector.load %arg7[%c25, %c0_172] : memref<49x64xf32, #tpu.memory_space<vmem>>, vector<1x64xf32>
    %529 = vector.shape_cast %528 : vector<1x64xf32> to vector<64xf32>
    %530 = vector.shape_cast %529 : vector<64xf32> to vector<1x1x64xf32>
    %531 = vector.broadcast %530 : vector<1x1x64xf32> to vector<8x8x64xf32>
    %532 = arith.mulf %527, %531 : vector<8x8x64xf32>
    %533 = arith.addf %526, %532 : vector<8x8x64xf32>
    %534 = vector.extract_strided_slice %505 {offsets = [5, 0, 0], sizes = [8, 8, 64], strides = [1, 1, 1]} : vector<16x8x64xf32> to vector<8x8x64xf32>
    %c32 = arith.constant 32 : index
    %c0_173 = arith.constant 0 : index
    %535 = vector.load %arg7[%c32, %c0_173] : memref<49x64xf32, #tpu.memory_space<vmem>>, vector<1x64xf32>
    %536 = vector.shape_cast %535 : vector<1x64xf32> to vector<64xf32>
    %537 = vector.shape_cast %536 : vector<64xf32> to vector<1x1x64xf32>
    %538 = vector.broadcast %537 : vector<1x1x64xf32> to vector<8x8x64xf32>
    %539 = arith.mulf %534, %538 : vector<8x8x64xf32>
    %540 = arith.addf %533, %539 : vector<8x8x64xf32>
    %541 = vector.extract_strided_slice %505 {offsets = [6, 0, 0], sizes = [8, 8, 64], strides = [1, 1, 1]} : vector<16x8x64xf32> to vector<8x8x64xf32>
    %c39 = arith.constant 39 : index
    %c0_174 = arith.constant 0 : index
    %542 = vector.load %arg7[%c39, %c0_174] : memref<49x64xf32, #tpu.memory_space<vmem>>, vector<1x64xf32>
    %543 = vector.shape_cast %542 : vector<1x64xf32> to vector<64xf32>
    %544 = vector.shape_cast %543 : vector<64xf32> to vector<1x1x64xf32>
    %545 = vector.broadcast %544 : vector<1x1x64xf32> to vector<8x8x64xf32>
    %546 = arith.mulf %541, %545 : vector<8x8x64xf32>
    %547 = arith.addf %540, %546 : vector<8x8x64xf32>
    %548 = vector.extract_strided_slice %505 {offsets = [7, 0, 0], sizes = [8, 8, 64], strides = [1, 1, 1]} : vector<16x8x64xf32> to vector<8x8x64xf32>
    %c46 = arith.constant 46 : index
    %c0_175 = arith.constant 0 : index
    %549 = vector.load %arg7[%c46, %c0_175] : memref<49x64xf32, #tpu.memory_space<vmem>>, vector<1x64xf32>
    %550 = vector.shape_cast %549 : vector<1x64xf32> to vector<64xf32>
    %551 = vector.shape_cast %550 : vector<64xf32> to vector<1x1x64xf32>
    %552 = vector.broadcast %551 : vector<1x1x64xf32> to vector<8x8x64xf32>
    %553 = arith.mulf %548, %552 : vector<8x8x64xf32>
    %554 = arith.addf %547, %553 : vector<8x8x64xf32>
    %c0_176 = arith.constant 0 : index
    %c6_177 = arith.constant 6 : index
    %c0_178 = arith.constant 0 : index
    %555 = vector.load %arg21[%c0_176, %c6_177, %c0_178] : memref<16x16x64xf32, #tpu.memory_space<vmem>>, vector<16x8x64xf32>
    %556 = vector.extract_strided_slice %555 {offsets = [1, 0, 0], sizes = [8, 8, 64], strides = [1, 1, 1]} : vector<16x8x64xf32> to vector<8x8x64xf32>
    %c5_179 = arith.constant 5 : index
    %c0_180 = arith.constant 0 : index
    %557 = vector.load %arg7[%c5_179, %c0_180] : memref<49x64xf32, #tpu.memory_space<vmem>>, vector<1x64xf32>
    %558 = vector.shape_cast %557 : vector<1x64xf32> to vector<64xf32>
    %559 = vector.shape_cast %558 : vector<64xf32> to vector<1x1x64xf32>
    %560 = vector.broadcast %559 : vector<1x1x64xf32> to vector<8x8x64xf32>
    %561 = arith.mulf %556, %560 : vector<8x8x64xf32>
    %562 = arith.addf %554, %561 : vector<8x8x64xf32>
    %563 = vector.extract_strided_slice %555 {offsets = [2, 0, 0], sizes = [8, 8, 64], strides = [1, 1, 1]} : vector<16x8x64xf32> to vector<8x8x64xf32>
    %c12_181 = arith.constant 12 : index
    %c0_182 = arith.constant 0 : index
    %564 = vector.load %arg7[%c12_181, %c0_182] : memref<49x64xf32, #tpu.memory_space<vmem>>, vector<1x64xf32>
    %565 = vector.shape_cast %564 : vector<1x64xf32> to vector<64xf32>
    %566 = vector.shape_cast %565 : vector<64xf32> to vector<1x1x64xf32>
    %567 = vector.broadcast %566 : vector<1x1x64xf32> to vector<8x8x64xf32>
    %568 = arith.mulf %563, %567 : vector<8x8x64xf32>
    %569 = arith.addf %562, %568 : vector<8x8x64xf32>
    %570 = vector.extract_strided_slice %555 {offsets = [3, 0, 0], sizes = [8, 8, 64], strides = [1, 1, 1]} : vector<16x8x64xf32> to vector<8x8x64xf32>
    %c19_183 = arith.constant 19 : index
    %c0_184 = arith.constant 0 : index
    %571 = vector.load %arg7[%c19_183, %c0_184] : memref<49x64xf32, #tpu.memory_space<vmem>>, vector<1x64xf32>
    %572 = vector.shape_cast %571 : vector<1x64xf32> to vector<64xf32>
    %573 = vector.shape_cast %572 : vector<64xf32> to vector<1x1x64xf32>
    %574 = vector.broadcast %573 : vector<1x1x64xf32> to vector<8x8x64xf32>
    %575 = arith.mulf %570, %574 : vector<8x8x64xf32>
    %576 = arith.addf %569, %575 : vector<8x8x64xf32>
    %577 = vector.extract_strided_slice %555 {offsets = [4, 0, 0], sizes = [8, 8, 64], strides = [1, 1, 1]} : vector<16x8x64xf32> to vector<8x8x64xf32>
    %c26 = arith.constant 26 : index
    %c0_185 = arith.constant 0 : index
    %578 = vector.load %arg7[%c26, %c0_185] : memref<49x64xf32, #tpu.memory_space<vmem>>, vector<1x64xf32>
    %579 = vector.shape_cast %578 : vector<1x64xf32> to vector<64xf32>
    %580 = vector.shape_cast %579 : vector<64xf32> to vector<1x1x64xf32>
    %581 = vector.broadcast %580 : vector<1x1x64xf32> to vector<8x8x64xf32>
    %582 = arith.mulf %577, %581 : vector<8x8x64xf32>
    %583 = arith.addf %576, %582 : vector<8x8x64xf32>
    %584 = vector.extract_strided_slice %555 {offsets = [5, 0, 0], sizes = [8, 8, 64], strides = [1, 1, 1]} : vector<16x8x64xf32> to vector<8x8x64xf32>
    %c33 = arith.constant 33 : index
    %c0_186 = arith.constant 0 : index
    %585 = vector.load %arg7[%c33, %c0_186] : memref<49x64xf32, #tpu.memory_space<vmem>>, vector<1x64xf32>
    %586 = vector.shape_cast %585 : vector<1x64xf32> to vector<64xf32>
    %587 = vector.shape_cast %586 : vector<64xf32> to vector<1x1x64xf32>
    %588 = vector.broadcast %587 : vector<1x1x64xf32> to vector<8x8x64xf32>
    %589 = arith.mulf %584, %588 : vector<8x8x64xf32>
    %590 = arith.addf %583, %589 : vector<8x8x64xf32>
    %591 = vector.extract_strided_slice %555 {offsets = [6, 0, 0], sizes = [8, 8, 64], strides = [1, 1, 1]} : vector<16x8x64xf32> to vector<8x8x64xf32>
    %c40 = arith.constant 40 : index
    %c0_187 = arith.constant 0 : index
    %592 = vector.load %arg7[%c40, %c0_187] : memref<49x64xf32, #tpu.memory_space<vmem>>, vector<1x64xf32>
    %593 = vector.shape_cast %592 : vector<1x64xf32> to vector<64xf32>
    %594 = vector.shape_cast %593 : vector<64xf32> to vector<1x1x64xf32>
    %595 = vector.broadcast %594 : vector<1x1x64xf32> to vector<8x8x64xf32>
    %596 = arith.mulf %591, %595 : vector<8x8x64xf32>
    %597 = arith.addf %590, %596 : vector<8x8x64xf32>
    %598 = vector.extract_strided_slice %555 {offsets = [7, 0, 0], sizes = [8, 8, 64], strides = [1, 1, 1]} : vector<16x8x64xf32> to vector<8x8x64xf32>
    %c47 = arith.constant 47 : index
    %c0_188 = arith.constant 0 : index
    %599 = vector.load %arg7[%c47, %c0_188] : memref<49x64xf32, #tpu.memory_space<vmem>>, vector<1x64xf32>
    %600 = vector.shape_cast %599 : vector<1x64xf32> to vector<64xf32>
    %601 = vector.shape_cast %600 : vector<64xf32> to vector<1x1x64xf32>
    %602 = vector.broadcast %601 : vector<1x1x64xf32> to vector<8x8x64xf32>
    %603 = arith.mulf %598, %602 : vector<8x8x64xf32>
    %604 = arith.addf %597, %603 : vector<8x8x64xf32>
    %c0_189 = arith.constant 0 : index
    %c7_190 = arith.constant 7 : index
    %c0_191 = arith.constant 0 : index
    %605 = vector.load %arg21[%c0_189, %c7_190, %c0_191] : memref<16x16x64xf32, #tpu.memory_space<vmem>>, vector<16x8x64xf32>
    %606 = vector.extract_strided_slice %605 {offsets = [1, 0, 0], sizes = [8, 8, 64], strides = [1, 1, 1]} : vector<16x8x64xf32> to vector<8x8x64xf32>
    %c6_192 = arith.constant 6 : index
    %c0_193 = arith.constant 0 : index
    %607 = vector.load %arg7[%c6_192, %c0_193] : memref<49x64xf32, #tpu.memory_space<vmem>>, vector<1x64xf32>
    %608 = vector.shape_cast %607 : vector<1x64xf32> to vector<64xf32>
    %609 = vector.shape_cast %608 : vector<64xf32> to vector<1x1x64xf32>
    %610 = vector.broadcast %609 : vector<1x1x64xf32> to vector<8x8x64xf32>
    %611 = arith.mulf %606, %610 : vector<8x8x64xf32>
    %612 = arith.addf %604, %611 : vector<8x8x64xf32>
    %613 = vector.extract_strided_slice %605 {offsets = [2, 0, 0], sizes = [8, 8, 64], strides = [1, 1, 1]} : vector<16x8x64xf32> to vector<8x8x64xf32>
    %c13_194 = arith.constant 13 : index
    %c0_195 = arith.constant 0 : index
    %614 = vector.load %arg7[%c13_194, %c0_195] : memref<49x64xf32, #tpu.memory_space<vmem>>, vector<1x64xf32>
    %615 = vector.shape_cast %614 : vector<1x64xf32> to vector<64xf32>
    %616 = vector.shape_cast %615 : vector<64xf32> to vector<1x1x64xf32>
    %617 = vector.broadcast %616 : vector<1x1x64xf32> to vector<8x8x64xf32>
    %618 = arith.mulf %613, %617 : vector<8x8x64xf32>
    %619 = arith.addf %612, %618 : vector<8x8x64xf32>
    %620 = vector.extract_strided_slice %605 {offsets = [3, 0, 0], sizes = [8, 8, 64], strides = [1, 1, 1]} : vector<16x8x64xf32> to vector<8x8x64xf32>
    %c20_196 = arith.constant 20 : index
    %c0_197 = arith.constant 0 : index
    %621 = vector.load %arg7[%c20_196, %c0_197] : memref<49x64xf32, #tpu.memory_space<vmem>>, vector<1x64xf32>
    %622 = vector.shape_cast %621 : vector<1x64xf32> to vector<64xf32>
    %623 = vector.shape_cast %622 : vector<64xf32> to vector<1x1x64xf32>
    %624 = vector.broadcast %623 : vector<1x1x64xf32> to vector<8x8x64xf32>
    %625 = arith.mulf %620, %624 : vector<8x8x64xf32>
    %626 = arith.addf %619, %625 : vector<8x8x64xf32>
    %627 = vector.extract_strided_slice %605 {offsets = [4, 0, 0], sizes = [8, 8, 64], strides = [1, 1, 1]} : vector<16x8x64xf32> to vector<8x8x64xf32>
    %c27 = arith.constant 27 : index
    %c0_198 = arith.constant 0 : index
    %628 = vector.load %arg7[%c27, %c0_198] : memref<49x64xf32, #tpu.memory_space<vmem>>, vector<1x64xf32>
    %629 = vector.shape_cast %628 : vector<1x64xf32> to vector<64xf32>
    %630 = vector.shape_cast %629 : vector<64xf32> to vector<1x1x64xf32>
    %631 = vector.broadcast %630 : vector<1x1x64xf32> to vector<8x8x64xf32>
    %632 = arith.mulf %627, %631 : vector<8x8x64xf32>
    %633 = arith.addf %626, %632 : vector<8x8x64xf32>
    %634 = vector.extract_strided_slice %605 {offsets = [5, 0, 0], sizes = [8, 8, 64], strides = [1, 1, 1]} : vector<16x8x64xf32> to vector<8x8x64xf32>
    %c34 = arith.constant 34 : index
    %c0_199 = arith.constant 0 : index
    %635 = vector.load %arg7[%c34, %c0_199] : memref<49x64xf32, #tpu.memory_space<vmem>>, vector<1x64xf32>
    %636 = vector.shape_cast %635 : vector<1x64xf32> to vector<64xf32>
    %637 = vector.shape_cast %636 : vector<64xf32> to vector<1x1x64xf32>
    %638 = vector.broadcast %637 : vector<1x1x64xf32> to vector<8x8x64xf32>
    %639 = arith.mulf %634, %638 : vector<8x8x64xf32>
    %640 = arith.addf %633, %639 : vector<8x8x64xf32>
    %641 = vector.extract_strided_slice %605 {offsets = [6, 0, 0], sizes = [8, 8, 64], strides = [1, 1, 1]} : vector<16x8x64xf32> to vector<8x8x64xf32>
    %c41 = arith.constant 41 : index
    %c0_200 = arith.constant 0 : index
    %642 = vector.load %arg7[%c41, %c0_200] : memref<49x64xf32, #tpu.memory_space<vmem>>, vector<1x64xf32>
    %643 = vector.shape_cast %642 : vector<1x64xf32> to vector<64xf32>
    %644 = vector.shape_cast %643 : vector<64xf32> to vector<1x1x64xf32>
    %645 = vector.broadcast %644 : vector<1x1x64xf32> to vector<8x8x64xf32>
    %646 = arith.mulf %641, %645 : vector<8x8x64xf32>
    %647 = arith.addf %640, %646 : vector<8x8x64xf32>
    %648 = vector.extract_strided_slice %605 {offsets = [7, 0, 0], sizes = [8, 8, 64], strides = [1, 1, 1]} : vector<16x8x64xf32> to vector<8x8x64xf32>
    %c48 = arith.constant 48 : index
    %c0_201 = arith.constant 0 : index
    %649 = vector.load %arg7[%c48, %c0_201] : memref<49x64xf32, #tpu.memory_space<vmem>>, vector<1x64xf32>
    %650 = vector.shape_cast %649 : vector<1x64xf32> to vector<64xf32>
    %651 = vector.shape_cast %650 : vector<64xf32> to vector<1x1x64xf32>
    %652 = vector.broadcast %651 : vector<1x1x64xf32> to vector<8x8x64xf32>
    %653 = arith.mulf %648, %652 : vector<8x8x64xf32>
    %654 = arith.addf %647, %653 : vector<8x8x64xf32>
    %c2_202 = arith.constant 2 : index
    %c0_203 = arith.constant 0 : index
    %655 = vector.load %arg9[%c2_202, %c0_203] : memref<4x64xf32, #tpu.memory_space<vmem>>, vector<1x64xf32>
    %656 = vector.shape_cast %655 : vector<1x64xf32> to vector<64xf32>
    %657 = vector.shape_cast %656 : vector<64xf32> to vector<1x1x64xf32>
    %658 = vector.broadcast %657 : vector<1x1x64xf32> to vector<8x8x64xf32>
    %659 = arith.addf %654, %658 : vector<8x8x64xf32>
    %660 = vector.shape_cast %659 : vector<8x8x64xf32> to vector<64x64xf32>
    %661 = arith.truncf %660 : vector<64x64xf32> to vector<64x64xbf16>
    %c2_204 = arith.constant 2 : index
    %c0_205 = arith.constant 0 : index
    %c0_206 = arith.constant 0 : index
    %662 = vector.load %arg10[%c2_204, %c0_205, %c0_206] : memref<4x64x16xbf16, #tpu.memory_space<vmem>>, vector<1x64x16xbf16>
    %663 = vector.shape_cast %662 : vector<1x64x16xbf16> to vector<64x16xbf16>
    %cst_207 = arith.constant dense<0.000000e+00> : vector<64x16xf32>
    %664 = tpu.matmul %661, %663, %cst_207 {dimension_numbers = #tpu.dot_dimension_numbers<[1], [0], [0], [1], [0, 0, 1, 1], [], []>} : vector<64x64xbf16>, vector<64x16xbf16>, vector<64x16xf32> -> vector<64x16xf32>
    %c2_208 = arith.constant 2 : index
    %c0_209 = arith.constant 0 : index
    %665 = vector.load %arg11[%c2_208, %c0_209] : memref<4x16xf32, #tpu.memory_space<vmem>>, vector<1x16xf32>
    %666 = vector.shape_cast %665 : vector<1x16xf32> to vector<16xf32>
    %667 = vector.shape_cast %666 : vector<16xf32> to vector<1x16xf32>
    %668 = vector.broadcast %667 : vector<1x16xf32> to vector<64x16xf32>
    %669 = arith.addf %664, %668 : vector<64x16xf32>
    %cst_210 = arith.constant dense<0.000000e+00> : vector<16xf32>
    %670 = vector.multi_reduction <add>, %669, %cst_210 [0] : vector<64x16xf32> to vector<16xf32>
    %671 = vector.shape_cast %670 : vector<16xf32> to vector<1x16xf32>
    %cst_211 = arith.constant 1.562500e-02 : f32
    %672 = vector.broadcast %cst_211 : f32 to vector<1x16xf32>
    %673 = arith.mulf %671, %672 : vector<1x16xf32>
    %cst_212 = arith.constant 0.000000e+00 : f32
    %674 = vector.broadcast %cst_212 : f32 to vector<8x8x64xf32>
    %c0_213 = arith.constant 0 : index
    %c0_214 = arith.constant 0 : index
    %c0_215 = arith.constant 0 : index
    %675 = vector.load %arg21[%c0_213, %c0_214, %c0_215] : memref<16x16x64xf32, #tpu.memory_space<vmem>>, vector<16x8x64xf32>
    %676 = vector.extract_strided_slice %675 {offsets = [0, 0, 0], sizes = [8, 8, 64], strides = [1, 1, 1]} : vector<16x8x64xf32> to vector<8x8x64xf32>
    %c0_216 = arith.constant 0 : index
    %c0_217 = arith.constant 0 : index
    %677 = vector.load %arg8[%c0_216, %c0_217] : memref<81x64xf32, #tpu.memory_space<vmem>>, vector<1x64xf32>
    %678 = vector.shape_cast %677 : vector<1x64xf32> to vector<64xf32>
    %679 = vector.shape_cast %678 : vector<64xf32> to vector<1x1x64xf32>
    %680 = vector.broadcast %679 : vector<1x1x64xf32> to vector<8x8x64xf32>
    %681 = arith.mulf %676, %680 : vector<8x8x64xf32>
    %682 = arith.addf %674, %681 : vector<8x8x64xf32>
    %683 = vector.extract_strided_slice %675 {offsets = [1, 0, 0], sizes = [8, 8, 64], strides = [1, 1, 1]} : vector<16x8x64xf32> to vector<8x8x64xf32>
    %c9_218 = arith.constant 9 : index
    %c0_219 = arith.constant 0 : index
    %684 = vector.load %arg8[%c9_218, %c0_219] : memref<81x64xf32, #tpu.memory_space<vmem>>, vector<1x64xf32>
    %685 = vector.shape_cast %684 : vector<1x64xf32> to vector<64xf32>
    %686 = vector.shape_cast %685 : vector<64xf32> to vector<1x1x64xf32>
    %687 = vector.broadcast %686 : vector<1x1x64xf32> to vector<8x8x64xf32>
    %688 = arith.mulf %683, %687 : vector<8x8x64xf32>
    %689 = arith.addf %682, %688 : vector<8x8x64xf32>
    %690 = vector.extract_strided_slice %675 {offsets = [2, 0, 0], sizes = [8, 8, 64], strides = [1, 1, 1]} : vector<16x8x64xf32> to vector<8x8x64xf32>
    %c18_220 = arith.constant 18 : index
    %c0_221 = arith.constant 0 : index
    %691 = vector.load %arg8[%c18_220, %c0_221] : memref<81x64xf32, #tpu.memory_space<vmem>>, vector<1x64xf32>
    %692 = vector.shape_cast %691 : vector<1x64xf32> to vector<64xf32>
    %693 = vector.shape_cast %692 : vector<64xf32> to vector<1x1x64xf32>
    %694 = vector.broadcast %693 : vector<1x1x64xf32> to vector<8x8x64xf32>
    %695 = arith.mulf %690, %694 : vector<8x8x64xf32>
    %696 = arith.addf %689, %695 : vector<8x8x64xf32>
    %697 = vector.extract_strided_slice %675 {offsets = [3, 0, 0], sizes = [8, 8, 64], strides = [1, 1, 1]} : vector<16x8x64xf32> to vector<8x8x64xf32>
    %c27_222 = arith.constant 27 : index
    %c0_223 = arith.constant 0 : index
    %698 = vector.load %arg8[%c27_222, %c0_223] : memref<81x64xf32, #tpu.memory_space<vmem>>, vector<1x64xf32>
    %699 = vector.shape_cast %698 : vector<1x64xf32> to vector<64xf32>
    %700 = vector.shape_cast %699 : vector<64xf32> to vector<1x1x64xf32>
    %701 = vector.broadcast %700 : vector<1x1x64xf32> to vector<8x8x64xf32>
    %702 = arith.mulf %697, %701 : vector<8x8x64xf32>
    %703 = arith.addf %696, %702 : vector<8x8x64xf32>
    %704 = vector.extract_strided_slice %675 {offsets = [4, 0, 0], sizes = [8, 8, 64], strides = [1, 1, 1]} : vector<16x8x64xf32> to vector<8x8x64xf32>
    %c36_224 = arith.constant 36 : index
    %c0_225 = arith.constant 0 : index
    %705 = vector.load %arg8[%c36_224, %c0_225] : memref<81x64xf32, #tpu.memory_space<vmem>>, vector<1x64xf32>
    %706 = vector.shape_cast %705 : vector<1x64xf32> to vector<64xf32>
    %707 = vector.shape_cast %706 : vector<64xf32> to vector<1x1x64xf32>
    %708 = vector.broadcast %707 : vector<1x1x64xf32> to vector<8x8x64xf32>
    %709 = arith.mulf %704, %708 : vector<8x8x64xf32>
    %710 = arith.addf %703, %709 : vector<8x8x64xf32>
    %711 = vector.extract_strided_slice %675 {offsets = [5, 0, 0], sizes = [8, 8, 64], strides = [1, 1, 1]} : vector<16x8x64xf32> to vector<8x8x64xf32>
    %c45_226 = arith.constant 45 : index
    %c0_227 = arith.constant 0 : index
    %712 = vector.load %arg8[%c45_226, %c0_227] : memref<81x64xf32, #tpu.memory_space<vmem>>, vector<1x64xf32>
    %713 = vector.shape_cast %712 : vector<1x64xf32> to vector<64xf32>
    %714 = vector.shape_cast %713 : vector<64xf32> to vector<1x1x64xf32>
    %715 = vector.broadcast %714 : vector<1x1x64xf32> to vector<8x8x64xf32>
    %716 = arith.mulf %711, %715 : vector<8x8x64xf32>
    %717 = arith.addf %710, %716 : vector<8x8x64xf32>
    %718 = vector.extract_strided_slice %675 {offsets = [6, 0, 0], sizes = [8, 8, 64], strides = [1, 1, 1]} : vector<16x8x64xf32> to vector<8x8x64xf32>
    %c54 = arith.constant 54 : index
    %c0_228 = arith.constant 0 : index
    %719 = vector.load %arg8[%c54, %c0_228] : memref<81x64xf32, #tpu.memory_space<vmem>>, vector<1x64xf32>
    %720 = vector.shape_cast %719 : vector<1x64xf32> to vector<64xf32>
    %721 = vector.shape_cast %720 : vector<64xf32> to vector<1x1x64xf32>
    %722 = vector.broadcast %721 : vector<1x1x64xf32> to vector<8x8x64xf32>
    %723 = arith.mulf %718, %722 : vector<8x8x64xf32>
    %724 = arith.addf %717, %723 : vector<8x8x64xf32>
    %725 = vector.extract_strided_slice %675 {offsets = [7, 0, 0], sizes = [8, 8, 64], strides = [1, 1, 1]} : vector<16x8x64xf32> to vector<8x8x64xf32>
    %c63 = arith.constant 63 : index
    %c0_229 = arith.constant 0 : index
    %726 = vector.load %arg8[%c63, %c0_229] : memref<81x64xf32, #tpu.memory_space<vmem>>, vector<1x64xf32>
    %727 = vector.shape_cast %726 : vector<1x64xf32> to vector<64xf32>
    %728 = vector.shape_cast %727 : vector<64xf32> to vector<1x1x64xf32>
    %729 = vector.broadcast %728 : vector<1x1x64xf32> to vector<8x8x64xf32>
    %730 = arith.mulf %725, %729 : vector<8x8x64xf32>
    %731 = arith.addf %724, %730 : vector<8x8x64xf32>
    %732 = vector.extract_strided_slice %675 {offsets = [8, 0, 0], sizes = [8, 8, 64], strides = [1, 1, 1]} : vector<16x8x64xf32> to vector<8x8x64xf32>
    %c72 = arith.constant 72 : index
    %c0_230 = arith.constant 0 : index
    %733 = vector.load %arg8[%c72, %c0_230] : memref<81x64xf32, #tpu.memory_space<vmem>>, vector<1x64xf32>
    %734 = vector.shape_cast %733 : vector<1x64xf32> to vector<64xf32>
    %735 = vector.shape_cast %734 : vector<64xf32> to vector<1x1x64xf32>
    %736 = vector.broadcast %735 : vector<1x1x64xf32> to vector<8x8x64xf32>
    %737 = arith.mulf %732, %736 : vector<8x8x64xf32>
    %738 = arith.addf %731, %737 : vector<8x8x64xf32>
    %c0_231 = arith.constant 0 : index
    %c1_232 = arith.constant 1 : index
    %c0_233 = arith.constant 0 : index
    %739 = vector.load %arg21[%c0_231, %c1_232, %c0_233] : memref<16x16x64xf32, #tpu.memory_space<vmem>>, vector<16x8x64xf32>
    %740 = vector.extract_strided_slice %739 {offsets = [0, 0, 0], sizes = [8, 8, 64], strides = [1, 1, 1]} : vector<16x8x64xf32> to vector<8x8x64xf32>
    %c1_234 = arith.constant 1 : index
    %c0_235 = arith.constant 0 : index
    %741 = vector.load %arg8[%c1_234, %c0_235] : memref<81x64xf32, #tpu.memory_space<vmem>>, vector<1x64xf32>
    %742 = vector.shape_cast %741 : vector<1x64xf32> to vector<64xf32>
    %743 = vector.shape_cast %742 : vector<64xf32> to vector<1x1x64xf32>
    %744 = vector.broadcast %743 : vector<1x1x64xf32> to vector<8x8x64xf32>
    %745 = arith.mulf %740, %744 : vector<8x8x64xf32>
    %746 = arith.addf %738, %745 : vector<8x8x64xf32>
    %747 = vector.extract_strided_slice %739 {offsets = [1, 0, 0], sizes = [8, 8, 64], strides = [1, 1, 1]} : vector<16x8x64xf32> to vector<8x8x64xf32>
    %c10_236 = arith.constant 10 : index
    %c0_237 = arith.constant 0 : index
    %748 = vector.load %arg8[%c10_236, %c0_237] : memref<81x64xf32, #tpu.memory_space<vmem>>, vector<1x64xf32>
    %749 = vector.shape_cast %748 : vector<1x64xf32> to vector<64xf32>
    %750 = vector.shape_cast %749 : vector<64xf32> to vector<1x1x64xf32>
    %751 = vector.broadcast %750 : vector<1x1x64xf32> to vector<8x8x64xf32>
    %752 = arith.mulf %747, %751 : vector<8x8x64xf32>
    %753 = arith.addf %746, %752 : vector<8x8x64xf32>
    %754 = vector.extract_strided_slice %739 {offsets = [2, 0, 0], sizes = [8, 8, 64], strides = [1, 1, 1]} : vector<16x8x64xf32> to vector<8x8x64xf32>
    %c19_238 = arith.constant 19 : index
    %c0_239 = arith.constant 0 : index
    %755 = vector.load %arg8[%c19_238, %c0_239] : memref<81x64xf32, #tpu.memory_space<vmem>>, vector<1x64xf32>
    %756 = vector.shape_cast %755 : vector<1x64xf32> to vector<64xf32>
    %757 = vector.shape_cast %756 : vector<64xf32> to vector<1x1x64xf32>
    %758 = vector.broadcast %757 : vector<1x1x64xf32> to vector<8x8x64xf32>
    %759 = arith.mulf %754, %758 : vector<8x8x64xf32>
    %760 = arith.addf %753, %759 : vector<8x8x64xf32>
    %761 = vector.extract_strided_slice %739 {offsets = [3, 0, 0], sizes = [8, 8, 64], strides = [1, 1, 1]} : vector<16x8x64xf32> to vector<8x8x64xf32>
    %c28_240 = arith.constant 28 : index
    %c0_241 = arith.constant 0 : index
    %762 = vector.load %arg8[%c28_240, %c0_241] : memref<81x64xf32, #tpu.memory_space<vmem>>, vector<1x64xf32>
    %763 = vector.shape_cast %762 : vector<1x64xf32> to vector<64xf32>
    %764 = vector.shape_cast %763 : vector<64xf32> to vector<1x1x64xf32>
    %765 = vector.broadcast %764 : vector<1x1x64xf32> to vector<8x8x64xf32>
    %766 = arith.mulf %761, %765 : vector<8x8x64xf32>
    %767 = arith.addf %760, %766 : vector<8x8x64xf32>
    %768 = vector.extract_strided_slice %739 {offsets = [4, 0, 0], sizes = [8, 8, 64], strides = [1, 1, 1]} : vector<16x8x64xf32> to vector<8x8x64xf32>
    %c37_242 = arith.constant 37 : index
    %c0_243 = arith.constant 0 : index
    %769 = vector.load %arg8[%c37_242, %c0_243] : memref<81x64xf32, #tpu.memory_space<vmem>>, vector<1x64xf32>
    %770 = vector.shape_cast %769 : vector<1x64xf32> to vector<64xf32>
    %771 = vector.shape_cast %770 : vector<64xf32> to vector<1x1x64xf32>
    %772 = vector.broadcast %771 : vector<1x1x64xf32> to vector<8x8x64xf32>
    %773 = arith.mulf %768, %772 : vector<8x8x64xf32>
    %774 = arith.addf %767, %773 : vector<8x8x64xf32>
    %775 = vector.extract_strided_slice %739 {offsets = [5, 0, 0], sizes = [8, 8, 64], strides = [1, 1, 1]} : vector<16x8x64xf32> to vector<8x8x64xf32>
    %c46_244 = arith.constant 46 : index
    %c0_245 = arith.constant 0 : index
    %776 = vector.load %arg8[%c46_244, %c0_245] : memref<81x64xf32, #tpu.memory_space<vmem>>, vector<1x64xf32>
    %777 = vector.shape_cast %776 : vector<1x64xf32> to vector<64xf32>
    %778 = vector.shape_cast %777 : vector<64xf32> to vector<1x1x64xf32>
    %779 = vector.broadcast %778 : vector<1x1x64xf32> to vector<8x8x64xf32>
    %780 = arith.mulf %775, %779 : vector<8x8x64xf32>
    %781 = arith.addf %774, %780 : vector<8x8x64xf32>
    %782 = vector.extract_strided_slice %739 {offsets = [6, 0, 0], sizes = [8, 8, 64], strides = [1, 1, 1]} : vector<16x8x64xf32> to vector<8x8x64xf32>
    %c55 = arith.constant 55 : index
    %c0_246 = arith.constant 0 : index
    %783 = vector.load %arg8[%c55, %c0_246] : memref<81x64xf32, #tpu.memory_space<vmem>>, vector<1x64xf32>
    %784 = vector.shape_cast %783 : vector<1x64xf32> to vector<64xf32>
    %785 = vector.shape_cast %784 : vector<64xf32> to vector<1x1x64xf32>
    %786 = vector.broadcast %785 : vector<1x1x64xf32> to vector<8x8x64xf32>
    %787 = arith.mulf %782, %786 : vector<8x8x64xf32>
    %788 = arith.addf %781, %787 : vector<8x8x64xf32>
    %789 = vector.extract_strided_slice %739 {offsets = [7, 0, 0], sizes = [8, 8, 64], strides = [1, 1, 1]} : vector<16x8x64xf32> to vector<8x8x64xf32>
    %c64 = arith.constant 64 : index
    %c0_247 = arith.constant 0 : index
    %790 = vector.load %arg8[%c64, %c0_247] : memref<81x64xf32, #tpu.memory_space<vmem>>, vector<1x64xf32>
    %791 = vector.shape_cast %790 : vector<1x64xf32> to vector<64xf32>
    %792 = vector.shape_cast %791 : vector<64xf32> to vector<1x1x64xf32>
    %793 = vector.broadcast %792 : vector<1x1x64xf32> to vector<8x8x64xf32>
    %794 = arith.mulf %789, %793 : vector<8x8x64xf32>
    %795 = arith.addf %788, %794 : vector<8x8x64xf32>
    %796 = vector.extract_strided_slice %739 {offsets = [8, 0, 0], sizes = [8, 8, 64], strides = [1, 1, 1]} : vector<16x8x64xf32> to vector<8x8x64xf32>
    %c73 = arith.constant 73 : index
    %c0_248 = arith.constant 0 : index
    %797 = vector.load %arg8[%c73, %c0_248] : memref<81x64xf32, #tpu.memory_space<vmem>>, vector<1x64xf32>
    %798 = vector.shape_cast %797 : vector<1x64xf32> to vector<64xf32>
    %799 = vector.shape_cast %798 : vector<64xf32> to vector<1x1x64xf32>
    %800 = vector.broadcast %799 : vector<1x1x64xf32> to vector<8x8x64xf32>
    %801 = arith.mulf %796, %800 : vector<8x8x64xf32>
    %802 = arith.addf %795, %801 : vector<8x8x64xf32>
    %c0_249 = arith.constant 0 : index
    %c2_250 = arith.constant 2 : index
    %c0_251 = arith.constant 0 : index
    %803 = vector.load %arg21[%c0_249, %c2_250, %c0_251] : memref<16x16x64xf32, #tpu.memory_space<vmem>>, vector<16x8x64xf32>
    %804 = vector.extract_strided_slice %803 {offsets = [0, 0, 0], sizes = [8, 8, 64], strides = [1, 1, 1]} : vector<16x8x64xf32> to vector<8x8x64xf32>
    %c2_252 = arith.constant 2 : index
    %c0_253 = arith.constant 0 : index
    %805 = vector.load %arg8[%c2_252, %c0_253] : memref<81x64xf32, #tpu.memory_space<vmem>>, vector<1x64xf32>
    %806 = vector.shape_cast %805 : vector<1x64xf32> to vector<64xf32>
    %807 = vector.shape_cast %806 : vector<64xf32> to vector<1x1x64xf32>
    %808 = vector.broadcast %807 : vector<1x1x64xf32> to vector<8x8x64xf32>
    %809 = arith.mulf %804, %808 : vector<8x8x64xf32>
    %810 = arith.addf %802, %809 : vector<8x8x64xf32>
    %811 = vector.extract_strided_slice %803 {offsets = [1, 0, 0], sizes = [8, 8, 64], strides = [1, 1, 1]} : vector<16x8x64xf32> to vector<8x8x64xf32>
    %c11_254 = arith.constant 11 : index
    %c0_255 = arith.constant 0 : index
    %812 = vector.load %arg8[%c11_254, %c0_255] : memref<81x64xf32, #tpu.memory_space<vmem>>, vector<1x64xf32>
    %813 = vector.shape_cast %812 : vector<1x64xf32> to vector<64xf32>
    %814 = vector.shape_cast %813 : vector<64xf32> to vector<1x1x64xf32>
    %815 = vector.broadcast %814 : vector<1x1x64xf32> to vector<8x8x64xf32>
    %816 = arith.mulf %811, %815 : vector<8x8x64xf32>
    %817 = arith.addf %810, %816 : vector<8x8x64xf32>
    %818 = vector.extract_strided_slice %803 {offsets = [2, 0, 0], sizes = [8, 8, 64], strides = [1, 1, 1]} : vector<16x8x64xf32> to vector<8x8x64xf32>
    %c20_256 = arith.constant 20 : index
    %c0_257 = arith.constant 0 : index
    %819 = vector.load %arg8[%c20_256, %c0_257] : memref<81x64xf32, #tpu.memory_space<vmem>>, vector<1x64xf32>
    %820 = vector.shape_cast %819 : vector<1x64xf32> to vector<64xf32>
    %821 = vector.shape_cast %820 : vector<64xf32> to vector<1x1x64xf32>
    %822 = vector.broadcast %821 : vector<1x1x64xf32> to vector<8x8x64xf32>
    %823 = arith.mulf %818, %822 : vector<8x8x64xf32>
    %824 = arith.addf %817, %823 : vector<8x8x64xf32>
    %825 = vector.extract_strided_slice %803 {offsets = [3, 0, 0], sizes = [8, 8, 64], strides = [1, 1, 1]} : vector<16x8x64xf32> to vector<8x8x64xf32>
    %c29_258 = arith.constant 29 : index
    %c0_259 = arith.constant 0 : index
    %826 = vector.load %arg8[%c29_258, %c0_259] : memref<81x64xf32, #tpu.memory_space<vmem>>, vector<1x64xf32>
    %827 = vector.shape_cast %826 : vector<1x64xf32> to vector<64xf32>
    %828 = vector.shape_cast %827 : vector<64xf32> to vector<1x1x64xf32>
    %829 = vector.broadcast %828 : vector<1x1x64xf32> to vector<8x8x64xf32>
    %830 = arith.mulf %825, %829 : vector<8x8x64xf32>
    %831 = arith.addf %824, %830 : vector<8x8x64xf32>
    %832 = vector.extract_strided_slice %803 {offsets = [4, 0, 0], sizes = [8, 8, 64], strides = [1, 1, 1]} : vector<16x8x64xf32> to vector<8x8x64xf32>
    %c38_260 = arith.constant 38 : index
    %c0_261 = arith.constant 0 : index
    %833 = vector.load %arg8[%c38_260, %c0_261] : memref<81x64xf32, #tpu.memory_space<vmem>>, vector<1x64xf32>
    %834 = vector.shape_cast %833 : vector<1x64xf32> to vector<64xf32>
    %835 = vector.shape_cast %834 : vector<64xf32> to vector<1x1x64xf32>
    %836 = vector.broadcast %835 : vector<1x1x64xf32> to vector<8x8x64xf32>
    %837 = arith.mulf %832, %836 : vector<8x8x64xf32>
    %838 = arith.addf %831, %837 : vector<8x8x64xf32>
    %839 = vector.extract_strided_slice %803 {offsets = [5, 0, 0], sizes = [8, 8, 64], strides = [1, 1, 1]} : vector<16x8x64xf32> to vector<8x8x64xf32>
    %c47_262 = arith.constant 47 : index
    %c0_263 = arith.constant 0 : index
    %840 = vector.load %arg8[%c47_262, %c0_263] : memref<81x64xf32, #tpu.memory_space<vmem>>, vector<1x64xf32>
    %841 = vector.shape_cast %840 : vector<1x64xf32> to vector<64xf32>
    %842 = vector.shape_cast %841 : vector<64xf32> to vector<1x1x64xf32>
    %843 = vector.broadcast %842 : vector<1x1x64xf32> to vector<8x8x64xf32>
    %844 = arith.mulf %839, %843 : vector<8x8x64xf32>
    %845 = arith.addf %838, %844 : vector<8x8x64xf32>
    %846 = vector.extract_strided_slice %803 {offsets = [6, 0, 0], sizes = [8, 8, 64], strides = [1, 1, 1]} : vector<16x8x64xf32> to vector<8x8x64xf32>
    %c56 = arith.constant 56 : index
    %c0_264 = arith.constant 0 : index
    %847 = vector.load %arg8[%c56, %c0_264] : memref<81x64xf32, #tpu.memory_space<vmem>>, vector<1x64xf32>
    %848 = vector.shape_cast %847 : vector<1x64xf32> to vector<64xf32>
    %849 = vector.shape_cast %848 : vector<64xf32> to vector<1x1x64xf32>
    %850 = vector.broadcast %849 : vector<1x1x64xf32> to vector<8x8x64xf32>
    %851 = arith.mulf %846, %850 : vector<8x8x64xf32>
    %852 = arith.addf %845, %851 : vector<8x8x64xf32>
    %853 = vector.extract_strided_slice %803 {offsets = [7, 0, 0], sizes = [8, 8, 64], strides = [1, 1, 1]} : vector<16x8x64xf32> to vector<8x8x64xf32>
    %c65 = arith.constant 65 : index
    %c0_265 = arith.constant 0 : index
    %854 = vector.load %arg8[%c65, %c0_265] : memref<81x64xf32, #tpu.memory_space<vmem>>, vector<1x64xf32>
    %855 = vector.shape_cast %854 : vector<1x64xf32> to vector<64xf32>
    %856 = vector.shape_cast %855 : vector<64xf32> to vector<1x1x64xf32>
    %857 = vector.broadcast %856 : vector<1x1x64xf32> to vector<8x8x64xf32>
    %858 = arith.mulf %853, %857 : vector<8x8x64xf32>
    %859 = arith.addf %852, %858 : vector<8x8x64xf32>
    %860 = vector.extract_strided_slice %803 {offsets = [8, 0, 0], sizes = [8, 8, 64], strides = [1, 1, 1]} : vector<16x8x64xf32> to vector<8x8x64xf32>
    %c74 = arith.constant 74 : index
    %c0_266 = arith.constant 0 : index
    %861 = vector.load %arg8[%c74, %c0_266] : memref<81x64xf32, #tpu.memory_space<vmem>>, vector<1x64xf32>
    %862 = vector.shape_cast %861 : vector<1x64xf32> to vector<64xf32>
    %863 = vector.shape_cast %862 : vector<64xf32> to vector<1x1x64xf32>
    %864 = vector.broadcast %863 : vector<1x1x64xf32> to vector<8x8x64xf32>
    %865 = arith.mulf %860, %864 : vector<8x8x64xf32>
    %866 = arith.addf %859, %865 : vector<8x8x64xf32>
    %c0_267 = arith.constant 0 : index
    %c3_268 = arith.constant 3 : index
    %c0_269 = arith.constant 0 : index
    %867 = vector.load %arg21[%c0_267, %c3_268, %c0_269] : memref<16x16x64xf32, #tpu.memory_space<vmem>>, vector<16x8x64xf32>
    %868 = vector.extract_strided_slice %867 {offsets = [0, 0, 0], sizes = [8, 8, 64], strides = [1, 1, 1]} : vector<16x8x64xf32> to vector<8x8x64xf32>
    %c3_270 = arith.constant 3 : index
    %c0_271 = arith.constant 0 : index
    %869 = vector.load %arg8[%c3_270, %c0_271] : memref<81x64xf32, #tpu.memory_space<vmem>>, vector<1x64xf32>
    %870 = vector.shape_cast %869 : vector<1x64xf32> to vector<64xf32>
    %871 = vector.shape_cast %870 : vector<64xf32> to vector<1x1x64xf32>
    %872 = vector.broadcast %871 : vector<1x1x64xf32> to vector<8x8x64xf32>
    %873 = arith.mulf %868, %872 : vector<8x8x64xf32>
    %874 = arith.addf %866, %873 : vector<8x8x64xf32>
    %875 = vector.extract_strided_slice %867 {offsets = [1, 0, 0], sizes = [8, 8, 64], strides = [1, 1, 1]} : vector<16x8x64xf32> to vector<8x8x64xf32>
    %c12_272 = arith.constant 12 : index
    %c0_273 = arith.constant 0 : index
    %876 = vector.load %arg8[%c12_272, %c0_273] : memref<81x64xf32, #tpu.memory_space<vmem>>, vector<1x64xf32>
    %877 = vector.shape_cast %876 : vector<1x64xf32> to vector<64xf32>
    %878 = vector.shape_cast %877 : vector<64xf32> to vector<1x1x64xf32>
    %879 = vector.broadcast %878 : vector<1x1x64xf32> to vector<8x8x64xf32>
    %880 = arith.mulf %875, %879 : vector<8x8x64xf32>
    %881 = arith.addf %874, %880 : vector<8x8x64xf32>
    %882 = vector.extract_strided_slice %867 {offsets = [2, 0, 0], sizes = [8, 8, 64], strides = [1, 1, 1]} : vector<16x8x64xf32> to vector<8x8x64xf32>
    %c21_274 = arith.constant 21 : index
    %c0_275 = arith.constant 0 : index
    %883 = vector.load %arg8[%c21_274, %c0_275] : memref<81x64xf32, #tpu.memory_space<vmem>>, vector<1x64xf32>
    %884 = vector.shape_cast %883 : vector<1x64xf32> to vector<64xf32>
    %885 = vector.shape_cast %884 : vector<64xf32> to vector<1x1x64xf32>
    %886 = vector.broadcast %885 : vector<1x1x64xf32> to vector<8x8x64xf32>
    %887 = arith.mulf %882, %886 : vector<8x8x64xf32>
    %888 = arith.addf %881, %887 : vector<8x8x64xf32>
    %889 = vector.extract_strided_slice %867 {offsets = [3, 0, 0], sizes = [8, 8, 64], strides = [1, 1, 1]} : vector<16x8x64xf32> to vector<8x8x64xf32>
    %c30_276 = arith.constant 30 : index
    %c0_277 = arith.constant 0 : index
    %890 = vector.load %arg8[%c30_276, %c0_277] : memref<81x64xf32, #tpu.memory_space<vmem>>, vector<1x64xf32>
    %891 = vector.shape_cast %890 : vector<1x64xf32> to vector<64xf32>
    %892 = vector.shape_cast %891 : vector<64xf32> to vector<1x1x64xf32>
    %893 = vector.broadcast %892 : vector<1x1x64xf32> to vector<8x8x64xf32>
    %894 = arith.mulf %889, %893 : vector<8x8x64xf32>
    %895 = arith.addf %888, %894 : vector<8x8x64xf32>
    %896 = vector.extract_strided_slice %867 {offsets = [4, 0, 0], sizes = [8, 8, 64], strides = [1, 1, 1]} : vector<16x8x64xf32> to vector<8x8x64xf32>
    %c39_278 = arith.constant 39 : index
    %c0_279 = arith.constant 0 : index
    %897 = vector.load %arg8[%c39_278, %c0_279] : memref<81x64xf32, #tpu.memory_space<vmem>>, vector<1x64xf32>
    %898 = vector.shape_cast %897 : vector<1x64xf32> to vector<64xf32>
    %899 = vector.shape_cast %898 : vector<64xf32> to vector<1x1x64xf32>
    %900 = vector.broadcast %899 : vector<1x1x64xf32> to vector<8x8x64xf32>
    %901 = arith.mulf %896, %900 : vector<8x8x64xf32>
    %902 = arith.addf %895, %901 : vector<8x8x64xf32>
    %903 = vector.extract_strided_slice %867 {offsets = [5, 0, 0], sizes = [8, 8, 64], strides = [1, 1, 1]} : vector<16x8x64xf32> to vector<8x8x64xf32>
    %c48_280 = arith.constant 48 : index
    %c0_281 = arith.constant 0 : index
    %904 = vector.load %arg8[%c48_280, %c0_281] : memref<81x64xf32, #tpu.memory_space<vmem>>, vector<1x64xf32>
    %905 = vector.shape_cast %904 : vector<1x64xf32> to vector<64xf32>
    %906 = vector.shape_cast %905 : vector<64xf32> to vector<1x1x64xf32>
    %907 = vector.broadcast %906 : vector<1x1x64xf32> to vector<8x8x64xf32>
    %908 = arith.mulf %903, %907 : vector<8x8x64xf32>
    %909 = arith.addf %902, %908 : vector<8x8x64xf32>
    %910 = vector.extract_strided_slice %867 {offsets = [6, 0, 0], sizes = [8, 8, 64], strides = [1, 1, 1]} : vector<16x8x64xf32> to vector<8x8x64xf32>
    %c57 = arith.constant 57 : index
    %c0_282 = arith.constant 0 : index
    %911 = vector.load %arg8[%c57, %c0_282] : memref<81x64xf32, #tpu.memory_space<vmem>>, vector<1x64xf32>
    %912 = vector.shape_cast %911 : vector<1x64xf32> to vector<64xf32>
    %913 = vector.shape_cast %912 : vector<64xf32> to vector<1x1x64xf32>
    %914 = vector.broadcast %913 : vector<1x1x64xf32> to vector<8x8x64xf32>
    %915 = arith.mulf %910, %914 : vector<8x8x64xf32>
    %916 = arith.addf %909, %915 : vector<8x8x64xf32>
    %917 = vector.extract_strided_slice %867 {offsets = [7, 0, 0], sizes = [8, 8, 64], strides = [1, 1, 1]} : vector<16x8x64xf32> to vector<8x8x64xf32>
    %c66 = arith.constant 66 : index
    %c0_283 = arith.constant 0 : index
    %918 = vector.load %arg8[%c66, %c0_283] : memref<81x64xf32, #tpu.memory_space<vmem>>, vector<1x64xf32>
    %919 = vector.shape_cast %918 : vector<1x64xf32> to vector<64xf32>
    %920 = vector.shape_cast %919 : vector<64xf32> to vector<1x1x64xf32>
    %921 = vector.broadcast %920 : vector<1x1x64xf32> to vector<8x8x64xf32>
    %922 = arith.mulf %917, %921 : vector<8x8x64xf32>
    %923 = arith.addf %916, %922 : vector<8x8x64xf32>
    %924 = vector.extract_strided_slice %867 {offsets = [8, 0, 0], sizes = [8, 8, 64], strides = [1, 1, 1]} : vector<16x8x64xf32> to vector<8x8x64xf32>
    %c75 = arith.constant 75 : index
    %c0_284 = arith.constant 0 : index
    %925 = vector.load %arg8[%c75, %c0_284] : memref<81x64xf32, #tpu.memory_space<vmem>>, vector<1x64xf32>
    %926 = vector.shape_cast %925 : vector<1x64xf32> to vector<64xf32>
    %927 = vector.shape_cast %926 : vector<64xf32> to vector<1x1x64xf32>
    %928 = vector.broadcast %927 : vector<1x1x64xf32> to vector<8x8x64xf32>
    %929 = arith.mulf %924, %928 : vector<8x8x64xf32>
    %930 = arith.addf %923, %929 : vector<8x8x64xf32>
    %c0_285 = arith.constant 0 : index
    %c4_286 = arith.constant 4 : index
    %c0_287 = arith.constant 0 : index
    %931 = vector.load %arg21[%c0_285, %c4_286, %c0_287] : memref<16x16x64xf32, #tpu.memory_space<vmem>>, vector<16x8x64xf32>
    %932 = vector.extract_strided_slice %931 {offsets = [0, 0, 0], sizes = [8, 8, 64], strides = [1, 1, 1]} : vector<16x8x64xf32> to vector<8x8x64xf32>
    %c4_288 = arith.constant 4 : index
    %c0_289 = arith.constant 0 : index
    %933 = vector.load %arg8[%c4_288, %c0_289] : memref<81x64xf32, #tpu.memory_space<vmem>>, vector<1x64xf32>
    %934 = vector.shape_cast %933 : vector<1x64xf32> to vector<64xf32>
    %935 = vector.shape_cast %934 : vector<64xf32> to vector<1x1x64xf32>
    %936 = vector.broadcast %935 : vector<1x1x64xf32> to vector<8x8x64xf32>
    %937 = arith.mulf %932, %936 : vector<8x8x64xf32>
    %938 = arith.addf %930, %937 : vector<8x8x64xf32>
    %939 = vector.extract_strided_slice %931 {offsets = [1, 0, 0], sizes = [8, 8, 64], strides = [1, 1, 1]} : vector<16x8x64xf32> to vector<8x8x64xf32>
    %c13_290 = arith.constant 13 : index
    %c0_291 = arith.constant 0 : index
    %940 = vector.load %arg8[%c13_290, %c0_291] : memref<81x64xf32, #tpu.memory_space<vmem>>, vector<1x64xf32>
    %941 = vector.shape_cast %940 : vector<1x64xf32> to vector<64xf32>
    %942 = vector.shape_cast %941 : vector<64xf32> to vector<1x1x64xf32>
    %943 = vector.broadcast %942 : vector<1x1x64xf32> to vector<8x8x64xf32>
    %944 = arith.mulf %939, %943 : vector<8x8x64xf32>
    %945 = arith.addf %938, %944 : vector<8x8x64xf32>
    %946 = vector.extract_strided_slice %931 {offsets = [2, 0, 0], sizes = [8, 8, 64], strides = [1, 1, 1]} : vector<16x8x64xf32> to vector<8x8x64xf32>
    %c22_292 = arith.constant 22 : index
    %c0_293 = arith.constant 0 : index
    %947 = vector.load %arg8[%c22_292, %c0_293] : memref<81x64xf32, #tpu.memory_space<vmem>>, vector<1x64xf32>
    %948 = vector.shape_cast %947 : vector<1x64xf32> to vector<64xf32>
    %949 = vector.shape_cast %948 : vector<64xf32> to vector<1x1x64xf32>
    %950 = vector.broadcast %949 : vector<1x1x64xf32> to vector<8x8x64xf32>
    %951 = arith.mulf %946, %950 : vector<8x8x64xf32>
    %952 = arith.addf %945, %951 : vector<8x8x64xf32>
    %953 = vector.extract_strided_slice %931 {offsets = [3, 0, 0], sizes = [8, 8, 64], strides = [1, 1, 1]} : vector<16x8x64xf32> to vector<8x8x64xf32>
    %c31_294 = arith.constant 31 : index
    %c0_295 = arith.constant 0 : index
    %954 = vector.load %arg8[%c31_294, %c0_295] : memref<81x64xf32, #tpu.memory_space<vmem>>, vector<1x64xf32>
    %955 = vector.shape_cast %954 : vector<1x64xf32> to vector<64xf32>
    %956 = vector.shape_cast %955 : vector<64xf32> to vector<1x1x64xf32>
    %957 = vector.broadcast %956 : vector<1x1x64xf32> to vector<8x8x64xf32>
    %958 = arith.mulf %953, %957 : vector<8x8x64xf32>
    %959 = arith.addf %952, %958 : vector<8x8x64xf32>
    %960 = vector.extract_strided_slice %931 {offsets = [4, 0, 0], sizes = [8, 8, 64], strides = [1, 1, 1]} : vector<16x8x64xf32> to vector<8x8x64xf32>
    %c40_296 = arith.constant 40 : index
    %c0_297 = arith.constant 0 : index
    %961 = vector.load %arg8[%c40_296, %c0_297] : memref<81x64xf32, #tpu.memory_space<vmem>>, vector<1x64xf32>
    %962 = vector.shape_cast %961 : vector<1x64xf32> to vector<64xf32>
    %963 = vector.shape_cast %962 : vector<64xf32> to vector<1x1x64xf32>
    %964 = vector.broadcast %963 : vector<1x1x64xf32> to vector<8x8x64xf32>
    %965 = arith.mulf %960, %964 : vector<8x8x64xf32>
    %966 = arith.addf %959, %965 : vector<8x8x64xf32>
    %967 = vector.extract_strided_slice %931 {offsets = [5, 0, 0], sizes = [8, 8, 64], strides = [1, 1, 1]} : vector<16x8x64xf32> to vector<8x8x64xf32>
    %c49 = arith.constant 49 : index
    %c0_298 = arith.constant 0 : index
    %968 = vector.load %arg8[%c49, %c0_298] : memref<81x64xf32, #tpu.memory_space<vmem>>, vector<1x64xf32>
    %969 = vector.shape_cast %968 : vector<1x64xf32> to vector<64xf32>
    %970 = vector.shape_cast %969 : vector<64xf32> to vector<1x1x64xf32>
    %971 = vector.broadcast %970 : vector<1x1x64xf32> to vector<8x8x64xf32>
    %972 = arith.mulf %967, %971 : vector<8x8x64xf32>
    %973 = arith.addf %966, %972 : vector<8x8x64xf32>
    %974 = vector.extract_strided_slice %931 {offsets = [6, 0, 0], sizes = [8, 8, 64], strides = [1, 1, 1]} : vector<16x8x64xf32> to vector<8x8x64xf32>
    %c58 = arith.constant 58 : index
    %c0_299 = arith.constant 0 : index
    %975 = vector.load %arg8[%c58, %c0_299] : memref<81x64xf32, #tpu.memory_space<vmem>>, vector<1x64xf32>
    %976 = vector.shape_cast %975 : vector<1x64xf32> to vector<64xf32>
    %977 = vector.shape_cast %976 : vector<64xf32> to vector<1x1x64xf32>
    %978 = vector.broadcast %977 : vector<1x1x64xf32> to vector<8x8x64xf32>
    %979 = arith.mulf %974, %978 : vector<8x8x64xf32>
    %980 = arith.addf %973, %979 : vector<8x8x64xf32>
    %981 = vector.extract_strided_slice %931 {offsets = [7, 0, 0], sizes = [8, 8, 64], strides = [1, 1, 1]} : vector<16x8x64xf32> to vector<8x8x64xf32>
    %c67 = arith.constant 67 : index
    %c0_300 = arith.constant 0 : index
    %982 = vector.load %arg8[%c67, %c0_300] : memref<81x64xf32, #tpu.memory_space<vmem>>, vector<1x64xf32>
    %983 = vector.shape_cast %982 : vector<1x64xf32> to vector<64xf32>
    %984 = vector.shape_cast %983 : vector<64xf32> to vector<1x1x64xf32>
    %985 = vector.broadcast %984 : vector<1x1x64xf32> to vector<8x8x64xf32>
    %986 = arith.mulf %981, %985 : vector<8x8x64xf32>
    %987 = arith.addf %980, %986 : vector<8x8x64xf32>
    %988 = vector.extract_strided_slice %931 {offsets = [8, 0, 0], sizes = [8, 8, 64], strides = [1, 1, 1]} : vector<16x8x64xf32> to vector<8x8x64xf32>
    %c76 = arith.constant 76 : index
    %c0_301 = arith.constant 0 : index
    %989 = vector.load %arg8[%c76, %c0_301] : memref<81x64xf32, #tpu.memory_space<vmem>>, vector<1x64xf32>
    %990 = vector.shape_cast %989 : vector<1x64xf32> to vector<64xf32>
    %991 = vector.shape_cast %990 : vector<64xf32> to vector<1x1x64xf32>
    %992 = vector.broadcast %991 : vector<1x1x64xf32> to vector<8x8x64xf32>
    %993 = arith.mulf %988, %992 : vector<8x8x64xf32>
    %994 = arith.addf %987, %993 : vector<8x8x64xf32>
    %c0_302 = arith.constant 0 : index
    %c5_303 = arith.constant 5 : index
    %c0_304 = arith.constant 0 : index
    %995 = vector.load %arg21[%c0_302, %c5_303, %c0_304] : memref<16x16x64xf32, #tpu.memory_space<vmem>>, vector<16x8x64xf32>
    %996 = vector.extract_strided_slice %995 {offsets = [0, 0, 0], sizes = [8, 8, 64], strides = [1, 1, 1]} : vector<16x8x64xf32> to vector<8x8x64xf32>
    %c5_305 = arith.constant 5 : index
    %c0_306 = arith.constant 0 : index
    %997 = vector.load %arg8[%c5_305, %c0_306] : memref<81x64xf32, #tpu.memory_space<vmem>>, vector<1x64xf32>
    %998 = vector.shape_cast %997 : vector<1x64xf32> to vector<64xf32>
    %999 = vector.shape_cast %998 : vector<64xf32> to vector<1x1x64xf32>
    %1000 = vector.broadcast %999 : vector<1x1x64xf32> to vector<8x8x64xf32>
    %1001 = arith.mulf %996, %1000 : vector<8x8x64xf32>
    %1002 = arith.addf %994, %1001 : vector<8x8x64xf32>
    %1003 = vector.extract_strided_slice %995 {offsets = [1, 0, 0], sizes = [8, 8, 64], strides = [1, 1, 1]} : vector<16x8x64xf32> to vector<8x8x64xf32>
    %c14_307 = arith.constant 14 : index
    %c0_308 = arith.constant 0 : index
    %1004 = vector.load %arg8[%c14_307, %c0_308] : memref<81x64xf32, #tpu.memory_space<vmem>>, vector<1x64xf32>
    %1005 = vector.shape_cast %1004 : vector<1x64xf32> to vector<64xf32>
    %1006 = vector.shape_cast %1005 : vector<64xf32> to vector<1x1x64xf32>
    %1007 = vector.broadcast %1006 : vector<1x1x64xf32> to vector<8x8x64xf32>
    %1008 = arith.mulf %1003, %1007 : vector<8x8x64xf32>
    %1009 = arith.addf %1002, %1008 : vector<8x8x64xf32>
    %1010 = vector.extract_strided_slice %995 {offsets = [2, 0, 0], sizes = [8, 8, 64], strides = [1, 1, 1]} : vector<16x8x64xf32> to vector<8x8x64xf32>
    %c23_309 = arith.constant 23 : index
    %c0_310 = arith.constant 0 : index
    %1011 = vector.load %arg8[%c23_309, %c0_310] : memref<81x64xf32, #tpu.memory_space<vmem>>, vector<1x64xf32>
    %1012 = vector.shape_cast %1011 : vector<1x64xf32> to vector<64xf32>
    %1013 = vector.shape_cast %1012 : vector<64xf32> to vector<1x1x64xf32>
    %1014 = vector.broadcast %1013 : vector<1x1x64xf32> to vector<8x8x64xf32>
    %1015 = arith.mulf %1010, %1014 : vector<8x8x64xf32>
    %1016 = arith.addf %1009, %1015 : vector<8x8x64xf32>
    %1017 = vector.extract_strided_slice %995 {offsets = [3, 0, 0], sizes = [8, 8, 64], strides = [1, 1, 1]} : vector<16x8x64xf32> to vector<8x8x64xf32>
    %c32_311 = arith.constant 32 : index
    %c0_312 = arith.constant 0 : index
    %1018 = vector.load %arg8[%c32_311, %c0_312] : memref<81x64xf32, #tpu.memory_space<vmem>>, vector<1x64xf32>
    %1019 = vector.shape_cast %1018 : vector<1x64xf32> to vector<64xf32>
    %1020 = vector.shape_cast %1019 : vector<64xf32> to vector<1x1x64xf32>
    %1021 = vector.broadcast %1020 : vector<1x1x64xf32> to vector<8x8x64xf32>
    %1022 = arith.mulf %1017, %1021 : vector<8x8x64xf32>
    %1023 = arith.addf %1016, %1022 : vector<8x8x64xf32>
    %1024 = vector.extract_strided_slice %995 {offsets = [4, 0, 0], sizes = [8, 8, 64], strides = [1, 1, 1]} : vector<16x8x64xf32> to vector<8x8x64xf32>
    %c41_313 = arith.constant 41 : index
    %c0_314 = arith.constant 0 : index
    %1025 = vector.load %arg8[%c41_313, %c0_314] : memref<81x64xf32, #tpu.memory_space<vmem>>, vector<1x64xf32>
    %1026 = vector.shape_cast %1025 : vector<1x64xf32> to vector<64xf32>
    %1027 = vector.shape_cast %1026 : vector<64xf32> to vector<1x1x64xf32>
    %1028 = vector.broadcast %1027 : vector<1x1x64xf32> to vector<8x8x64xf32>
    %1029 = arith.mulf %1024, %1028 : vector<8x8x64xf32>
    %1030 = arith.addf %1023, %1029 : vector<8x8x64xf32>
    %1031 = vector.extract_strided_slice %995 {offsets = [5, 0, 0], sizes = [8, 8, 64], strides = [1, 1, 1]} : vector<16x8x64xf32> to vector<8x8x64xf32>
    %c50 = arith.constant 50 : index
    %c0_315 = arith.constant 0 : index
    %1032 = vector.load %arg8[%c50, %c0_315] : memref<81x64xf32, #tpu.memory_space<vmem>>, vector<1x64xf32>
    %1033 = vector.shape_cast %1032 : vector<1x64xf32> to vector<64xf32>
    %1034 = vector.shape_cast %1033 : vector<64xf32> to vector<1x1x64xf32>
    %1035 = vector.broadcast %1034 : vector<1x1x64xf32> to vector<8x8x64xf32>
    %1036 = arith.mulf %1031, %1035 : vector<8x8x64xf32>
    %1037 = arith.addf %1030, %1036 : vector<8x8x64xf32>
    %1038 = vector.extract_strided_slice %995 {offsets = [6, 0, 0], sizes = [8, 8, 64], strides = [1, 1, 1]} : vector<16x8x64xf32> to vector<8x8x64xf32>
    %c59 = arith.constant 59 : index
    %c0_316 = arith.constant 0 : index
    %1039 = vector.load %arg8[%c59, %c0_316] : memref<81x64xf32, #tpu.memory_space<vmem>>, vector<1x64xf32>
    %1040 = vector.shape_cast %1039 : vector<1x64xf32> to vector<64xf32>
    %1041 = vector.shape_cast %1040 : vector<64xf32> to vector<1x1x64xf32>
    %1042 = vector.broadcast %1041 : vector<1x1x64xf32> to vector<8x8x64xf32>
    %1043 = arith.mulf %1038, %1042 : vector<8x8x64xf32>
    %1044 = arith.addf %1037, %1043 : vector<8x8x64xf32>
    %1045 = vector.extract_strided_slice %995 {offsets = [7, 0, 0], sizes = [8, 8, 64], strides = [1, 1, 1]} : vector<16x8x64xf32> to vector<8x8x64xf32>
    %c68 = arith.constant 68 : index
    %c0_317 = arith.constant 0 : index
    %1046 = vector.load %arg8[%c68, %c0_317] : memref<81x64xf32, #tpu.memory_space<vmem>>, vector<1x64xf32>
    %1047 = vector.shape_cast %1046 : vector<1x64xf32> to vector<64xf32>
    %1048 = vector.shape_cast %1047 : vector<64xf32> to vector<1x1x64xf32>
    %1049 = vector.broadcast %1048 : vector<1x1x64xf32> to vector<8x8x64xf32>
    %1050 = arith.mulf %1045, %1049 : vector<8x8x64xf32>
    %1051 = arith.addf %1044, %1050 : vector<8x8x64xf32>
    %1052 = vector.extract_strided_slice %995 {offsets = [8, 0, 0], sizes = [8, 8, 64], strides = [1, 1, 1]} : vector<16x8x64xf32> to vector<8x8x64xf32>
    %c77 = arith.constant 77 : index
    %c0_318 = arith.constant 0 : index
    %1053 = vector.load %arg8[%c77, %c0_318] : memref<81x64xf32, #tpu.memory_space<vmem>>, vector<1x64xf32>
    %1054 = vector.shape_cast %1053 : vector<1x64xf32> to vector<64xf32>
    %1055 = vector.shape_cast %1054 : vector<64xf32> to vector<1x1x64xf32>
    %1056 = vector.broadcast %1055 : vector<1x1x64xf32> to vector<8x8x64xf32>
    %1057 = arith.mulf %1052, %1056 : vector<8x8x64xf32>
    %1058 = arith.addf %1051, %1057 : vector<8x8x64xf32>
    %c0_319 = arith.constant 0 : index
    %c6_320 = arith.constant 6 : index
    %c0_321 = arith.constant 0 : index
    %1059 = vector.load %arg21[%c0_319, %c6_320, %c0_321] : memref<16x16x64xf32, #tpu.memory_space<vmem>>, vector<16x8x64xf32>
    %1060 = vector.extract_strided_slice %1059 {offsets = [0, 0, 0], sizes = [8, 8, 64], strides = [1, 1, 1]} : vector<16x8x64xf32> to vector<8x8x64xf32>
    %c6_322 = arith.constant 6 : index
    %c0_323 = arith.constant 0 : index
    %1061 = vector.load %arg8[%c6_322, %c0_323] : memref<81x64xf32, #tpu.memory_space<vmem>>, vector<1x64xf32>
    %1062 = vector.shape_cast %1061 : vector<1x64xf32> to vector<64xf32>
    %1063 = vector.shape_cast %1062 : vector<64xf32> to vector<1x1x64xf32>
    %1064 = vector.broadcast %1063 : vector<1x1x64xf32> to vector<8x8x64xf32>
    %1065 = arith.mulf %1060, %1064 : vector<8x8x64xf32>
    %1066 = arith.addf %1058, %1065 : vector<8x8x64xf32>
    %1067 = vector.extract_strided_slice %1059 {offsets = [1, 0, 0], sizes = [8, 8, 64], strides = [1, 1, 1]} : vector<16x8x64xf32> to vector<8x8x64xf32>
    %c15_324 = arith.constant 15 : index
    %c0_325 = arith.constant 0 : index
    %1068 = vector.load %arg8[%c15_324, %c0_325] : memref<81x64xf32, #tpu.memory_space<vmem>>, vector<1x64xf32>
    %1069 = vector.shape_cast %1068 : vector<1x64xf32> to vector<64xf32>
    %1070 = vector.shape_cast %1069 : vector<64xf32> to vector<1x1x64xf32>
    %1071 = vector.broadcast %1070 : vector<1x1x64xf32> to vector<8x8x64xf32>
    %1072 = arith.mulf %1067, %1071 : vector<8x8x64xf32>
    %1073 = arith.addf %1066, %1072 : vector<8x8x64xf32>
    %1074 = vector.extract_strided_slice %1059 {offsets = [2, 0, 0], sizes = [8, 8, 64], strides = [1, 1, 1]} : vector<16x8x64xf32> to vector<8x8x64xf32>
    %c24_326 = arith.constant 24 : index
    %c0_327 = arith.constant 0 : index
    %1075 = vector.load %arg8[%c24_326, %c0_327] : memref<81x64xf32, #tpu.memory_space<vmem>>, vector<1x64xf32>
    %1076 = vector.shape_cast %1075 : vector<1x64xf32> to vector<64xf32>
    %1077 = vector.shape_cast %1076 : vector<64xf32> to vector<1x1x64xf32>
    %1078 = vector.broadcast %1077 : vector<1x1x64xf32> to vector<8x8x64xf32>
    %1079 = arith.mulf %1074, %1078 : vector<8x8x64xf32>
    %1080 = arith.addf %1073, %1079 : vector<8x8x64xf32>
    %1081 = vector.extract_strided_slice %1059 {offsets = [3, 0, 0], sizes = [8, 8, 64], strides = [1, 1, 1]} : vector<16x8x64xf32> to vector<8x8x64xf32>
    %c33_328 = arith.constant 33 : index
    %c0_329 = arith.constant 0 : index
    %1082 = vector.load %arg8[%c33_328, %c0_329] : memref<81x64xf32, #tpu.memory_space<vmem>>, vector<1x64xf32>
    %1083 = vector.shape_cast %1082 : vector<1x64xf32> to vector<64xf32>
    %1084 = vector.shape_cast %1083 : vector<64xf32> to vector<1x1x64xf32>
    %1085 = vector.broadcast %1084 : vector<1x1x64xf32> to vector<8x8x64xf32>
    %1086 = arith.mulf %1081, %1085 : vector<8x8x64xf32>
    %1087 = arith.addf %1080, %1086 : vector<8x8x64xf32>
    %1088 = vector.extract_strided_slice %1059 {offsets = [4, 0, 0], sizes = [8, 8, 64], strides = [1, 1, 1]} : vector<16x8x64xf32> to vector<8x8x64xf32>
    %c42_330 = arith.constant 42 : index
    %c0_331 = arith.constant 0 : index
    %1089 = vector.load %arg8[%c42_330, %c0_331] : memref<81x64xf32, #tpu.memory_space<vmem>>, vector<1x64xf32>
    %1090 = vector.shape_cast %1089 : vector<1x64xf32> to vector<64xf32>
    %1091 = vector.shape_cast %1090 : vector<64xf32> to vector<1x1x64xf32>
    %1092 = vector.broadcast %1091 : vector<1x1x64xf32> to vector<8x8x64xf32>
    %1093 = arith.mulf %1088, %1092 : vector<8x8x64xf32>
    %1094 = arith.addf %1087, %1093 : vector<8x8x64xf32>
    %1095 = vector.extract_strided_slice %1059 {offsets = [5, 0, 0], sizes = [8, 8, 64], strides = [1, 1, 1]} : vector<16x8x64xf32> to vector<8x8x64xf32>
    %c51 = arith.constant 51 : index
    %c0_332 = arith.constant 0 : index
    %1096 = vector.load %arg8[%c51, %c0_332] : memref<81x64xf32, #tpu.memory_space<vmem>>, vector<1x64xf32>
    %1097 = vector.shape_cast %1096 : vector<1x64xf32> to vector<64xf32>
    %1098 = vector.shape_cast %1097 : vector<64xf32> to vector<1x1x64xf32>
    %1099 = vector.broadcast %1098 : vector<1x1x64xf32> to vector<8x8x64xf32>
    %1100 = arith.mulf %1095, %1099 : vector<8x8x64xf32>
    %1101 = arith.addf %1094, %1100 : vector<8x8x64xf32>
    %1102 = vector.extract_strided_slice %1059 {offsets = [6, 0, 0], sizes = [8, 8, 64], strides = [1, 1, 1]} : vector<16x8x64xf32> to vector<8x8x64xf32>
    %c60 = arith.constant 60 : index
    %c0_333 = arith.constant 0 : index
    %1103 = vector.load %arg8[%c60, %c0_333] : memref<81x64xf32, #tpu.memory_space<vmem>>, vector<1x64xf32>
    %1104 = vector.shape_cast %1103 : vector<1x64xf32> to vector<64xf32>
    %1105 = vector.shape_cast %1104 : vector<64xf32> to vector<1x1x64xf32>
    %1106 = vector.broadcast %1105 : vector<1x1x64xf32> to vector<8x8x64xf32>
    %1107 = arith.mulf %1102, %1106 : vector<8x8x64xf32>
    %1108 = arith.addf %1101, %1107 : vector<8x8x64xf32>
    %1109 = vector.extract_strided_slice %1059 {offsets = [7, 0, 0], sizes = [8, 8, 64], strides = [1, 1, 1]} : vector<16x8x64xf32> to vector<8x8x64xf32>
    %c69 = arith.constant 69 : index
    %c0_334 = arith.constant 0 : index
    %1110 = vector.load %arg8[%c69, %c0_334] : memref<81x64xf32, #tpu.memory_space<vmem>>, vector<1x64xf32>
    %1111 = vector.shape_cast %1110 : vector<1x64xf32> to vector<64xf32>
    %1112 = vector.shape_cast %1111 : vector<64xf32> to vector<1x1x64xf32>
    %1113 = vector.broadcast %1112 : vector<1x1x64xf32> to vector<8x8x64xf32>
    %1114 = arith.mulf %1109, %1113 : vector<8x8x64xf32>
    %1115 = arith.addf %1108, %1114 : vector<8x8x64xf32>
    %1116 = vector.extract_strided_slice %1059 {offsets = [8, 0, 0], sizes = [8, 8, 64], strides = [1, 1, 1]} : vector<16x8x64xf32> to vector<8x8x64xf32>
    %c78 = arith.constant 78 : index
    %c0_335 = arith.constant 0 : index
    %1117 = vector.load %arg8[%c78, %c0_335] : memref<81x64xf32, #tpu.memory_space<vmem>>, vector<1x64xf32>
    %1118 = vector.shape_cast %1117 : vector<1x64xf32> to vector<64xf32>
    %1119 = vector.shape_cast %1118 : vector<64xf32> to vector<1x1x64xf32>
    %1120 = vector.broadcast %1119 : vector<1x1x64xf32> to vector<8x8x64xf32>
    %1121 = arith.mulf %1116, %1120 : vector<8x8x64xf32>
    %1122 = arith.addf %1115, %1121 : vector<8x8x64xf32>
    %c0_336 = arith.constant 0 : index
    %c7_337 = arith.constant 7 : index
    %c0_338 = arith.constant 0 : index
    %1123 = vector.load %arg21[%c0_336, %c7_337, %c0_338] : memref<16x16x64xf32, #tpu.memory_space<vmem>>, vector<16x8x64xf32>
    %1124 = vector.extract_strided_slice %1123 {offsets = [0, 0, 0], sizes = [8, 8, 64], strides = [1, 1, 1]} : vector<16x8x64xf32> to vector<8x8x64xf32>
    %c7_339 = arith.constant 7 : index
    %c0_340 = arith.constant 0 : index
    %1125 = vector.load %arg8[%c7_339, %c0_340] : memref<81x64xf32, #tpu.memory_space<vmem>>, vector<1x64xf32>
    %1126 = vector.shape_cast %1125 : vector<1x64xf32> to vector<64xf32>
    %1127 = vector.shape_cast %1126 : vector<64xf32> to vector<1x1x64xf32>
    %1128 = vector.broadcast %1127 : vector<1x1x64xf32> to vector<8x8x64xf32>
    %1129 = arith.mulf %1124, %1128 : vector<8x8x64xf32>
    %1130 = arith.addf %1122, %1129 : vector<8x8x64xf32>
    %1131 = vector.extract_strided_slice %1123 {offsets = [1, 0, 0], sizes = [8, 8, 64], strides = [1, 1, 1]} : vector<16x8x64xf32> to vector<8x8x64xf32>
    %c16_341 = arith.constant 16 : index
    %c0_342 = arith.constant 0 : index
    %1132 = vector.load %arg8[%c16_341, %c0_342] : memref<81x64xf32, #tpu.memory_space<vmem>>, vector<1x64xf32>
    %1133 = vector.shape_cast %1132 : vector<1x64xf32> to vector<64xf32>
    %1134 = vector.shape_cast %1133 : vector<64xf32> to vector<1x1x64xf32>
    %1135 = vector.broadcast %1134 : vector<1x1x64xf32> to vector<8x8x64xf32>
    %1136 = arith.mulf %1131, %1135 : vector<8x8x64xf32>
    %1137 = arith.addf %1130, %1136 : vector<8x8x64xf32>
    %1138 = vector.extract_strided_slice %1123 {offsets = [2, 0, 0], sizes = [8, 8, 64], strides = [1, 1, 1]} : vector<16x8x64xf32> to vector<8x8x64xf32>
    %c25_343 = arith.constant 25 : index
    %c0_344 = arith.constant 0 : index
    %1139 = vector.load %arg8[%c25_343, %c0_344] : memref<81x64xf32, #tpu.memory_space<vmem>>, vector<1x64xf32>
    %1140 = vector.shape_cast %1139 : vector<1x64xf32> to vector<64xf32>
    %1141 = vector.shape_cast %1140 : vector<64xf32> to vector<1x1x64xf32>
    %1142 = vector.broadcast %1141 : vector<1x1x64xf32> to vector<8x8x64xf32>
    %1143 = arith.mulf %1138, %1142 : vector<8x8x64xf32>
    %1144 = arith.addf %1137, %1143 : vector<8x8x64xf32>
    %1145 = vector.extract_strided_slice %1123 {offsets = [3, 0, 0], sizes = [8, 8, 64], strides = [1, 1, 1]} : vector<16x8x64xf32> to vector<8x8x64xf32>
    %c34_345 = arith.constant 34 : index
    %c0_346 = arith.constant 0 : index
    %1146 = vector.load %arg8[%c34_345, %c0_346] : memref<81x64xf32, #tpu.memory_space<vmem>>, vector<1x64xf32>
    %1147 = vector.shape_cast %1146 : vector<1x64xf32> to vector<64xf32>
    %1148 = vector.shape_cast %1147 : vector<64xf32> to vector<1x1x64xf32>
    %1149 = vector.broadcast %1148 : vector<1x1x64xf32> to vector<8x8x64xf32>
    %1150 = arith.mulf %1145, %1149 : vector<8x8x64xf32>
    %1151 = arith.addf %1144, %1150 : vector<8x8x64xf32>
    %1152 = vector.extract_strided_slice %1123 {offsets = [4, 0, 0], sizes = [8, 8, 64], strides = [1, 1, 1]} : vector<16x8x64xf32> to vector<8x8x64xf32>
    %c43_347 = arith.constant 43 : index
    %c0_348 = arith.constant 0 : index
    %1153 = vector.load %arg8[%c43_347, %c0_348] : memref<81x64xf32, #tpu.memory_space<vmem>>, vector<1x64xf32>
    %1154 = vector.shape_cast %1153 : vector<1x64xf32> to vector<64xf32>
    %1155 = vector.shape_cast %1154 : vector<64xf32> to vector<1x1x64xf32>
    %1156 = vector.broadcast %1155 : vector<1x1x64xf32> to vector<8x8x64xf32>
    %1157 = arith.mulf %1152, %1156 : vector<8x8x64xf32>
    %1158 = arith.addf %1151, %1157 : vector<8x8x64xf32>
    %1159 = vector.extract_strided_slice %1123 {offsets = [5, 0, 0], sizes = [8, 8, 64], strides = [1, 1, 1]} : vector<16x8x64xf32> to vector<8x8x64xf32>
    %c52 = arith.constant 52 : index
    %c0_349 = arith.constant 0 : index
    %1160 = vector.load %arg8[%c52, %c0_349] : memref<81x64xf32, #tpu.memory_space<vmem>>, vector<1x64xf32>
    %1161 = vector.shape_cast %1160 : vector<1x64xf32> to vector<64xf32>
    %1162 = vector.shape_cast %1161 : vector<64xf32> to vector<1x1x64xf32>
    %1163 = vector.broadcast %1162 : vector<1x1x64xf32> to vector<8x8x64xf32>
    %1164 = arith.mulf %1159, %1163 : vector<8x8x64xf32>
    %1165 = arith.addf %1158, %1164 : vector<8x8x64xf32>
    %1166 = vector.extract_strided_slice %1123 {offsets = [6, 0, 0], sizes = [8, 8, 64], strides = [1, 1, 1]} : vector<16x8x64xf32> to vector<8x8x64xf32>
    %c61 = arith.constant 61 : index
    %c0_350 = arith.constant 0 : index
    %1167 = vector.load %arg8[%c61, %c0_350] : memref<81x64xf32, #tpu.memory_space<vmem>>, vector<1x64xf32>
    %1168 = vector.shape_cast %1167 : vector<1x64xf32> to vector<64xf32>
    %1169 = vector.shape_cast %1168 : vector<64xf32> to vector<1x1x64xf32>
    %1170 = vector.broadcast %1169 : vector<1x1x64xf32> to vector<8x8x64xf32>
    %1171 = arith.mulf %1166, %1170 : vector<8x8x64xf32>
    %1172 = arith.addf %1165, %1171 : vector<8x8x64xf32>
    %1173 = vector.extract_strided_slice %1123 {offsets = [7, 0, 0], sizes = [8, 8, 64], strides = [1, 1, 1]} : vector<16x8x64xf32> to vector<8x8x64xf32>
    %c70 = arith.constant 70 : index
    %c0_351 = arith.constant 0 : index
    %1174 = vector.load %arg8[%c70, %c0_351] : memref<81x64xf32, #tpu.memory_space<vmem>>, vector<1x64xf32>
    %1175 = vector.shape_cast %1174 : vector<1x64xf32> to vector<64xf32>
    %1176 = vector.shape_cast %1175 : vector<64xf32> to vector<1x1x64xf32>
    %1177 = vector.broadcast %1176 : vector<1x1x64xf32> to vector<8x8x64xf32>
    %1178 = arith.mulf %1173, %1177 : vector<8x8x64xf32>
    %1179 = arith.addf %1172, %1178 : vector<8x8x64xf32>
    %1180 = vector.extract_strided_slice %1123 {offsets = [8, 0, 0], sizes = [8, 8, 64], strides = [1, 1, 1]} : vector<16x8x64xf32> to vector<8x8x64xf32>
    %c79 = arith.constant 79 : index
    %c0_352 = arith.constant 0 : index
    %1181 = vector.load %arg8[%c79, %c0_352] : memref<81x64xf32, #tpu.memory_space<vmem>>, vector<1x64xf32>
    %1182 = vector.shape_cast %1181 : vector<1x64xf32> to vector<64xf32>
    %1183 = vector.shape_cast %1182 : vector<64xf32> to vector<1x1x64xf32>
    %1184 = vector.broadcast %1183 : vector<1x1x64xf32> to vector<8x8x64xf32>
    %1185 = arith.mulf %1180, %1184 : vector<8x8x64xf32>
    %1186 = arith.addf %1179, %1185 : vector<8x8x64xf32>
    %c0_353 = arith.constant 0 : index
    %c8_354 = arith.constant 8 : index
    %c0_355 = arith.constant 0 : index
    %1187 = vector.load %arg21[%c0_353, %c8_354, %c0_355] : memref<16x16x64xf32, #tpu.memory_space<vmem>>, vector<16x8x64xf32>
    %1188 = vector.extract_strided_slice %1187 {offsets = [0, 0, 0], sizes = [8, 8, 64], strides = [1, 1, 1]} : vector<16x8x64xf32> to vector<8x8x64xf32>
    %c8_356 = arith.constant 8 : index
    %c0_357 = arith.constant 0 : index
    %1189 = vector.load %arg8[%c8_356, %c0_357] : memref<81x64xf32, #tpu.memory_space<vmem>>, vector<1x64xf32>
    %1190 = vector.shape_cast %1189 : vector<1x64xf32> to vector<64xf32>
    %1191 = vector.shape_cast %1190 : vector<64xf32> to vector<1x1x64xf32>
    %1192 = vector.broadcast %1191 : vector<1x1x64xf32> to vector<8x8x64xf32>
    %1193 = arith.mulf %1188, %1192 : vector<8x8x64xf32>
    %1194 = arith.addf %1186, %1193 : vector<8x8x64xf32>
    %1195 = vector.extract_strided_slice %1187 {offsets = [1, 0, 0], sizes = [8, 8, 64], strides = [1, 1, 1]} : vector<16x8x64xf32> to vector<8x8x64xf32>
    %c17_358 = arith.constant 17 : index
    %c0_359 = arith.constant 0 : index
    %1196 = vector.load %arg8[%c17_358, %c0_359] : memref<81x64xf32, #tpu.memory_space<vmem>>, vector<1x64xf32>
    %1197 = vector.shape_cast %1196 : vector<1x64xf32> to vector<64xf32>
    %1198 = vector.shape_cast %1197 : vector<64xf32> to vector<1x1x64xf32>
    %1199 = vector.broadcast %1198 : vector<1x1x64xf32> to vector<8x8x64xf32>
    %1200 = arith.mulf %1195, %1199 : vector<8x8x64xf32>
    %1201 = arith.addf %1194, %1200 : vector<8x8x64xf32>
    %1202 = vector.extract_strided_slice %1187 {offsets = [2, 0, 0], sizes = [8, 8, 64], strides = [1, 1, 1]} : vector<16x8x64xf32> to vector<8x8x64xf32>
    %c26_360 = arith.constant 26 : index
    %c0_361 = arith.constant 0 : index
    %1203 = vector.load %arg8[%c26_360, %c0_361] : memref<81x64xf32, #tpu.memory_space<vmem>>, vector<1x64xf32>
    %1204 = vector.shape_cast %1203 : vector<1x64xf32> to vector<64xf32>
    %1205 = vector.shape_cast %1204 : vector<64xf32> to vector<1x1x64xf32>
    %1206 = vector.broadcast %1205 : vector<1x1x64xf32> to vector<8x8x64xf32>
    %1207 = arith.mulf %1202, %1206 : vector<8x8x64xf32>
    %1208 = arith.addf %1201, %1207 : vector<8x8x64xf32>
    %1209 = vector.extract_strided_slice %1187 {offsets = [3, 0, 0], sizes = [8, 8, 64], strides = [1, 1, 1]} : vector<16x8x64xf32> to vector<8x8x64xf32>
    %c35_362 = arith.constant 35 : index
    %c0_363 = arith.constant 0 : index
    %1210 = vector.load %arg8[%c35_362, %c0_363] : memref<81x64xf32, #tpu.memory_space<vmem>>, vector<1x64xf32>
    %1211 = vector.shape_cast %1210 : vector<1x64xf32> to vector<64xf32>
    %1212 = vector.shape_cast %1211 : vector<64xf32> to vector<1x1x64xf32>
    %1213 = vector.broadcast %1212 : vector<1x1x64xf32> to vector<8x8x64xf32>
    %1214 = arith.mulf %1209, %1213 : vector<8x8x64xf32>
    %1215 = arith.addf %1208, %1214 : vector<8x8x64xf32>
    %1216 = vector.extract_strided_slice %1187 {offsets = [4, 0, 0], sizes = [8, 8, 64], strides = [1, 1, 1]} : vector<16x8x64xf32> to vector<8x8x64xf32>
    %c44_364 = arith.constant 44 : index
    %c0_365 = arith.constant 0 : index
    %1217 = vector.load %arg8[%c44_364, %c0_365] : memref<81x64xf32, #tpu.memory_space<vmem>>, vector<1x64xf32>
    %1218 = vector.shape_cast %1217 : vector<1x64xf32> to vector<64xf32>
    %1219 = vector.shape_cast %1218 : vector<64xf32> to vector<1x1x64xf32>
    %1220 = vector.broadcast %1219 : vector<1x1x64xf32> to vector<8x8x64xf32>
    %1221 = arith.mulf %1216, %1220 : vector<8x8x64xf32>
    %1222 = arith.addf %1215, %1221 : vector<8x8x64xf32>
    %1223 = vector.extract_strided_slice %1187 {offsets = [5, 0, 0], sizes = [8, 8, 64], strides = [1, 1, 1]} : vector<16x8x64xf32> to vector<8x8x64xf32>
    %c53 = arith.constant 53 : index
    %c0_366 = arith.constant 0 : index
    %1224 = vector.load %arg8[%c53, %c0_366] : memref<81x64xf32, #tpu.memory_space<vmem>>, vector<1x64xf32>
    %1225 = vector.shape_cast %1224 : vector<1x64xf32> to vector<64xf32>
    %1226 = vector.shape_cast %1225 : vector<64xf32> to vector<1x1x64xf32>
    %1227 = vector.broadcast %1226 : vector<1x1x64xf32> to vector<8x8x64xf32>
    %1228 = arith.mulf %1223, %1227 : vector<8x8x64xf32>
    %1229 = arith.addf %1222, %1228 : vector<8x8x64xf32>
    %1230 = vector.extract_strided_slice %1187 {offsets = [6, 0, 0], sizes = [8, 8, 64], strides = [1, 1, 1]} : vector<16x8x64xf32> to vector<8x8x64xf32>
    %c62 = arith.constant 62 : index
    %c0_367 = arith.constant 0 : index
    %1231 = vector.load %arg8[%c62, %c0_367] : memref<81x64xf32, #tpu.memory_space<vmem>>, vector<1x64xf32>
    %1232 = vector.shape_cast %1231 : vector<1x64xf32> to vector<64xf32>
    %1233 = vector.shape_cast %1232 : vector<64xf32> to vector<1x1x64xf32>
    %1234 = vector.broadcast %1233 : vector<1x1x64xf32> to vector<8x8x64xf32>
    %1235 = arith.mulf %1230, %1234 : vector<8x8x64xf32>
    %1236 = arith.addf %1229, %1235 : vector<8x8x64xf32>
    %1237 = vector.extract_strided_slice %1187 {offsets = [7, 0, 0], sizes = [8, 8, 64], strides = [1, 1, 1]} : vector<16x8x64xf32> to vector<8x8x64xf32>
    %c71 = arith.constant 71 : index
    %c0_368 = arith.constant 0 : index
    %1238 = vector.load %arg8[%c71, %c0_368] : memref<81x64xf32, #tpu.memory_space<vmem>>, vector<1x64xf32>
    %1239 = vector.shape_cast %1238 : vector<1x64xf32> to vector<64xf32>
    %1240 = vector.shape_cast %1239 : vector<64xf32> to vector<1x1x64xf32>
    %1241 = vector.broadcast %1240 : vector<1x1x64xf32> to vector<8x8x64xf32>
    %1242 = arith.mulf %1237, %1241 : vector<8x8x64xf32>
    %1243 = arith.addf %1236, %1242 : vector<8x8x64xf32>
    %1244 = vector.extract_strided_slice %1187 {offsets = [8, 0, 0], sizes = [8, 8, 64], strides = [1, 1, 1]} : vector<16x8x64xf32> to vector<8x8x64xf32>
    %c80 = arith.constant 80 : index
    %c0_369 = arith.constant 0 : index
    %1245 = vector.load %arg8[%c80, %c0_369] : memref<81x64xf32, #tpu.memory_space<vmem>>, vector<1x64xf32>
    %1246 = vector.shape_cast %1245 : vector<1x64xf32> to vector<64xf32>
    %1247 = vector.shape_cast %1246 : vector<64xf32> to vector<1x1x64xf32>
    %1248 = vector.broadcast %1247 : vector<1x1x64xf32> to vector<8x8x64xf32>
    %1249 = arith.mulf %1244, %1248 : vector<8x8x64xf32>
    %1250 = arith.addf %1243, %1249 : vector<8x8x64xf32>
    %c3_370 = arith.constant 3 : index
    %c0_371 = arith.constant 0 : index
    %1251 = vector.load %arg9[%c3_370, %c0_371] : memref<4x64xf32, #tpu.memory_space<vmem>>, vector<1x64xf32>
    %1252 = vector.shape_cast %1251 : vector<1x64xf32> to vector<64xf32>
    %1253 = vector.shape_cast %1252 : vector<64xf32> to vector<1x1x64xf32>
    %1254 = vector.broadcast %1253 : vector<1x1x64xf32> to vector<8x8x64xf32>
    %1255 = arith.addf %1250, %1254 : vector<8x8x64xf32>
    %1256 = vector.shape_cast %1255 : vector<8x8x64xf32> to vector<64x64xf32>
    %1257 = arith.truncf %1256 : vector<64x64xf32> to vector<64x64xbf16>
    %c3_372 = arith.constant 3 : index
    %c0_373 = arith.constant 0 : index
    %c0_374 = arith.constant 0 : index
    %1258 = vector.load %arg10[%c3_372, %c0_373, %c0_374] : memref<4x64x16xbf16, #tpu.memory_space<vmem>>, vector<1x64x16xbf16>
    %1259 = vector.shape_cast %1258 : vector<1x64x16xbf16> to vector<64x16xbf16>
    %cst_375 = arith.constant dense<0.000000e+00> : vector<64x16xf32>
    %1260 = tpu.matmul %1257, %1259, %cst_375 {dimension_numbers = #tpu.dot_dimension_numbers<[1], [0], [0], [1], [0, 0, 1, 1], [], []>} : vector<64x64xbf16>, vector<64x16xbf16>, vector<64x16xf32> -> vector<64x16xf32>
    %c3_376 = arith.constant 3 : index
    %c0_377 = arith.constant 0 : index
    %1261 = vector.load %arg11[%c3_376, %c0_377] : memref<4x16xf32, #tpu.memory_space<vmem>>, vector<1x16xf32>
    %1262 = vector.shape_cast %1261 : vector<1x16xf32> to vector<16xf32>
    %1263 = vector.shape_cast %1262 : vector<16xf32> to vector<1x16xf32>
    %1264 = vector.broadcast %1263 : vector<1x16xf32> to vector<64x16xf32>
    %1265 = arith.addf %1260, %1264 : vector<64x16xf32>
    %cst_378 = arith.constant dense<0.000000e+00> : vector<16xf32>
    %1266 = vector.multi_reduction <add>, %1265, %cst_378 [0] : vector<64x16xf32> to vector<16xf32>
    %1267 = vector.shape_cast %1266 : vector<16xf32> to vector<1x16xf32>
    %cst_379 = arith.constant 1.562500e-02 : f32
    %1268 = vector.broadcast %cst_379 : f32 to vector<1x16xf32>
    %1269 = arith.mulf %1267, %1268 : vector<1x16xf32>
    %1270 = tpu.concatenate %103, %303, %673, %1269 in 0 : vector<1x16xf32>, vector<1x16xf32>, vector<1x16xf32>, vector<1x16xf32> -> vector<4x16xf32>
    %c0_380 = arith.constant 0 : index
    %c0_381 = arith.constant 0 : index
    %1271 = vector.load %arg12[%c0_380, %c0_381] : memref<16x4xf32, #tpu.memory_space<vmem>>, vector<16x4xf32>
    %cst_382 = arith.constant dense<0.000000e+00> : vector<4x4xf32>
    %1272 = tpu.matmul %1270, %1271, %cst_382 {dimension_numbers = #tpu.dot_dimension_numbers<[1], [0], [0], [1], [0, 0, 1, 1], [], []>} : vector<4x16xf32>, vector<16x4xf32>, vector<4x4xf32> -> vector<4x4xf32>
    %c0_383 = arith.constant 0 : index
    %c0_384 = arith.constant 0 : index
    %1273 = vector.load %arg13[%c0_383, %c0_384] : memref<1x4xf32, #tpu.memory_space<vmem>>, vector<1x4xf32>
    %1274 = vector.broadcast %1273 : vector<1x4xf32> to vector<4x4xf32>
    %1275 = arith.addf %1272, %1274 : vector<4x4xf32>
    %cst_385 = arith.constant 0.000000e+00 : f32
    %1276 = vector.broadcast %cst_385 : f32 to vector<4x4xf32>
    %1277 = arith.maximumf %1275, %1276 : vector<4x4xf32>
    %c0_386 = arith.constant 0 : index
    %c0_387 = arith.constant 0 : index
    %1278 = vector.load %arg14[%c0_386, %c0_387] : memref<4x16xf32, #tpu.memory_space<vmem>>, vector<4x16xf32>
    %cst_388 = arith.constant dense<0.000000e+00> : vector<4x16xf32>
    %1279 = tpu.matmul %1277, %1278, %cst_388 {dimension_numbers = #tpu.dot_dimension_numbers<[1], [0], [0], [1], [0, 0, 1, 1], [], []>} : vector<4x4xf32>, vector<4x16xf32>, vector<4x16xf32> -> vector<4x16xf32>
    %c0_389 = arith.constant 0 : index
    %c0_390 = arith.constant 0 : index
    %1280 = vector.load %arg15[%c0_389, %c0_390] : memref<1x16xf32, #tpu.memory_space<vmem>>, vector<1x16xf32>
    %1281 = vector.broadcast %1280 : vector<1x16xf32> to vector<4x16xf32>
    %1282 = arith.addf %1279, %1281 : vector<4x16xf32>
    %cst_391 = arith.constant 0.000000e+00 : f32
    %1283 = vector.broadcast %cst_391 : f32 to vector<4x16xf32>
    %1284 = arith.subf %1283, %1282 : vector<4x16xf32>
    %1285 = math.exp %1284 : vector<4x16xf32>
    %cst_392 = arith.constant 1.000000e+00 : f32
    %1286 = vector.broadcast %cst_392 : f32 to vector<4x16xf32>
    %1287 = arith.addf %1286, %1285 : vector<4x16xf32>
    %cst_393 = arith.constant 1.000000e+00 : f32
    %1288 = vector.broadcast %cst_393 : f32 to vector<4x16xf32>
    %1289 = arith.divf %1288, %1287 : vector<4x16xf32>
    %1290 = vector.extract_strided_slice %1289 {offsets = [0, 0], sizes = [1, 16], strides = [1, 1]} : vector<4x16xf32> to vector<1x16xf32>
    %1291 = vector.extract_strided_slice %1289 {offsets = [1, 0], sizes = [1, 16], strides = [1, 1]} : vector<4x16xf32> to vector<1x16xf32>
    %1292 = vector.extract_strided_slice %1289 {offsets = [2, 0], sizes = [1, 16], strides = [1, 1]} : vector<4x16xf32> to vector<1x16xf32>
    %1293 = vector.extract_strided_slice %1289 {offsets = [3, 0], sizes = [1, 16], strides = [1, 1]} : vector<4x16xf32> to vector<1x16xf32>
    %1294 = arith.maximumf %1290, %1291 : vector<1x16xf32>
    %1295 = arith.maximumf %1292, %1293 : vector<1x16xf32>
    %1296 = arith.maximumf %1294, %1295 : vector<1x16xf32>
    %1297 = arith.subf %1290, %1296 : vector<1x16xf32>
    %1298 = math.exp %1297 : vector<1x16xf32>
    %1299 = arith.subf %1291, %1296 : vector<1x16xf32>
    %1300 = math.exp %1299 : vector<1x16xf32>
    %1301 = arith.subf %1292, %1296 : vector<1x16xf32>
    %1302 = math.exp %1301 : vector<1x16xf32>
    %1303 = arith.subf %1293, %1296 : vector<1x16xf32>
    %1304 = math.exp %1303 : vector<1x16xf32>
    %1305 = arith.addf %1298, %1300 : vector<1x16xf32>
    %1306 = arith.addf %1305, %1302 : vector<1x16xf32>
    %1307 = arith.addf %1306, %1304 : vector<1x16xf32>
    %cst_394 = arith.constant 1.000000e+00 : f32
    %1308 = vector.broadcast %cst_394 : f32 to vector<1x16xf32>
    %1309 = arith.divf %1308, %1307 : vector<1x16xf32>
    %1310 = arith.mulf %1298, %1309 : vector<1x16xf32>
    %1311 = arith.mulf %1300, %1309 : vector<1x16xf32>
    %1312 = arith.mulf %1302, %1309 : vector<1x16xf32>
    %1313 = arith.mulf %1304, %1309 : vector<1x16xf32>
    %cst_395 = arith.constant 0.000000e+00 : f32
    %1314 = vector.broadcast %cst_395 : f32 to vector<64x16xf32>
    %1315 = vector.broadcast %1310 : vector<1x16xf32> to vector<64x16xf32>
    %1316 = arith.mulf %99, %1315 : vector<64x16xf32>
    %c0_396 = arith.constant 0 : index
    %c0_397 = arith.constant 0 : index
    %1317 = vector.load %arg16[%c0_396, %c0_397] : memref<4x16xf32, #tpu.memory_space<vmem>>, vector<1x16xf32>
    %1318 = vector.shape_cast %1317 : vector<1x16xf32> to vector<16xf32>
    %1319 = vector.shape_cast %1318 : vector<16xf32> to vector<1x16xf32>
    %1320 = vector.broadcast %1319 : vector<1x16xf32> to vector<64x16xf32>
    %1321 = arith.mulf %1316, %1320 : vector<64x16xf32>
    %c0_398 = arith.constant 0 : index
    %c0_399 = arith.constant 0 : index
    %1322 = vector.load %arg17[%c0_398, %c0_399] : memref<4x16xf32, #tpu.memory_space<vmem>>, vector<1x16xf32>
    %1323 = vector.shape_cast %1322 : vector<1x16xf32> to vector<16xf32>
    %1324 = vector.shape_cast %1323 : vector<16xf32> to vector<1x16xf32>
    %1325 = vector.broadcast %1324 : vector<1x16xf32> to vector<64x16xf32>
    %1326 = arith.addf %1321, %1325 : vector<64x16xf32>
    %cst_400 = arith.constant 0.000000e+00 : f32
    %1327 = vector.broadcast %cst_400 : f32 to vector<64x16xf32>
    %1328 = arith.maximumf %1326, %1327 : vector<64x16xf32>
    %1329 = arith.truncf %1328 : vector<64x16xf32> to vector<64x16xbf16>
    %c0_401 = arith.constant 0 : index
    %c0_402 = arith.constant 0 : index
    %c0_403 = arith.constant 0 : index
    %1330 = vector.load %arg18[%c0_401, %c0_402, %c0_403] : memref<4x16x16xbf16, #tpu.memory_space<vmem>>, vector<1x16x16xbf16>
    %1331 = vector.shape_cast %1330 : vector<1x16x16xbf16> to vector<16x16xbf16>
    %cst_404 = arith.constant dense<0.000000e+00> : vector<64x16xf32>
    %1332 = tpu.matmul %1329, %1331, %cst_404 {dimension_numbers = #tpu.dot_dimension_numbers<[1], [0], [0], [1], [0, 0, 1, 1], [], []>} : vector<64x16xbf16>, vector<16x16xbf16>, vector<64x16xf32> -> vector<64x16xf32>
    %1333 = arith.addf %1314, %1332 : vector<64x16xf32>
    %1334 = vector.broadcast %1311 : vector<1x16xf32> to vector<64x16xf32>
    %1335 = arith.mulf %299, %1334 : vector<64x16xf32>
    %c1_405 = arith.constant 1 : index
    %c0_406 = arith.constant 0 : index
    %1336 = vector.load %arg16[%c1_405, %c0_406] : memref<4x16xf32, #tpu.memory_space<vmem>>, vector<1x16xf32>
    %1337 = vector.shape_cast %1336 : vector<1x16xf32> to vector<16xf32>
    %1338 = vector.shape_cast %1337 : vector<16xf32> to vector<1x16xf32>
    %1339 = vector.broadcast %1338 : vector<1x16xf32> to vector<64x16xf32>
    %1340 = arith.mulf %1335, %1339 : vector<64x16xf32>
    %c1_407 = arith.constant 1 : index
    %c0_408 = arith.constant 0 : index
    %1341 = vector.load %arg17[%c1_407, %c0_408] : memref<4x16xf32, #tpu.memory_space<vmem>>, vector<1x16xf32>
    %1342 = vector.shape_cast %1341 : vector<1x16xf32> to vector<16xf32>
    %1343 = vector.shape_cast %1342 : vector<16xf32> to vector<1x16xf32>
    %1344 = vector.broadcast %1343 : vector<1x16xf32> to vector<64x16xf32>
    %1345 = arith.addf %1340, %1344 : vector<64x16xf32>
    %cst_409 = arith.constant 0.000000e+00 : f32
    %1346 = vector.broadcast %cst_409 : f32 to vector<64x16xf32>
    %1347 = arith.maximumf %1345, %1346 : vector<64x16xf32>
    %1348 = arith.truncf %1347 : vector<64x16xf32> to vector<64x16xbf16>
    %c1_410 = arith.constant 1 : index
    %c0_411 = arith.constant 0 : index
    %c0_412 = arith.constant 0 : index
    %1349 = vector.load %arg18[%c1_410, %c0_411, %c0_412] : memref<4x16x16xbf16, #tpu.memory_space<vmem>>, vector<1x16x16xbf16>
    %1350 = vector.shape_cast %1349 : vector<1x16x16xbf16> to vector<16x16xbf16>
    %cst_413 = arith.constant dense<0.000000e+00> : vector<64x16xf32>
    %1351 = tpu.matmul %1348, %1350, %cst_413 {dimension_numbers = #tpu.dot_dimension_numbers<[1], [0], [0], [1], [0, 0, 1, 1], [], []>} : vector<64x16xbf16>, vector<16x16xbf16>, vector<64x16xf32> -> vector<64x16xf32>
    %1352 = arith.addf %1333, %1351 : vector<64x16xf32>
    %1353 = vector.broadcast %1312 : vector<1x16xf32> to vector<64x16xf32>
    %1354 = arith.mulf %669, %1353 : vector<64x16xf32>
    %c2_414 = arith.constant 2 : index
    %c0_415 = arith.constant 0 : index
    %1355 = vector.load %arg16[%c2_414, %c0_415] : memref<4x16xf32, #tpu.memory_space<vmem>>, vector<1x16xf32>
    %1356 = vector.shape_cast %1355 : vector<1x16xf32> to vector<16xf32>
    %1357 = vector.shape_cast %1356 : vector<16xf32> to vector<1x16xf32>
    %1358 = vector.broadcast %1357 : vector<1x16xf32> to vector<64x16xf32>
    %1359 = arith.mulf %1354, %1358 : vector<64x16xf32>
    %c2_416 = arith.constant 2 : index
    %c0_417 = arith.constant 0 : index
    %1360 = vector.load %arg17[%c2_416, %c0_417] : memref<4x16xf32, #tpu.memory_space<vmem>>, vector<1x16xf32>
    %1361 = vector.shape_cast %1360 : vector<1x16xf32> to vector<16xf32>
    %1362 = vector.shape_cast %1361 : vector<16xf32> to vector<1x16xf32>
    %1363 = vector.broadcast %1362 : vector<1x16xf32> to vector<64x16xf32>
    %1364 = arith.addf %1359, %1363 : vector<64x16xf32>
    %cst_418 = arith.constant 0.000000e+00 : f32
    %1365 = vector.broadcast %cst_418 : f32 to vector<64x16xf32>
    %1366 = arith.maximumf %1364, %1365 : vector<64x16xf32>
    %1367 = arith.truncf %1366 : vector<64x16xf32> to vector<64x16xbf16>
    %c2_419 = arith.constant 2 : index
    %c0_420 = arith.constant 0 : index
    %c0_421 = arith.constant 0 : index
    %1368 = vector.load %arg18[%c2_419, %c0_420, %c0_421] : memref<4x16x16xbf16, #tpu.memory_space<vmem>>, vector<1x16x16xbf16>
    %1369 = vector.shape_cast %1368 : vector<1x16x16xbf16> to vector<16x16xbf16>
    %cst_422 = arith.constant dense<0.000000e+00> : vector<64x16xf32>
    %1370 = tpu.matmul %1367, %1369, %cst_422 {dimension_numbers = #tpu.dot_dimension_numbers<[1], [0], [0], [1], [0, 0, 1, 1], [], []>} : vector<64x16xbf16>, vector<16x16xbf16>, vector<64x16xf32> -> vector<64x16xf32>
    %1371 = arith.addf %1352, %1370 : vector<64x16xf32>
    %1372 = vector.broadcast %1313 : vector<1x16xf32> to vector<64x16xf32>
    %1373 = arith.mulf %1265, %1372 : vector<64x16xf32>
    %c3_423 = arith.constant 3 : index
    %c0_424 = arith.constant 0 : index
    %1374 = vector.load %arg16[%c3_423, %c0_424] : memref<4x16xf32, #tpu.memory_space<vmem>>, vector<1x16xf32>
    %1375 = vector.shape_cast %1374 : vector<1x16xf32> to vector<16xf32>
    %1376 = vector.shape_cast %1375 : vector<16xf32> to vector<1x16xf32>
    %1377 = vector.broadcast %1376 : vector<1x16xf32> to vector<64x16xf32>
    %1378 = arith.mulf %1373, %1377 : vector<64x16xf32>
    %c3_425 = arith.constant 3 : index
    %c0_426 = arith.constant 0 : index
    %1379 = vector.load %arg17[%c3_425, %c0_426] : memref<4x16xf32, #tpu.memory_space<vmem>>, vector<1x16xf32>
    %1380 = vector.shape_cast %1379 : vector<1x16xf32> to vector<16xf32>
    %1381 = vector.shape_cast %1380 : vector<16xf32> to vector<1x16xf32>
    %1382 = vector.broadcast %1381 : vector<1x16xf32> to vector<64x16xf32>
    %1383 = arith.addf %1378, %1382 : vector<64x16xf32>
    %cst_427 = arith.constant 0.000000e+00 : f32
    %1384 = vector.broadcast %cst_427 : f32 to vector<64x16xf32>
    %1385 = arith.maximumf %1383, %1384 : vector<64x16xf32>
    %1386 = arith.truncf %1385 : vector<64x16xf32> to vector<64x16xbf16>
    %c3_428 = arith.constant 3 : index
    %c0_429 = arith.constant 0 : index
    %c0_430 = arith.constant 0 : index
    %1387 = vector.load %arg18[%c3_428, %c0_429, %c0_430] : memref<4x16x16xbf16, #tpu.memory_space<vmem>>, vector<1x16x16xbf16>
    %1388 = vector.shape_cast %1387 : vector<1x16x16xbf16> to vector<16x16xbf16>
    %cst_431 = arith.constant dense<0.000000e+00> : vector<64x16xf32>
    %1389 = tpu.matmul %1386, %1388, %cst_431 {dimension_numbers = #tpu.dot_dimension_numbers<[1], [0], [0], [1], [0, 0, 1, 1], [], []>} : vector<64x16xbf16>, vector<16x16xbf16>, vector<64x16xf32> -> vector<64x16xf32>
    %1390 = arith.addf %1371, %1389 : vector<64x16xf32>
    %c0_432 = arith.constant 0 : index
    %c0_433 = arith.constant 0 : index
    %1391 = vector.load %arg19[%c0_432, %c0_433] : memref<1x16xf32, #tpu.memory_space<vmem>>, vector<1x16xf32>
    %1392 = vector.broadcast %1391 : vector<1x16xf32> to vector<64x16xf32>
    %1393 = arith.addf %1390, %1392 : vector<64x16xf32>
    %1394 = tpu.transpose %1393, [1, 0] : vector<64x16xf32> -> vector<16x64xf32>
    %1395 = arith.addf %1394, %1 : vector<16x64xf32>
    %cst_434 = arith.constant 0.000000e+00 : f32
    %1396 = vector.broadcast %cst_434 : f32 to vector<16x64xf32>
    %1397 = arith.maximumf %1395, %1396 : vector<16x64xf32>
    %c0_435 = arith.constant 0 : index
    %c0_436 = arith.constant 0 : index
    %c0_437 = arith.constant 0 : index
    %1398 = vector.load %arg20[%c0_435, %c0_436, %c0_437] : memref<1x16x64xf32, #tpu.memory_space<vmem>>, vector<1x16x64xf32>
    %1399 = vector.shape_cast %1398 : vector<1x16x64xf32> to vector<16x64xf32>
    %1400 = vector.shape_cast %1397 : vector<16x64xf32> to vector<1x16x64xf32>
    tpu.vector_store %arg20[%c0_435, %c0_436, %c0_437], %1400 {strides = array<i32>} : memref<1x16x64xf32, #tpu.memory_space<vmem>>, vector<1x16x64xf32>,
    return
  }
  func.func @transform_0(%arg0: i32) -> (i32, i32, i32) {
    %c0_i32 = arith.constant 0 : i32
    %c0_i32_0 = arith.constant 0 : i32
    %c0_i32_1 = arith.constant 0 : i32
    return %arg0, %c0_i32, %c0_i32_0 : i32, i32, i32
  }
  func.func @transform_1(%arg0: i32) -> (i32, i32) {
    %c0_i32 = arith.constant 0 : i32
    %c0_i32_0 = arith.constant 0 : i32
    %c0_i32_1 = arith.constant 0 : i32
    return %c0_i32, %c0_i32_0 : i32, i32
  }
  func.func @transform_2(%arg0: i32) -> (i32, i32) {
    %c0_i32 = arith.constant 0 : i32
    %c0_i32_0 = arith.constant 0 : i32
    %c0_i32_1 = arith.constant 0 : i32
    return %c0_i32, %c0_i32_0 : i32, i32
  }
  func.func @transform_3(%arg0: i32) -> (i32, i32) {
    %c0_i32 = arith.constant 0 : i32
    %c0_i32_0 = arith.constant 0 : i32
    %c0_i32_1 = arith.constant 0 : i32
    return %c0_i32, %c0_i32_0 : i32, i32
  }
  func.func @transform_4(%arg0: i32) -> (i32, i32) {
    %c0_i32 = arith.constant 0 : i32
    %c0_i32_0 = arith.constant 0 : i32
    %c0_i32_1 = arith.constant 0 : i32
    return %c0_i32, %c0_i32_0 : i32, i32
  }
  func.func @transform_5(%arg0: i32) -> (i32, i32) {
    %c0_i32 = arith.constant 0 : i32
    %c0_i32_0 = arith.constant 0 : i32
    %c0_i32_1 = arith.constant 0 : i32
    return %c0_i32, %c0_i32_0 : i32, i32
  }
  func.func @transform_6(%arg0: i32) -> (i32, i32) {
    %c0_i32 = arith.constant 0 : i32
    %c0_i32_0 = arith.constant 0 : i32
    %c0_i32_1 = arith.constant 0 : i32
    return %c0_i32, %c0_i32_0 : i32, i32
  }
  func.func @transform_7(%arg0: i32) -> (i32, i32) {
    %c0_i32 = arith.constant 0 : i32
    %c0_i32_0 = arith.constant 0 : i32
    %c0_i32_1 = arith.constant 0 : i32
    return %c0_i32, %c0_i32_0 : i32, i32
  }
  func.func @transform_8(%arg0: i32) -> (i32, i32) {
    %c0_i32 = arith.constant 0 : i32
    %c0_i32_0 = arith.constant 0 : i32
    %c0_i32_1 = arith.constant 0 : i32
    return %c0_i32, %c0_i32_0 : i32, i32
  }
  func.func @transform_9(%arg0: i32) -> (i32, i32, i32) {
    %c0_i32 = arith.constant 0 : i32
    %c0_i32_0 = arith.constant 0 : i32
    %c0_i32_1 = arith.constant 0 : i32
    %c0_i32_2 = arith.constant 0 : i32
    return %c0_i32, %c0_i32_0, %c0_i32_1 : i32, i32, i32
  }
  func.func @transform_10(%arg0: i32) -> (i32, i32) {
    %c0_i32 = arith.constant 0 : i32
    %c0_i32_0 = arith.constant 0 : i32
    %c0_i32_1 = arith.constant 0 : i32
    return %c0_i32, %c0_i32_0 : i32, i32
  }
  func.func @transform_11(%arg0: i32) -> (i32, i32) {
    %c0_i32 = arith.constant 0 : i32
    %c0_i32_0 = arith.constant 0 : i32
    %c0_i32_1 = arith.constant 0 : i32
    return %c0_i32, %c0_i32_0 : i32, i32
  }
  func.func @transform_12(%arg0: i32) -> (i32, i32) {
    %c0_i32 = arith.constant 0 : i32
    %c0_i32_0 = arith.constant 0 : i32
    %c0_i32_1 = arith.constant 0 : i32
    return %c0_i32, %c0_i32_0 : i32, i32
  }
  func.func @transform_13(%arg0: i32) -> (i32, i32) {
    %c0_i32 = arith.constant 0 : i32
    %c0_i32_0 = arith.constant 0 : i32
    %c0_i32_1 = arith.constant 0 : i32
    return %c0_i32, %c0_i32_0 : i32, i32
  }
  func.func @transform_14(%arg0: i32) -> (i32, i32) {
    %c0_i32 = arith.constant 0 : i32
    %c0_i32_0 = arith.constant 0 : i32
    %c0_i32_1 = arith.constant 0 : i32
    return %c0_i32, %c0_i32_0 : i32, i32
  }
  func.func @transform_15(%arg0: i32) -> (i32, i32) {
    %c0_i32 = arith.constant 0 : i32
    %c0_i32_0 = arith.constant 0 : i32
    %c0_i32_1 = arith.constant 0 : i32
    return %c0_i32, %c0_i32_0 : i32, i32
  }
  func.func @transform_16(%arg0: i32) -> (i32, i32) {
    %c0_i32 = arith.constant 0 : i32
    %c0_i32_0 = arith.constant 0 : i32
    %c0_i32_1 = arith.constant 0 : i32
    return %c0_i32, %c0_i32_0 : i32, i32
  }
  func.func @transform_17(%arg0: i32) -> (i32, i32, i32) {
    %c0_i32 = arith.constant 0 : i32
    %c0_i32_0 = arith.constant 0 : i32
    %c0_i32_1 = arith.constant 0 : i32
    %c0_i32_2 = arith.constant 0 : i32
    return %c0_i32, %c0_i32_0, %c0_i32_1 : i32, i32, i32
  }
  func.func @transform_18(%arg0: i32) -> (i32, i32) {
    %c0_i32 = arith.constant 0 : i32
    %c0_i32_0 = arith.constant 0 : i32
    %c0_i32_1 = arith.constant 0 : i32
    return %c0_i32, %c0_i32_0 : i32, i32
  }
  func.func @transform_19(%arg0: i32) -> (i32, i32, i32) {
    %c0_i32 = arith.constant 0 : i32
    %c0_i32_0 = arith.constant 0 : i32
    %c0_i32_1 = arith.constant 0 : i32
    return %arg0, %c0_i32, %c0_i32_0 : i32, i32, i32
  }
}

</mosaic_0001>

<llo_original>
// kernel: tpu_custom_call.1
$region0: #{tpu_custom_call.1}
  #allocation0 [shape = 'u32[]', space=smem, size = 0x4, offset = 0x4, fixed_abs, tag = 'smem constant byte address 0x4 - core index']
  #allocation1 [shape = 'u32[144,128]{1,0:T(1,128)}', space=vmem, size = 0x12000, scoped, tag = 'internal scratch']
  #allocation2 [shape = 'f32[16,16,64]{2,1,0:T(8,128)}', space=vmem, size = 0x20000, scoped, tag = 'scratch operand']
  %s0 = inlined_call_operand.vmem [shape: f32[2,16,64], index: 0, kind: input, shape index: {}]
  %s1 = inlined_call_operand.vmem [shape: bf16[16,64], index: 1, kind: input, shape index: {}]
  %s2 = inlined_call_operand.vmem [shape: f32[1,64], index: 2, kind: input, shape index: {}]
  %s3 = inlined_call_operand.vmem [shape: f32[1,64], index: 3, kind: input, shape index: {}]
  %s4 = inlined_call_operand.vmem [shape: f32[9,64], index: 4, kind: input, shape index: {}]
  %s5 = inlined_call_operand.vmem [shape: f32[25,64], index: 5, kind: input, shape index: {}]
  %s6 = inlined_call_operand.vmem [shape: f32[49,64], index: 6, kind: input, shape index: {}]
  %s7 = inlined_call_operand.vmem [shape: f32[81,64], index: 7, kind: input, shape index: {}]
  %s8 = inlined_call_operand.vmem [shape: f32[4,64], index: 8, kind: input, shape index: {}]
  %s9 = inlined_call_operand.vmem [shape: bf16[4,64,16], index: 9, kind: input, shape index: {}]
  %s10 = inlined_call_operand.vmem [shape: f32[4,16], index: 10, kind: input, shape index: {}]
  %s11 = inlined_call_operand.vmem [shape: f32[16,4], index: 11, kind: input, shape index: {}]
  %s12 = inlined_call_operand.vmem [shape: f32[1,4], index: 12, kind: input, shape index: {}]
  %s13 = inlined_call_operand.vmem [shape: f32[4,16], index: 13, kind: input, shape index: {}]
  %s14 = inlined_call_operand.vmem [shape: f32[1,16], index: 14, kind: input, shape index: {}]
  %s15 = inlined_call_operand.vmem [shape: f32[4,16], index: 15, kind: input, shape index: {}]
  %s16 = inlined_call_operand.vmem [shape: f32[4,16], index: 16, kind: input, shape index: {}]
  %s17 = inlined_call_operand.vmem [shape: bf16[4,16,16], index: 17, kind: input, shape index: {}]
  %s18 = inlined_call_operand.vmem [shape: f32[1,16], index: 18, kind: input, shape index: {}]
  %s19 = inlined_call_operand.hbm [shape: f32[2,16,64], index: 19, kind: output, shape index: {}]
  %s20 = sld [smem:[#allocation0]]
  $region109: #{tpu_custom_call.1} parent=0
    _
  %s22 = ssub.s32 1, %s20
  %s23 = scalar_select 0, %s22, %s20
  $region1: #{tpu_custom_call.1} parent=0
    #allocation3 [shape = 'u8[16384]{0}', space=vmem, size = 0x4000, scoped, tag = 'output window, operand 0']
    #allocation4 [shape = 's32[2]{0}', space=sflag, size = 0x8, scoped, tag = 'scoped memory for tpu_custom_call.1']
    %24 = vsyncpa [#allocation4], 0
    %s25 = scalar_lea.sflag [#allocation4], 1
    %26 = vsyncpa %s25, 0
    loop: start=0, step=1, limit=4
    $region2: #{tpu_custom_call.1} parent=1 // loop_pre_header
      _
    $region3: #{tpu_custom_call.1} parent=1 // loop_header
      %s28 = sphi 0, %s32
      %p29 = scmp.ge.s32.totalorder %s28, 4
      %s38 = sphi 0, %s40
      %s41 = sphi 0, %s38
      %s42 = sphi 0, %s41
      %s58 = sphi 0, %s42
      %s62 = sphi 0, %s62
      %s64 = sphi 0, %s62
      %s65 = sphi 0, %s64
      %s79 = sphi 0, %s65
      %s83 = sphi 0, %s83
      %s85 = sphi 0, %s83
      %s86 = sphi 0, %s85
      %s100 = sphi 0, %s86
      %s104 = sphi 0, %s104
      %s106 = sphi 0, %s104
      %s107 = sphi 0, %s106
      %s121 = sphi 0, %s107
      %s125 = sphi 0, %s125
      %s127 = sphi 0, %s125
      %s128 = sphi 0, %s127
      %s142 = sphi 0, %s128
      %s146 = sphi 0, %s146
      %s148 = sphi 0, %s146
      %s149 = sphi 0, %s148
      %s163 = sphi 0, %s149
      %s167 = sphi 0, %s167
      %s169 = sphi 0, %s167
      %s170 = sphi 0, %s169
      %s184 = sphi 0, %s170
      %s188 = sphi 0, %s188
      %s190 = sphi 0, %s188
      %s191 = sphi 0, %s190
      %s205 = sphi 0, %s191
      %s209 = sphi 0, %s209
      %s211 = sphi 0, %s209
      %s212 = sphi 0, %s211
      %s226 = sphi 0, %s212
      %s230 = sphi 0, %s230
      %s232 = sphi 0, %s230
      %s233 = sphi 0, %s232
      %s247 = sphi 0, %s233
      %s251 = sphi 0, %s251
      %s253 = sphi 0, %s251
      %s254 = sphi 0, %s253
      %s268 = sphi 0, %s254
      %s272 = sphi 0, %s272
      %s274 = sphi 0, %s272
      %s275 = sphi 0, %s274
      %s289 = sphi 0, %s275
      %s293 = sphi 0, %s293
      %s295 = sphi 0, %s293
      %s296 = sphi 0, %s295
      %s310 = sphi 0, %s296
      %s314 = sphi 0, %s314
      %s316 = sphi 0, %s314
      %s317 = sphi 0, %s316
      %s331 = sphi 0, %s317
      %s335 = sphi 0, %s335
      %s337 = sphi 0, %s335
      %s338 = sphi 0, %s337
      %s352 = sphi 0, %s338
      %s356 = sphi 0, %s356
      %s358 = sphi 0, %s356
      %s359 = sphi 0, %s358
      %s373 = sphi 0, %s359
      %s377 = sphi 0, %s377
      %s379 = sphi 0, %s377
      %s380 = sphi 0, %s379
      %s394 = sphi 0, %s380
      %s398 = sphi 0, %s398
      %s400 = sphi 0, %s398
      %s401 = sphi 0, %s400
      %s415 = sphi 0, %s401
      %s419 = sphi 0, %s419
      %s421 = sphi 0, %s419
      %s422 = sphi 0, %s421
      %s436 = sphi 0, %s422
      %s442 = sphi 0, %s444
      %s445 = sphi 0, %s442
      %s446 = sphi 0, %s445
      %s462 = sphi 0, %s446
    $region4: #{tpu_custom_call.1} parent=1 // loop_header_branch
      %31 = sbr.rel (%p29) target = $region8
    $region5: #{tpu_custom_call.1} parent=1 // loop_body
      %s33 = ssub.s32 %s28, 1
      %s34 = ssub.s32 %s28, 2
      %s35 = sadd.s32 %s28, 1
      %s36 = ssub.s32 %s28, %s35
      %p37 = scmp.eq.s32.totalorder %s36, 0
      %s39 = sadd.s32 %s38, 1
      %s40 = scalar_select %p37, %s38, %s39
      %p43 = pneg %p37
      %p44 = scmp.eq.s32.totalorder %s28, 1
      %p45 = por %p43, %p44
      %p46 = scmp.ne.s32.totalorder %s38, %s41
      %p47 = scmp.eq.s32.totalorder %s28, 0
      %p48 = por %p46, %p47
      %p49 = scmp.ne.s32.totalorder %s38, %s41
      %p50 = scmp.eq.s32.totalorder %s33, 1
      %p51 = por %p49, %p50
      %p52 = scmp.ne.s32.totalorder %s41, %s42
      %p53 = scmp.eq.s32.totalorder %s33, 0
      %p54 = por %p52, %p53
      %p55 = scmp.ne.s32.totalorder %s41, %s42
      %p56 = scmp.eq.s32.totalorder %s34, 1
      %p57 = por %p55, %p56
      %p59 = scmp.ne.s32.totalorder %s42, %s58
      %p60 = scmp.eq.s32.totalorder %s34, 0
      %p61 = por %p59, %p60
      %s63 = sadd.s32 %s62, 1
      %p66 = scmp.eq.s32.totalorder %s28, 1
      %p67 = scmp.ne.s32.totalorder %s62, %s64
      %p68 = scmp.eq.s32.totalorder %s28, 0
      %p69 = por %p67, %p68
      %p70 = scmp.ne.s32.totalorder %s62, %s64
      %p71 = scmp.eq.s32.totalorder %s33, 1
      %p72 = por %p70, %p71
      %p73 = scmp.ne.s32.totalorder %s64, %s65
      %p74 = scmp.eq.s32.totalorder %s33, 0
      %p75 = por %p73, %p74
      %p76 = scmp.ne.s32.totalorder %s64, %s65
      %p77 = scmp.eq.s32.totalorder %s34, 1
      %p78 = por %p76, %p77
      %p80 = scmp.ne.s32.totalorder %s65, %s79
      %p81 = scmp.eq.s32.totalorder %s34, 0
      %p82 = por %p80, %p81
      %s84 = sadd.s32 %s83, 1
      %p87 = scmp.eq.s32.totalorder %s28, 1
      %p88 = scmp.ne.s32.totalorder %s83, %s85
      %p89 = scmp.eq.s32.totalorder %s28, 0
      %p90 = por %p88, %p89
      %p91 = scmp.ne.s32.totalorder %s83, %s85
      %p92 = scmp.eq.s32.totalorder %s33, 1
      %p93 = por %p91, %p92
      %p94 = scmp.ne.s32.totalorder %s85, %s86
      %p95 = scmp.eq.s32.totalorder %s33, 0
      %p96 = por %p94, %p95
      %p97 = scmp.ne.s32.totalorder %s85, %s86
      %p98 = scmp.eq.s32.totalorder %s34, 1
      %p99 = por %p97, %p98
      %p101 = scmp.ne.s32.totalorder %s86, %s100
      %p102 = scmp.eq.s32.totalorder %s34, 0
      %p103 = por %p101, %p102
      %s105 = sadd.s32 %s104, 1
      %p108 = scmp.eq.s32.totalorder %s28, 1
      %p109 = scmp.ne.s32.totalorder %s104, %s106
      %p110 = scmp.eq.s32.totalorder %s28, 0
      %p111 = por %p109, %p110
      %p112 = scmp.ne.s32.totalorder %s104, %s106
      %p113 = scmp.eq.s32.totalorder %s33, 1
      %p114 = por %p112, %p113
      %p115 = scmp.ne.s32.totalorder %s106, %s107
      %p116 = scmp.eq.s32.totalorder %s33, 0
      %p117 = por %p115, %p116
      %p118 = scmp.ne.s32.totalorder %s106, %s107
      %p119 = scmp.eq.s32.totalorder %s34, 1
      %p120 = por %p118, %p119
      %p122 = scmp.ne.s32.totalorder %s107, %s121
      %p123 = scmp.eq.s32.totalorder %s34, 0
      %p124 = por %p122, %p123
      %s126 = sadd.s32 %s125, 1
      %p129 = scmp.eq.s32.totalorder %s28, 1
      %p130 = scmp.ne.s32.totalorder %s125, %s127
      %p131 = scmp.eq.s32.totalorder %s28, 0
      %p132 = por %p130, %p131
      %p133 = scmp.ne.s32.totalorder %s125, %s127
      %p134 = scmp.eq.s32.totalorder %s33, 1
      %p135 = por %p133, %p134
      %p136 = scmp.ne.s32.totalorder %s127, %s128
      %p137 = scmp.eq.s32.totalorder %s33, 0
      %p138 = por %p136, %p137
      %p139 = scmp.ne.s32.totalorder %s127, %s128
      %p140 = scmp.eq.s32.totalorder %s34, 1
      %p141 = por %p139, %p140
      %p143 = scmp.ne.s32.totalorder %s128, %s142
      %p144 = scmp.eq.s32.totalorder %s34, 0
      %p145 = por %p143, %p144
      %s147 = sadd.s32 %s146, 1
      %p150 = scmp.eq.s32.totalorder %s28, 1
      %p151 = scmp.ne.s32.totalorder %s146, %s148
      %p152 = scmp.eq.s32.totalorder %s28, 0
      %p153 = por %p151, %p152
      %p154 = scmp.ne.s32.totalorder %s146, %s148
      %p155 = scmp.eq.s32.totalorder %s33, 1
      %p156 = por %p154, %p155
      %p157 = scmp.ne.s32.totalorder %s148, %s149
      %p158 = scmp.eq.s32.totalorder %s33, 0
      %p159 = por %p157, %p158
      %p160 = scmp.ne.s32.totalorder %s148, %s149
      %p161 = scmp.eq.s32.totalorder %s34, 1
      %p162 = por %p160, %p161
      %p164 = scmp.ne.s32.totalorder %s149, %s163
      %p165 = scmp.eq.s32.totalorder %s34, 0
      %p166 = por %p164, %p165
      %s168 = sadd.s32 %s167, 1
      %p171 = scmp.eq.s32.totalorder %s28, 1
      %p172 = scmp.ne.s32.totalorder %s167, %s169
      %p173 = scmp.eq.s32.totalorder %s28, 0
      %p174 = por %p172, %p173
      %p175 = scmp.ne.s32.totalorder %s167, %s169
      %p176 = scmp.eq.s32.totalorder %s33, 1
      %p177 = por %p175, %p176
      %p178 = scmp.ne.s32.totalorder %s169, %s170
      %p179 = scmp.eq.s32.totalorder %s33, 0
      %p180 = por %p178, %p179
      %p181 = scmp.ne.s32.totalorder %s169, %s170
      %p182 = scmp.eq.s32.totalorder %s34, 1
      %p183 = por %p181, %p182
      %p185 = scmp.ne.s32.totalorder %s170, %s184
      %p186 = scmp.eq.s32.totalorder %s34, 0
      %p187 = por %p185, %p186
      %s189 = sadd.s32 %s188, 1
      %p192 = scmp.eq.s32.totalorder %s28, 1
      %p193 = scmp.ne.s32.totalorder %s188, %s190
      %p194 = scmp.eq.s32.totalorder %s28, 0
      %p195 = por %p193, %p194
      %p196 = scmp.ne.s32.totalorder %s188, %s190
      %p197 = scmp.eq.s32.totalorder %s33, 1
      %p198 = por %p196, %p197
      %p199 = scmp.ne.s32.totalorder %s190, %s191
      %p200 = scmp.eq.s32.totalorder %s33, 0
      %p201 = por %p199, %p200
      %p202 = scmp.ne.s32.totalorder %s190, %s191
      %p203 = scmp.eq.s32.totalorder %s34, 1
      %p204 = por %p202, %p203
      %p206 = scmp.ne.s32.totalorder %s191, %s205
      %p207 = scmp.eq.s32.totalorder %s34, 0
      %p208 = por %p206, %p207
      %s210 = sadd.s32 %s209, 1
      %p213 = scmp.eq.s32.totalorder %s28, 1
      %p214 = scmp.ne.s32.totalorder %s209, %s211
      %p215 = scmp.eq.s32.totalorder %s28, 0
      %p216 = por %p214, %p215
      %p217 = scmp.ne.s32.totalorder %s209, %s211
      %p218 = scmp.eq.s32.totalorder %s33, 1
      %p219 = por %p217, %p218
      %p220 = scmp.ne.s32.totalorder %s211, %s212
      %p221 = scmp.eq.s32.totalorder %s33, 0
      %p222 = por %p220, %p221
      %p223 = scmp.ne.s32.totalorder %s211, %s212
      %p224 = scmp.eq.s32.totalorder %s34, 1
      %p225 = por %p223, %p224
      %p227 = scmp.ne.s32.totalorder %s212, %s226
      %p228 = scmp.eq.s32.totalorder %s34, 0
      %p229 = por %p227, %p228
      %s231 = sadd.s32 %s230, 1
      %p234 = scmp.eq.s32.totalorder %s28, 1
      %p235 = scmp.ne.s32.totalorder %s230, %s232
      %p236 = scmp.eq.s32.totalorder %s28, 0
      %p237 = por %p235, %p236
      %p238 = scmp.ne.s32.totalorder %s230, %s232
      %p239 = scmp.eq.s32.totalorder %s33, 1
      %p240 = por %p238, %p239
      %p241 = scmp.ne.s32.totalorder %s232, %s233
      %p242 = scmp.eq.s32.totalorder %s33, 0
      %p243 = por %p241, %p242
      %p244 = scmp.ne.s32.totalorder %s232, %s233
      %p245 = scmp.eq.s32.totalorder %s34, 1
      %p246 = por %p244, %p245
      %p248 = scmp.ne.s32.totalorder %s233, %s247
      %p249 = scmp.eq.s32.totalorder %s34, 0
      %p250 = por %p248, %p249
      %s252 = sadd.s32 %s251, 1
      %p255 = scmp.eq.s32.totalorder %s28, 1
      %p256 = scmp.ne.s32.totalorder %s251, %s253
      %p257 = scmp.eq.s32.totalorder %s28, 0
      %p258 = por %p256, %p257
      %p259 = scmp.ne.s32.totalorder %s251, %s253
      %p260 = scmp.eq.s32.totalorder %s33, 1
      %p261 = por %p259, %p260
      %p262 = scmp.ne.s32.totalorder %s253, %s254
      %p263 = scmp.eq.s32.totalorder %s33, 0
      %p264 = por %p262, %p263
      %p265 = scmp.ne.s32.totalorder %s253, %s254
      %p266 = scmp.eq.s32.totalorder %s34, 1
      %p267 = por %p265, %p266
      %p269 = scmp.ne.s32.totalorder %s254, %s268
      %p270 = scmp.eq.s32.totalorder %s34, 0
      %p271 = por %p269, %p270
      %s273 = sadd.s32 %s272, 1
      %p276 = scmp.eq.s32.totalorder %s28, 1
      %p277 = scmp.ne.s32.totalorder %s272, %s274
      %p278 = scmp.eq.s32.totalorder %s28, 0
      %p279 = por %p277, %p278
      %p280 = scmp.ne.s32.totalorder %s272, %s274
      %p281 = scmp.eq.s32.totalorder %s33, 1
      %p282 = por %p280, %p281
      %p283 = scmp.ne.s32.totalorder %s274, %s275
      %p284 = scmp.eq.s32.totalorder %s33, 0
      %p285 = por %p283, %p284
      %p286 = scmp.ne.s32.totalorder %s274, %s275
      %p287 = scmp.eq.s32.totalorder %s34, 1
      %p288 = por %p286, %p287
      %p290 = scmp.ne.s32.totalorder %s275, %s289
      %p291 = scmp.eq.s32.totalorder %s34, 0
      %p292 = por %p290, %p291
      %s294 = sadd.s32 %s293, 1
      %p297 = scmp.eq.s32.totalorder %s28, 1
      %p298 = scmp.ne.s32.totalorder %s293, %s295
      %p299 = scmp.eq.s32.totalorder %s28, 0
      %p300 = por %p298, %p299
      %p301 = scmp.ne.s32.totalorder %s293, %s295
      %p302 = scmp.eq.s32.totalorder %s33, 1
      %p303 = por %p301, %p302
      %p304 = scmp.ne.s32.totalorder %s295, %s296
      %p305 = scmp.eq.s32.totalorder %s33, 0
      %p306 = por %p304, %p305
      %p307 = scmp.ne.s32.totalorder %s295, %s296
      %p308 = scmp.eq.s32.totalorder %s34, 1
      %p309 = por %p307, %p308
      %p311 = scmp.ne.s32.totalorder %s296, %s310
      %p312 = scmp.eq.s32.totalorder %s34, 0
      %p313 = por %p311, %p312
      %s315 = sadd.s32 %s314, 1
      %p318 = scmp.eq.s32.totalorder %s28, 1
      %p319 = scmp.ne.s32.totalorder %s314, %s316
      %p320 = scmp.eq.s32.totalorder %s28, 0
      %p321 = por %p319, %p320
      %p322 = scmp.ne.s32.totalorder %s314, %s316
      %p323 = scmp.eq.s32.totalorder %s33, 1
      %p324 = por %p322, %p323
      %p325 = scmp.ne.s32.totalorder %s316, %s317
      %p326 = scmp.eq.s32.totalorder %s33, 0
      %p327 = por %p325, %p326
      %p328 = scmp.ne.s32.totalorder %s316, %s317
      %p329 = scmp.eq.s32.totalorder %s34, 1
      %p330 = por %p328, %p329
      %p332 = scmp.ne.s32.totalorder %s317, %s331
      %p333 = scmp.eq.s32.totalorder %s34, 0
      %p334 = por %p332, %p333
      %s336 = sadd.s32 %s335, 1
      %p339 = scmp.eq.s32.totalorder %s28, 1
      %p340 = scmp.ne.s32.totalorder %s335, %s337
      %p341 = scmp.eq.s32.totalorder %s28, 0
      %p342 = por %p340, %p341
      %p343 = scmp.ne.s32.totalorder %s335, %s337
      %p344 = scmp.eq.s32.totalorder %s33, 1
      %p345 = por %p343, %p344
      %p346 = scmp.ne.s32.totalorder %s337, %s338
      %p347 = scmp.eq.s32.totalorder %s33, 0
      %p348 = por %p346, %p347
      %p349 = scmp.ne.s32.totalorder %s337, %s338
      %p350 = scmp.eq.s32.totalorder %s34, 1
      %p351 = por %p349, %p350
      %p353 = scmp.ne.s32.totalorder %s338, %s352
      %p354 = scmp.eq.s32.totalorder %s34, 0
      %p355 = por %p353, %p354
      %s357 = sadd.s32 %s356, 1
      %p360 = scmp.eq.s32.totalorder %s28, 1
      %p361 = scmp.ne.s32.totalorder %s356, %s358
      %p362 = scmp.eq.s32.totalorder %s28, 0
      %p363 = por %p361, %p362
      %p364 = scmp.ne.s32.totalorder %s356, %s358
      %p365 = scmp.eq.s32.totalorder %s33, 1
      %p366 = por %p364, %p365
      %p367 = scmp.ne.s32.totalorder %s358, %s359
      %p368 = scmp.eq.s32.totalorder %s33, 0
      %p369 = por %p367, %p368
      %p370 = scmp.ne.s32.totalorder %s358, %s359
      %p371 = scmp.eq.s32.totalorder %s34, 1
      %p372 = por %p370, %p371
      %p374 = scmp.ne.s32.totalorder %s359, %s373
      %p375 = scmp.eq.s32.totalorder %s34, 0
      %p376 = por %p374, %p375
      %s378 = sadd.s32 %s377, 1
      %p381 = scmp.eq.s32.totalorder %s28, 1
      %p382 = scmp.ne.s32.totalorder %s377, %s379
      %p383 = scmp.eq.s32.totalorder %s28, 0
      %p384 = por %p382, %p383
      %p385 = scmp.ne.s32.totalorder %s377, %s379
      %p386 = scmp.eq.s32.totalorder %s33, 1
      %p387 = por %p385, %p386
      %p388 = scmp.ne.s32.totalorder %s379, %s380
      %p389 = scmp.eq.s32.totalorder %s33, 0
      %p390 = por %p388, %p389
      %p391 = scmp.ne.s32.totalorder %s379, %s380
      %p392 = scmp.eq.s32.totalorder %s34, 1
      %p393 = por %p391, %p392
      %p395 = scmp.ne.s32.totalorder %s380, %s394
      %p396 = scmp.eq.s32.totalorder %s34, 0
      %p397 = por %p395, %p396
      %s399 = sadd.s32 %s398, 1
      %p402 = scmp.eq.s32.totalorder %s28, 1
      %p403 = scmp.ne.s32.totalorder %s398, %s400
      %p404 = scmp.eq.s32.totalorder %s28, 0
      %p405 = por %p403, %p404
      %p406 = scmp.ne.s32.totalorder %s398, %s400
      %p407 = scmp.eq.s32.totalorder %s33, 1
      %p408 = por %p406, %p407
      %p409 = scmp.ne.s32.totalorder %s400, %s401
      %p410 = scmp.eq.s32.totalorder %s33, 0
      %p411 = por %p409, %p410
      %p412 = scmp.ne.s32.totalorder %s400, %s401
      %p413 = scmp.eq.s32.totalorder %s34, 1
      %p414 = por %p412, %p413
      %p416 = scmp.ne.s32.totalorder %s401, %s415
      %p417 = scmp.eq.s32.totalorder %s34, 0
      %p418 = por %p416, %p417
      %s420 = sadd.s32 %s419, 1
      %p423 = scmp.eq.s32.totalorder %s28, 1
      %p424 = scmp.ne.s32.totalorder %s419, %s421
      %p425 = scmp.eq.s32.totalorder %s28, 0
      %p426 = por %p424, %p425
      %p427 = scmp.ne.s32.totalorder %s419, %s421
      %p428 = scmp.eq.s32.totalorder %s33, 1
      %p429 = por %p427, %p428
      %p430 = scmp.ne.s32.totalorder %s421, %s422
      %p431 = scmp.eq.s32.totalorder %s33, 0
      %p432 = por %p430, %p431
      %p433 = scmp.ne.s32.totalorder %s421, %s422
      %p434 = scmp.eq.s32.totalorder %s34, 1
      %p435 = por %p433, %p434
      %p437 = scmp.ne.s32.totalorder %s422, %s436
      %p438 = scmp.eq.s32.totalorder %s34, 0
      %p439 = por %p437, %p438
      %s440 = ssub.s32 %s28, %s35
      %p441 = scmp.eq.s32.totalorder %s440, 0
      %s443 = sadd.s32 %s442, 1
      %s444 = scalar_select %p441, %s442, %s443
      %p447 = pneg %p441
      %p448 = scmp.eq.s32.totalorder %s28, 1
      %p449 = por %p447, %p448
      %p450 = scmp.ne.s32.totalorder %s442, %s445
      %p451 = scmp.eq.s32.totalorder %s28, 0
      %p452 = por %p450, %p451
      %p453 = scmp.ne.s32.totalorder %s442, %s445
      %p454 = scmp.eq.s32.totalorder %s33, 1
      %p455 = por %p453, %p454
      %p456 = scmp.ne.s32.totalorder %s445, %s446
      %p457 = scmp.eq.s32.totalorder %s33, 0
      %p458 = por %p456, %p457
      %p459 = scmp.ne.s32.totalorder %s445, %s446
      %p460 = scmp.eq.s32.totalorder %s34, 1
      %p461 = por %p459, %p460
      %p463 = scmp.ne.s32.totalorder %s446, %s462
      %p464 = scmp.eq.s32.totalorder %s34, 0
      %p465 = por %p463, %p464
      %p466 = scmp.le.s32.totalorder 1, %s28
      %p467 = scmp.lt.s32.totalorder %s28, 3
      %p468 = pnand %p466, %p467
      %p469 = pneg %p468
      // Predicated region
      $region9: #{tpu_custom_call.1} parent=5 // pred_check
        _
      $region10: #{tpu_custom_call.1} parent=5 // pred_check_branch
        %471 = sbr.rel (%p468) target = $region12
      $region11: #{tpu_custom_call.1} parent=5 // pred_region
        %s472 = ssub.s32 %s28, 1
        // Predicated region
        $region13: #{tpu_custom_call.1} parent=11 // pred_check
          %p473 = pneg %p75
        $region14: #{tpu_custom_call.1} parent=11 // pred_check_branch
          %475 = sbr.rel (%p473) target = $region16
        $region15: #{tpu_custom_call.1} parent=11 // pred_region
          _
        $region16: #{tpu_custom_call.1} parent=11 // pred_fallthru
          _
        // Predicated region
        $region17: #{tpu_custom_call.1} parent=11 // pred_check
          %p476 = pneg %p96
        $region18: #{tpu_custom_call.1} parent=11 // pred_check_branch
          %478 = sbr.rel (%p476) target = $region20
        $region19: #{tpu_custom_call.1} parent=11 // pred_region
          _
        $region20: #{tpu_custom_call.1} parent=11 // pred_fallthru
          _
        // Predicated region
        $region21: #{tpu_custom_call.1} parent=11 // pred_check
          %p479 = pneg %p117
        $region22: #{tpu_custom_call.1} parent=11 // pred_check_branch
          %481 = sbr.rel (%p479) target = $region24
        $region23: #{tpu_custom_call.1} parent=11 // pred_region
          _
        $region24: #{tpu_custom_call.1} parent=11 // pred_fallthru
          _
        // Predicated region
        $region25: #{tpu_custom_call.1} parent=11 // pred_check
          %p482 = pneg %p138
        $region26: #{tpu_custom_call.1} parent=11 // pred_check_branch
          %484 = sbr.rel (%p482) target = $region28
        $region27: #{tpu_custom_call.1} parent=11 // pred_region
          _
        $region28: #{tpu_custom_call.1} parent=11 // pred_fallthru
          _
        // Predicated region
        $region29: #{tpu_custom_call.1} parent=11 // pred_check
          %p485 = pneg %p159
        $region30: #{tpu_custom_call.1} parent=11 // pred_check_branch
          %487 = sbr.rel (%p485) target = $region32
        $region31: #{tpu_custom_call.1} parent=11 // pred_region
          _
        $region32: #{tpu_custom_call.1} parent=11 // pred_fallthru
          _
        // Predicated region
        $region33: #{tpu_custom_call.1} parent=11 // pred_check
          %p488 = pneg %p180
        $region34: #{tpu_custom_call.1} parent=11 // pred_check_branch
          %490 = sbr.rel (%p488) target = $region36
        $region35: #{tpu_custom_call.1} parent=11 // pred_region
          _
        $region36: #{tpu_custom_call.1} parent=11 // pred_fallthru
          _
        // Predicated region
        $region37: #{tpu_custom_call.1} parent=11 // pred_check
          %p491 = pneg %p201
        $region38: #{tpu_custom_call.1} parent=11 // pred_check_branch
          %493 = sbr.rel (%p491) target = $region40
        $region39: #{tpu_custom_call.1} parent=11 // pred_region
          _
        $region40: #{tpu_custom_call.1} parent=11 // pred_fallthru
          _
        // Predicated region
        $region41: #{tpu_custom_call.1} parent=11 // pred_check
          %p494 = pneg %p222
        $region42: #{tpu_custom_call.1} parent=11 // pred_check_branch
          %496 = sbr.rel (%p494) target = $region44
        $region43: #{tpu_custom_call.1} parent=11 // pred_region
          _
        $region44: #{tpu_custom_call.1} parent=11 // pred_fallthru
          _
        // Predicated region
        $region45: #{tpu_custom_call.1} parent=11 // pred_check
          %p497 = pneg %p243
        $region46: #{tpu_custom_call.1} parent=11 // pred_check_branch
          %499 = sbr.rel (%p497) target = $region48
        $region47: #{tpu_custom_call.1} parent=11 // pred_region
          _
        $region48: #{tpu_custom_call.1} parent=11 // pred_fallthru
          _
        // Predicated region
        $region49: #{tpu_custom_call.1} parent=11 // pred_check
          %p500 = pneg %p264
        $region50: #{tpu_custom_call.1} parent=11 // pred_check_branch
          %502 = sbr.rel (%p500) target = $region52
        $region51: #{tpu_custom_call.1} parent=11 // pred_region
          _
        $region52: #{tpu_custom_call.1} parent=11 // pred_fallthru
          _
        // Predicated region
        $region53: #{tpu_custom_call.1} parent=11 // pred_check
          %p503 = pneg %p285
        $region54: #{tpu_custom_call.1} parent=11 // pred_check_branch
          %505 = sbr.rel (%p503) target = $region56
        $region55: #{tpu_custom_call.1} parent=11 // pred_region
          _
        $region56: #{tpu_custom_call.1} parent=11 // pred_fallthru
          _
        // Predicated region
        $region57: #{tpu_custom_call.1} parent=11 // pred_check
          %p506 = pneg %p306
        $region58: #{tpu_custom_call.1} parent=11 // pred_check_branch
          %508 = sbr.rel (%p506) target = $region60
        $region59: #{tpu_custom_call.1} parent=11 // pred_region
          _
        $region60: #{tpu_custom_call.1} parent=11 // pred_fallthru
          _
        // Predicated region
        $region61: #{tpu_custom_call.1} parent=11 // pred_check
          %p509 = pneg %p327
        $region62: #{tpu_custom_call.1} parent=11 // pred_check_branch
          %511 = sbr.rel (%p509) target = $region64
        $region63: #{tpu_custom_call.1} parent=11 // pred_region
          _
        $region64: #{tpu_custom_call.1} parent=11 // pred_fallthru
          _
        // Predicated region
        $region65: #{tpu_custom_call.1} parent=11 // pred_check
          %p512 = pneg %p348
        $region66: #{tpu_custom_call.1} parent=11 // pred_check_branch
          %514 = sbr.rel (%p512) target = $region68
        $region67: #{tpu_custom_call.1} parent=11 // pred_region
          _
        $region68: #{tpu_custom_call.1} parent=11 // pred_fallthru
          _
        // Predicated region
        $region69: #{tpu_custom_call.1} parent=11 // pred_check
          %p515 = pneg %p369
        $region70: #{tpu_custom_call.1} parent=11 // pred_check_branch
          %517 = sbr.rel (%p515) target = $region72
        $region71: #{tpu_custom_call.1} parent=11 // pred_region
          _
        $region72: #{tpu_custom_call.1} parent=11 // pred_fallthru
          _
        // Predicated region
        $region73: #{tpu_custom_call.1} parent=11 // pred_check
          %p518 = pneg %p390
        $region74: #{tpu_custom_call.1} parent=11 // pred_check_branch
          %520 = sbr.rel (%p518) target = $region76
        $region75: #{tpu_custom_call.1} parent=11 // pred_region
          _
        $region76: #{tpu_custom_call.1} parent=11 // pred_fallthru
          _
        // Predicated region
        $region77: #{tpu_custom_call.1} parent=11 // pred_check
          %p521 = pneg %p411
        $region78: #{tpu_custom_call.1} parent=11 // pred_check_branch
          %523 = sbr.rel (%p521) target = $region80
        $region79: #{tpu_custom_call.1} parent=11 // pred_region
          _
        $region80: #{tpu_custom_call.1} parent=11 // pred_fallthru
          _
        // Predicated region
        $region81: #{tpu_custom_call.1} parent=11 // pred_check
          %p524 = pneg %p432
        $region82: #{tpu_custom_call.1} parent=11 // pred_check_branch
          %526 = sbr.rel (%p524) target = $region84
        $region83: #{tpu_custom_call.1} parent=11 // pred_region
          _
        $region84: #{tpu_custom_call.1} parent=11 // pred_fallthru
          _
      $region12: #{tpu_custom_call.1} parent=5 // pred_fallthru
        _
      %p527 = scmp.lt.s32.totalorder %s28, 2
      // Predicated region
      $region85: #{tpu_custom_call.1} parent=5 // pred_check
        %p528 = pneg %p527
      $region86: #{tpu_custom_call.1} parent=5 // pred_check_branch
        %530 = sbr.rel (%p528) target = $region88
      $region87: #{tpu_custom_call.1} parent=5 // pred_region
        // Predicated region
        $region89: #{tpu_custom_call.1} parent=87 // pred_check
          %p531 = pneg %p48
        $region90: #{tpu_custom_call.1} parent=87 // pred_check_branch
          %533 = sbr.rel (%p531) target = $region92
        $region91: #{tpu_custom_call.1} parent=87 // pred_region
          %p534 = scmp.lt.s32.totalorder %s28, 1
          %s535 = scalar_select %p534, %s28, 1
          %s536 = smul.addr %s535, 2
          %s537 = smul.addr %s536, 8
          %s538 = scalar_lea.vmem %s0, %s537
        $region92: #{tpu_custom_call.1} parent=87 // pred_fallthru
          _
      $region88: #{tpu_custom_call.1} parent=5 // pred_fallthru
        _
      %p539 = scmp.le.s32.totalorder 1, %s28
      %p540 = scmp.lt.s32.totalorder %s28, 3
      %p541 = pnand %p539, %p540
      %p542 = pneg %p541
      // Predicated region
      $region93: #{tpu_custom_call.1} parent=5 // pred_check
        _
      $region94: #{tpu_custom_call.1} parent=5 // pred_check_branch
        %544 = sbr.rel (%p541) target = $region96
      $region95: #{tpu_custom_call.1} parent=5 // pred_region
        %s545 = ssub.s32 %s28, 1
        %p546 = scmp.lt.s32.totalorder %s33, 1
        %s547 = scalar_select %p546, %s33, 1
        %s548 = smul.addr %s547, 2
        %s549 = smul.addr %s548, 8
        %s550 = scalar_lea.vmem %s0, %s549
        %p551 = pneg %p54
        %p552 = pneg %p51
        %p553 = pneg %p75
        %p554 = pneg %p72
        %p555 = pneg %p96
        %p556 = pneg %p93
        %p557 = pneg %p117
        %p558 = pneg %p114
        %p559 = pneg %p138
        %p560 = pneg %p135
        %p561 = pneg %p159
        %p562 = pneg %p156
        %p563 = pneg %p180
        %p564 = pneg %p177
        %p565 = pneg %p201
        %p566 = pneg %p198
        %p567 = pneg %p222
        %p568 = pneg %p219
        %p569 = pneg %p243
        %p570 = pneg %p240
        %p571 = pneg %p264
        %p572 = pneg %p261
        %p573 = pneg %p285
        %p574 = pneg %p282
        %p575 = pneg %p306
        %p576 = pneg %p303
        %p577 = pneg %p327
        %p578 = pneg %p324
        %p579 = pneg %p348
        %p580 = pneg %p345
        %p581 = pneg %p369
        %p582 = pneg %p366
        %p583 = pneg %p390
        %p584 = pneg %p387
        %p585 = pneg %p411
        %p586 = pneg %p408
        %p587 = pneg %p432
        %p588 = pneg %p429
        %p589 = pneg %p458
        %p590 = pneg %p455
        %s591 = sand.u32 %s445, 1
        %s592 = scalar_lea.sflag [#allocation4], %s591
        %s593 = sand.u32 %s445, 1
        %s594 = smul.addr %s593, 16
        %s595 = scalar_lea.vmem [#allocation3], %s594
        %p596 = scmp.lt.s32.totalorder %s33, 1
        %s597 = scalar_select %p596, %s33, 1
        %s598 = smul.addr %s597, 2
        %s599 = smul.addr %s598, 8
        %s600 = scalar_lea.vmem %s0, %s599
        %v602 = vld [vmem:[%s600] sm:$0xff]
        %v603 = vld [vmem:[%s600 + $0x8] sm:$0xff]
        %604 = vxpose.xlu0.b32.start [1/16] %v602, 128
        %605 = vxpose.xlu0.b32.cont [2/16] %v603, 128
        %606 = vxpose.xlu0.b32.cont [3/16] 0.0, 128
        %607 = vxpose.xlu0.b32.cont [4/16] 0.0, 128
        %608 = vxpose.xlu0.b32.cont [5/16] 0.0, 128
        %609 = vxpose.xlu0.b32.cont [6/16] 0.0, 128
        %610 = vxpose.xlu0.b32.cont [7/16] 0.0, 128
        %611 = vxpose.xlu0.b32.cont [8/16] 0.0, 128
        %612 = vxpose.xlu0.b32.cont [9/16] 0.0, 128
        %613 = vxpose.xlu0.b32.cont [10/16] 0.0, 128
        %614 = vxpose.xlu0.b32.cont [11/16] 0.0, 128
        %615 = vxpose.xlu0.b32.cont [12/16] 0.0, 128
        %616 = vxpose.xlu0.b32.cont [13/16] 0.0, 128
        %617 = vxpose.xlu0.b32.cont [14/16] 0.0, 128
        %618 = vxpose.xlu0.b32.cont [15/16] 0.0, 128
        %619 = vxpose.xlu0.b32.end [16/16] 0.0, 128
        %v620 = vpop.trf.xlu0
        %v621 = vpop.trf.xlu0
        %v622 = vpop.trf.xlu0
        %v623 = vpop.trf.xlu0
        %v624 = vpop.trf.xlu0
        %v625 = vpop.trf.xlu0
        %v626 = vpop.trf.xlu0
        %v627 = vpop.trf.xlu0
        %v628 = vpop.trf.xlu0
        %v629 = vpop.trf.xlu0
        %v630 = vpop.trf.xlu0
        %v631 = vpop.trf.xlu0
        %v632 = vpop.trf.xlu0
        %v633 = vpop.trf.xlu0
        %v634 = vpop.trf.xlu0
        %v635 = vpop.trf.xlu0
        %v636 = vpack.c.bf16 %v621, %v620
        %v637 = vpack.c.bf16 %v623, %v622
        %v638 = vpack.c.bf16 %v625, %v624
        %v639 = vpack.c.bf16 %v627, %v626
        %v640 = vld [vmem:[%s1] sm:$0xf]
        %v641 = vld [vmem:[%s1 + $0x4] sm:$0xf]
        %v644 = vunpack.c.l.b16 %v640
        %v645 = vunpack.c.l.b16 %v641
        %v646 = vpack.c.b16 %v645, %v644
        %vm648 = vcmask 130048
        %v650 = vsel %vm648, %v636, 0
        %v653 = vsel %vm648, %v637, 0
        %v656 = vsel %vm648, %v638, 0
        %v659 = vsel %vm648, %v639, 0
        %661 = vmatprep.subr.bf16.mxu0 0
        %662 = vmatpush1.bf16.msra.mxu0 %v646
        %663 = vmatprep.subr.bf16.mxu0 0
        %664 = vmatpush1.bf16.msra.mxu0 0
        %665 = vmatprep.subr.bf16.mxu0 0
        %666 = vmatpush1.bf16.msra.mxu0 0
        %667 = vmatprep.subr.bf16.mxu0 0
        %668 = vmatpush1.bf16.msra.mxu0 0
        %669 = vmatprep.subr.bf16.mxu0 0
        %670 = vmatpush1.bf16.msra.mxu0 0
        %671 = vmatprep.subr.bf16.mxu0 0
        %672 = vmatpush1.bf16.msra.mxu0 0
        %673 = vmatprep.subr.bf16.mxu0 0
        %674 = vmatpush1.bf16.msra.mxu0 0
        %675 = vmatprep.subr.bf16.mxu0 0
        %676 = vmatpush1.bf16.msra.mxu0 0
        %677 = vmatprep.subr.bf16.mxu0 0
        %678 = vmatpush1.bf16.msra.mxu0 0
        %679 = vmatprep.subr.bf16.mxu0 0
        %680 = vmatpush1.bf16.msra.mxu0 0
        %681 = vmatprep.subr.bf16.mxu0 0
        %682 = vmatpush1.bf16.msra.mxu0 0
        %683 = vmatprep.subr.bf16.mxu0 0
        %684 = vmatpush1.bf16.msra.mxu0 0
        %685 = vmatprep.subr.bf16.mxu0 0
        %686 = vmatpush1.bf16.msra.mxu0 0
        %687 = vmatprep.subr.bf16.mxu0 0
        %688 = vmatpush1.bf16.msra.mxu0 0
        %689 = vmatprep.subr.bf16.mxu0 0
        %690 = vmatpush1.bf16.msra.mxu0 0
        %691 = vmatprep.subr.bf16.mxu0 0
        %692 = vmatpush1.bf16.msra.mxu0 0
        %693 = vmatprep.mubr.bf16.mxu0 0
        %694 = vmatmul.mubr.bf16.gmra.mrb[0].mxu0 %v650
        %v695 = vpop.f32.mrb[0].mxu0
        %v696 = vadd.f32 0.0, %v695
        %v697 = vpop.f32.mrb[0].mxu0
        %v698 = vpop.f32.mrb[0].mxu0
        %v699 = vadd.f32 0.0, %v698
        %v700 = vpop.f32.mrb[0].mxu0
        %701 = vmatprep.mubr.bf16.mxu0 0
        %702 = vmatmul.mubr.bf16.gmra.mrb[0].mxu0 %v653
        %v703 = vpop.f32.mrb[0].mxu0
        %v704 = vadd.f32 0.0, %v703
        %v705 = vpop.f32.mrb[0].mxu0
        %v706 = vpop.f32.mrb[0].mxu0
        %v707 = vadd.f32 0.0, %v706
        %v708 = vpop.f32.mrb[0].mxu0
        %709 = vmatprep.mubr.bf16.mxu0 0
        %710 = vmatmul.mubr.bf16.gmra.mrb[0].mxu0 %v656
        %v711 = vpop.f32.mrb[0].mxu0
        %v712 = vadd.f32 0.0, %v711
        %v713 = vpop.f32.mrb[0].mxu0
        %v714 = vpop.f32.mrb[0].mxu0
        %v715 = vadd.f32 0.0, %v714
        %v716 = vpop.f32.mrb[0].mxu0
        %717 = vmatprep.mubr.bf16.mxu0 0
        %718 = vmatmul.mubr.bf16.gmra.mrb[0].mxu0 %v659
        %v719 = vpop.f32.mrb[0].mxu0
        %v720 = vadd.f32 0.0, %v719
        %v721 = vpop.f32.mrb[0].mxu0
        %v722 = vpop.f32.mrb[0].mxu0
        %v723 = vadd.f32 0.0, %v722
        %v724 = vpop.f32.mrb[0].mxu0
        %725 = vdwg.mxu0
        %v726 = vld [vmem:[%s2] sm:$0x1]
        %v728 = vlaneseq
        %v729 = vshrl.u32 %v728, 7
        %v730 = vsub.s32 0, %v729
        %v731 = vrot.slane %v726, %v730
        %v733 = vmul.f32 %v696, %v731
        %v734 = vmul.f32 %v699, %v731
        %v735 = vmul.f32 %v704, %v731
        %v736 = vmul.f32 %v707, %v731
        %v737 = vmul.f32 %v712, %v731
        %v738 = vmul.f32 %v715, %v731
        %v739 = vmul.f32 %v720, %v731
        %v740 = vmul.f32 %v723, %v731
        %v741 = vld [vmem:[%s3] sm:$0x1]
        %v743 = vlaneseq
        %v744 = vshrl.u32 %v743, 7
        %v745 = vsub.s32 0, %v744
        %v746 = vrot.slane %v741, %v745
        %v748 = vadd.f32 %v733, %v746
        %v749 = vadd.f32 %v734, %v746
        %v750 = vadd.f32 %v735, %v746
        %v751 = vadd.f32 %v736, %v746
        %v752 = vadd.f32 %v737, %v746
        %v753 = vadd.f32 %v738, %v746
        %v754 = vadd.f32 %v739, %v746
        %v755 = vadd.f32 %v740, %v746
        %v756 = vmax.f32 %v748, 0.0
        %v757 = vmax.f32 %v749, 0.0
        %v758 = vmax.f32 %v750, 0.0
        %v759 = vmax.f32 %v751, 0.0
        %v760 = vmax.f32 %v752, 0.0
        %v761 = vmax.f32 %v753, 0.0
        %v762 = vmax.f32 %v754, 0.0
        %v763 = vmax.f32 %v755, 0.0
        %vm764 = vcmask 523264
        %765 = vst.msk [vmem:[#allocation2] sm:$0xff] %vm764, 0.0
        %766 = vst.msk [vmem:[#allocation2 + $0x8] sm:$0xff] %vm764, 0.0
        %767 = vst.msk [vmem:[#allocation2 + $0x10] sm:$0xff] %vm764, 0.0
        %768 = vst.msk [vmem:[#allocation2 + $0x18] sm:$0xff] %vm764, 0.0
        %769 = vst.msk [vmem:[#allocation2 + $0x20] sm:$0xff] %vm764, 0.0
        %770 = vst.msk [vmem:[#allocation2 + $0x28] sm:$0xff] %vm764, 0.0
        %771 = vst.msk [vmem:[#allocation2 + $0x30] sm:$0xff] %vm764, 0.0
        %772 = vst.msk [vmem:[#allocation2 + $0x38] sm:$0xff] %vm764, 0.0
        %773 = vst.msk [vmem:[#allocation2 + $0x40] sm:$0xff] %vm764, 0.0
        %774 = vst.msk [vmem:[#allocation2 + $0x48] sm:$0xff] %vm764, 0.0
        %775 = vst.msk [vmem:[#allocation2 + $0x50] sm:$0xff] %vm764, 0.0
        %776 = vst.msk [vmem:[#allocation2 + $0x58] sm:$0xff] %vm764, 0.0
        %777 = vst.msk [vmem:[#allocation2 + $0x60] sm:$0xff] %vm764, 0.0
        %778 = vst.msk [vmem:[#allocation2 + $0x68] sm:$0xff] %vm764, 0.0
        %779 = vst.msk [vmem:[#allocation2 + $0x70] sm:$0xff] %vm764, 0.0
        %780 = vst.msk [vmem:[#allocation2 + $0x78] sm:$0xff] %vm764, 0.0
        %781 = vst.msk [vmem:[#allocation2 + $0x80] sm:$0xff] %vm764, 0.0
        %782 = vst.msk [vmem:[#allocation2 + $0x88] sm:$0xff] %vm764, 0.0
        %783 = vst.msk [vmem:[#allocation2 + $0x90] sm:$0xff] %vm764, 0.0
        %784 = vst.msk [vmem:[#allocation2 + $0x98] sm:$0xff] %vm764, 0.0
        %785 = vst.msk [vmem:[#allocation2 + $0xa0] sm:$0xff] %vm764, 0.0
        %786 = vst.msk [vmem:[#allocation2 + $0xa8] sm:$0xff] %vm764, 0.0
        %787 = vst.msk [vmem:[#allocation2 + $0xb0] sm:$0xff] %vm764, 0.0
        %788 = vst.msk [vmem:[#allocation2 + $0xb8] sm:$0xff] %vm764, 0.0
        %789 = vst.msk [vmem:[#allocation2 + $0xc0] sm:$0xff] %vm764, 0.0
        %790 = vst.msk [vmem:[#allocation2 + $0xc8] sm:$0xff] %vm764, 0.0
        %791 = vst.msk [vmem:[#allocation2 + $0xd0] sm:$0xff] %vm764, 0.0
        %792 = vst.msk [vmem:[#allocation2 + $0xd8] sm:$0xff] %vm764, 0.0
        %793 = vst.msk [vmem:[#allocation2 + $0xe0] sm:$0xff] %vm764, 0.0
        %794 = vst.msk [vmem:[#allocation2 + $0xe8] sm:$0xff] %vm764, 0.0
        %795 = vst.msk [vmem:[#allocation2 + $0xf0] sm:$0xff] %vm764, 0.0
        %796 = vst.msk [vmem:[#allocation2 + $0xf8] sm:$0xff] %vm764, 0.0
        %s797 = scalar_lea.vmem [#allocation2], 64
        %798 = vst.msk [vmem:[%s797 + $0x4] sm:$0xff] %vm764, %v756
        %799 = vst.msk [vmem:[%s797 + $0x14] sm:$0xff] %vm764, %v757
        %800 = vst.msk [vmem:[%s797 + $0x24] sm:$0xff] %vm764, %v758
        %801 = vst.msk [vmem:[%s797 + $0x34] sm:$0xff] %vm764, %v759
        %802 = vst.msk [vmem:[%s797 + $0x44] sm:$0xff] %vm764, %v760
        %803 = vst.msk [vmem:[%s797 + $0x54] sm:$0xff] %vm764, %v761
        %804 = vst.msk [vmem:[%s797 + $0x64] sm:$0xff] %vm764, %v762
        %805 = vst.msk [vmem:[%s797 + $0x74] sm:$0xff] %vm764, %v763
        %v806 = vld [vmem:[#allocation2 + $0x3] sm:$0xff]
        %v807 = vld [vmem:[#allocation2 + $0x13] sm:$0xff]
        %v808 = vld [vmem:[#allocation2 + $0x23] sm:$0xff]
        %v809 = vld [vmem:[#allocation2 + $0x33] sm:$0xff]
        %v810 = vld [vmem:[#allocation2 + $0x43] sm:$0xff]
        %v811 = vld [vmem:[#allocation2 + $0x53] sm:$0xff]
        %v812 = vld [vmem:[#allocation2 + $0x63] sm:$0xff]
        %v813 = vld [vmem:[#allocation2 + $0x73] sm:$0xff]
        %v814 = vld [vmem:[#allocation2 + $0x83] sm:$0xff]
        %v815 = vld [vmem:[#allocation2 + $0x93] sm:$0xff]
        %v816 = vld [vmem:[#allocation2 + $0xa3] sm:$0xff]
        %v817 = vld [vmem:[#allocation2 + $0xb3] sm:$0xff]
        %v818 = vld [vmem:[#allocation2 + $0xc3] sm:$0xff]
        %v819 = vld [vmem:[#allocation2 + $0xd3] sm:$0xff]
        %v820 = vld [vmem:[#allocation2 + $0xe3] sm:$0xff]
        %v821 = vld [vmem:[#allocation2 + $0xf3] sm:$0xff]
        %v822 = vld [vmem:[%s4] sm:$0x1]
        %v823 = vlaneseq
        %v824 = vshrl.u32 %v823, 7
        %v825 = vsub.s32 0, %v824
        %v826 = vrot.slane %v822, %v825
        %v827 = vmul.f32 %v809, %v826
        %v828 = vmul.f32 %v810, %v826
        %v829 = vmul.f32 %v811, %v826
        %v830 = vmul.f32 %v812, %v826
        %v831 = vmul.f32 %v813, %v826
        %v832 = vmul.f32 %v814, %v826
        %v833 = vmul.f32 %v815, %v826
        %v834 = vmul.f32 %v816, %v826
        %v835 = vadd.f32 %v827, 0.0
        %v836 = vadd.f32 %v828, 0.0
        %v837 = vadd.f32 %v829, 0.0
        %v838 = vadd.f32 %v830, 0.0
        %v839 = vadd.f32 %v831, 0.0
        %v840 = vadd.f32 %v832, 0.0
        %v841 = vadd.f32 %v833, 0.0
        %v842 = vadd.f32 %v834, 0.0
        %v843 = vld [vmem:[%s4 + $0x3] sm:$0x1]
        %v844 = vlaneseq
        %v845 = vshrl.u32 %v844, 7
        %v846 = vsub.s32 0, %v845
        %v847 = vrot.slane %v843, %v846
        %v848 = vmul.f32 %v810, %v847
        %v849 = vmul.f32 %v811, %v847
        %v850 = vmul.f32 %v812, %v847
        %v851 = vmul.f32 %v813, %v847
        %v852 = vmul.f32 %v814, %v847
        %v853 = vmul.f32 %v815, %v847
        %v854 = vmul.f32 %v816, %v847
        %v855 = vmul.f32 %v817, %v847
        %v856 = vadd.f32 %v835, %v848
        %v857 = vadd.f32 %v836, %v849
        %v858 = vadd.f32 %v837, %v850
        %v859 = vadd.f32 %v838, %v851
        %v860 = vadd.f32 %v839, %v852
        %v861 = vadd.f32 %v840, %v853
        %v862 = vadd.f32 %v841, %v854
        %v863 = vadd.f32 %v842, %v855
        %v864 = vld [vmem:[%s4 + $0x6] sm:$0x1]
        %v865 = vlaneseq
        %v866 = vshrl.u32 %v865, 7
        %v867 = vsub.s32 0, %v866
        %v868 = vrot.slane %v864, %v867
        %v869 = vmul.f32 %v811, %v868
        %v870 = vmul.f32 %v812, %v868
        %v871 = vmul.f32 %v813, %v868
        %v872 = vmul.f32 %v814, %v868
        %v873 = vmul.f32 %v815, %v868
        %v874 = vmul.f32 %v816, %v868
        %v875 = vmul.f32 %v817, %v868
        %v876 = vmul.f32 %v818, %v868
        %v877 = vadd.f32 %v856, %v869
        %v878 = vadd.f32 %v857, %v870
        %v879 = vadd.f32 %v858, %v871
        %v880 = vadd.f32 %v859, %v872
        %v881 = vadd.f32 %v860, %v873
        %v882 = vadd.f32 %v861, %v874
        %v883 = vadd.f32 %v862, %v875
        %v884 = vadd.f32 %v863, %v876
        %v885 = vld [vmem:[#allocation2 + $0x4] sm:$0xff]
        %v886 = vld [vmem:[#allocation2 + $0x14] sm:$0xff]
        %v887 = vld [vmem:[#allocation2 + $0x24] sm:$0xff]
        %v888 = vld [vmem:[#allocation2 + $0x34] sm:$0xff]
        %v889 = vld [vmem:[#allocation2 + $0x44] sm:$0xff]
        %v890 = vld [vmem:[#allocation2 + $0x54] sm:$0xff]
        %v891 = vld [vmem:[#allocation2 + $0x64] sm:$0xff]
        %v892 = vld [vmem:[#allocation2 + $0x74] sm:$0xff]
        %v893 = vld [vmem:[#allocation2 + $0x84] sm:$0xff]
        %v894 = vld [vmem:[#allocation2 + $0x94] sm:$0xff]
        %v895 = vld [vmem:[#allocation2 + $0xa4] sm:$0xff]
        %v896 = vld [vmem:[#allocation2 + $0xb4] sm:$0xff]
        %v897 = vld [vmem:[#allocation2 + $0xc4] sm:$0xff]
        %v898 = vld [vmem:[#allocation2 + $0xd4] sm:$0xff]
        %v899 = vld [vmem:[#allocation2 + $0xe4] sm:$0xff]
        %v900 = vld [vmem:[#allocation2 + $0xf4] sm:$0xff]
        %v901 = vld [vmem:[%s4 + $0x1] sm:$0x1]
        %v902 = vlaneseq
        %v903 = vshrl.u32 %v902, 7
        %v904 = vsub.s32 0, %v903
        %v905 = vrot.slane %v901, %v904
        %v906 = vmul.f32 %v888, %v905
        %v907 = vmul.f32 %v889, %v905
        %v908 = vmul.f32 %v890, %v905
        %v909 = vmul.f32 %v891, %v905
        %v910 = vmul.f32 %v892, %v905
        %v911 = vmul.f32 %v893, %v905
        %v912 = vmul.f32 %v894, %v905
        %v913 = vmul.f32 %v895, %v905
        %v914 = vadd.f32 %v877, %v906
        %v915 = vadd.f32 %v878, %v907
        %v916 = vadd.f32 %v879, %v908
        %v917 = vadd.f32 %v880, %v909
        %v918 = vadd.f32 %v881, %v910
        %v919 = vadd.f32 %v882, %v911
        %v920 = vadd.f32 %v883, %v912
        %v921 = vadd.f32 %v884, %v913
        %v922 = vld [vmem:[%s4 + $0x4] sm:$0x1]
        %v923 = vlaneseq
        %v924 = vshrl.u32 %v923, 7
        %v925 = vsub.s32 0, %v924
        %v926 = vrot.slane %v922, %v925
        %v927 = vmul.f32 %v889, %v926
        %v928 = vmul.f32 %v890, %v926
        %v929 = vmul.f32 %v891, %v926
        %v930 = vmul.f32 %v892, %v926
        %v931 = vmul.f32 %v893, %v926
        %v932 = vmul.f32 %v894, %v926
        %v933 = vmul.f32 %v895, %v926
        %v934 = vmul.f32 %v896, %v926
        %v935 = vadd.f32 %v914, %v927
        %v936 = vadd.f32 %v915, %v928
        %v937 = vadd.f32 %v916, %v929
        %v938 = vadd.f32 %v917, %v930
        %v939 = vadd.f32 %v918, %v931
        %v940 = vadd.f32 %v919, %v932
        %v941 = vadd.f32 %v920, %v933
        %v942 = vadd.f32 %v921, %v934
        %v943 = vld [vmem:[%s4 + $0x7] sm:$0x1]
        %v944 = vlaneseq
        %v945 = vshrl.u32 %v944, 7
        %v946 = vsub.s32 0, %v945
        %v947 = vrot.slane %v943, %v946
        %v948 = vmul.f32 %v890, %v947
        %v949 = vmul.f32 %v891, %v947
        %v950 = vmul.f32 %v892, %v947
        %v951 = vmul.f32 %v893, %v947
        %v952 = vmul.f32 %v894, %v947
        %v953 = vmul.f32 %v895, %v947
        %v954 = vmul.f32 %v896, %v947
        %v955 = vmul.f32 %v897, %v947
        %v956 = vadd.f32 %v935, %v948
        %v957 = vadd.f32 %v936, %v949
        %v958 = vadd.f32 %v937, %v950
        %v959 = vadd.f32 %v938, %v951
        %v960 = vadd.f32 %v939, %v952
        %v961 = vadd.f32 %v940, %v953
        %v962 = vadd.f32 %v941, %v954
        %v963 = vadd.f32 %v942, %v955
        %v964 = vld [vmem:[#allocation2 + $0x5] sm:$0xff]
        %v965 = vld [vmem:[#allocation2 + $0x15] sm:$0xff]
        %v966 = vld [vmem:[#allocation2 + $0x25] sm:$0xff]
        %v967 = vld [vmem:[#allocation2 + $0x35] sm:$0xff]
        %v968 = vld [vmem:[#allocation2 + $0x45] sm:$0xff]
        %v969 = vld [vmem:[#allocation2 + $0x55] sm:$0xff]
        %v970 = vld [vmem:[#allocation2 + $0x65] sm:$0xff]
        %v971 = vld [vmem:[#allocation2 + $0x75] sm:$0xff]
        %v972 = vld [vmem:[#allocation2 + $0x85] sm:$0xff]
        %v973 = vld [vmem:[#allocation2 + $0x95] sm:$0xff]
        %v974 = vld [vmem:[#allocation2 + $0xa5] sm:$0xff]
        %v975 = vld [vmem:[#allocation2 + $0xb5] sm:$0xff]
        %v976 = vld [vmem:[#allocation2 + $0xc5] sm:$0xff]
        %v977 = vld [vmem:[#allocation2 + $0xd5] sm:$0xff]
        %v978 = vld [vmem:[#allocation2 + $0xe5] sm:$0xff]
        %v979 = vld [vmem:[#allocation2 + $0xf5] sm:$0xff]
        %v980 = vld [vmem:[%s4 + $0x2] sm:$0x1]
        %v981 = vlaneseq
        %v982 = vshrl.u32 %v981, 7
        %v983 = vsub.s32 0, %v982
        %v984 = vrot.slane %v980, %v983
        %v985 = vmul.f32 %v967, %v984
        %v986 = vmul.f32 %v968, %v984
        %v987 = vmul.f32 %v969, %v984
        %v988 = vmul.f32 %v970, %v984
        %v989 = vmul.f32 %v971, %v984
        %v990 = vmul.f32 %v972, %v984
        %v991 = vmul.f32 %v973, %v984
        %v992 = vmul.f32 %v974, %v984
        %v993 = vadd.f32 %v956, %v985
        %v994 = vadd.f32 %v957, %v986
        %v995 = vadd.f32 %v958, %v987
        %v996 = vadd.f32 %v959, %v988
        %v997 = vadd.f32 %v960, %v989
        %v998 = vadd.f32 %v961, %v990
        %v999 = vadd.f32 %v962, %v991
        %v1000 = vadd.f32 %v963, %v992
        %v1001 = vld [vmem:[%s4 + $0x5] sm:$0x1]
        %v1002 = vlaneseq
        %v1003 = vshrl.u32 %v1002, 7
        %v1004 = vsub.s32 0, %v1003
        %v1005 = vrot.slane %v1001, %v1004
        %v1006 = vmul.f32 %v968, %v1005
        %v1007 = vmul.f32 %v969, %v1005
        %v1008 = vmul.f32 %v970, %v1005
        %v1009 = vmul.f32 %v971, %v1005
        %v1010 = vmul.f32 %v972, %v1005
        %v1011 = vmul.f32 %v973, %v1005
        %v1012 = vmul.f32 %v974, %v1005
        %v1013 = vmul.f32 %v975, %v1005
        %v1014 = vadd.f32 %v993, %v1006
        %v1015 = vadd.f32 %v994, %v1007
        %v1016 = vadd.f32 %v995, %v1008
        %v1017 = vadd.f32 %v996, %v1009
        %v1018 = vadd.f32 %v997, %v1010
        %v1019 = vadd.f32 %v998, %v1011
        %v1020 = vadd.f32 %v999, %v1012
        %v1021 = vadd.f32 %v1000, %v1013
        %v1022 = vld [vmem:[%s4 + $0x8] sm:$0x1]
        %v1023 = vlaneseq
        %v1024 = vshrl.u32 %v1023, 7
        %v1025 = vsub.s32 0, %v1024
        %v1026 = vrot.slane %v1022, %v1025
        %v1027 = vmul.f32 %v969, %v1026
        %v1028 = vmul.f32 %v970, %v1026
        %v1029 = vmul.f32 %v971, %v1026
        %v1030 = vmul.f32 %v972, %v1026
        %v1031 = vmul.f32 %v973, %v1026
        %v1032 = vmul.f32 %v974, %v1026
        %v1033 = vmul.f32 %v975, %v1026
        %v1034 = vmul.f32 %v976, %v1026
        %v1035 = vadd.f32 %v1014, %v1027
        %v1036 = vadd.f32 %v1015, %v1028
        %v1037 = vadd.f32 %v1016, %v1029
        %v1038 = vadd.f32 %v1017, %v1030
        %v1039 = vadd.f32 %v1018, %v1031
        %v1040 = vadd.f32 %v1019, %v1032
        %v1041 = vadd.f32 %v1020, %v1033
        %v1042 = vadd.f32 %v1021, %v1034
        %v1043 = vld [vmem:[%s8] sm:$0x1]
        %v1044 = vlaneseq
        %v1045 = vshrl.u32 %v1044, 7
        %v1046 = vsub.s32 0, %v1045
        %v1047 = vrot.slane %v1043, %v1046
        %v1048 = vadd.f32 %v1035, %v1047
        %v1049 = vadd.f32 %v1036, %v1047
        %v1050 = vadd.f32 %v1037, %v1047
        %v1051 = vadd.f32 %v1038, %v1047
        %v1052 = vadd.f32 %v1039, %v1047
        %v1053 = vadd.f32 %v1040, %v1047
        %v1054 = vadd.f32 %v1041, %v1047
        %v1055 = vadd.f32 %v1042, %v1047
        %v1056 = vpack.c.bf16 %v1049, %v1048
        %v1057 = vpack.c.bf16 %v1051, %v1050
        %v1058 = vpack.c.bf16 %v1053, %v1052
        %v1059 = vpack.c.bf16 %v1055, %v1054
        %v1060 = vld [vmem:[%s9] sm:$0xf]
        %v1061 = vld [vmem:[%s9 + $0x4] sm:$0xf]
        %v1062 = vld [vmem:[%s9 + $0x8] sm:$0xf]
        %v1063 = vld [vmem:[%s9 + $0xc] sm:$0xf]
        %v1064 = vld [vmem:[%s9 + $0x10] sm:$0xf]
        %v1065 = vld [vmem:[%s9 + $0x14] sm:$0xf]
        %v1066 = vld [vmem:[%s9 + $0x18] sm:$0xf]
        %v1067 = vld [vmem:[%s9 + $0x1c] sm:$0xf]
        %v1068 = vld [vmem:[%s10] sm:$0x1]
        %v1069 = vlaneseq
        %v1070 = vshrl.u32 %v1069, 7
        %v1071 = vsub.s32 0, %v1070
        %v1072 = vrot.slane %v1068, %v1071
        %v1081 = vunpack.c.l.b16 %v1060
        %v1082 = vunpack.c.l.b16 %v1061
        %v1083 = vunpack.c.l.b16 %v1062
        %v1084 = vunpack.c.l.b16 %v1063
        %v1085 = vunpack.c.l.b16 %v1064
        %v1086 = vunpack.c.l.b16 %v1065
        %v1087 = vunpack.c.l.b16 %v1066
        %v1088 = vunpack.c.l.b16 %v1067
        %v1089 = vpack.c.b16 %v1082, %v1081
        %v1090 = vpack.c.b16 %v1084, %v1083
        %v1091 = vpack.c.b16 %v1086, %v1085
        %v1092 = vpack.c.b16 %v1088, %v1087
        %v1098 = vsel %vm764, %v1056, 0
        %v1101 = vsel %vm764, %v1057, 0
        %v1104 = vsel %vm764, %v1058, 0
        %v1107 = vsel %vm764, %v1059, 0
        %1109 = vmatprep.subr.bf16.mxu0 0
        %1110 = vmatpush1.bf16.msra.mxu0 %v1089
        %1111 = vmatprep.subr.bf16.mxu0 0
        %1112 = vmatpush1.bf16.msra.mxu0 %v1090
        %1113 = vmatprep.subr.bf16.mxu0 0
        %1114 = vmatpush1.bf16.msra.mxu0 %v1091
        %1115 = vmatprep.subr.bf16.mxu0 0
        %1116 = vmatpush1.bf16.msra.mxu0 %v1092
        %1117 = vmatprep.subr.bf16.mxu0 0
        %1118 = vmatpush1.bf16.msra.mxu0 0
        %1119 = vmatprep.subr.bf16.mxu0 0
        %1120 = vmatpush1.bf16.msra.mxu0 0
        %1121 = vmatprep.subr.bf16.mxu0 0
        %1122 = vmatpush1.bf16.msra.mxu0 0
        %1123 = vmatprep.subr.bf16.mxu0 0
        %1124 = vmatpush1.bf16.msra.mxu0 0
        %1125 = vmatprep.subr.bf16.mxu0 0
        %1126 = vmatpush1.bf16.msra.mxu0 0
        %1127 = vmatprep.subr.bf16.mxu0 0
        %1128 = vmatpush1.bf16.msra.mxu0 0
        %1129 = vmatprep.subr.bf16.mxu0 0
        %1130 = vmatpush1.bf16.msra.mxu0 0
        %1131 = vmatprep.subr.bf16.mxu0 0
        %1132 = vmatpush1.bf16.msra.mxu0 0
        %1133 = vmatprep.subr.bf16.mxu0 0
        %1134 = vmatpush1.bf16.msra.mxu0 0
        %1135 = vmatprep.subr.bf16.mxu0 0
        %1136 = vmatpush1.bf16.msra.mxu0 0
        %1137 = vmatprep.subr.bf16.mxu0 0
        %1138 = vmatpush1.bf16.msra.mxu0 0
        %1139 = vmatprep.subr.bf16.mxu0 0
        %1140 = vmatpush1.bf16.msra.mxu0 0
        %1141 = vmatprep.mubr.bf16.mxu0 0
        %1142 = vmatmul.mubr.bf16.gmra.mrb[0].mxu0 %v1098
        %v1143 = vpop.f32.mrb[0].mxu0
        %v1144 = vadd.f32 %v1072, %v1143
        %v1145 = vpop.f32.mrb[0].mxu0
        %v1146 = vpop.f32.mrb[0].mxu0
        %v1147 = vadd.f32 %v1072, %v1146
        %v1148 = vpop.f32.mrb[0].mxu0
        %1149 = vmatprep.mubr.bf16.mxu0 0
        %1150 = vmatmul.mubr.bf16.gmra.mrb[0].mxu0 %v1101
        %v1151 = vpop.f32.mrb[0].mxu0
        %v1152 = vadd.f32 %v1072, %v1151
        %v1153 = vpop.f32.mrb[0].mxu0
        %v1154 = vpop.f32.mrb[0].mxu0
        %v1155 = vadd.f32 %v1072, %v1154
        %v1156 = vpop.f32.mrb[0].mxu0
        %1157 = vmatprep.mubr.bf16.mxu0 0
        %1158 = vmatmul.mubr.bf16.gmra.mrb[0].mxu0 %v1104
        %v1159 = vpop.f32.mrb[0].mxu0
        %v1160 = vadd.f32 %v1072, %v1159
        %v1161 = vpop.f32.mrb[0].mxu0
        %v1162 = vpop.f32.mrb[0].mxu0
        %v1163 = vadd.f32 %v1072, %v1162
        %v1164 = vpop.f32.mrb[0].mxu0
        %1165 = vmatprep.mubr.bf16.mxu0 0
        %1166 = vmatmul.mubr.bf16.gmra.mrb[0].mxu0 %v1107
        %v1167 = vpop.f32.mrb[0].mxu0
        %v1168 = vadd.f32 %v1072, %v1167
        %v1169 = vpop.f32.mrb[0].mxu0
        %v1170 = vpop.f32.mrb[0].mxu0
        %v1171 = vadd.f32 %v1072, %v1170
        %v1172 = vpop.f32.mrb[0].mxu0
        %1173 = vdwg.mxu0
        %v1174 = vsel %vm648, %v1144, 0.0
        %v1175 = vsel %vm648, %v1147, 0.0
        %v1176 = vadd.f32 %v1174, %v1175
        %v1177 = vsel %vm648, %v1152, 0.0
        %v1178 = vadd.f32 %v1176, %v1177
        %v1179 = vsel %vm648, %v1155, 0.0
        %v1180 = vadd.f32 %v1178, %v1179
        %v1181 = vsel %vm648, %v1160, 0.0
        %v1182 = vadd.f32 %v1180, %v1181
        %v1183 = vsel %vm648, %v1163, 0.0
        %v1184 = vadd.f32 %v1182, %v1183
        %v1185 = vsel %vm648, %v1168, 0.0
        %v1186 = vadd.f32 %v1184, %v1185
        %v1187 = vsel %vm648, %v1171, 0.0
        %v1188 = vadd.f32 %v1186, %v1187
        %v1189 = vrot.slane %v1188, 4
        %v1190 = vadd.f32 %v1188, %v1189
        %v1191 = vrot.slane %v1190, 2
        %v1192 = vadd.f32 %v1190, %v1191
        %v1193 = vrot.slane %v1192, 1
        %v1194 = vadd.f32 %v1192, %v1193
        %v1195 = vmul.f32 %v1194, 0.015625
        %v1196 = vld [vmem:[#allocation2 + $0x2] sm:$0xff]
        %v1197 = vld [vmem:[#allocation2 + $0x12] sm:$0xff]
        %v1198 = vld [vmem:[#allocation2 + $0x22] sm:$0xff]
        %v1199 = vld [vmem:[#allocation2 + $0x32] sm:$0xff]
        %v1200 = vld [vmem:[#allocation2 + $0x42] sm:$0xff]
        %v1201 = vld [vmem:[#allocation2 + $0x52] sm:$0xff]
        %v1202 = vld [vmem:[#allocation2 + $0x62] sm:$0xff]
        %v1203 = vld [vmem:[#allocation2 + $0x72] sm:$0xff]
        %v1204 = vld [vmem:[#allocation2 + $0x82] sm:$0xff]
        %v1205 = vld [vmem:[#allocation2 + $0x92] sm:$0xff]
        %v1206 = vld [vmem:[#allocation2 + $0xa2] sm:$0xff]
        %v1207 = vld [vmem:[#allocation2 + $0xb2] sm:$0xff]
        %v1208 = vld [vmem:[#allocation2 + $0xc2] sm:$0xff]
        %v1209 = vld [vmem:[#allocation2 + $0xd2] sm:$0xff]
        %v1210 = vld [vmem:[#allocation2 + $0xe2] sm:$0xff]
        %v1211 = vld [vmem:[#allocation2 + $0xf2] sm:$0xff]
        %v1212 = vld [vmem:[%s5] sm:$0x1]
        %v1213 = vlaneseq
        %v1214 = vshrl.u32 %v1213, 7
        %v1215 = vsub.s32 0, %v1214
        %v1216 = vrot.slane %v1212, %v1215
        %v1217 = vmul.f32 %v1198, %v1216
        %v1218 = vmul.f32 %v1199, %v1216
        %v1219 = vmul.f32 %v1200, %v1216
        %v1220 = vmul.f32 %v1201, %v1216
        %v1221 = vmul.f32 %v1202, %v1216
        %v1222 = vmul.f32 %v1203, %v1216
        %v1223 = vmul.f32 %v1204, %v1216
        %v1224 = vmul.f32 %v1205, %v1216
        %v1225 = vadd.f32 %v1217, 0.0
        %v1226 = vadd.f32 %v1218, 0.0
        %v1227 = vadd.f32 %v1219, 0.0
        %v1228 = vadd.f32 %v1220, 0.0
        %v1229 = vadd.f32 %v1221, 0.0
        %v1230 = vadd.f32 %v1222, 0.0
        %v1231 = vadd.f32 %v1223, 0.0
        %v1232 = vadd.f32 %v1224, 0.0
        %v1233 = vld [vmem:[%s5 + $0x5] sm:$0x1]
        %v1234 = vlaneseq
        %v1235 = vshrl.u32 %v1234, 7
        %v1236 = vsub.s32 0, %v1235
        %v1237 = vrot.slane %v1233, %v1236
        %v1238 = vmul.f32 %v1199, %v1237
        %v1239 = vmul.f32 %v1200, %v1237
        %v1240 = vmul.f32 %v1201, %v1237
        %v1241 = vmul.f32 %v1202, %v1237
        %v1242 = vmul.f32 %v1203, %v1237
        %v1243 = vmul.f32 %v1204, %v1237
        %v1244 = vmul.f32 %v1205, %v1237
        %v1245 = vmul.f32 %v1206, %v1237
        %v1246 = vadd.f32 %v1225, %v1238
        %v1247 = vadd.f32 %v1226, %v1239
        %v1248 = vadd.f32 %v1227, %v1240
        %v1249 = vadd.f32 %v1228, %v1241
        %v1250 = vadd.f32 %v1229, %v1242
        %v1251 = vadd.f32 %v1230, %v1243
        %v1252 = vadd.f32 %v1231, %v1244
        %v1253 = vadd.f32 %v1232, %v1245
        %v1254 = vld [vmem:[%s5 + $0xa] sm:$0x1]
        %v1255 = vlaneseq
        %v1256 = vshrl.u32 %v1255, 7
        %v1257 = vsub.s32 0, %v1256
        %v1258 = vrot.slane %v1254, %v1257
        %v1259 = vmul.f32 %v1200, %v1258
        %v1260 = vmul.f32 %v1201, %v1258
        %v1261 = vmul.f32 %v1202, %v1258
        %v1262 = vmul.f32 %v1203, %v1258
        %v1263 = vmul.f32 %v1204, %v1258
        %v1264 = vmul.f32 %v1205, %v1258
        %v1265 = vmul.f32 %v1206, %v1258
        %v1266 = vmul.f32 %v1207, %v1258
        %v1267 = vadd.f32 %v1246, %v1259
        %v1268 = vadd.f32 %v1247, %v1260
        %v1269 = vadd.f32 %v1248, %v1261
        %v1270 = vadd.f32 %v1249, %v1262
        %v1271 = vadd.f32 %v1250, %v1263
        %v1272 = vadd.f32 %v1251, %v1264
        %v1273 = vadd.f32 %v1252, %v1265
        %v1274 = vadd.f32 %v1253, %v1266
        %v1275 = vld [vmem:[%s5 + $0xf] sm:$0x1]
        %v1276 = vlaneseq
        %v1277 = vshrl.u32 %v1276, 7
        %v1278 = vsub.s32 0, %v1277
        %v1279 = vrot.slane %v1275, %v1278
        %v1280 = vmul.f32 %v1201, %v1279
        %v1281 = vmul.f32 %v1202, %v1279
        %v1282 = vmul.f32 %v1203, %v1279
        %v1283 = vmul.f32 %v1204, %v1279
        %v1284 = vmul.f32 %v1205, %v1279
        %v1285 = vmul.f32 %v1206, %v1279
        %v1286 = vmul.f32 %v1207, %v1279
        %v1287 = vmul.f32 %v1208, %v1279
        %v1288 = vadd.f32 %v1267, %v1280
        %v1289 = vadd.f32 %v1268, %v1281
        %v1290 = vadd.f32 %v1269, %v1282
        %v1291 = vadd.f32 %v1270, %v1283
        %v1292 = vadd.f32 %v1271, %v1284
        %v1293 = vadd.f32 %v1272, %v1285
        %v1294 = vadd.f32 %v1273, %v1286
        %v1295 = vadd.f32 %v1274, %v1287
        %v1296 = vld [vmem:[%s5 + $0x14] sm:$0x1]
        %v1297 = vlaneseq
        %v1298 = vshrl.u32 %v1297, 7
        %v1299 = vsub.s32 0, %v1298
        %v1300 = vrot.slane %v1296, %v1299
        %v1301 = vmul.f32 %v1202, %v1300
        %v1302 = vmul.f32 %v1203, %v1300
        %v1303 = vmul.f32 %v1204, %v1300
        %v1304 = vmul.f32 %v1205, %v1300
        %v1305 = vmul.f32 %v1206, %v1300
        %v1306 = vmul.f32 %v1207, %v1300
        %v1307 = vmul.f32 %v1208, %v1300
        %v1308 = vmul.f32 %v1209, %v1300
        %v1309 = vadd.f32 %v1288, %v1301
        %v1310 = vadd.f32 %v1289, %v1302
        %v1311 = vadd.f32 %v1290, %v1303
        %v1312 = vadd.f32 %v1291, %v1304
        %v1313 = vadd.f32 %v1292, %v1305
        %v1314 = vadd.f32 %v1293, %v1306
        %v1315 = vadd.f32 %v1294, %v1307
        %v1316 = vadd.f32 %v1295, %v1308
        %v1317 = vld [vmem:[%s5 + $0x1] sm:$0x1]
        %v1318 = vlaneseq
        %v1319 = vshrl.u32 %v1318, 7
        %v1320 = vsub.s32 0, %v1319
        %v1321 = vrot.slane %v1317, %v1320
        %v1322 = vmul.f32 %v808, %v1321
        %v1323 = vmul.f32 %v809, %v1321
        %v1324 = vmul.f32 %v810, %v1321
        %v1325 = vmul.f32 %v811, %v1321
        %v1326 = vmul.f32 %v812, %v1321
        %v1327 = vmul.f32 %v813, %v1321
        %v1328 = vmul.f32 %v814, %v1321
        %v1329 = vmul.f32 %v815, %v1321
        %v1330 = vadd.f32 %v1309, %v1322
        %v1331 = vadd.f32 %v1310, %v1323
        %v1332 = vadd.f32 %v1311, %v1324
        %v1333 = vadd.f32 %v1312, %v1325
        %v1334 = vadd.f32 %v1313, %v1326
        %v1335 = vadd.f32 %v1314, %v1327
        %v1336 = vadd.f32 %v1315, %v1328
        %v1337 = vadd.f32 %v1316, %v1329
        %v1338 = vld [vmem:[%s5 + $0x6] sm:$0x1]
        %v1339 = vlaneseq
        %v1340 = vshrl.u32 %v1339, 7
        %v1341 = vsub.s32 0, %v1340
        %v1342 = vrot.slane %v1338, %v1341
        %v1343 = vmul.f32 %v809, %v1342
        %v1344 = vmul.f32 %v810, %v1342
        %v1345 = vmul.f32 %v811, %v1342
        %v1346 = vmul.f32 %v812, %v1342
        %v1347 = vmul.f32 %v813, %v1342
        %v1348 = vmul.f32 %v814, %v1342
        %v1349 = vmul.f32 %v815, %v1342
        %v1350 = vmul.f32 %v816, %v1342
        %v1351 = vadd.f32 %v1330, %v1343
        %v1352 = vadd.f32 %v1331, %v1344
        %v1353 = vadd.f32 %v1332, %v1345
        %v1354 = vadd.f32 %v1333, %v1346
        %v1355 = vadd.f32 %v1334, %v1347
        %v1356 = vadd.f32 %v1335, %v1348
        %v1357 = vadd.f32 %v1336, %v1349
        %v1358 = vadd.f32 %v1337, %v1350
        %v1359 = vld [vmem:[%s5 + $0xb] sm:$0x1]
        %v1360 = vlaneseq
        %v1361 = vshrl.u32 %v1360, 7
        %v1362 = vsub.s32 0, %v1361
        %v1363 = vrot.slane %v1359, %v1362
        %v1364 = vmul.f32 %v810, %v1363
        %v1365 = vmul.f32 %v811, %v1363
        %v1366 = vmul.f32 %v812, %v1363
        %v1367 = vmul.f32 %v813, %v1363
        %v1368 = vmul.f32 %v814, %v1363
        %v1369 = vmul.f32 %v815, %v1363
        %v1370 = vmul.f32 %v816, %v1363
        %v1371 = vmul.f32 %v817, %v1363
        %v1372 = vadd.f32 %v1351, %v1364
        %v1373 = vadd.f32 %v1352, %v1365
        %v1374 = vadd.f32 %v1353, %v1366
        %v1375 = vadd.f32 %v1354, %v1367
        %v1376 = vadd.f32 %v1355, %v1368
        %v1377 = vadd.f32 %v1356, %v1369
        %v1378 = vadd.f32 %v1357, %v1370
        %v1379 = vadd.f32 %v1358, %v1371
        %v1380 = vld [vmem:[%s5 + $0x10] sm:$0x1]
        %v1381 = vlaneseq
        %v1382 = vshrl.u32 %v1381, 7
        %v1383 = vsub.s32 0, %v1382
        %v1384 = vrot.slane %v1380, %v1383
        %v1385 = vmul.f32 %v811, %v1384
        %v1386 = vmul.f32 %v812, %v1384
        %v1387 = vmul.f32 %v813, %v1384
        %v1388 = vmul.f32 %v814, %v1384
        %v1389 = vmul.f32 %v815, %v1384
        %v1390 = vmul.f32 %v816, %v1384
        %v1391 = vmul.f32 %v817, %v1384
        %v1392 = vmul.f32 %v818, %v1384
        %v1393 = vadd.f32 %v1372, %v1385
        %v1394 = vadd.f32 %v1373, %v1386
        %v1395 = vadd.f32 %v1374, %v1387
        %v1396 = vadd.f32 %v1375, %v1388
        %v1397 = vadd.f32 %v1376, %v1389
        %v1398 = vadd.f32 %v1377, %v1390
        %v1399 = vadd.f32 %v1378, %v1391
        %v1400 = vadd.f32 %v1379, %v1392
        %v1401 = vld [vmem:[%s5 + $0x15] sm:$0x1]
        %v1402 = vlaneseq
        %v1403 = vshrl.u32 %v1402, 7
        %v1404 = vsub.s32 0, %v1403
        %v1405 = vrot.slane %v1401, %v1404
        %v1406 = vmul.f32 %v812, %v1405
        %v1407 = vmul.f32 %v813, %v1405
        %v1408 = vmul.f32 %v814, %v1405
        %v1409 = vmul.f32 %v815, %v1405
        %v1410 = vmul.f32 %v816, %v1405
        %v1411 = vmul.f32 %v817, %v1405
        %v1412 = vmul.f32 %v818, %v1405
        %v1413 = vmul.f32 %v819, %v1405
        %v1414 = vadd.f32 %v1393, %v1406
        %v1415 = vadd.f32 %v1394, %v1407
        %v1416 = vadd.f32 %v1395, %v1408
        %v1417 = vadd.f32 %v1396, %v1409
        %v1418 = vadd.f32 %v1397, %v1410
        %v1419 = vadd.f32 %v1398, %v1411
        %v1420 = vadd.f32 %v1399, %v1412
        %v1421 = vadd.f32 %v1400, %v1413
        %v1422 = vld [vmem:[%s5 + $0x2] sm:$0x1]
        %v1423 = vlaneseq
        %v1424 = vshrl.u32 %v1423, 7
        %v1425 = vsub.s32 0, %v1424
        %v1426 = vrot.slane %v1422, %v1425
        %v1427 = vmul.f32 %v887, %v1426
        %v1428 = vmul.f32 %v888, %v1426
        %v1429 = vmul.f32 %v889, %v1426
        %v1430 = vmul.f32 %v890, %v1426
        %v1431 = vmul.f32 %v891, %v1426
        %v1432 = vmul.f32 %v892, %v1426
        %v1433 = vmul.f32 %v893, %v1426
        %v1434 = vmul.f32 %v894, %v1426
        %v1435 = vadd.f32 %v1414, %v1427
        %v1436 = vadd.f32 %v1415, %v1428
        %v1437 = vadd.f32 %v1416, %v1429
        %v1438 = vadd.f32 %v1417, %v1430
        %v1439 = vadd.f32 %v1418, %v1431
        %v1440 = vadd.f32 %v1419, %v1432
        %v1441 = vadd.f32 %v1420, %v1433
        %v1442 = vadd.f32 %v1421, %v1434
        %v1443 = vld [vmem:[%s5 + $0x7] sm:$0x1]
        %v1444 = vlaneseq
        %v1445 = vshrl.u32 %v1444, 7
        %v1446 = vsub.s32 0, %v1445
        %v1447 = vrot.slane %v1443, %v1446
        %v1448 = vmul.f32 %v888, %v1447
        %v1449 = vmul.f32 %v889, %v1447
        %v1450 = vmul.f32 %v890, %v1447
        %v1451 = vmul.f32 %v891, %v1447
        %v1452 = vmul.f32 %v892, %v1447
        %v1453 = vmul.f32 %v893, %v1447
        %v1454 = vmul.f32 %v894, %v1447
        %v1455 = vmul.f32 %v895, %v1447
        %v1456 = vadd.f32 %v1435, %v1448
        %v1457 = vadd.f32 %v1436, %v1449
        %v1458 = vadd.f32 %v1437, %v1450
        %v1459 = vadd.f32 %v1438, %v1451
        %v1460 = vadd.f32 %v1439, %v1452
        %v1461 = vadd.f32 %v1440, %v1453
        %v1462 = vadd.f32 %v1441, %v1454
        %v1463 = vadd.f32 %v1442, %v1455
        %v1464 = vld [vmem:[%s5 + $0xc] sm:$0x1]
        %v1465 = vlaneseq
        %v1466 = vshrl.u32 %v1465, 7
        %v1467 = vsub.s32 0, %v1466
        %v1468 = vrot.slane %v1464, %v1467
        %v1469 = vmul.f32 %v889, %v1468
        %v1470 = vmul.f32 %v890, %v1468
        %v1471 = vmul.f32 %v891, %v1468
        %v1472 = vmul.f32 %v892, %v1468
        %v1473 = vmul.f32 %v893, %v1468
        %v1474 = vmul.f32 %v894, %v1468
        %v1475 = vmul.f32 %v895, %v1468
        %v1476 = vmul.f32 %v896, %v1468
        %v1477 = vadd.f32 %v1456, %v1469
        %v1478 = vadd.f32 %v1457, %v1470
        %v1479 = vadd.f32 %v1458, %v1471
        %v1480 = vadd.f32 %v1459, %v1472
        %v1481 = vadd.f32 %v1460, %v1473
        %v1482 = vadd.f32 %v1461, %v1474
        %v1483 = vadd.f32 %v1462, %v1475
        %v1484 = vadd.f32 %v1463, %v1476
        %v1485 = vld [vmem:[%s5 + $0x11] sm:$0x1]
        %v1486 = vlaneseq
        %v1487 = vshrl.u32 %v1486, 7
        %v1488 = vsub.s32 0, %v1487
        %v1489 = vrot.slane %v1485, %v1488
        %v1490 = vmul.f32 %v890, %v1489
        %v1491 = vmul.f32 %v891, %v1489
        %v1492 = vmul.f32 %v892, %v1489
        %v1493 = vmul.f32 %v893, %v1489
        %v1494 = vmul.f32 %v894, %v1489
        %v1495 = vmul.f32 %v895, %v1489
        %v1496 = vmul.f32 %v896, %v1489
        %v1497 = vmul.f32 %v897, %v1489
        %v1498 = vadd.f32 %v1477, %v1490
        %v1499 = vadd.f32 %v1478, %v1491
        %v1500 = vadd.f32 %v1479, %v1492
        %v1501 = vadd.f32 %v1480, %v1493
        %v1502 = vadd.f32 %v1481, %v1494
        %v1503 = vadd.f32 %v1482, %v1495
        %v1504 = vadd.f32 %v1483, %v1496
        %v1505 = vadd.f32 %v1484, %v1497
        %v1506 = vld [vmem:[%s5 + $0x16] sm:$0x1]
        %v1507 = vlaneseq
        %v1508 = vshrl.u32 %v1507, 7
        %v1509 = vsub.s32 0, %v1508
        %v1510 = vrot.slane %v1506, %v1509
        %v1511 = vmul.f32 %v891, %v1510
        %v1512 = vmul.f32 %v892, %v1510
        %v1513 = vmul.f32 %v893, %v1510
        %v1514 = vmul.f32 %v894, %v1510
        %v1515 = vmul.f32 %v895, %v1510
        %v1516 = vmul.f32 %v896, %v1510
        %v1517 = vmul.f32 %v897, %v1510
        %v1518 = vmul.f32 %v898, %v1510
        %v1519 = vadd.f32 %v1498, %v1511
        %v1520 = vadd.f32 %v1499, %v1512
        %v1521 = vadd.f32 %v1500, %v1513
        %v1522 = vadd.f32 %v1501, %v1514
        %v1523 = vadd.f32 %v1502, %v1515
        %v1524 = vadd.f32 %v1503, %v1516
        %v1525 = vadd.f32 %v1504, %v1517
        %v1526 = vadd.f32 %v1505, %v1518
        %v1527 = vld [vmem:[%s5 + $0x3] sm:$0x1]
        %v1528 = vlaneseq
        %v1529 = vshrl.u32 %v1528, 7
        %v1530 = vsub.s32 0, %v1529
        %v1531 = vrot.slane %v1527, %v1530
        %v1532 = vmul.f32 %v966, %v1531
        %v1533 = vmul.f32 %v967, %v1531
        %v1534 = vmul.f32 %v968, %v1531
        %v1535 = vmul.f32 %v969, %v1531
        %v1536 = vmul.f32 %v970, %v1531
        %v1537 = vmul.f32 %v971, %v1531
        %v1538 = vmul.f32 %v972, %v1531
        %v1539 = vmul.f32 %v973, %v1531
        %v1540 = vadd.f32 %v1519, %v1532
        %v1541 = vadd.f32 %v1520, %v1533
        %v1542 = vadd.f32 %v1521, %v1534
        %v1543 = vadd.f32 %v1522, %v1535
        %v1544 = vadd.f32 %v1523, %v1536
        %v1545 = vadd.f32 %v1524, %v1537
        %v1546 = vadd.f32 %v1525, %v1538
        %v1547 = vadd.f32 %v1526, %v1539
        %v1548 = vld [vmem:[%s5 + $0x8] sm:$0x1]
        %v1549 = vlaneseq
        %v1550 = vshrl.u32 %v1549, 7
        %v1551 = vsub.s32 0, %v1550
        %v1552 = vrot.slane %v1548, %v1551
        %v1553 = vmul.f32 %v967, %v1552
        %v1554 = vmul.f32 %v968, %v1552
        %v1555 = vmul.f32 %v969, %v1552
        %v1556 = vmul.f32 %v970, %v1552
        %v1557 = vmul.f32 %v971, %v1552
        %v1558 = vmul.f32 %v972, %v1552
        %v1559 = vmul.f32 %v973, %v1552
        %v1560 = vmul.f32 %v974, %v1552
        %v1561 = vadd.f32 %v1540, %v1553
        %v1562 = vadd.f32 %v1541, %v1554
        %v1563 = vadd.f32 %v1542, %v1555
        %v1564 = vadd.f32 %v1543, %v1556
        %v1565 = vadd.f32 %v1544, %v1557
        %v1566 = vadd.f32 %v1545, %v1558
        %v1567 = vadd.f32 %v1546, %v1559
        %v1568 = vadd.f32 %v1547, %v1560
        %v1569 = vld [vmem:[%s5 + $0xd] sm:$0x1]
        %v1570 = vlaneseq
        %v1571 = vshrl.u32 %v1570, 7
        %v1572 = vsub.s32 0, %v1571
        %v1573 = vrot.slane %v1569, %v1572
        %v1574 = vmul.f32 %v968, %v1573
        %v1575 = vmul.f32 %v969, %v1573
        %v1576 = vmul.f32 %v970, %v1573
        %v1577 = vmul.f32 %v971, %v1573
        %v1578 = vmul.f32 %v972, %v1573
        %v1579 = vmul.f32 %v973, %v1573
        %v1580 = vmul.f32 %v974, %v1573
        %v1581 = vmul.f32 %v975, %v1573
        %v1582 = vadd.f32 %v1561, %v1574
        %v1583 = vadd.f32 %v1562, %v1575
        %v1584 = vadd.f32 %v1563, %v1576
        %v1585 = vadd.f32 %v1564, %v1577
        %v1586 = vadd.f32 %v1565, %v1578
        %v1587 = vadd.f32 %v1566, %v1579
        %v1588 = vadd.f32 %v1567, %v1580
        %v1589 = vadd.f32 %v1568, %v1581
        %v1590 = vld [vmem:[%s5 + $0x12] sm:$0x1]
        %v1591 = vlaneseq
        %v1592 = vshrl.u32 %v1591, 7
        %v1593 = vsub.s32 0, %v1592
        %v1594 = vrot.slane %v1590, %v1593
        %v1595 = vmul.f32 %v969, %v1594
        %v1596 = vmul.f32 %v970, %v1594
        %v1597 = vmul.f32 %v971, %v1594
        %v1598 = vmul.f32 %v972, %v1594
        %v1599 = vmul.f32 %v973, %v1594
        %v1600 = vmul.f32 %v974, %v1594
        %v1601 = vmul.f32 %v975, %v1594
        %v1602 = vmul.f32 %v976, %v1594
        %v1603 = vadd.f32 %v1582, %v1595
        %v1604 = vadd.f32 %v1583, %v1596
        %v1605 = vadd.f32 %v1584, %v1597
        %v1606 = vadd.f32 %v1585, %v1598
        %v1607 = vadd.f32 %v1586, %v1599
        %v1608 = vadd.f32 %v1587, %v1600
        %v1609 = vadd.f32 %v1588, %v1601
        %v1610 = vadd.f32 %v1589, %v1602
        %v1611 = vld [vmem:[%s5 + $0x17] sm:$0x1]
        %v1612 = vlaneseq
        %v1613 = vshrl.u32 %v1612, 7
        %v1614 = vsub.s32 0, %v1613
        %v1615 = vrot.slane %v1611, %v1614
        %v1616 = vmul.f32 %v970, %v1615
        %v1617 = vmul.f32 %v971, %v1615
        %v1618 = vmul.f32 %v972, %v1615
        %v1619 = vmul.f32 %v973, %v1615
        %v1620 = vmul.f32 %v974, %v1615
        %v1621 = vmul.f32 %v975, %v1615
        %v1622 = vmul.f32 %v976, %v1615
        %v1623 = vmul.f32 %v977, %v1615
        %v1624 = vadd.f32 %v1603, %v1616
        %v1625 = vadd.f32 %v1604, %v1617
        %v1626 = vadd.f32 %v1605, %v1618
        %v1627 = vadd.f32 %v1606, %v1619
        %v1628 = vadd.f32 %v1607, %v1620
        %v1629 = vadd.f32 %v1608, %v1621
        %v1630 = vadd.f32 %v1609, %v1622
        %v1631 = vadd.f32 %v1610, %v1623
        %v1632 = vld [vmem:[#allocation2 + $0x6] sm:$0xff]
        %v1633 = vld [vmem:[#allocation2 + $0x16] sm:$0xff]
        %v1634 = vld [vmem:[#allocation2 + $0x26] sm:$0xff]
        %v1635 = vld [vmem:[#allocation2 + $0x36] sm:$0xff]
        %v1636 = vld [vmem:[#allocation2 + $0x46] sm:$0xff]
        %v1637 = vld [vmem:[#allocation2 + $0x56] sm:$0xff]
        %v1638 = vld [vmem:[#allocation2 + $0x66] sm:$0xff]
        %v1639 = vld [vmem:[#allocation2 + $0x76] sm:$0xff]
        %v1640 = vld [vmem:[#allocation2 + $0x86] sm:$0xff]
        %v1641 = vld [vmem:[#allocation2 + $0x96] sm:$0xff]
        %v1642 = vld [vmem:[#allocation2 + $0xa6] sm:$0xff]
        %v1643 = vld [vmem:[#allocation2 + $0xb6] sm:$0xff]
        %v1644 = vld [vmem:[#allocation2 + $0xc6] sm:$0xff]
        %v1645 = vld [vmem:[#allocation2 + $0xd6] sm:$0xff]
        %v1646 = vld [vmem:[#allocation2 + $0xe6] sm:$0xff]
        %v1647 = vld [vmem:[#allocation2 + $0xf6] sm:$0xff]
        %v1648 = vld [vmem:[%s5 + $0x4] sm:$0x1]
        %v1649 = vlaneseq
        %v1650 = vshrl.u32 %v1649, 7
        %v1651 = vsub.s32 0, %v1650
        %v1652 = vrot.slane %v1648, %v1651
        %v1653 = vmul.f32 %v1634, %v1652
        %v1654 = vmul.f32 %v1635, %v1652
        %v1655 = vmul.f32 %v1636, %v1652
        %v1656 = vmul.f32 %v1637, %v1652
        %v1657 = vmul.f32 %v1638, %v1652
        %v1658 = vmul.f32 %v1639, %v1652
        %v1659 = vmul.f32 %v1640, %v1652
        %v1660 = vmul.f32 %v1641, %v1652
        %v1661 = vadd.f32 %v1624, %v1653
        %v1662 = vadd.f32 %v1625, %v1654
        %v1663 = vadd.f32 %v1626, %v1655
        %v1664 = vadd.f32 %v1627, %v1656
        %v1665 = vadd.f32 %v1628, %v1657
        %v1666 = vadd.f32 %v1629, %v1658
        %v1667 = vadd.f32 %v1630, %v1659
        %v1668 = vadd.f32 %v1631, %v1660
        %v1669 = vld [vmem:[%s5 + $0x9] sm:$0x1]
        %v1670 = vlaneseq
        %v1671 = vshrl.u32 %v1670, 7
        %v1672 = vsub.s32 0, %v1671
        %v1673 = vrot.slane %v1669, %v1672
        %v1674 = vmul.f32 %v1635, %v1673
        %v1675 = vmul.f32 %v1636, %v1673
        %v1676 = vmul.f32 %v1637, %v1673
        %v1677 = vmul.f32 %v1638, %v1673
        %v1678 = vmul.f32 %v1639, %v1673
        %v1679 = vmul.f32 %v1640, %v1673
        %v1680 = vmul.f32 %v1641, %v1673
        %v1681 = vmul.f32 %v1642, %v1673
        %v1682 = vadd.f32 %v1661, %v1674
        %v1683 = vadd.f32 %v1662, %v1675
        %v1684 = vadd.f32 %v1663, %v1676
        %v1685 = vadd.f32 %v1664, %v1677
        %v1686 = vadd.f32 %v1665, %v1678
        %v1687 = vadd.f32 %v1666, %v1679
        %v1688 = vadd.f32 %v1667, %v1680
        %v1689 = vadd.f32 %v1668, %v1681
        %v1690 = vld [vmem:[%s5 + $0xe] sm:$0x1]
        %v1691 = vlaneseq
        %v1692 = vshrl.u32 %v1691, 7
        %v1693 = vsub.s32 0, %v1692
        %v1694 = vrot.slane %v1690, %v1693
        %v1695 = vmul.f32 %v1636, %v1694
        %v1696 = vmul.f32 %v1637, %v1694
        %v1697 = vmul.f32 %v1638, %v1694
        %v1698 = vmul.f32 %v1639, %v1694
        %v1699 = vmul.f32 %v1640, %v1694
        %v1700 = vmul.f32 %v1641, %v1694
        %v1701 = vmul.f32 %v1642, %v1694
        %v1702 = vmul.f32 %v1643, %v1694
        %v1703 = vadd.f32 %v1682, %v1695
        %v1704 = vadd.f32 %v1683, %v1696
        %v1705 = vadd.f32 %v1684, %v1697
        %v1706 = vadd.f32 %v1685, %v1698
        %v1707 = vadd.f32 %v1686, %v1699
        %v1708 = vadd.f32 %v1687, %v1700
        %v1709 = vadd.f32 %v1688, %v1701
        %v1710 = vadd.f32 %v1689, %v1702
        %v1711 = vld [vmem:[%s5 + $0x13] sm:$0x1]
        %v1712 = vlaneseq
        %v1713 = vshrl.u32 %v1712, 7
        %v1714 = vsub.s32 0, %v1713
        %v1715 = vrot.slane %v1711, %v1714
        %v1716 = vmul.f32 %v1637, %v1715
        %v1717 = vmul.f32 %v1638, %v1715
        %v1718 = vmul.f32 %v1639, %v1715
        %v1719 = vmul.f32 %v1640, %v1715
        %v1720 = vmul.f32 %v1641, %v1715
        %v1721 = vmul.f32 %v1642, %v1715
        %v1722 = vmul.f32 %v1643, %v1715
        %v1723 = vmul.f32 %v1644, %v1715
        %v1724 = vadd.f32 %v1703, %v1716
        %v1725 = vadd.f32 %v1704, %v1717
        %v1726 = vadd.f32 %v1705, %v1718
        %v1727 = vadd.f32 %v1706, %v1719
        %v1728 = vadd.f32 %v1707, %v1720
        %v1729 = vadd.f32 %v1708, %v1721
        %v1730 = vadd.f32 %v1709, %v1722
        %v1731 = vadd.f32 %v1710, %v1723
        %v1732 = vld [vmem:[%s5 + $0x18] sm:$0x1]
        %v1733 = vlaneseq
        %v1734 = vshrl.u32 %v1733, 7
        %v1735 = vsub.s32 0, %v1734
        %v1736 = vrot.slane %v1732, %v1735
        %v1737 = vmul.f32 %v1638, %v1736
        %v1738 = vmul.f32 %v1639, %v1736
        %v1739 = vmul.f32 %v1640, %v1736
        %v1740 = vmul.f32 %v1641, %v1736
        %v1741 = vmul.f32 %v1642, %v1736
        %v1742 = vmul.f32 %v1643, %v1736
        %v1743 = vmul.f32 %v1644, %v1736
        %v1744 = vmul.f32 %v1645, %v1736
        %v1745 = vadd.f32 %v1724, %v1737
        %v1746 = vadd.f32 %v1725, %v1738
        %v1747 = vadd.f32 %v1726, %v1739
        %v1748 = vadd.f32 %v1727, %v1740
        %v1749 = vadd.f32 %v1728, %v1741
        %v1750 = vadd.f32 %v1729, %v1742
        %v1751 = vadd.f32 %v1730, %v1743
        %v1752 = vadd.f32 %v1731, %v1744
        %v1753 = vld [vmem:[%s8 + $0x1] sm:$0x1]
        %v1754 = vlaneseq
        %v1755 = vshrl.u32 %v1754, 7
        %v1756 = vsub.s32 0, %v1755
        %v1757 = vrot.slane %v1753, %v1756
        %v1758 = vadd.f32 %v1745, %v1757
        %v1759 = vadd.f32 %v1746, %v1757
        %v1760 = vadd.f32 %v1747, %v1757
        %v1761 = vadd.f32 %v1748, %v1757
        %v1762 = vadd.f32 %v1749, %v1757
        %v1763 = vadd.f32 %v1750, %v1757
        %v1764 = vadd.f32 %v1751, %v1757
        %v1765 = vadd.f32 %v1752, %v1757
        %v1766 = vpack.c.bf16 %v1759, %v1758
        %v1767 = vpack.c.bf16 %v1761, %v1760
        %v1768 = vpack.c.bf16 %v1763, %v1762
        %v1769 = vpack.c.bf16 %v1765, %v1764
        %s1770 = scalar_lea.vmem %s9, 32
        %v1771 = vld [vmem:[%s1770] sm:$0xf]
        %v1772 = vld [vmem:[%s1770 + $0x4] sm:$0xf]
        %v1773 = vld [vmem:[%s1770 + $0x8] sm:$0xf]
        %v1774 = vld [vmem:[%s1770 + $0xc] sm:$0xf]
        %v1775 = vld [vmem:[%s1770 + $0x10] sm:$0xf]
        %v1776 = vld [vmem:[%s1770 + $0x14] sm:$0xf]
        %v1777 = vld [vmem:[%s1770 + $0x18] sm:$0xf]
        %v1778 = vld [vmem:[%s1770 + $0x1c] sm:$0xf]
        %v1779 = vld [vmem:[%s10 + $0x1] sm:$0x1]
        %v1780 = vlaneseq
        %v1781 = vshrl.u32 %v1780, 7
        %v1782 = vsub.s32 0, %v1781
        %v1783 = vrot.slane %v1779, %v1782
        %v1792 = vunpack.c.l.b16 %v1771
        %v1793 = vunpack.c.l.b16 %v1772
        %v1794 = vunpack.c.l.b16 %v1773
        %v1795 = vunpack.c.l.b16 %v1774
        %v1796 = vunpack.c.l.b16 %v1775
        %v1797 = vunpack.c.l.b16 %v1776
        %v1798 = vunpack.c.l.b16 %v1777
        %v1799 = vunpack.c.l.b16 %v1778
        %v1800 = vpack.c.b16 %v1793, %v1792
        %v1801 = vpack.c.b16 %v1795, %v1794
        %v1802 = vpack.c.b16 %v1797, %v1796
        %v1803 = vpack.c.b16 %v1799, %v1798
        %v1809 = vsel %vm764, %v1766, 0
        %v1812 = vsel %vm764, %v1767, 0
        %v1815 = vsel %vm764, %v1768, 0
        %v1818 = vsel %vm764, %v1769, 0
        %1820 = vmatprep.subr.bf16.mxu0 0
        %1821 = vmatpush1.bf16.msra.mxu0 %v1800
        %1822 = vmatprep.subr.bf16.mxu0 0
        %1823 = vmatpush1.bf16.msra.mxu0 %v1801
        %1824 = vmatprep.subr.bf16.mxu0 0
        %1825 = vmatpush1.bf16.msra.mxu0 %v1802
        %1826 = vmatprep.subr.bf16.mxu0 0
        %1827 = vmatpush1.bf16.msra.mxu0 %v1803
        %1828 = vmatprep.subr.bf16.mxu0 0
        %1829 = vmatpush1.bf16.msra.mxu0 0
        %1830 = vmatprep.subr.bf16.mxu0 0
        %1831 = vmatpush1.bf16.msra.mxu0 0
        %1832 = vmatprep.subr.bf16.mxu0 0
        %1833 = vmatpush1.bf16.msra.mxu0 0
        %1834 = vmatprep.subr.bf16.mxu0 0
        %1835 = vmatpush1.bf16.msra.mxu0 0
        %1836 = vmatprep.subr.bf16.mxu0 0
        %1837 = vmatpush1.bf16.msra.mxu0 0
        %1838 = vmatprep.subr.bf16.mxu0 0
        %1839 = vmatpush1.bf16.msra.mxu0 0
        %1840 = vmatprep.subr.bf16.mxu0 0
        %1841 = vmatpush1.bf16.msra.mxu0 0
        %1842 = vmatprep.subr.bf16.mxu0 0
        %1843 = vmatpush1.bf16.msra.mxu0 0
        %1844 = vmatprep.subr.bf16.mxu0 0
        %1845 = vmatpush1.bf16.msra.mxu0 0
        %1846 = vmatprep.subr.bf16.mxu0 0
        %1847 = vmatpush1.bf16.msra.mxu0 0
        %1848 = vmatprep.subr.bf16.mxu0 0
        %1849 = vmatpush1.bf16.msra.mxu0 0
        %1850 = vmatprep.subr.bf16.mxu0 0
        %1851 = vmatpush1.bf16.msra.mxu0 0
        %1852 = vmatprep.mubr.bf16.mxu0 0
        %1853 = vmatmul.mubr.bf16.gmra.mrb[0].mxu0 %v1809
        %v1854 = vpop.f32.mrb[0].mxu0
        %v1855 = vadd.f32 %v1783, %v1854
        %v1856 = vpop.f32.mrb[0].mxu0
        %v1857 = vpop.f32.mrb[0].mxu0
        %v1858 = vadd.f32 %v1783, %v1857
        %v1859 = vpop.f32.mrb[0].mxu0
        %1860 = vmatprep.mubr.bf16.mxu0 0
        %1861 = vmatmul.mubr.bf16.gmra.mrb[0].mxu0 %v1812
        %v1862 = vpop.f32.mrb[0].mxu0
        %v1863 = vadd.f32 %v1783, %v1862
        %v1864 = vpop.f32.mrb[0].mxu0
        %v1865 = vpop.f32.mrb[0].mxu0
        %v1866 = vadd.f32 %v1783, %v1865
        %v1867 = vpop.f32.mrb[0].mxu0
        %1868 = vmatprep.mubr.bf16.mxu0 0
        %1869 = vmatmul.mubr.bf16.gmra.mrb[0].mxu0 %v1815
        %v1870 = vpop.f32.mrb[0].mxu0
        %v1871 = vadd.f32 %v1783, %v1870
        %v1872 = vpop.f32.mrb[0].mxu0
        %v1873 = vpop.f32.mrb[0].mxu0
        %v1874 = vadd.f32 %v1783, %v1873
        %v1875 = vpop.f32.mrb[0].mxu0
        %1876 = vmatprep.mubr.bf16.mxu0 0
        %1877 = vmatmul.mubr.bf16.gmra.mrb[0].mxu0 %v1818
        %v1878 = vpop.f32.mrb[0].mxu0
        %v1879 = vadd.f32 %v1783, %v1878
        %v1880 = vpop.f32.mrb[0].mxu0
        %v1881 = vpop.f32.mrb[0].mxu0
        %v1882 = vadd.f32 %v1783, %v1881
        %v1883 = vpop.f32.mrb[0].mxu0
        %1884 = vdwg.mxu0
        %v1885 = vsel %vm648, %v1855, 0.0
        %v1886 = vsel %vm648, %v1858, 0.0
        %v1887 = vadd.f32 %v1885, %v1886
        %v1888 = vsel %vm648, %v1863, 0.0
        %v1889 = vadd.f32 %v1887, %v1888
        %v1890 = vsel %vm648, %v1866, 0.0
        %v1891 = vadd.f32 %v1889, %v1890
        %v1892 = vsel %vm648, %v1871, 0.0
        %v1893 = vadd.f32 %v1891, %v1892
        %v1894 = vsel %vm648, %v1874, 0.0
        %v1895 = vadd.f32 %v1893, %v1894
        %v1896 = vsel %vm648, %v1879, 0.0
        %v1897 = vadd.f32 %v1895, %v1896
        %v1898 = vsel %vm648, %v1882, 0.0
        %v1899 = vadd.f32 %v1897, %v1898
        %v1900 = vrot.slane %v1899, 4
        %v1901 = vadd.f32 %v1899, %v1900
        %v1902 = vrot.slane %v1901, 2
        %v1903 = vadd.f32 %v1901, %v1902
        %v1904 = vrot.slane %v1903, 1
        %v1905 = vadd.f32 %v1903, %v1904
        %v1906 = vmul.f32 %v1905, 0.015625
        %v1907 = vld [vmem:[#allocation2 + $0x1] sm:$0xff]
        %v1908 = vld [vmem:[#allocation2 + $0x11] sm:$0xff]
        %v1909 = vld [vmem:[#allocation2 + $0x21] sm:$0xff]
        %v1910 = vld [vmem:[#allocation2 + $0x31] sm:$0xff]
        %v1911 = vld [vmem:[#allocation2 + $0x41] sm:$0xff]
        %v1912 = vld [vmem:[#allocation2 + $0x51] sm:$0xff]
        %v1913 = vld [vmem:[#allocation2 + $0x61] sm:$0xff]
        %v1914 = vld [vmem:[#allocation2 + $0x71] sm:$0xff]
        %v1915 = vld [vmem:[#allocation2 + $0x81] sm:$0xff]
        %v1916 = vld [vmem:[#allocation2 + $0x91] sm:$0xff]
        %v1917 = vld [vmem:[#allocation2 + $0xa1] sm:$0xff]
        %v1918 = vld [vmem:[#allocation2 + $0xb1] sm:$0xff]
        %v1919 = vld [vmem:[#allocation2 + $0xc1] sm:$0xff]
        %v1920 = vld [vmem:[#allocation2 + $0xd1] sm:$0xff]
        %v1921 = vld [vmem:[#allocation2 + $0xe1] sm:$0xff]
        %v1922 = vld [vmem:[#allocation2 + $0xf1] sm:$0xff]
        %v1923 = vld [vmem:[%s6] sm:$0x1]
        %v1924 = vlaneseq
        %v1925 = vshrl.u32 %v1924, 7
        %v1926 = vsub.s32 0, %v1925
        %v1927 = vrot.slane %v1923, %v1926
        %v1928 = vmul.f32 %v1908, %v1927
        %v1929 = vmul.f32 %v1909, %v1927
        %v1930 = vmul.f32 %v1910, %v1927
        %v1931 = vmul.f32 %v1911, %v1927
        %v1932 = vmul.f32 %v1912, %v1927
        %v1933 = vmul.f32 %v1913, %v1927
        %v1934 = vmul.f32 %v1914, %v1927
        %v1935 = vmul.f32 %v1915, %v1927
        %v1936 = vadd.f32 %v1928, 0.0
        %v1937 = vadd.f32 %v1929, 0.0
        %v1938 = vadd.f32 %v1930, 0.0
        %v1939 = vadd.f32 %v1931, 0.0
        %v1940 = vadd.f32 %v1932, 0.0
        %v1941 = vadd.f32 %v1933, 0.0
        %v1942 = vadd.f32 %v1934, 0.0
        %v1943 = vadd.f32 %v1935, 0.0
        %v1944 = vld [vmem:[%s6 + $0x7] sm:$0x1]
        %v1945 = vlaneseq
        %v1946 = vshrl.u32 %v1945, 7
        %v1947 = vsub.s32 0, %v1946
        %v1948 = vrot.slane %v1944, %v1947
        %v1949 = vmul.f32 %v1909, %v1948
        %v1950 = vmul.f32 %v1910, %v1948
        %v1951 = vmul.f32 %v1911, %v1948
        %v1952 = vmul.f32 %v1912, %v1948
        %v1953 = vmul.f32 %v1913, %v1948
        %v1954 = vmul.f32 %v1914, %v1948
        %v1955 = vmul.f32 %v1915, %v1948
        %v1956 = vmul.f32 %v1916, %v1948
        %v1957 = vadd.f32 %v1936, %v1949
        %v1958 = vadd.f32 %v1937, %v1950
        %v1959 = vadd.f32 %v1938, %v1951
        %v1960 = vadd.f32 %v1939, %v1952
        %v1961 = vadd.f32 %v1940, %v1953
        %v1962 = vadd.f32 %v1941, %v1954
        %v1963 = vadd.f32 %v1942, %v1955
        %v1964 = vadd.f32 %v1943, %v1956
        %v1965 = vld [vmem:[%s6 + $0xe] sm:$0x1]
        %v1966 = vlaneseq
        %v1967 = vshrl.u32 %v1966, 7
        %v1968 = vsub.s32 0, %v1967
        %v1969 = vrot.slane %v1965, %v1968
        %v1970 = vmul.f32 %v1910, %v1969
        %v1971 = vmul.f32 %v1911, %v1969
        %v1972 = vmul.f32 %v1912, %v1969
        %v1973 = vmul.f32 %v1913, %v1969
        %v1974 = vmul.f32 %v1914, %v1969
        %v1975 = vmul.f32 %v1915, %v1969
        %v1976 = vmul.f32 %v1916, %v1969
        %v1977 = vmul.f32 %v1917, %v1969
        %v1978 = vadd.f32 %v1957, %v1970
        %v1979 = vadd.f32 %v1958, %v1971
        %v1980 = vadd.f32 %v1959, %v1972
        %v1981 = vadd.f32 %v1960, %v1973
        %v1982 = vadd.f32 %v1961, %v1974
        %v1983 = vadd.f32 %v1962, %v1975
        %v1984 = vadd.f32 %v1963, %v1976
        %v1985 = vadd.f32 %v1964, %v1977
        %v1986 = vld [vmem:[%s6 + $0x15] sm:$0x1]
        %v1987 = vlaneseq
        %v1988 = vshrl.u32 %v1987, 7
        %v1989 = vsub.s32 0, %v1988
        %v1990 = vrot.slane %v1986, %v1989
        %v1991 = vmul.f32 %v1911, %v1990
        %v1992 = vmul.f32 %v1912, %v1990
        %v1993 = vmul.f32 %v1913, %v1990
        %v1994 = vmul.f32 %v1914, %v1990
        %v1995 = vmul.f32 %v1915, %v1990
        %v1996 = vmul.f32 %v1916, %v1990
        %v1997 = vmul.f32 %v1917, %v1990
        %v1998 = vmul.f32 %v1918, %v1990
        %v1999 = vadd.f32 %v1978, %v1991
        %v2000 = vadd.f32 %v1979, %v1992
        %v2001 = vadd.f32 %v1980, %v1993
        %v2002 = vadd.f32 %v1981, %v1994
        %v2003 = vadd.f32 %v1982, %v1995
        %v2004 = vadd.f32 %v1983, %v1996
        %v2005 = vadd.f32 %v1984, %v1997
        %v2006 = vadd.f32 %v1985, %v1998
        %v2007 = vld [vmem:[%s6 + $0x1c] sm:$0x1]
        %v2008 = vlaneseq
        %v2009 = vshrl.u32 %v2008, 7
        %v2010 = vsub.s32 0, %v2009
        %v2011 = vrot.slane %v2007, %v2010
        %v2012 = vmul.f32 %v1912, %v2011
        %v2013 = vmul.f32 %v1913, %v2011
        %v2014 = vmul.f32 %v1914, %v2011
        %v2015 = vmul.f32 %v1915, %v2011
        %v2016 = vmul.f32 %v1916, %v2011
        %v2017 = vmul.f32 %v1917, %v2011
        %v2018 = vmul.f32 %v1918, %v2011
        %v2019 = vmul.f32 %v1919, %v2011
        %v2020 = vadd.f32 %v1999, %v2012
        %v2021 = vadd.f32 %v2000, %v2013
        %v2022 = vadd.f32 %v2001, %v2014
        %v2023 = vadd.f32 %v2002, %v2015
        %v2024 = vadd.f32 %v2003, %v2016
        %v2025 = vadd.f32 %v2004, %v2017
        %v2026 = vadd.f32 %v2005, %v2018
        %v2027 = vadd.f32 %v2006, %v2019
        %v2028 = vld [vmem:[%s6 + $0x23] sm:$0x1]
        %v2029 = vlaneseq
        %v2030 = vshrl.u32 %v2029, 7
        %v2031 = vsub.s32 0, %v2030
        %v2032 = vrot.slane %v2028, %v2031
        %v2033 = vmul.f32 %v1913, %v2032
        %v2034 = vmul.f32 %v1914, %v2032
        %v2035 = vmul.f32 %v1915, %v2032
        %v2036 = vmul.f32 %v1916, %v2032
        %v2037 = vmul.f32 %v1917, %v2032
        %v2038 = vmul.f32 %v1918, %v2032
        %v2039 = vmul.f32 %v1919, %v2032
        %v2040 = vmul.f32 %v1920, %v2032
        %v2041 = vadd.f32 %v2020, %v2033
        %v2042 = vadd.f32 %v2021, %v2034
        %v2043 = vadd.f32 %v2022, %v2035
        %v2044 = vadd.f32 %v2023, %v2036
        %v2045 = vadd.f32 %v2024, %v2037
        %v2046 = vadd.f32 %v2025, %v2038
        %v2047 = vadd.f32 %v2026, %v2039
        %v2048 = vadd.f32 %v2027, %v2040
        %v2049 = vld [vmem:[%s6 + $0x2a] sm:$0x1]
        %v2050 = vlaneseq
        %v2051 = vshrl.u32 %v2050, 7
        %v2052 = vsub.s32 0, %v2051
        %v2053 = vrot.slane %v2049, %v2052
        %v2054 = vmul.f32 %v1914, %v2053
        %v2055 = vmul.f32 %v1915, %v2053
        %v2056 = vmul.f32 %v1916, %v2053
        %v2057 = vmul.f32 %v1917, %v2053
        %v2058 = vmul.f32 %v1918, %v2053
        %v2059 = vmul.f32 %v1919, %v2053
        %v2060 = vmul.f32 %v1920, %v2053
        %v2061 = vmul.f32 %v1921, %v2053
        %v2062 = vadd.f32 %v2041, %v2054
        %v2063 = vadd.f32 %v2042, %v2055
        %v2064 = vadd.f32 %v2043, %v2056
        %v2065 = vadd.f32 %v2044, %v2057
        %v2066 = vadd.f32 %v2045, %v2058
        %v2067 = vadd.f32 %v2046, %v2059
        %v2068 = vadd.f32 %v2047, %v2060
        %v2069 = vadd.f32 %v2048, %v2061
        %v2070 = vld [vmem:[%s6 + $0x1] sm:$0x1]
        %v2071 = vlaneseq
        %v2072 = vshrl.u32 %v2071, 7
        %v2073 = vsub.s32 0, %v2072
        %v2074 = vrot.slane %v2070, %v2073
        %v2075 = vmul.f32 %v1197, %v2074
        %v2076 = vmul.f32 %v1198, %v2074
        %v2077 = vmul.f32 %v1199, %v2074
        %v2078 = vmul.f32 %v1200, %v2074
        %v2079 = vmul.f32 %v1201, %v2074
        %v2080 = vmul.f32 %v1202, %v2074
        %v2081 = vmul.f32 %v1203, %v2074
        %v2082 = vmul.f32 %v1204, %v2074
        %v2083 = vadd.f32 %v2062, %v2075
        %v2084 = vadd.f32 %v2063, %v2076
        %v2085 = vadd.f32 %v2064, %v2077
        %v2086 = vadd.f32 %v2065, %v2078
        %v2087 = vadd.f32 %v2066, %v2079
        %v2088 = vadd.f32 %v2067, %v2080
        %v2089 = vadd.f32 %v2068, %v2081
        %v2090 = vadd.f32 %v2069, %v2082
        %v2091 = vld [vmem:[%s6 + $0x8] sm:$0x1]
        %v2092 = vlaneseq
        %v2093 = vshrl.u32 %v2092, 7
        %v2094 = vsub.s32 0, %v2093
        %v2095 = vrot.slane %v2091, %v2094
        %v2096 = vmul.f32 %v1198, %v2095
        %v2097 = vmul.f32 %v1199, %v2095
        %v2098 = vmul.f32 %v1200, %v2095
        %v2099 = vmul.f32 %v1201, %v2095
        %v2100 = vmul.f32 %v1202, %v2095
        %v2101 = vmul.f32 %v1203, %v2095
        %v2102 = vmul.f32 %v1204, %v2095
        %v2103 = vmul.f32 %v1205, %v2095
        %v2104 = vadd.f32 %v2083, %v2096
        %v2105 = vadd.f32 %v2084, %v2097
        %v2106 = vadd.f32 %v2085, %v2098
        %v2107 = vadd.f32 %v2086, %v2099
        %v2108 = vadd.f32 %v2087, %v2100
        %v2109 = vadd.f32 %v2088, %v2101
        %v2110 = vadd.f32 %v2089, %v2102
        %v2111 = vadd.f32 %v2090, %v2103
        %v2112 = vld [vmem:[%s6 + $0xf] sm:$0x1]
        %v2113 = vlaneseq
        %v2114 = vshrl.u32 %v2113, 7
        %v2115 = vsub.s32 0, %v2114
        %v2116 = vrot.slane %v2112, %v2115
        %v2117 = vmul.f32 %v1199, %v2116
        %v2118 = vmul.f32 %v1200, %v2116
        %v2119 = vmul.f32 %v1201, %v2116
        %v2120 = vmul.f32 %v1202, %v2116
        %v2121 = vmul.f32 %v1203, %v2116
        %v2122 = vmul.f32 %v1204, %v2116
        %v2123 = vmul.f32 %v1205, %v2116
        %v2124 = vmul.f32 %v1206, %v2116
        %v2125 = vadd.f32 %v2104, %v2117
        %v2126 = vadd.f32 %v2105, %v2118
        %v2127 = vadd.f32 %v2106, %v2119
        %v2128 = vadd.f32 %v2107, %v2120
        %v2129 = vadd.f32 %v2108, %v2121
        %v2130 = vadd.f32 %v2109, %v2122
        %v2131 = vadd.f32 %v2110, %v2123
        %v2132 = vadd.f32 %v2111, %v2124
        %v2133 = vld [vmem:[%s6 + $0x16] sm:$0x1]
        %v2134 = vlaneseq
        %v2135 = vshrl.u32 %v2134, 7
        %v2136 = vsub.s32 0, %v2135
        %v2137 = vrot.slane %v2133, %v2136
        %v2138 = vmul.f32 %v1200, %v2137
        %v2139 = vmul.f32 %v1201, %v2137
        %v2140 = vmul.f32 %v1202, %v2137
        %v2141 = vmul.f32 %v1203, %v2137
        %v2142 = vmul.f32 %v1204, %v2137
        %v2143 = vmul.f32 %v1205, %v2137
        %v2144 = vmul.f32 %v1206, %v2137
        %v2145 = vmul.f32 %v1207, %v2137
        %v2146 = vadd.f32 %v2125, %v2138
        %v2147 = vadd.f32 %v2126, %v2139
        %v2148 = vadd.f32 %v2127, %v2140
        %v2149 = vadd.f32 %v2128, %v2141
        %v2150 = vadd.f32 %v2129, %v2142
        %v2151 = vadd.f32 %v2130, %v2143
        %v2152 = vadd.f32 %v2131, %v2144
        %v2153 = vadd.f32 %v2132, %v2145
        %v2154 = vld [vmem:[%s6 + $0x1d] sm:$0x1]
        %v2155 = vlaneseq
        %v2156 = vshrl.u32 %v2155, 7
        %v2157 = vsub.s32 0, %v2156
        %v2158 = vrot.slane %v2154, %v2157
        %v2159 = vmul.f32 %v1201, %v2158
        %v2160 = vmul.f32 %v1202, %v2158
        %v2161 = vmul.f32 %v1203, %v2158
        %v2162 = vmul.f32 %v1204, %v2158
        %v2163 = vmul.f32 %v1205, %v2158
        %v2164 = vmul.f32 %v1206, %v2158
        %v2165 = vmul.f32 %v1207, %v2158
        %v2166 = vmul.f32 %v1208, %v2158
        %v2167 = vadd.f32 %v2146, %v2159
        %v2168 = vadd.f32 %v2147, %v2160
        %v2169 = vadd.f32 %v2148, %v2161
        %v2170 = vadd.f32 %v2149, %v2162
        %v2171 = vadd.f32 %v2150, %v2163
        %v2172 = vadd.f32 %v2151, %v2164
        %v2173 = vadd.f32 %v2152, %v2165
        %v2174 = vadd.f32 %v2153, %v2166
        %v2175 = vld [vmem:[%s6 + $0x24] sm:$0x1]
        %v2176 = vlaneseq
        %v2177 = vshrl.u32 %v2176, 7
        %v2178 = vsub.s32 0, %v2177
        %v2179 = vrot.slane %v2175, %v2178
        %v2180 = vmul.f32 %v1202, %v2179
        %v2181 = vmul.f32 %v1203, %v2179
        %v2182 = vmul.f32 %v1204, %v2179
        %v2183 = vmul.f32 %v1205, %v2179
        %v2184 = vmul.f32 %v1206, %v2179
        %v2185 = vmul.f32 %v1207, %v2179
        %v2186 = vmul.f32 %v1208, %v2179
        %v2187 = vmul.f32 %v1209, %v2179
        %v2188 = vadd.f32 %v2167, %v2180
        %v2189 = vadd.f32 %v2168, %v2181
        %v2190 = vadd.f32 %v2169, %v2182
        %v2191 = vadd.f32 %v2170, %v2183
        %v2192 = vadd.f32 %v2171, %v2184
        %v2193 = vadd.f32 %v2172, %v2185
        %v2194 = vadd.f32 %v2173, %v2186
        %v2195 = vadd.f32 %v2174, %v2187
        %v2196 = vld [vmem:[%s6 + $0x2b] sm:$0x1]
        %v2197 = vlaneseq
        %v2198 = vshrl.u32 %v2197, 7
        %v2199 = vsub.s32 0, %v2198
        %v2200 = vrot.slane %v2196, %v2199
        %v2201 = vmul.f32 %v1203, %v2200
        %v2202 = vmul.f32 %v1204, %v2200
        %v2203 = vmul.f32 %v1205, %v2200
        %v2204 = vmul.f32 %v1206, %v2200
        %v2205 = vmul.f32 %v1207, %v2200
        %v2206 = vmul.f32 %v1208, %v2200
        %v2207 = vmul.f32 %v1209, %v2200
        %v2208 = vmul.f32 %v1210, %v2200
        %v2209 = vadd.f32 %v2188, %v2201
        %v2210 = vadd.f32 %v2189, %v2202
        %v2211 = vadd.f32 %v2190, %v2203
        %v2212 = vadd.f32 %v2191, %v2204
        %v2213 = vadd.f32 %v2192, %v2205
        %v2214 = vadd.f32 %v2193, %v2206
        %v2215 = vadd.f32 %v2194, %v2207
        %v2216 = vadd.f32 %v2195, %v2208
        %v2217 = vld [vmem:[%s6 + $0x2] sm:$0x1]
        %v2218 = vlaneseq
        %v2219 = vshrl.u32 %v2218, 7
        %v2220 = vsub.s32 0, %v2219
        %v2221 = vrot.slane %v2217, %v2220
        %v2222 = vmul.f32 %v807, %v2221
        %v2223 = vmul.f32 %v808, %v2221
        %v2224 = vmul.f32 %v809, %v2221
        %v2225 = vmul.f32 %v810, %v2221
        %v2226 = vmul.f32 %v811, %v2221
        %v2227 = vmul.f32 %v812, %v2221
        %v2228 = vmul.f32 %v813, %v2221
        %v2229 = vmul.f32 %v814, %v2221
        %v2230 = vadd.f32 %v2209, %v2222
        %v2231 = vadd.f32 %v2210, %v2223
        %v2232 = vadd.f32 %v2211, %v2224
        %v2233 = vadd.f32 %v2212, %v2225
        %v2234 = vadd.f32 %v2213, %v2226
        %v2235 = vadd.f32 %v2214, %v2227
        %v2236 = vadd.f32 %v2215, %v2228
        %v2237 = vadd.f32 %v2216, %v2229
        %v2238 = vld [vmem:[%s6 + $0x9] sm:$0x1]
        %v2239 = vlaneseq
        %v2240 = vshrl.u32 %v2239, 7
        %v2241 = vsub.s32 0, %v2240
        %v2242 = vrot.slane %v2238, %v2241
        %v2243 = vmul.f32 %v808, %v2242
        %v2244 = vmul.f32 %v809, %v2242
        %v2245 = vmul.f32 %v810, %v2242
        %v2246 = vmul.f32 %v811, %v2242
        %v2247 = vmul.f32 %v812, %v2242
        %v2248 = vmul.f32 %v813, %v2242
        %v2249 = vmul.f32 %v814, %v2242
        %v2250 = vmul.f32 %v815, %v2242
        %v2251 = vadd.f32 %v2230, %v2243
        %v2252 = vadd.f32 %v2231, %v2244
        %v2253 = vadd.f32 %v2232, %v2245
        %v2254 = vadd.f32 %v2233, %v2246
        %v2255 = vadd.f32 %v2234, %v2247
        %v2256 = vadd.f32 %v2235, %v2248
        %v2257 = vadd.f32 %v2236, %v2249
        %v2258 = vadd.f32 %v2237, %v2250
        %v2259 = vld [vmem:[%s6 + $0x10] sm:$0x1]
        %v2260 = vlaneseq
        %v2261 = vshrl.u32 %v2260, 7
        %v2262 = vsub.s32 0, %v2261
        %v2263 = vrot.slane %v2259, %v2262
        %v2264 = vmul.f32 %v809, %v2263
        %v2265 = vmul.f32 %v810, %v2263
        %v2266 = vmul.f32 %v811, %v2263
        %v2267 = vmul.f32 %v812, %v2263
        %v2268 = vmul.f32 %v813, %v2263
        %v2269 = vmul.f32 %v814, %v2263
        %v2270 = vmul.f32 %v815, %v2263
        %v2271 = vmul.f32 %v816, %v2263
        %v2272 = vadd.f32 %v2251, %v2264
        %v2273 = vadd.f32 %v2252, %v2265
        %v2274 = vadd.f32 %v2253, %v2266
        %v2275 = vadd.f32 %v2254, %v2267
        %v2276 = vadd.f32 %v2255, %v2268
        %v2277 = vadd.f32 %v2256, %v2269
        %v2278 = vadd.f32 %v2257, %v2270
        %v2279 = vadd.f32 %v2258, %v2271
        %v2280 = vld [vmem:[%s6 + $0x17] sm:$0x1]
        %v2281 = vlaneseq
        %v2282 = vshrl.u32 %v2281, 7
        %v2283 = vsub.s32 0, %v2282
        %v2284 = vrot.slane %v2280, %v2283
        %v2285 = vmul.f32 %v810, %v2284
        %v2286 = vmul.f32 %v811, %v2284
        %v2287 = vmul.f32 %v812, %v2284
        %v2288 = vmul.f32 %v813, %v2284
        %v2289 = vmul.f32 %v814, %v2284
        %v2290 = vmul.f32 %v815, %v2284
        %v2291 = vmul.f32 %v816, %v2284
        %v2292 = vmul.f32 %v817, %v2284
        %v2293 = vadd.f32 %v2272, %v2285
        %v2294 = vadd.f32 %v2273, %v2286
        %v2295 = vadd.f32 %v2274, %v2287
        %v2296 = vadd.f32 %v2275, %v2288
        %v2297 = vadd.f32 %v2276, %v2289
        %v2298 = vadd.f32 %v2277, %v2290
        %v2299 = vadd.f32 %v2278, %v2291
        %v2300 = vadd.f32 %v2279, %v2292
        %v2301 = vld [vmem:[%s6 + $0x1e] sm:$0x1]
        %v2302 = vlaneseq
        %v2303 = vshrl.u32 %v2302, 7
        %v2304 = vsub.s32 0, %v2303
        %v2305 = vrot.slane %v2301, %v2304
        %v2306 = vmul.f32 %v811, %v2305
        %v2307 = vmul.f32 %v812, %v2305
        %v2308 = vmul.f32 %v813, %v2305
        %v2309 = vmul.f32 %v814, %v2305
        %v2310 = vmul.f32 %v815, %v2305
        %v2311 = vmul.f32 %v816, %v2305
        %v2312 = vmul.f32 %v817, %v2305
        %v2313 = vmul.f32 %v818, %v2305
        %v2314 = vadd.f32 %v2293, %v2306
        %v2315 = vadd.f32 %v2294, %v2307
        %v2316 = vadd.f32 %v2295, %v2308
        %v2317 = vadd.f32 %v2296, %v2309
        %v2318 = vadd.f32 %v2297, %v2310
        %v2319 = vadd.f32 %v2298, %v2311
        %v2320 = vadd.f32 %v2299, %v2312
        %v2321 = vadd.f32 %v2300, %v2313
        %v2322 = vld [vmem:[%s6 + $0x25] sm:$0x1]
        %v2323 = vlaneseq
        %v2324 = vshrl.u32 %v2323, 7
        %v2325 = vsub.s32 0, %v2324
        %v2326 = vrot.slane %v2322, %v2325
        %v2327 = vmul.f32 %v812, %v2326
        %v2328 = vmul.f32 %v813, %v2326
        %v2329 = vmul.f32 %v814, %v2326
        %v2330 = vmul.f32 %v815, %v2326
        %v2331 = vmul.f32 %v816, %v2326
        %v2332 = vmul.f32 %v817, %v2326
        %v2333 = vmul.f32 %v818, %v2326
        %v2334 = vmul.f32 %v819, %v2326
        %v2335 = vadd.f32 %v2314, %v2327
        %v2336 = vadd.f32 %v2315, %v2328
        %v2337 = vadd.f32 %v2316, %v2329
        %v2338 = vadd.f32 %v2317, %v2330
        %v2339 = vadd.f32 %v2318, %v2331
        %v2340 = vadd.f32 %v2319, %v2332
        %v2341 = vadd.f32 %v2320, %v2333
        %v2342 = vadd.f32 %v2321, %v2334
        %v2343 = vld [vmem:[%s6 + $0x2c] sm:$0x1]
        %v2344 = vlaneseq
        %v2345 = vshrl.u32 %v2344, 7
        %v2346 = vsub.s32 0, %v2345
        %v2347 = vrot.slane %v2343, %v2346
        %v2348 = vmul.f32 %v813, %v2347
        %v2349 = vmul.f32 %v814, %v2347
        %v2350 = vmul.f32 %v815, %v2347
        %v2351 = vmul.f32 %v816, %v2347
        %v2352 = vmul.f32 %v817, %v2347
        %v2353 = vmul.f32 %v818, %v2347
        %v2354 = vmul.f32 %v819, %v2347
        %v2355 = vmul.f32 %v820, %v2347
        %v2356 = vadd.f32 %v2335, %v2348
        %v2357 = vadd.f32 %v2336, %v2349
        %v2358 = vadd.f32 %v2337, %v2350
        %v2359 = vadd.f32 %v2338, %v2351
        %v2360 = vadd.f32 %v2339, %v2352
        %v2361 = vadd.f32 %v2340, %v2353
        %v2362 = vadd.f32 %v2341, %v2354
        %v2363 = vadd.f32 %v2342, %v2355
        %v2364 = vld [vmem:[%s6 + $0x3] sm:$0x1]
        %v2365 = vlaneseq
        %v2366 = vshrl.u32 %v2365, 7
        %v2367 = vsub.s32 0, %v2366
        %v2368 = vrot.slane %v2364, %v2367
        %v2369 = vmul.f32 %v886, %v2368
        %v2370 = vmul.f32 %v887, %v2368
        %v2371 = vmul.f32 %v888, %v2368
        %v2372 = vmul.f32 %v889, %v2368
        %v2373 = vmul.f32 %v890, %v2368
        %v2374 = vmul.f32 %v891, %v2368
        %v2375 = vmul.f32 %v892, %v2368
        %v2376 = vmul.f32 %v893, %v2368
        %v2377 = vadd.f32 %v2356, %v2369
        %v2378 = vadd.f32 %v2357, %v2370
        %v2379 = vadd.f32 %v2358, %v2371
        %v2380 = vadd.f32 %v2359, %v2372
        %v2381 = vadd.f32 %v2360, %v2373
        %v2382 = vadd.f32 %v2361, %v2374
        %v2383 = vadd.f32 %v2362, %v2375
        %v2384 = vadd.f32 %v2363, %v2376
        %v2385 = vld [vmem:[%s6 + $0xa] sm:$0x1]
        %v2386 = vlaneseq
        %v2387 = vshrl.u32 %v2386, 7
        %v2388 = vsub.s32 0, %v2387
        %v2389 = vrot.slane %v2385, %v2388
        %v2390 = vmul.f32 %v887, %v2389
        %v2391 = vmul.f32 %v888, %v2389
        %v2392 = vmul.f32 %v889, %v2389
        %v2393 = vmul.f32 %v890, %v2389
        %v2394 = vmul.f32 %v891, %v2389
        %v2395 = vmul.f32 %v892, %v2389
        %v2396 = vmul.f32 %v893, %v2389
        %v2397 = vmul.f32 %v894, %v2389
        %v2398 = vadd.f32 %v2377, %v2390
        %v2399 = vadd.f32 %v2378, %v2391
        %v2400 = vadd.f32 %v2379, %v2392
        %v2401 = vadd.f32 %v2380, %v2393
        %v2402 = vadd.f32 %v2381, %v2394
        %v2403 = vadd.f32 %v2382, %v2395
        %v2404 = vadd.f32 %v2383, %v2396
        %v2405 = vadd.f32 %v2384, %v2397
        %v2406 = vld [vmem:[%s6 + $0x11] sm:$0x1]
        %v2407 = vlaneseq
        %v2408 = vshrl.u32 %v2407, 7
        %v2409 = vsub.s32 0, %v2408
        %v2410 = vrot.slane %v2406, %v2409
        %v2411 = vmul.f32 %v888, %v2410
        %v2412 = vmul.f32 %v889, %v2410
        %v2413 = vmul.f32 %v890, %v2410
        %v2414 = vmul.f32 %v891, %v2410
        %v2415 = vmul.f32 %v892, %v2410
        %v2416 = vmul.f32 %v893, %v2410
        %v2417 = vmul.f32 %v894, %v2410
        %v2418 = vmul.f32 %v895, %v2410
        %v2419 = vadd.f32 %v2398, %v2411
        %v2420 = vadd.f32 %v2399, %v2412
        %v2421 = vadd.f32 %v2400, %v2413
        %v2422 = vadd.f32 %v2401, %v2414
        %v2423 = vadd.f32 %v2402, %v2415
        %v2424 = vadd.f32 %v2403, %v2416
        %v2425 = vadd.f32 %v2404, %v2417
        %v2426 = vadd.f32 %v2405, %v2418
        %v2427 = vld [vmem:[%s6 + $0x18] sm:$0x1]
        %v2428 = vlaneseq
        %v2429 = vshrl.u32 %v2428, 7
        %v2430 = vsub.s32 0, %v2429
        %v2431 = vrot.slane %v2427, %v2430
        %v2432 = vmul.f32 %v889, %v2431
        %v2433 = vmul.f32 %v890, %v2431
        %v2434 = vmul.f32 %v891, %v2431
        %v2435 = vmul.f32 %v892, %v2431
        %v2436 = vmul.f32 %v893, %v2431
        %v2437 = vmul.f32 %v894, %v2431
        %v2438 = vmul.f32 %v895, %v2431
        %v2439 = vmul.f32 %v896, %v2431
        %v2440 = vadd.f32 %v2419, %v2432
        %v2441 = vadd.f32 %v2420, %v2433
        %v2442 = vadd.f32 %v2421, %v2434
        %v2443 = vadd.f32 %v2422, %v2435
        %v2444 = vadd.f32 %v2423, %v2436
        %v2445 = vadd.f32 %v2424, %v2437
        %v2446 = vadd.f32 %v2425, %v2438
        %v2447 = vadd.f32 %v2426, %v2439
        %v2448 = vld [vmem:[%s6 + $0x1f] sm:$0x1]
        %v2449 = vlaneseq
        %v2450 = vshrl.u32 %v2449, 7
        %v2451 = vsub.s32 0, %v2450
        %v2452 = vrot.slane %v2448, %v2451
        %v2453 = vmul.f32 %v890, %v2452
        %v2454 = vmul.f32 %v891, %v2452
        %v2455 = vmul.f32 %v892, %v2452
        %v2456 = vmul.f32 %v893, %v2452
        %v2457 = vmul.f32 %v894, %v2452
        %v2458 = vmul.f32 %v895, %v2452
        %v2459 = vmul.f32 %v896, %v2452
        %v2460 = vmul.f32 %v897, %v2452
        %v2461 = vadd.f32 %v2440, %v2453
        %v2462 = vadd.f32 %v2441, %v2454
        %v2463 = vadd.f32 %v2442, %v2455
        %v2464 = vadd.f32 %v2443, %v2456
        %v2465 = vadd.f32 %v2444, %v2457
        %v2466 = vadd.f32 %v2445, %v2458
        %v2467 = vadd.f32 %v2446, %v2459
        %v2468 = vadd.f32 %v2447, %v2460
        %v2469 = vld [vmem:[%s6 + $0x26] sm:$0x1]
        %v2470 = vlaneseq
        %v2471 = vshrl.u32 %v2470, 7
        %v2472 = vsub.s32 0, %v2471
        %v2473 = vrot.slane %v2469, %v2472
        %v2474 = vmul.f32 %v891, %v2473
        %v2475 = vmul.f32 %v892, %v2473
        %v2476 = vmul.f32 %v893, %v2473
        %v2477 = vmul.f32 %v894, %v2473
        %v2478 = vmul.f32 %v895, %v2473
        %v2479 = vmul.f32 %v896, %v2473
        %v2480 = vmul.f32 %v897, %v2473
        %v2481 = vmul.f32 %v898, %v2473
        %v2482 = vadd.f32 %v2461, %v2474
        %v2483 = vadd.f32 %v2462, %v2475
        %v2484 = vadd.f32 %v2463, %v2476
        %v2485 = vadd.f32 %v2464, %v2477
        %v2486 = vadd.f32 %v2465, %v2478
        %v2487 = vadd.f32 %v2466, %v2479
        %v2488 = vadd.f32 %v2467, %v2480
        %v2489 = vadd.f32 %v2468, %v2481
        %v2490 = vld [vmem:[%s6 + $0x2d] sm:$0x1]
        %v2491 = vlaneseq
        %v2492 = vshrl.u32 %v2491, 7
        %v2493 = vsub.s32 0, %v2492
        %v2494 = vrot.slane %v2490, %v2493
        %v2495 = vmul.f32 %v892, %v2494
        %v2496 = vmul.f32 %v893, %v2494
        %v2497 = vmul.f32 %v894, %v2494
        %v2498 = vmul.f32 %v895, %v2494
        %v2499 = vmul.f32 %v896, %v2494
        %v2500 = vmul.f32 %v897, %v2494
        %v2501 = vmul.f32 %v898, %v2494
        %v2502 = vmul.f32 %v899, %v2494
        %v2503 = vadd.f32 %v2482, %v2495
        %v2504 = vadd.f32 %v2483, %v2496
        %v2505 = vadd.f32 %v2484, %v2497
        %v2506 = vadd.f32 %v2485, %v2498
        %v2507 = vadd.f32 %v2486, %v2499
        %v2508 = vadd.f32 %v2487, %v2500
        %v2509 = vadd.f32 %v2488, %v2501
        %v2510 = vadd.f32 %v2489, %v2502
        %v2511 = vld [vmem:[%s6 + $0x4] sm:$0x1]
        %v2512 = vlaneseq
        %v2513 = vshrl.u32 %v2512, 7
        %v2514 = vsub.s32 0, %v2513
        %v2515 = vrot.slane %v2511, %v2514
        %v2516 = vmul.f32 %v965, %v2515
        %v2517 = vmul.f32 %v966, %v2515
        %v2518 = vmul.f32 %v967, %v2515
        %v2519 = vmul.f32 %v968, %v2515
        %v2520 = vmul.f32 %v969, %v2515
        %v2521 = vmul.f32 %v970, %v2515
        %v2522 = vmul.f32 %v971, %v2515
        %v2523 = vmul.f32 %v972, %v2515
        %v2524 = vadd.f32 %v2503, %v2516
        %v2525 = vadd.f32 %v2504, %v2517
        %v2526 = vadd.f32 %v2505, %v2518
        %v2527 = vadd.f32 %v2506, %v2519
        %v2528 = vadd.f32 %v2507, %v2520
        %v2529 = vadd.f32 %v2508, %v2521
        %v2530 = vadd.f32 %v2509, %v2522
        %v2531 = vadd.f32 %v2510, %v2523
        %v2532 = vld [vmem:[%s6 + $0xb] sm:$0x1]
        %v2533 = vlaneseq
        %v2534 = vshrl.u32 %v2533, 7
        %v2535 = vsub.s32 0, %v2534
        %v2536 = vrot.slane %v2532, %v2535
        %v2537 = vmul.f32 %v966, %v2536
        %v2538 = vmul.f32 %v967, %v2536
        %v2539 = vmul.f32 %v968, %v2536
        %v2540 = vmul.f32 %v969, %v2536
        %v2541 = vmul.f32 %v970, %v2536
        %v2542 = vmul.f32 %v971, %v2536
        %v2543 = vmul.f32 %v972, %v2536
        %v2544 = vmul.f32 %v973, %v2536
        %v2545 = vadd.f32 %v2524, %v2537
        %v2546 = vadd.f32 %v2525, %v2538
        %v2547 = vadd.f32 %v2526, %v2539
        %v2548 = vadd.f32 %v2527, %v2540
        %v2549 = vadd.f32 %v2528, %v2541
        %v2550 = vadd.f32 %v2529, %v2542
        %v2551 = vadd.f32 %v2530, %v2543
        %v2552 = vadd.f32 %v2531, %v2544
        %v2553 = vld [vmem:[%s6 + $0x12] sm:$0x1]
        %v2554 = vlaneseq
        %v2555 = vshrl.u32 %v2554, 7
        %v2556 = vsub.s32 0, %v2555
        %v2557 = vrot.slane %v2553, %v2556
        %v2558 = vmul.f32 %v967, %v2557
        %v2559 = vmul.f32 %v968, %v2557
        %v2560 = vmul.f32 %v969, %v2557
        %v2561 = vmul.f32 %v970, %v2557
        %v2562 = vmul.f32 %v971, %v2557
        %v2563 = vmul.f32 %v972, %v2557
        %v2564 = vmul.f32 %v973, %v2557
        %v2565 = vmul.f32 %v974, %v2557
        %v2566 = vadd.f32 %v2545, %v2558
        %v2567 = vadd.f32 %v2546, %v2559
        %v2568 = vadd.f32 %v2547, %v2560
        %v2569 = vadd.f32 %v2548, %v2561
        %v2570 = vadd.f32 %v2549, %v2562
        %v2571 = vadd.f32 %v2550, %v2563
        %v2572 = vadd.f32 %v2551, %v2564
        %v2573 = vadd.f32 %v2552, %v2565
        %v2574 = vld [vmem:[%s6 + $0x19] sm:$0x1]
        %v2575 = vlaneseq
        %v2576 = vshrl.u32 %v2575, 7
        %v2577 = vsub.s32 0, %v2576
        %v2578 = vrot.slane %v2574, %v2577
        %v2579 = vmul.f32 %v968, %v2578
        %v2580 = vmul.f32 %v969, %v2578
        %v2581 = vmul.f32 %v970, %v2578
        %v2582 = vmul.f32 %v971, %v2578
        %v2583 = vmul.f32 %v972, %v2578
        %v2584 = vmul.f32 %v973, %v2578
        %v2585 = vmul.f32 %v974, %v2578
        %v2586 = vmul.f32 %v975, %v2578
        %v2587 = vadd.f32 %v2566, %v2579
        %v2588 = vadd.f32 %v2567, %v2580
        %v2589 = vadd.f32 %v2568, %v2581
        %v2590 = vadd.f32 %v2569, %v2582
        %v2591 = vadd.f32 %v2570, %v2583
        %v2592 = vadd.f32 %v2571, %v2584
        %v2593 = vadd.f32 %v2572, %v2585
        %v2594 = vadd.f32 %v2573, %v2586
        %v2595 = vld [vmem:[%s6 + $0x20] sm:$0x1]
        %v2596 = vlaneseq
        %v2597 = vshrl.u32 %v2596, 7
        %v2598 = vsub.s32 0, %v2597
        %v2599 = vrot.slane %v2595, %v2598
        %v2600 = vmul.f32 %v969, %v2599
        %v2601 = vmul.f32 %v970, %v2599
        %v2602 = vmul.f32 %v971, %v2599
        %v2603 = vmul.f32 %v972, %v2599
        %v2604 = vmul.f32 %v973, %v2599
        %v2605 = vmul.f32 %v974, %v2599
        %v2606 = vmul.f32 %v975, %v2599
        %v2607 = vmul.f32 %v976, %v2599
        %v2608 = vadd.f32 %v2587, %v2600
        %v2609 = vadd.f32 %v2588, %v2601
        %v2610 = vadd.f32 %v2589, %v2602
        %v2611 = vadd.f32 %v2590, %v2603
        %v2612 = vadd.f32 %v2591, %v2604
        %v2613 = vadd.f32 %v2592, %v2605
        %v2614 = vadd.f32 %v2593, %v2606
        %v2615 = vadd.f32 %v2594, %v2607
        %v2616 = vld [vmem:[%s6 + $0x27] sm:$0x1]
        %v2617 = vlaneseq
        %v2618 = vshrl.u32 %v2617, 7
        %v2619 = vsub.s32 0, %v2618
        %v2620 = vrot.slane %v2616, %v2619
        %v2621 = vmul.f32 %v970, %v2620
        %v2622 = vmul.f32 %v971, %v2620
        %v2623 = vmul.f32 %v972, %v2620
        %v2624 = vmul.f32 %v973, %v2620
        %v2625 = vmul.f32 %v974, %v2620
        %v2626 = vmul.f32 %v975, %v2620
        %v2627 = vmul.f32 %v976, %v2620
        %v2628 = vmul.f32 %v977, %v2620
        %v2629 = vadd.f32 %v2608, %v2621
        %v2630 = vadd.f32 %v2609, %v2622
        %v2631 = vadd.f32 %v2610, %v2623
        %v2632 = vadd.f32 %v2611, %v2624
        %v2633 = vadd.f32 %v2612, %v2625
        %v2634 = vadd.f32 %v2613, %v2626
        %v2635 = vadd.f32 %v2614, %v2627
        %v2636 = vadd.f32 %v2615, %v2628
        %v2637 = vld [vmem:[%s6 + $0x2e] sm:$0x1]
        %v2638 = vlaneseq
        %v2639 = vshrl.u32 %v2638, 7
        %v2640 = vsub.s32 0, %v2639
        %v2641 = vrot.slane %v2637, %v2640
        %v2642 = vmul.f32 %v971, %v2641
        %v2643 = vmul.f32 %v972, %v2641
        %v2644 = vmul.f32 %v973, %v2641
        %v2645 = vmul.f32 %v974, %v2641
        %v2646 = vmul.f32 %v975, %v2641
        %v2647 = vmul.f32 %v976, %v2641
        %v2648 = vmul.f32 %v977, %v2641
        %v2649 = vmul.f32 %v978, %v2641
        %v2650 = vadd.f32 %v2629, %v2642
        %v2651 = vadd.f32 %v2630, %v2643
        %v2652 = vadd.f32 %v2631, %v2644
        %v2653 = vadd.f32 %v2632, %v2645
        %v2654 = vadd.f32 %v2633, %v2646
        %v2655 = vadd.f32 %v2634, %v2647
        %v2656 = vadd.f32 %v2635, %v2648
        %v2657 = vadd.f32 %v2636, %v2649
        %v2658 = vld [vmem:[%s6 + $0x5] sm:$0x1]
        %v2659 = vlaneseq
        %v2660 = vshrl.u32 %v2659, 7
        %v2661 = vsub.s32 0, %v2660
        %v2662 = vrot.slane %v2658, %v2661
        %v2663 = vmul.f32 %v1633, %v2662
        %v2664 = vmul.f32 %v1634, %v2662
        %v2665 = vmul.f32 %v1635, %v2662
        %v2666 = vmul.f32 %v1636, %v2662
        %v2667 = vmul.f32 %v1637, %v2662
        %v2668 = vmul.f32 %v1638, %v2662
        %v2669 = vmul.f32 %v1639, %v2662
        %v2670 = vmul.f32 %v1640, %v2662
        %v2671 = vadd.f32 %v2650, %v2663
        %v2672 = vadd.f32 %v2651, %v2664
        %v2673 = vadd.f32 %v2652, %v2665
        %v2674 = vadd.f32 %v2653, %v2666
        %v2675 = vadd.f32 %v2654, %v2667
        %v2676 = vadd.f32 %v2655, %v2668
        %v2677 = vadd.f32 %v2656, %v2669
        %v2678 = vadd.f32 %v2657, %v2670
        %v2679 = vld [vmem:[%s6 + $0xc] sm:$0x1]
        %v2680 = vlaneseq
        %v2681 = vshrl.u32 %v2680, 7
        %v2682 = vsub.s32 0, %v2681
        %v2683 = vrot.slane %v2679, %v2682
        %v2684 = vmul.f32 %v1634, %v2683
        %v2685 = vmul.f32 %v1635, %v2683
        %v2686 = vmul.f32 %v1636, %v2683
        %v2687 = vmul.f32 %v1637, %v2683
        %v2688 = vmul.f32 %v1638, %v2683
        %v2689 = vmul.f32 %v1639, %v2683
        %v2690 = vmul.f32 %v1640, %v2683
        %v2691 = vmul.f32 %v1641, %v2683
        %v2692 = vadd.f32 %v2671, %v2684
        %v2693 = vadd.f32 %v2672, %v2685
        %v2694 = vadd.f32 %v2673, %v2686
        %v2695 = vadd.f32 %v2674, %v2687
        %v2696 = vadd.f32 %v2675, %v2688
        %v2697 = vadd.f32 %v2676, %v2689
        %v2698 = vadd.f32 %v2677, %v2690
        %v2699 = vadd.f32 %v2678, %v2691
        %v2700 = vld [vmem:[%s6 + $0x13] sm:$0x1]
        %v2701 = vlaneseq
        %v2702 = vshrl.u32 %v2701, 7
        %v2703 = vsub.s32 0, %v2702
        %v2704 = vrot.slane %v2700, %v2703
        %v2705 = vmul.f32 %v1635, %v2704
        %v2706 = vmul.f32 %v1636, %v2704
        %v2707 = vmul.f32 %v1637, %v2704
        %v2708 = vmul.f32 %v1638, %v2704
        %v2709 = vmul.f32 %v1639, %v2704
        %v2710 = vmul.f32 %v1640, %v2704
        %v2711 = vmul.f32 %v1641, %v2704
        %v2712 = vmul.f32 %v1642, %v2704
        %v2713 = vadd.f32 %v2692, %v2705
        %v2714 = vadd.f32 %v2693, %v2706
        %v2715 = vadd.f32 %v2694, %v2707
        %v2716 = vadd.f32 %v2695, %v2708
        %v2717 = vadd.f32 %v2696, %v2709
        %v2718 = vadd.f32 %v2697, %v2710
        %v2719 = vadd.f32 %v2698, %v2711
        %v2720 = vadd.f32 %v2699, %v2712
        %v2721 = vld [vmem:[%s6 + $0x1a] sm:$0x1]
        %v2722 = vlaneseq
        %v2723 = vshrl.u32 %v2722, 7
        %v2724 = vsub.s32 0, %v2723
        %v2725 = vrot.slane %v2721, %v2724
        %v2726 = vmul.f32 %v1636, %v2725
        %v2727 = vmul.f32 %v1637, %v2725
        %v2728 = vmul.f32 %v1638, %v2725
        %v2729 = vmul.f32 %v1639, %v2725
        %v2730 = vmul.f32 %v1640, %v2725
        %v2731 = vmul.f32 %v1641, %v2725
        %v2732 = vmul.f32 %v1642, %v2725
        %v2733 = vmul.f32 %v1643, %v2725
        %v2734 = vadd.f32 %v2713, %v2726
        %v2735 = vadd.f32 %v2714, %v2727
        %v2736 = vadd.f32 %v2715, %v2728
        %v2737 = vadd.f32 %v2716, %v2729
        %v2738 = vadd.f32 %v2717, %v2730
        %v2739 = vadd.f32 %v2718, %v2731
        %v2740 = vadd.f32 %v2719, %v2732
        %v2741 = vadd.f32 %v2720, %v2733
        %v2742 = vld [vmem:[%s6 + $0x21] sm:$0x1]
        %v2743 = vlaneseq
        %v2744 = vshrl.u32 %v2743, 7
        %v2745 = vsub.s32 0, %v2744
        %v2746 = vrot.slane %v2742, %v2745
        %v2747 = vmul.f32 %v1637, %v2746
        %v2748 = vmul.f32 %v1638, %v2746
        %v2749 = vmul.f32 %v1639, %v2746
        %v2750 = vmul.f32 %v1640, %v2746
        %v2751 = vmul.f32 %v1641, %v2746
        %v2752 = vmul.f32 %v1642, %v2746
        %v2753 = vmul.f32 %v1643, %v2746
        %v2754 = vmul.f32 %v1644, %v2746
        %v2755 = vadd.f32 %v2734, %v2747
        %v2756 = vadd.f32 %v2735, %v2748
        %v2757 = vadd.f32 %v2736, %v2749
        %v2758 = vadd.f32 %v2737, %v2750
        %v2759 = vadd.f32 %v2738, %v2751
        %v2760 = vadd.f32 %v2739, %v2752
        %v2761 = vadd.f32 %v2740, %v2753
        %v2762 = vadd.f32 %v2741, %v2754
        %v2763 = vld [vmem:[%s6 + $0x28] sm:$0x1]
        %v2764 = vlaneseq
        %v2765 = vshrl.u32 %v2764, 7
        %v2766 = vsub.s32 0, %v2765
        %v2767 = vrot.slane %v2763, %v2766
        %v2768 = vmul.f32 %v1638, %v2767
        %v2769 = vmul.f32 %v1639, %v2767
        %v2770 = vmul.f32 %v1640, %v2767
        %v2771 = vmul.f32 %v1641, %v2767
        %v2772 = vmul.f32 %v1642, %v2767
        %v2773 = vmul.f32 %v1643, %v2767
        %v2774 = vmul.f32 %v1644, %v2767
        %v2775 = vmul.f32 %v1645, %v2767
        %v2776 = vadd.f32 %v2755, %v2768
        %v2777 = vadd.f32 %v2756, %v2769
        %v2778 = vadd.f32 %v2757, %v2770
        %v2779 = vadd.f32 %v2758, %v2771
        %v2780 = vadd.f32 %v2759, %v2772
        %v2781 = vadd.f32 %v2760, %v2773
        %v2782 = vadd.f32 %v2761, %v2774
        %v2783 = vadd.f32 %v2762, %v2775
        %v2784 = vld [vmem:[%s6 + $0x2f] sm:$0x1]
        %v2785 = vlaneseq
        %v2786 = vshrl.u32 %v2785, 7
        %v2787 = vsub.s32 0, %v2786
        %v2788 = vrot.slane %v2784, %v2787
        %v2789 = vmul.f32 %v1639, %v2788
        %v2790 = vmul.f32 %v1640, %v2788
        %v2791 = vmul.f32 %v1641, %v2788
        %v2792 = vmul.f32 %v1642, %v2788
        %v2793 = vmul.f32 %v1643, %v2788
        %v2794 = vmul.f32 %v1644, %v2788
        %v2795 = vmul.f32 %v1645, %v2788
        %v2796 = vmul.f32 %v1646, %v2788
        %v2797 = vadd.f32 %v2776, %v2789
        %v2798 = vadd.f32 %v2777, %v2790
        %v2799 = vadd.f32 %v2778, %v2791
        %v2800 = vadd.f32 %v2779, %v2792
        %v2801 = vadd.f32 %v2780, %v2793
        %v2802 = vadd.f32 %v2781, %v2794
        %v2803 = vadd.f32 %v2782, %v2795
        %v2804 = vadd.f32 %v2783, %v2796
        %v2805 = vld [vmem:[#allocation2 + $0x7] sm:$0xff]
        %v2806 = vld [vmem:[#allocation2 + $0x17] sm:$0xff]
        %v2807 = vld [vmem:[#allocation2 + $0x27] sm:$0xff]
        %v2808 = vld [vmem:[#allocation2 + $0x37] sm:$0xff]
        %v2809 = vld [vmem:[#allocation2 + $0x47] sm:$0xff]
        %v2810 = vld [vmem:[#allocation2 + $0x57] sm:$0xff]
        %v2811 = vld [vmem:[#allocation2 + $0x67] sm:$0xff]
        %v2812 = vld [vmem:[#allocation2 + $0x77] sm:$0xff]
        %v2813 = vld [vmem:[#allocation2 + $0x87] sm:$0xff]
        %v2814 = vld [vmem:[#allocation2 + $0x97] sm:$0xff]
        %v2815 = vld [vmem:[#allocation2 + $0xa7] sm:$0xff]
        %v2816 = vld [vmem:[#allocation2 + $0xb7] sm:$0xff]
        %v2817 = vld [vmem:[#allocation2 + $0xc7] sm:$0xff]
        %v2818 = vld [vmem:[#allocation2 + $0xd7] sm:$0xff]
        %v2819 = vld [vmem:[#allocation2 + $0xe7] sm:$0xff]
        %v2820 = vld [vmem:[#allocation2 + $0xf7] sm:$0xff]
        %v2821 = vld [vmem:[%s6 + $0x6] sm:$0x1]
        %v2822 = vlaneseq
        %v2823 = vshrl.u32 %v2822, 7
        %v2824 = vsub.s32 0, %v2823
        %v2825 = vrot.slane %v2821, %v2824
        %v2826 = vmul.f32 %v2806, %v2825
        %v2827 = vmul.f32 %v2807, %v2825
        %v2828 = vmul.f32 %v2808, %v2825
        %v2829 = vmul.f32 %v2809, %v2825
        %v2830 = vmul.f32 %v2810, %v2825
        %v2831 = vmul.f32 %v2811, %v2825
        %v2832 = vmul.f32 %v2812, %v2825
        %v2833 = vmul.f32 %v2813, %v2825
        %v2834 = vadd.f32 %v2797, %v2826
        %v2835 = vadd.f32 %v2798, %v2827
        %v2836 = vadd.f32 %v2799, %v2828
        %v2837 = vadd.f32 %v2800, %v2829
        %v2838 = vadd.f32 %v2801, %v2830
        %v2839 = vadd.f32 %v2802, %v2831
        %v2840 = vadd.f32 %v2803, %v2832
        %v2841 = vadd.f32 %v2804, %v2833
        %v2842 = vld [vmem:[%s6 + $0xd] sm:$0x1]
        %v2843 = vlaneseq
        %v2844 = vshrl.u32 %v2843, 7
        %v2845 = vsub.s32 0, %v2844
        %v2846 = vrot.slane %v2842, %v2845
        %v2847 = vmul.f32 %v2807, %v2846
        %v2848 = vmul.f32 %v2808, %v2846
        %v2849 = vmul.f32 %v2809, %v2846
        %v2850 = vmul.f32 %v2810, %v2846
        %v2851 = vmul.f32 %v2811, %v2846
        %v2852 = vmul.f32 %v2812, %v2846
        %v2853 = vmul.f32 %v2813, %v2846
        %v2854 = vmul.f32 %v2814, %v2846
        %v2855 = vadd.f32 %v2834, %v2847
        %v2856 = vadd.f32 %v2835, %v2848
        %v2857 = vadd.f32 %v2836, %v2849
        %v2858 = vadd.f32 %v2837, %v2850
        %v2859 = vadd.f32 %v2838, %v2851
        %v2860 = vadd.f32 %v2839, %v2852
        %v2861 = vadd.f32 %v2840, %v2853
        %v2862 = vadd.f32 %v2841, %v2854
        %v2863 = vld [vmem:[%s6 + $0x14] sm:$0x1]
        %v2864 = vlaneseq
        %v2865 = vshrl.u32 %v2864, 7
        %v2866 = vsub.s32 0, %v2865
        %v2867 = vrot.slane %v2863, %v2866
        %v2868 = vmul.f32 %v2808, %v2867
        %v2869 = vmul.f32 %v2809, %v2867
        %v2870 = vmul.f32 %v2810, %v2867
        %v2871 = vmul.f32 %v2811, %v2867
        %v2872 = vmul.f32 %v2812, %v2867
        %v2873 = vmul.f32 %v2813, %v2867
        %v2874 = vmul.f32 %v2814, %v2867
        %v2875 = vmul.f32 %v2815, %v2867
        %v2876 = vadd.f32 %v2855, %v2868
        %v2877 = vadd.f32 %v2856, %v2869
        %v2878 = vadd.f32 %v2857, %v2870
        %v2879 = vadd.f32 %v2858, %v2871
        %v2880 = vadd.f32 %v2859, %v2872
        %v2881 = vadd.f32 %v2860, %v2873
        %v2882 = vadd.f32 %v2861, %v2874
        %v2883 = vadd.f32 %v2862, %v2875
        %v2884 = vld [vmem:[%s6 + $0x1b] sm:$0x1]
        %v2885 = vlaneseq
        %v2886 = vshrl.u32 %v2885, 7
        %v2887 = vsub.s32 0, %v2886
        %v2888 = vrot.slane %v2884, %v2887
        %v2889 = vmul.f32 %v2809, %v2888
        %v2890 = vmul.f32 %v2810, %v2888
        %v2891 = vmul.f32 %v2811, %v2888
        %v2892 = vmul.f32 %v2812, %v2888
        %v2893 = vmul.f32 %v2813, %v2888
        %v2894 = vmul.f32 %v2814, %v2888
        %v2895 = vmul.f32 %v2815, %v2888
        %v2896 = vmul.f32 %v2816, %v2888
        %v2897 = vadd.f32 %v2876, %v2889
        %v2898 = vadd.f32 %v2877, %v2890
        %v2899 = vadd.f32 %v2878, %v2891
        %v2900 = vadd.f32 %v2879, %v2892
        %v2901 = vadd.f32 %v2880, %v2893
        %v2902 = vadd.f32 %v2881, %v2894
        %v2903 = vadd.f32 %v2882, %v2895
        %v2904 = vadd.f32 %v2883, %v2896
        %v2905 = vld [vmem:[%s6 + $0x22] sm:$0x1]
        %v2906 = vlaneseq
        %v2907 = vshrl.u32 %v2906, 7
        %v2908 = vsub.s32 0, %v2907
        %v2909 = vrot.slane %v2905, %v2908
        %v2910 = vmul.f32 %v2810, %v2909
        %v2911 = vmul.f32 %v2811, %v2909
        %v2912 = vmul.f32 %v2812, %v2909
        %v2913 = vmul.f32 %v2813, %v2909
        %v2914 = vmul.f32 %v2814, %v2909
        %v2915 = vmul.f32 %v2815, %v2909
        %v2916 = vmul.f32 %v2816, %v2909
        %v2917 = vmul.f32 %v2817, %v2909
        %v2918 = vadd.f32 %v2897, %v2910
        %v2919 = vadd.f32 %v2898, %v2911
        %v2920 = vadd.f32 %v2899, %v2912
        %v2921 = vadd.f32 %v2900, %v2913
        %v2922 = vadd.f32 %v2901, %v2914
        %v2923 = vadd.f32 %v2902, %v2915
        %v2924 = vadd.f32 %v2903, %v2916
        %v2925 = vadd.f32 %v2904, %v2917
        %v2926 = vld [vmem:[%s6 + $0x29] sm:$0x1]
        %v2927 = vlaneseq
        %v2928 = vshrl.u32 %v2927, 7
        %v2929 = vsub.s32 0, %v2928
        %v2930 = vrot.slane %v2926, %v2929
        %v2931 = vmul.f32 %v2811, %v2930
        %v2932 = vmul.f32 %v2812, %v2930
        %v2933 = vmul.f32 %v2813, %v2930
        %v2934 = vmul.f32 %v2814, %v2930
        %v2935 = vmul.f32 %v2815, %v2930
        %v2936 = vmul.f32 %v2816, %v2930
        %v2937 = vmul.f32 %v2817, %v2930
        %v2938 = vmul.f32 %v2818, %v2930
        %v2939 = vadd.f32 %v2918, %v2931
        %v2940 = vadd.f32 %v2919, %v2932
        %v2941 = vadd.f32 %v2920, %v2933
        %v2942 = vadd.f32 %v2921, %v2934
        %v2943 = vadd.f32 %v2922, %v2935
        %v2944 = vadd.f32 %v2923, %v2936
        %v2945 = vadd.f32 %v2924, %v2937
        %v2946 = vadd.f32 %v2925, %v2938
        %v2947 = vld [vmem:[%s6 + $0x30] sm:$0x1]
        %v2948 = vlaneseq
        %v2949 = vshrl.u32 %v2948, 7
        %v2950 = vsub.s32 0, %v2949
        %v2951 = vrot.slane %v2947, %v2950
        %v2952 = vmul.f32 %v2812, %v2951
        %v2953 = vmul.f32 %v2813, %v2951
        %v2954 = vmul.f32 %v2814, %v2951
        %v2955 = vmul.f32 %v2815, %v2951
        %v2956 = vmul.f32 %v2816, %v2951
        %v2957 = vmul.f32 %v2817, %v2951
        %v2958 = vmul.f32 %v2818, %v2951
        %v2959 = vmul.f32 %v2819, %v2951
        %v2960 = vadd.f32 %v2939, %v2952
        %v2961 = vadd.f32 %v2940, %v2953
        %v2962 = vadd.f32 %v2941, %v2954
        %v2963 = vadd.f32 %v2942, %v2955
        %v2964 = vadd.f32 %v2943, %v2956
        %v2965 = vadd.f32 %v2944, %v2957
        %v2966 = vadd.f32 %v2945, %v2958
        %v2967 = vadd.f32 %v2946, %v2959
        %v2968 = vld [vmem:[%s8 + $0x2] sm:$0x1]
        %v2969 = vlaneseq
        %v2970 = vshrl.u32 %v2969, 7
        %v2971 = vsub.s32 0, %v2970
        %v2972 = vrot.slane %v2968, %v2971
        %v2973 = vadd.f32 %v2960, %v2972
        %v2974 = vadd.f32 %v2961, %v2972
        %v2975 = vadd.f32 %v2962, %v2972
        %v2976 = vadd.f32 %v2963, %v2972
        %v2977 = vadd.f32 %v2964, %v2972
        %v2978 = vadd.f32 %v2965, %v2972
        %v2979 = vadd.f32 %v2966, %v2972
        %v2980 = vadd.f32 %v2967, %v2972
        %v2981 = vpack.c.bf16 %v2974, %v2973
        %v2982 = vpack.c.bf16 %v2976, %v2975
        %v2983 = vpack.c.bf16 %v2978, %v2977
        %v2984 = vpack.c.bf16 %v2980, %v2979
        %s2985 = scalar_lea.vmem %s9, 64
        %v2986 = vld [vmem:[%s2985] sm:$0xf]
        %v2987 = vld [vmem:[%s2985 + $0x4] sm:$0xf]
        %v2988 = vld [vmem:[%s2985 + $0x8] sm:$0xf]
        %v2989 = vld [vmem:[%s2985 + $0xc] sm:$0xf]
        %v2990 = vld [vmem:[%s2985 + $0x10] sm:$0xf]
        %v2991 = vld [vmem:[%s2985 + $0x14] sm:$0xf]
        %v2992 = vld [vmem:[%s2985 + $0x18] sm:$0xf]
        %v2993 = vld [vmem:[%s2985 + $0x1c] sm:$0xf]
        %v2994 = vld [vmem:[%s10 + $0x2] sm:$0x1]
        %v2995 = vlaneseq
        %v2996 = vshrl.u32 %v2995, 7
        %v2997 = vsub.s32 0, %v2996
        %v2998 = vrot.slane %v2994, %v2997
        %v3007 = vunpack.c.l.b16 %v2986
        %v3008 = vunpack.c.l.b16 %v2987
        %v3009 = vunpack.c.l.b16 %v2988
        %v3010 = vunpack.c.l.b16 %v2989
        %v3011 = vunpack.c.l.b16 %v2990
        %v3012 = vunpack.c.l.b16 %v2991
        %v3013 = vunpack.c.l.b16 %v2992
        %v3014 = vunpack.c.l.b16 %v2993
        %v3015 = vpack.c.b16 %v3008, %v3007
        %v3016 = vpack.c.b16 %v3010, %v3009
        %v3017 = vpack.c.b16 %v3012, %v3011
        %v3018 = vpack.c.b16 %v3014, %v3013
        %v3024 = vsel %vm764, %v2981, 0
        %v3027 = vsel %vm764, %v2982, 0
        %v3030 = vsel %vm764, %v2983, 0
        %v3033 = vsel %vm764, %v2984, 0
        %3035 = vmatprep.subr.bf16.mxu0 0
        %3036 = vmatpush1.bf16.msra.mxu0 %v3015
        %3037 = vmatprep.subr.bf16.mxu0 0
        %3038 = vmatpush1.bf16.msra.mxu0 %v3016
        %3039 = vmatprep.subr.bf16.mxu0 0
        %3040 = vmatpush1.bf16.msra.mxu0 %v3017
        %3041 = vmatprep.subr.bf16.mxu0 0
        %3042 = vmatpush1.bf16.msra.mxu0 %v3018
        %3043 = vmatprep.subr.bf16.mxu0 0
        %3044 = vmatpush1.bf16.msra.mxu0 0
        %3045 = vmatprep.subr.bf16.mxu0 0
        %3046 = vmatpush1.bf16.msra.mxu0 0
        %3047 = vmatprep.subr.bf16.mxu0 0
        %3048 = vmatpush1.bf16.msra.mxu0 0
        %3049 = vmatprep.subr.bf16.mxu0 0
        %3050 = vmatpush1.bf16.msra.mxu0 0
        %3051 = vmatprep.subr.bf16.mxu0 0
        %3052 = vmatpush1.bf16.msra.mxu0 0
        %3053 = vmatprep.subr.bf16.mxu0 0
        %3054 = vmatpush1.bf16.msra.mxu0 0
        %3055 = vmatprep.subr.bf16.mxu0 0
        %3056 = vmatpush1.bf16.msra.mxu0 0
        %3057 = vmatprep.subr.bf16.mxu0 0
        %3058 = vmatpush1.bf16.msra.mxu0 0
        %3059 = vmatprep.subr.bf16.mxu0 0
        %3060 = vmatpush1.bf16.msra.mxu0 0
        %3061 = vmatprep.subr.bf16.mxu0 0
        %3062 = vmatpush1.bf16.msra.mxu0 0
        %3063 = vmatprep.subr.bf16.mxu0 0
        %3064 = vmatpush1.bf16.msra.mxu0 0
        %3065 = vmatprep.subr.bf16.mxu0 0
        %3066 = vmatpush1.bf16.msra.mxu0 0
        %3067 = vmatprep.mubr.bf16.mxu0 0
        %3068 = vmatmul.mubr.bf16.gmra.mrb[0].mxu0 %v3024
        %v3069 = vpop.f32.mrb[0].mxu0
        %v3070 = vadd.f32 %v2998, %v3069
        %v3071 = vpop.f32.mrb[0].mxu0
        %v3072 = vpop.f32.mrb[0].mxu0
        %v3073 = vadd.f32 %v2998, %v3072
        %v3074 = vpop.f32.mrb[0].mxu0
        %3075 = vmatprep.mubr.bf16.mxu0 0
        %3076 = vmatmul.mubr.bf16.gmra.mrb[0].mxu0 %v3027
        %v3077 = vpop.f32.mrb[0].mxu0
        %v3078 = vadd.f32 %v2998, %v3077
        %v3079 = vpop.f32.mrb[0].mxu0
        %v3080 = vpop.f32.mrb[0].mxu0
        %v3081 = vadd.f32 %v2998, %v3080
        %v3082 = vpop.f32.mrb[0].mxu0
        %3083 = vmatprep.mubr.bf16.mxu0 0
        %3084 = vmatmul.mubr.bf16.gmra.mrb[0].mxu0 %v3030
        %v3085 = vpop.f32.mrb[0].mxu0
        %v3086 = vadd.f32 %v2998, %v3085
        %v3087 = vpop.f32.mrb[0].mxu0
        %v3088 = vpop.f32.mrb[0].mxu0
        %v3089 = vadd.f32 %v2998, %v3088
        %v3090 = vpop.f32.mrb[0].mxu0
        %3091 = vmatprep.mubr.bf16.mxu0 0
        %3092 = vmatmul.mubr.bf16.gmra.mrb[0].mxu0 %v3033
        %v3093 = vpop.f32.mrb[0].mxu0
        %v3094 = vadd.f32 %v2998, %v3093
        %v3095 = vpop.f32.mrb[0].mxu0
        %v3096 = vpop.f32.mrb[0].mxu0
        %v3097 = vadd.f32 %v2998, %v3096
        %v3098 = vpop.f32.mrb[0].mxu0
        %3099 = vdwg.mxu0
        %v3100 = vsel %vm648, %v3070, 0.0
        %v3101 = vsel %vm648, %v3073, 0.0
        %v3102 = vadd.f32 %v3100, %v3101
        %v3103 = vsel %vm648, %v3078, 0.0
        %v3104 = vadd.f32 %v3102, %v3103
        %v3105 = vsel %vm648, %v3081, 0.0
        %v3106 = vadd.f32 %v3104, %v3105
        %v3107 = vsel %vm648, %v3086, 0.0
        %v3108 = vadd.f32 %v3106, %v3107
        %v3109 = vsel %vm648, %v3089, 0.0
        %v3110 = vadd.f32 %v3108, %v3109
        %v3111 = vsel %vm648, %v3094, 0.0
        %v3112 = vadd.f32 %v3110, %v3111
        %v3113 = vsel %vm648, %v3097, 0.0
        %v3114 = vadd.f32 %v3112, %v3113
        %v3115 = vrot.slane %v3114, 4
        %v3116 = vadd.f32 %v3114, %v3115
        %v3117 = vrot.slane %v3116, 2
        %v3118 = vadd.f32 %v3116, %v3117
        %v3119 = vrot.slane %v3118, 1
        %v3120 = vadd.f32 %v3118, %v3119
        %v3121 = vmul.f32 %v3120, 0.015625
        %v3122 = vld [vmem:[#allocation2] sm:$0xff]
        %v3123 = vld [vmem:[#allocation2 + $0x10] sm:$0xff]
        %v3124 = vld [vmem:[#allocation2 + $0x20] sm:$0xff]
        %v3125 = vld [vmem:[#allocation2 + $0x30] sm:$0xff]
        %v3126 = vld [vmem:[#allocation2 + $0x40] sm:$0xff]
        %v3127 = vld [vmem:[#allocation2 + $0x50] sm:$0xff]
        %v3128 = vld [vmem:[#allocation2 + $0x60] sm:$0xff]
        %v3129 = vld [vmem:[#allocation2 + $0x70] sm:$0xff]
        %v3130 = vld [vmem:[#allocation2 + $0x80] sm:$0xff]
        %v3131 = vld [vmem:[#allocation2 + $0x90] sm:$0xff]
        %v3132 = vld [vmem:[#allocation2 + $0xa0] sm:$0xff]
        %v3133 = vld [vmem:[#allocation2 + $0xb0] sm:$0xff]
        %v3134 = vld [vmem:[#allocation2 + $0xc0] sm:$0xff]
        %v3135 = vld [vmem:[#allocation2 + $0xd0] sm:$0xff]
        %v3136 = vld [vmem:[#allocation2 + $0xe0] sm:$0xff]
        %v3137 = vld [vmem:[#allocation2 + $0xf0] sm:$0xff]
        %v3138 = vld [vmem:[%s7] sm:$0x1]
        %v3139 = vlaneseq
        %v3140 = vshrl.u32 %v3139, 7
        %v3141 = vsub.s32 0, %v3140
        %v3142 = vrot.slane %v3138, %v3141
        %v3143 = vmul.f32 %v3122, %v3142
        %v3144 = vmul.f32 %v3123, %v3142
        %v3145 = vmul.f32 %v3124, %v3142
        %v3146 = vmul.f32 %v3125, %v3142
        %v3147 = vmul.f32 %v3126, %v3142
        %v3148 = vmul.f32 %v3127, %v3142
        %v3149 = vmul.f32 %v3128, %v3142
        %v3150 = vmul.f32 %v3129, %v3142
        %v3151 = vadd.f32 %v3143, 0.0
        %v3152 = vadd.f32 %v3144, 0.0
        %v3153 = vadd.f32 %v3145, 0.0
        %v3154 = vadd.f32 %v3146, 0.0
        %v3155 = vadd.f32 %v3147, 0.0
        %v3156 = vadd.f32 %v3148, 0.0
        %v3157 = vadd.f32 %v3149, 0.0
        %v3158 = vadd.f32 %v3150, 0.0
        %v3159 = vld [vmem:[%s7 + $0x9] sm:$0x1]
        %v3160 = vlaneseq
        %v3161 = vshrl.u32 %v3160, 7
        %v3162 = vsub.s32 0, %v3161
        %v3163 = vrot.slane %v3159, %v3162
        %v3164 = vmul.f32 %v3123, %v3163
        %v3165 = vmul.f32 %v3124, %v3163
        %v3166 = vmul.f32 %v3125, %v3163
        %v3167 = vmul.f32 %v3126, %v3163
        %v3168 = vmul.f32 %v3127, %v3163
        %v3169 = vmul.f32 %v3128, %v3163
        %v3170 = vmul.f32 %v3129, %v3163
        %v3171 = vmul.f32 %v3130, %v3163
        %v3172 = vadd.f32 %v3151, %v3164
        %v3173 = vadd.f32 %v3152, %v3165
        %v3174 = vadd.f32 %v3153, %v3166
        %v3175 = vadd.f32 %v3154, %v3167
        %v3176 = vadd.f32 %v3155, %v3168
        %v3177 = vadd.f32 %v3156, %v3169
        %v3178 = vadd.f32 %v3157, %v3170
        %v3179 = vadd.f32 %v3158, %v3171
        %v3180 = vld [vmem:[%s7 + $0x12] sm:$0x1]
        %v3181 = vlaneseq
        %v3182 = vshrl.u32 %v3181, 7
        %v3183 = vsub.s32 0, %v3182
        %v3184 = vrot.slane %v3180, %v3183
        %v3185 = vmul.f32 %v3124, %v3184
        %v3186 = vmul.f32 %v3125, %v3184
        %v3187 = vmul.f32 %v3126, %v3184
        %v3188 = vmul.f32 %v3127, %v3184
        %v3189 = vmul.f32 %v3128, %v3184
        %v3190 = vmul.f32 %v3129, %v3184
        %v3191 = vmul.f32 %v3130, %v3184
        %v3192 = vmul.f32 %v3131, %v3184
        %v3193 = vadd.f32 %v3172, %v3185
        %v3194 = vadd.f32 %v3173, %v3186
        %v3195 = vadd.f32 %v3174, %v3187
        %v3196 = vadd.f32 %v3175, %v3188
        %v3197 = vadd.f32 %v3176, %v3189
        %v3198 = vadd.f32 %v3177, %v3190
        %v3199 = vadd.f32 %v3178, %v3191
        %v3200 = vadd.f32 %v3179, %v3192
        %v3201 = vld [vmem:[%s7 + $0x1b] sm:$0x1]
        %v3202 = vlaneseq
        %v3203 = vshrl.u32 %v3202, 7
        %v3204 = vsub.s32 0, %v3203
        %v3205 = vrot.slane %v3201, %v3204
        %v3206 = vmul.f32 %v3125, %v3205
        %v3207 = vmul.f32 %v3126, %v3205
        %v3208 = vmul.f32 %v3127, %v3205
        %v3209 = vmul.f32 %v3128, %v3205
        %v3210 = vmul.f32 %v3129, %v3205
        %v3211 = vmul.f32 %v3130, %v3205
        %v3212 = vmul.f32 %v3131, %v3205
        %v3213 = vmul.f32 %v3132, %v3205
        %v3214 = vadd.f32 %v3193, %v3206
        %v3215 = vadd.f32 %v3194, %v3207
        %v3216 = vadd.f32 %v3195, %v3208
        %v3217 = vadd.f32 %v3196, %v3209
        %v3218 = vadd.f32 %v3197, %v3210
        %v3219 = vadd.f32 %v3198, %v3211
        %v3220 = vadd.f32 %v3199, %v3212
        %v3221 = vadd.f32 %v3200, %v3213
        %v3222 = vld [vmem:[%s7 + $0x24] sm:$0x1]
        %v3223 = vlaneseq
        %v3224 = vshrl.u32 %v3223, 7
        %v3225 = vsub.s32 0, %v3224
        %v3226 = vrot.slane %v3222, %v3225
        %v3227 = vmul.f32 %v3126, %v3226
        %v3228 = vmul.f32 %v3127, %v3226
        %v3229 = vmul.f32 %v3128, %v3226
        %v3230 = vmul.f32 %v3129, %v3226
        %v3231 = vmul.f32 %v3130, %v3226
        %v3232 = vmul.f32 %v3131, %v3226
        %v3233 = vmul.f32 %v3132, %v3226
        %v3234 = vmul.f32 %v3133, %v3226
        %v3235 = vadd.f32 %v3214, %v3227
        %v3236 = vadd.f32 %v3215, %v3228
        %v3237 = vadd.f32 %v3216, %v3229
        %v3238 = vadd.f32 %v3217, %v3230
        %v3239 = vadd.f32 %v3218, %v3231
        %v3240 = vadd.f32 %v3219, %v3232
        %v3241 = vadd.f32 %v3220, %v3233
        %v3242 = vadd.f32 %v3221, %v3234
        %v3243 = vld [vmem:[%s7 + $0x2d] sm:$0x1]
        %v3244 = vlaneseq
        %v3245 = vshrl.u32 %v3244, 7
        %v3246 = vsub.s32 0, %v3245
        %v3247 = vrot.slane %v3243, %v3246
        %v3248 = vmul.f32 %v3127, %v3247
        %v3249 = vmul.f32 %v3128, %v3247
        %v3250 = vmul.f32 %v3129, %v3247
        %v3251 = vmul.f32 %v3130, %v3247
        %v3252 = vmul.f32 %v3131, %v3247
        %v3253 = vmul.f32 %v3132, %v3247
        %v3254 = vmul.f32 %v3133, %v3247
        %v3255 = vmul.f32 %v3134, %v3247
        %v3256 = vadd.f32 %v3235, %v3248
        %v3257 = vadd.f32 %v3236, %v3249
        %v3258 = vadd.f32 %v3237, %v3250
        %v3259 = vadd.f32 %v3238, %v3251
        %v3260 = vadd.f32 %v3239, %v3252
        %v3261 = vadd.f32 %v3240, %v3253
        %v3262 = vadd.f32 %v3241, %v3254
        %v3263 = vadd.f32 %v3242, %v3255
        %v3264 = vld [vmem:[%s7 + $0x36] sm:$0x1]
        %v3265 = vlaneseq
        %v3266 = vshrl.u32 %v3265, 7
        %v3267 = vsub.s32 0, %v3266
        %v3268 = vrot.slane %v3264, %v3267
        %v3269 = vmul.f32 %v3128, %v3268
        %v3270 = vmul.f32 %v3129, %v3268
        %v3271 = vmul.f32 %v3130, %v3268
        %v3272 = vmul.f32 %v3131, %v3268
        %v3273 = vmul.f32 %v3132, %v3268
        %v3274 = vmul.f32 %v3133, %v3268
        %v3275 = vmul.f32 %v3134, %v3268
        %v3276 = vmul.f32 %v3135, %v3268
        %v3277 = vadd.f32 %v3256, %v3269
        %v3278 = vadd.f32 %v3257, %v3270
        %v3279 = vadd.f32 %v3258, %v3271
        %v3280 = vadd.f32 %v3259, %v3272
        %v3281 = vadd.f32 %v3260, %v3273
        %v3282 = vadd.f32 %v3261, %v3274
        %v3283 = vadd.f32 %v3262, %v3275
        %v3284 = vadd.f32 %v3263, %v3276
        %v3285 = vld [vmem:[%s7 + $0x3f] sm:$0x1]
        %v3286 = vlaneseq
        %v3287 = vshrl.u32 %v3286, 7
        %v3288 = vsub.s32 0, %v3287
        %v3289 = vrot.slane %v3285, %v3288
        %v3290 = vmul.f32 %v3129, %v3289
        %v3291 = vmul.f32 %v3130, %v3289
        %v3292 = vmul.f32 %v3131, %v3289
        %v3293 = vmul.f32 %v3132, %v3289
        %v3294 = vmul.f32 %v3133, %v3289
        %v3295 = vmul.f32 %v3134, %v3289
        %v3296 = vmul.f32 %v3135, %v3289
        %v3297 = vmul.f32 %v3136, %v3289
        %v3298 = vadd.f32 %v3277, %v3290
        %v3299 = vadd.f32 %v3278, %v3291
        %v3300 = vadd.f32 %v3279, %v3292
        %v3301 = vadd.f32 %v3280, %v3293
        %v3302 = vadd.f32 %v3281, %v3294
        %v3303 = vadd.f32 %v3282, %v3295
        %v3304 = vadd.f32 %v3283, %v3296
        %v3305 = vadd.f32 %v3284, %v3297
        %v3306 = vld [vmem:[%s7 + $0x48] sm:$0x1]
        %v3307 = vlaneseq
        %v3308 = vshrl.u32 %v3307, 7
        %v3309 = vsub.s32 0, %v3308
        %v3310 = vrot.slane %v3306, %v3309
        %v3311 = vmul.f32 %v3130, %v3310
        %v3312 = vmul.f32 %v3131, %v3310
        %v3313 = vmul.f32 %v3132, %v3310
        %v3314 = vmul.f32 %v3133, %v3310
        %v3315 = vmul.f32 %v3134, %v3310
        %v3316 = vmul.f32 %v3135, %v3310
        %v3317 = vmul.f32 %v3136, %v3310
        %v3318 = vmul.f32 %v3137, %v3310
        %v3319 = vadd.f32 %v3298, %v3311
        %v3320 = vadd.f32 %v3299, %v3312
        %v3321 = vadd.f32 %v3300, %v3313
        %v3322 = vadd.f32 %v3301, %v3314
        %v3323 = vadd.f32 %v3302, %v3315
        %v3324 = vadd.f32 %v3303, %v3316
        %v3325 = vadd.f32 %v3304, %v3317
        %v3326 = vadd.f32 %v3305, %v3318
        %v3327 = vld [vmem:[%s7 + $0x1] sm:$0x1]
        %v3328 = vlaneseq
        %v3329 = vshrl.u32 %v3328, 7
        %v3330 = vsub.s32 0, %v3329
        %v3331 = vrot.slane %v3327, %v3330
        %v3332 = vmul.f32 %v1907, %v3331
        %v3333 = vmul.f32 %v1908, %v3331
        %v3334 = vmul.f32 %v1909, %v3331
        %v3335 = vmul.f32 %v1910, %v3331
        %v3336 = vmul.f32 %v1911, %v3331
        %v3337 = vmul.f32 %v1912, %v3331
        %v3338 = vmul.f32 %v1913, %v3331
        %v3339 = vmul.f32 %v1914, %v3331
        %v3340 = vadd.f32 %v3319, %v3332
        %v3341 = vadd.f32 %v3320, %v3333
        %v3342 = vadd.f32 %v3321, %v3334
        %v3343 = vadd.f32 %v3322, %v3335
        %v3344 = vadd.f32 %v3323, %v3336
        %v3345 = vadd.f32 %v3324, %v3337
        %v3346 = vadd.f32 %v3325, %v3338
        %v3347 = vadd.f32 %v3326, %v3339
        %v3348 = vld [vmem:[%s7 + $0xa] sm:$0x1]
        %v3349 = vlaneseq
        %v3350 = vshrl.u32 %v3349, 7
        %v3351 = vsub.s32 0, %v3350
        %v3352 = vrot.slane %v3348, %v3351
        %v3353 = vmul.f32 %v1908, %v3352
        %v3354 = vmul.f32 %v1909, %v3352
        %v3355 = vmul.f32 %v1910, %v3352
        %v3356 = vmul.f32 %v1911, %v3352
        %v3357 = vmul.f32 %v1912, %v3352
        %v3358 = vmul.f32 %v1913, %v3352
        %v3359 = vmul.f32 %v1914, %v3352
        %v3360 = vmul.f32 %v1915, %v3352
        %v3361 = vadd.f32 %v3340, %v3353
        %v3362 = vadd.f32 %v3341, %v3354
        %v3363 = vadd.f32 %v3342, %v3355
        %v3364 = vadd.f32 %v3343, %v3356
        %v3365 = vadd.f32 %v3344, %v3357
        %v3366 = vadd.f32 %v3345, %v3358
        %v3367 = vadd.f32 %v3346, %v3359
        %v3368 = vadd.f32 %v3347, %v3360
        %v3369 = vld [vmem:[%s7 + $0x13] sm:$0x1]
        %v3370 = vlaneseq
        %v3371 = vshrl.u32 %v3370, 7
        %v3372 = vsub.s32 0, %v3371
        %v3373 = vrot.slane %v3369, %v3372
        %v3374 = vmul.f32 %v1909, %v3373
        %v3375 = vmul.f32 %v1910, %v3373
        %v3376 = vmul.f32 %v1911, %v3373
        %v3377 = vmul.f32 %v1912, %v3373
        %v3378 = vmul.f32 %v1913, %v3373
        %v3379 = vmul.f32 %v1914, %v3373
        %v3380 = vmul.f32 %v1915, %v3373
        %v3381 = vmul.f32 %v1916, %v3373
        %v3382 = vadd.f32 %v3361, %v3374
        %v3383 = vadd.f32 %v3362, %v3375
        %v3384 = vadd.f32 %v3363, %v3376
        %v3385 = vadd.f32 %v3364, %v3377
        %v3386 = vadd.f32 %v3365, %v3378
        %v3387 = vadd.f32 %v3366, %v3379
        %v3388 = vadd.f32 %v3367, %v3380
        %v3389 = vadd.f32 %v3368, %v3381
        %v3390 = vld [vmem:[%s7 + $0x1c] sm:$0x1]
        %v3391 = vlaneseq
        %v3392 = vshrl.u32 %v3391, 7
        %v3393 = vsub.s32 0, %v3392
        %v3394 = vrot.slane %v3390, %v3393
        %v3395 = vmul.f32 %v1910, %v3394
        %v3396 = vmul.f32 %v1911, %v3394
        %v3397 = vmul.f32 %v1912, %v3394
        %v3398 = vmul.f32 %v1913, %v3394
        %v3399 = vmul.f32 %v1914, %v3394
        %v3400 = vmul.f32 %v1915, %v3394
        %v3401 = vmul.f32 %v1916, %v3394
        %v3402 = vmul.f32 %v1917, %v3394
        %v3403 = vadd.f32 %v3382, %v3395
        %v3404 = vadd.f32 %v3383, %v3396
        %v3405 = vadd.f32 %v3384, %v3397
        %v3406 = vadd.f32 %v3385, %v3398
        %v3407 = vadd.f32 %v3386, %v3399
        %v3408 = vadd.f32 %v3387, %v3400
        %v3409 = vadd.f32 %v3388, %v3401
        %v3410 = vadd.f32 %v3389, %v3402
        %v3411 = vld [vmem:[%s7 + $0x25] sm:$0x1]
        %v3412 = vlaneseq
        %v3413 = vshrl.u32 %v3412, 7
        %v3414 = vsub.s32 0, %v3413
        %v3415 = vrot.slane %v3411, %v3414
        %v3416 = vmul.f32 %v1911, %v3415
        %v3417 = vmul.f32 %v1912, %v3415
        %v3418 = vmul.f32 %v1913, %v3415
        %v3419 = vmul.f32 %v1914, %v3415
        %v3420 = vmul.f32 %v1915, %v3415
        %v3421 = vmul.f32 %v1916, %v3415
        %v3422 = vmul.f32 %v1917, %v3415
        %v3423 = vmul.f32 %v1918, %v3415
        %v3424 = vadd.f32 %v3403, %v3416
        %v3425 = vadd.f32 %v3404, %v3417
        %v3426 = vadd.f32 %v3405, %v3418
        %v3427 = vadd.f32 %v3406, %v3419
        %v3428 = vadd.f32 %v3407, %v3420
        %v3429 = vadd.f32 %v3408, %v3421
        %v3430 = vadd.f32 %v3409, %v3422
        %v3431 = vadd.f32 %v3410, %v3423
        %v3432 = vld [vmem:[%s7 + $0x2e] sm:$0x1]
        %v3433 = vlaneseq
        %v3434 = vshrl.u32 %v3433, 7
        %v3435 = vsub.s32 0, %v3434
        %v3436 = vrot.slane %v3432, %v3435
        %v3437 = vmul.f32 %v1912, %v3436
        %v3438 = vmul.f32 %v1913, %v3436
        %v3439 = vmul.f32 %v1914, %v3436
        %v3440 = vmul.f32 %v1915, %v3436
        %v3441 = vmul.f32 %v1916, %v3436
        %v3442 = vmul.f32 %v1917, %v3436
        %v3443 = vmul.f32 %v1918, %v3436
        %v3444 = vmul.f32 %v1919, %v3436
        %v3445 = vadd.f32 %v3424, %v3437
        %v3446 = vadd.f32 %v3425, %v3438
        %v3447 = vadd.f32 %v3426, %v3439
        %v3448 = vadd.f32 %v3427, %v3440
        %v3449 = vadd.f32 %v3428, %v3441
        %v3450 = vadd.f32 %v3429, %v3442
        %v3451 = vadd.f32 %v3430, %v3443
        %v3452 = vadd.f32 %v3431, %v3444
        %v3453 = vld [vmem:[%s7 + $0x37] sm:$0x1]
        %v3454 = vlaneseq
        %v3455 = vshrl.u32 %v3454, 7
        %v3456 = vsub.s32 0, %v3455
        %v3457 = vrot.slane %v3453, %v3456
        %v3458 = vmul.f32 %v1913, %v3457
        %v3459 = vmul.f32 %v1914, %v3457
        %v3460 = vmul.f32 %v1915, %v3457
        %v3461 = vmul.f32 %v1916, %v3457
        %v3462 = vmul.f32 %v1917, %v3457
        %v3463 = vmul.f32 %v1918, %v3457
        %v3464 = vmul.f32 %v1919, %v3457
        %v3465 = vmul.f32 %v1920, %v3457
        %v3466 = vadd.f32 %v3445, %v3458
        %v3467 = vadd.f32 %v3446, %v3459
        %v3468 = vadd.f32 %v3447, %v3460
        %v3469 = vadd.f32 %v3448, %v3461
        %v3470 = vadd.f32 %v3449, %v3462
        %v3471 = vadd.f32 %v3450, %v3463
        %v3472 = vadd.f32 %v3451, %v3464
        %v3473 = vadd.f32 %v3452, %v3465
        %v3474 = vld [vmem:[%s7 + $0x40] sm:$0x1]
        %v3475 = vlaneseq
        %v3476 = vshrl.u32 %v3475, 7
        %v3477 = vsub.s32 0, %v3476
        %v3478 = vrot.slane %v3474, %v3477
        %v3479 = vmul.f32 %v1914, %v3478
        %v3480 = vmul.f32 %v1915, %v3478
        %v3481 = vmul.f32 %v1916, %v3478
        %v3482 = vmul.f32 %v1917, %v3478
        %v3483 = vmul.f32 %v1918, %v3478
        %v3484 = vmul.f32 %v1919, %v3478
        %v3485 = vmul.f32 %v1920, %v3478
        %v3486 = vmul.f32 %v1921, %v3478
        %v3487 = vadd.f32 %v3466, %v3479
        %v3488 = vadd.f32 %v3467, %v3480
        %v3489 = vadd.f32 %v3468, %v3481
        %v3490 = vadd.f32 %v3469, %v3482
        %v3491 = vadd.f32 %v3470, %v3483
        %v3492 = vadd.f32 %v3471, %v3484
        %v3493 = vadd.f32 %v3472, %v3485
        %v3494 = vadd.f32 %v3473, %v3486
        %v3495 = vld [vmem:[%s7 + $0x49] sm:$0x1]
        %v3496 = vlaneseq
        %v3497 = vshrl.u32 %v3496, 7
        %v3498 = vsub.s32 0, %v3497
        %v3499 = vrot.slane %v3495, %v3498
        %v3500 = vmul.f32 %v1915, %v3499
        %v3501 = vmul.f32 %v1916, %v3499
        %v3502 = vmul.f32 %v1917, %v3499
        %v3503 = vmul.f32 %v1918, %v3499
        %v3504 = vmul.f32 %v1919, %v3499
        %v3505 = vmul.f32 %v1920, %v3499
        %v3506 = vmul.f32 %v1921, %v3499
        %v3507 = vmul.f32 %v1922, %v3499
        %v3508 = vadd.f32 %v3487, %v3500
        %v3509 = vadd.f32 %v3488, %v3501
        %v3510 = vadd.f32 %v3489, %v3502
        %v3511 = vadd.f32 %v3490, %v3503
        %v3512 = vadd.f32 %v3491, %v3504
        %v3513 = vadd.f32 %v3492, %v3505
        %v3514 = vadd.f32 %v3493, %v3506
        %v3515 = vadd.f32 %v3494, %v3507
        %v3516 = vld [vmem:[%s7 + $0x2] sm:$0x1]
        %v3517 = vlaneseq
        %v3518 = vshrl.u32 %v3517, 7
        %v3519 = vsub.s32 0, %v3518
        %v3520 = vrot.slane %v3516, %v3519
        %v3521 = vmul.f32 %v1196, %v3520
        %v3522 = vmul.f32 %v1197, %v3520
        %v3523 = vmul.f32 %v1198, %v3520
        %v3524 = vmul.f32 %v1199, %v3520
        %v3525 = vmul.f32 %v1200, %v3520
        %v3526 = vmul.f32 %v1201, %v3520
        %v3527 = vmul.f32 %v1202, %v3520
        %v3528 = vmul.f32 %v1203, %v3520
        %v3529 = vadd.f32 %v3508, %v3521
        %v3530 = vadd.f32 %v3509, %v3522
        %v3531 = vadd.f32 %v3510, %v3523
        %v3532 = vadd.f32 %v3511, %v3524
        %v3533 = vadd.f32 %v3512, %v3525
        %v3534 = vadd.f32 %v3513, %v3526
        %v3535 = vadd.f32 %v3514, %v3527
        %v3536 = vadd.f32 %v3515, %v3528
        %v3537 = vld [vmem:[%s7 + $0xb] sm:$0x1]
        %v3538 = vlaneseq
        %v3539 = vshrl.u32 %v3538, 7
        %v3540 = vsub.s32 0, %v3539
        %v3541 = vrot.slane %v3537, %v3540
        %v3542 = vmul.f32 %v1197, %v3541
        %v3543 = vmul.f32 %v1198, %v3541
        %v3544 = vmul.f32 %v1199, %v3541
        %v3545 = vmul.f32 %v1200, %v3541
        %v3546 = vmul.f32 %v1201, %v3541
        %v3547 = vmul.f32 %v1202, %v3541
        %v3548 = vmul.f32 %v1203, %v3541
        %v3549 = vmul.f32 %v1204, %v3541
        %v3550 = vadd.f32 %v3529, %v3542
        %v3551 = vadd.f32 %v3530, %v3543
        %v3552 = vadd.f32 %v3531, %v3544
        %v3553 = vadd.f32 %v3532, %v3545
        %v3554 = vadd.f32 %v3533, %v3546
        %v3555 = vadd.f32 %v3534, %v3547
        %v3556 = vadd.f32 %v3535, %v3548
        %v3557 = vadd.f32 %v3536, %v3549
        %v3558 = vld [vmem:[%s7 + $0x14] sm:$0x1]
        %v3559 = vlaneseq
        %v3560 = vshrl.u32 %v3559, 7
        %v3561 = vsub.s32 0, %v3560
        %v3562 = vrot.slane %v3558, %v3561
        %v3563 = vmul.f32 %v1198, %v3562
        %v3564 = vmul.f32 %v1199, %v3562
        %v3565 = vmul.f32 %v1200, %v3562
        %v3566 = vmul.f32 %v1201, %v3562
        %v3567 = vmul.f32 %v1202, %v3562
        %v3568 = vmul.f32 %v1203, %v3562
        %v3569 = vmul.f32 %v1204, %v3562
        %v3570 = vmul.f32 %v1205, %v3562
        %v3571 = vadd.f32 %v3550, %v3563
        %v3572 = vadd.f32 %v3551, %v3564
        %v3573 = vadd.f32 %v3552, %v3565
        %v3574 = vadd.f32 %v3553, %v3566
        %v3575 = vadd.f32 %v3554, %v3567
        %v3576 = vadd.f32 %v3555, %v3568
        %v3577 = vadd.f32 %v3556, %v3569
        %v3578 = vadd.f32 %v3557, %v3570
        %v3579 = vld [vmem:[%s7 + $0x1d] sm:$0x1]
        %v3580 = vlaneseq
        %v3581 = vshrl.u32 %v3580, 7
        %v3582 = vsub.s32 0, %v3581
        %v3583 = vrot.slane %v3579, %v3582
        %v3584 = vmul.f32 %v1199, %v3583
        %v3585 = vmul.f32 %v1200, %v3583
        %v3586 = vmul.f32 %v1201, %v3583
        %v3587 = vmul.f32 %v1202, %v3583
        %v3588 = vmul.f32 %v1203, %v3583
        %v3589 = vmul.f32 %v1204, %v3583
        %v3590 = vmul.f32 %v1205, %v3583
        %v3591 = vmul.f32 %v1206, %v3583
        %v3592 = vadd.f32 %v3571, %v3584
        %v3593 = vadd.f32 %v3572, %v3585
        %v3594 = vadd.f32 %v3573, %v3586
        %v3595 = vadd.f32 %v3574, %v3587
        %v3596 = vadd.f32 %v3575, %v3588
        %v3597 = vadd.f32 %v3576, %v3589
        %v3598 = vadd.f32 %v3577, %v3590
        %v3599 = vadd.f32 %v3578, %v3591
        %v3600 = vld [vmem:[%s7 + $0x26] sm:$0x1]
        %v3601 = vlaneseq
        %v3602 = vshrl.u32 %v3601, 7
        %v3603 = vsub.s32 0, %v3602
        %v3604 = vrot.slane %v3600, %v3603
        %v3605 = vmul.f32 %v1200, %v3604
        %v3606 = vmul.f32 %v1201, %v3604
        %v3607 = vmul.f32 %v1202, %v3604
        %v3608 = vmul.f32 %v1203, %v3604
        %v3609 = vmul.f32 %v1204, %v3604
        %v3610 = vmul.f32 %v1205, %v3604
        %v3611 = vmul.f32 %v1206, %v3604
        %v3612 = vmul.f32 %v1207, %v3604
        %v3613 = vadd.f32 %v3592, %v3605
        %v3614 = vadd.f32 %v3593, %v3606
        %v3615 = vadd.f32 %v3594, %v3607
        %v3616 = vadd.f32 %v3595, %v3608
        %v3617 = vadd.f32 %v3596, %v3609
        %v3618 = vadd.f32 %v3597, %v3610
        %v3619 = vadd.f32 %v3598, %v3611
        %v3620 = vadd.f32 %v3599, %v3612
        %v3621 = vld [vmem:[%s7 + $0x2f] sm:$0x1]
        %v3622 = vlaneseq
        %v3623 = vshrl.u32 %v3622, 7
        %v3624 = vsub.s32 0, %v3623
        %v3625 = vrot.slane %v3621, %v3624
        %v3626 = vmul.f32 %v1201, %v3625
        %v3627 = vmul.f32 %v1202, %v3625
        %v3628 = vmul.f32 %v1203, %v3625
        %v3629 = vmul.f32 %v1204, %v3625
        %v3630 = vmul.f32 %v1205, %v3625
        %v3631 = vmul.f32 %v1206, %v3625
        %v3632 = vmul.f32 %v1207, %v3625
        %v3633 = vmul.f32 %v1208, %v3625
        %v3634 = vadd.f32 %v3613, %v3626
        %v3635 = vadd.f32 %v3614, %v3627
        %v3636 = vadd.f32 %v3615, %v3628
        %v3637 = vadd.f32 %v3616, %v3629
        %v3638 = vadd.f32 %v3617, %v3630
        %v3639 = vadd.f32 %v3618, %v3631
        %v3640 = vadd.f32 %v3619, %v3632
        %v3641 = vadd.f32 %v3620, %v3633
        %v3642 = vld [vmem:[%s7 + $0x38] sm:$0x1]
        %v3643 = vlaneseq
        %v3644 = vshrl.u32 %v3643, 7
        %v3645 = vsub.s32 0, %v3644
        %v3646 = vrot.slane %v3642, %v3645
        %v3647 = vmul.f32 %v1202, %v3646
        %v3648 = vmul.f32 %v1203, %v3646
        %v3649 = vmul.f32 %v1204, %v3646
        %v3650 = vmul.f32 %v1205, %v3646
        %v3651 = vmul.f32 %v1206, %v3646
        %v3652 = vmul.f32 %v1207, %v3646
        %v3653 = vmul.f32 %v1208, %v3646
        %v3654 = vmul.f32 %v1209, %v3646
        %v3655 = vadd.f32 %v3634, %v3647
        %v3656 = vadd.f32 %v3635, %v3648
        %v3657 = vadd.f32 %v3636, %v3649
        %v3658 = vadd.f32 %v3637, %v3650
        %v3659 = vadd.f32 %v3638, %v3651
        %v3660 = vadd.f32 %v3639, %v3652
        %v3661 = vadd.f32 %v3640, %v3653
        %v3662 = vadd.f32 %v3641, %v3654
        %v3663 = vld [vmem:[%s7 + $0x41] sm:$0x1]
        %v3664 = vlaneseq
        %v3665 = vshrl.u32 %v3664, 7
        %v3666 = vsub.s32 0, %v3665
        %v3667 = vrot.slane %v3663, %v3666
        %v3668 = vmul.f32 %v1203, %v3667
        %v3669 = vmul.f32 %v1204, %v3667
        %v3670 = vmul.f32 %v1205, %v3667
        %v3671 = vmul.f32 %v1206, %v3667
        %v3672 = vmul.f32 %v1207, %v3667
        %v3673 = vmul.f32 %v1208, %v3667
        %v3674 = vmul.f32 %v1209, %v3667
        %v3675 = vmul.f32 %v1210, %v3667
        %v3676 = vadd.f32 %v3655, %v3668
        %v3677 = vadd.f32 %v3656, %v3669
        %v3678 = vadd.f32 %v3657, %v3670
        %v3679 = vadd.f32 %v3658, %v3671
        %v3680 = vadd.f32 %v3659, %v3672
        %v3681 = vadd.f32 %v3660, %v3673
        %v3682 = vadd.f32 %v3661, %v3674
        %v3683 = vadd.f32 %v3662, %v3675
        %v3684 = vld [vmem:[%s7 + $0x4a] sm:$0x1]
        %v3685 = vlaneseq
        %v3686 = vshrl.u32 %v3685, 7
        %v3687 = vsub.s32 0, %v3686
        %v3688 = vrot.slane %v3684, %v3687
        %v3689 = vmul.f32 %v1204, %v3688
        %v3690 = vmul.f32 %v1205, %v3688
        %v3691 = vmul.f32 %v1206, %v3688
        %v3692 = vmul.f32 %v1207, %v3688
        %v3693 = vmul.f32 %v1208, %v3688
        %v3694 = vmul.f32 %v1209, %v3688
        %v3695 = vmul.f32 %v1210, %v3688
        %v3696 = vmul.f32 %v1211, %v3688
        %v3697 = vadd.f32 %v3676, %v3689
        %v3698 = vadd.f32 %v3677, %v3690
        %v3699 = vadd.f32 %v3678, %v3691
        %v3700 = vadd.f32 %v3679, %v3692
        %v3701 = vadd.f32 %v3680, %v3693
        %v3702 = vadd.f32 %v3681, %v3694
        %v3703 = vadd.f32 %v3682, %v3695
        %v3704 = vadd.f32 %v3683, %v3696
        %v3705 = vld [vmem:[%s7 + $0x3] sm:$0x1]
        %v3706 = vlaneseq
        %v3707 = vshrl.u32 %v3706, 7
        %v3708 = vsub.s32 0, %v3707
        %v3709 = vrot.slane %v3705, %v3708
        %v3710 = vmul.f32 %v806, %v3709
        %v3711 = vmul.f32 %v807, %v3709
        %v3712 = vmul.f32 %v808, %v3709
        %v3713 = vmul.f32 %v809, %v3709
        %v3714 = vmul.f32 %v810, %v3709
        %v3715 = vmul.f32 %v811, %v3709
        %v3716 = vmul.f32 %v812, %v3709
        %v3717 = vmul.f32 %v813, %v3709
        %v3718 = vadd.f32 %v3697, %v3710
        %v3719 = vadd.f32 %v3698, %v3711
        %v3720 = vadd.f32 %v3699, %v3712
        %v3721 = vadd.f32 %v3700, %v3713
        %v3722 = vadd.f32 %v3701, %v3714
        %v3723 = vadd.f32 %v3702, %v3715
        %v3724 = vadd.f32 %v3703, %v3716
        %v3725 = vadd.f32 %v3704, %v3717
        %v3726 = vld [vmem:[%s7 + $0xc] sm:$0x1]
        %v3727 = vlaneseq
        %v3728 = vshrl.u32 %v3727, 7
        %v3729 = vsub.s32 0, %v3728
        %v3730 = vrot.slane %v3726, %v3729
        %v3731 = vmul.f32 %v807, %v3730
        %v3732 = vmul.f32 %v808, %v3730
        %v3733 = vmul.f32 %v809, %v3730
        %v3734 = vmul.f32 %v810, %v3730
        %v3735 = vmul.f32 %v811, %v3730
        %v3736 = vmul.f32 %v812, %v3730
        %v3737 = vmul.f32 %v813, %v3730
        %v3738 = vmul.f32 %v814, %v3730
        %v3739 = vadd.f32 %v3718, %v3731
        %v3740 = vadd.f32 %v3719, %v3732
        %v3741 = vadd.f32 %v3720, %v3733
        %v3742 = vadd.f32 %v3721, %v3734
        %v3743 = vadd.f32 %v3722, %v3735
        %v3744 = vadd.f32 %v3723, %v3736
        %v3745 = vadd.f32 %v3724, %v3737
        %v3746 = vadd.f32 %v3725, %v3738
        %v3747 = vld [vmem:[%s7 + $0x15] sm:$0x1]
        %v3748 = vlaneseq
        %v3749 = vshrl.u32 %v3748, 7
        %v3750 = vsub.s32 0, %v3749
        %v3751 = vrot.slane %v3747, %v3750
        %v3752 = vmul.f32 %v808, %v3751
        %v3753 = vmul.f32 %v809, %v3751
        %v3754 = vmul.f32 %v810, %v3751
        %v3755 = vmul.f32 %v811, %v3751
        %v3756 = vmul.f32 %v812, %v3751
        %v3757 = vmul.f32 %v813, %v3751
        %v3758 = vmul.f32 %v814, %v3751
        %v3759 = vmul.f32 %v815, %v3751
        %v3760 = vadd.f32 %v3739, %v3752
        %v3761 = vadd.f32 %v3740, %v3753
        %v3762 = vadd.f32 %v3741, %v3754
        %v3763 = vadd.f32 %v3742, %v3755
        %v3764 = vadd.f32 %v3743, %v3756
        %v3765 = vadd.f32 %v3744, %v3757
        %v3766 = vadd.f32 %v3745, %v3758
        %v3767 = vadd.f32 %v3746, %v3759
        %v3768 = vld [vmem:[%s7 + $0x1e] sm:$0x1]
        %v3769 = vlaneseq
        %v3770 = vshrl.u32 %v3769, 7
        %v3771 = vsub.s32 0, %v3770
        %v3772 = vrot.slane %v3768, %v3771
        %v3773 = vmul.f32 %v809, %v3772
        %v3774 = vmul.f32 %v810, %v3772
        %v3775 = vmul.f32 %v811, %v3772
        %v3776 = vmul.f32 %v812, %v3772
        %v3777 = vmul.f32 %v813, %v3772
        %v3778 = vmul.f32 %v814, %v3772
        %v3779 = vmul.f32 %v815, %v3772
        %v3780 = vmul.f32 %v816, %v3772
        %v3781 = vadd.f32 %v3760, %v3773
        %v3782 = vadd.f32 %v3761, %v3774
        %v3783 = vadd.f32 %v3762, %v3775
        %v3784 = vadd.f32 %v3763, %v3776
        %v3785 = vadd.f32 %v3764, %v3777
        %v3786 = vadd.f32 %v3765, %v3778
        %v3787 = vadd.f32 %v3766, %v3779
        %v3788 = vadd.f32 %v3767, %v3780
        %v3789 = vld [vmem:[%s7 + $0x27] sm:$0x1]
        %v3790 = vlaneseq
        %v3791 = vshrl.u32 %v3790, 7
        %v3792 = vsub.s32 0, %v3791
        %v3793 = vrot.slane %v3789, %v3792
        %v3794 = vmul.f32 %v810, %v3793
        %v3795 = vmul.f32 %v811, %v3793
        %v3796 = vmul.f32 %v812, %v3793
        %v3797 = vmul.f32 %v813, %v3793
        %v3798 = vmul.f32 %v814, %v3793
        %v3799 = vmul.f32 %v815, %v3793
        %v3800 = vmul.f32 %v816, %v3793
        %v3801 = vmul.f32 %v817, %v3793
        %v3802 = vadd.f32 %v3781, %v3794
        %v3803 = vadd.f32 %v3782, %v3795
        %v3804 = vadd.f32 %v3783, %v3796
        %v3805 = vadd.f32 %v3784, %v3797
        %v3806 = vadd.f32 %v3785, %v3798
        %v3807 = vadd.f32 %v3786, %v3799
        %v3808 = vadd.f32 %v3787, %v3800
        %v3809 = vadd.f32 %v3788, %v3801
        %v3810 = vld [vmem:[%s7 + $0x30] sm:$0x1]
        %v3811 = vlaneseq
        %v3812 = vshrl.u32 %v3811, 7
        %v3813 = vsub.s32 0, %v3812
        %v3814 = vrot.slane %v3810, %v3813
        %v3815 = vmul.f32 %v811, %v3814
        %v3816 = vmul.f32 %v812, %v3814
        %v3817 = vmul.f32 %v813, %v3814
        %v3818 = vmul.f32 %v814, %v3814
        %v3819 = vmul.f32 %v815, %v3814
        %v3820 = vmul.f32 %v816, %v3814
        %v3821 = vmul.f32 %v817, %v3814
        %v3822 = vmul.f32 %v818, %v3814
        %v3823 = vadd.f32 %v3802, %v3815
        %v3824 = vadd.f32 %v3803, %v3816
        %v3825 = vadd.f32 %v3804, %v3817
        %v3826 = vadd.f32 %v3805, %v3818
        %v3827 = vadd.f32 %v3806, %v3819
        %v3828 = vadd.f32 %v3807, %v3820
        %v3829 = vadd.f32 %v3808, %v3821
        %v3830 = vadd.f32 %v3809, %v3822
        %v3831 = vld [vmem:[%s7 + $0x39] sm:$0x1]
        %v3832 = vlaneseq
        %v3833 = vshrl.u32 %v3832, 7
        %v3834 = vsub.s32 0, %v3833
        %v3835 = vrot.slane %v3831, %v3834
        %v3836 = vmul.f32 %v812, %v3835
        %v3837 = vmul.f32 %v813, %v3835
        %v3838 = vmul.f32 %v814, %v3835
        %v3839 = vmul.f32 %v815, %v3835
        %v3840 = vmul.f32 %v816, %v3835
        %v3841 = vmul.f32 %v817, %v3835
        %v3842 = vmul.f32 %v818, %v3835
        %v3843 = vmul.f32 %v819, %v3835
        %v3844 = vadd.f32 %v3823, %v3836
        %v3845 = vadd.f32 %v3824, %v3837
        %v3846 = vadd.f32 %v3825, %v3838
        %v3847 = vadd.f32 %v3826, %v3839
        %v3848 = vadd.f32 %v3827, %v3840
        %v3849 = vadd.f32 %v3828, %v3841
        %v3850 = vadd.f32 %v3829, %v3842
        %v3851 = vadd.f32 %v3830, %v3843
        %v3852 = vld [vmem:[%s7 + $0x42] sm:$0x1]
        %v3853 = vlaneseq
        %v3854 = vshrl.u32 %v3853, 7
        %v3855 = vsub.s32 0, %v3854
        %v3856 = vrot.slane %v3852, %v3855
        %v3857 = vmul.f32 %v813, %v3856
        %v3858 = vmul.f32 %v814, %v3856
        %v3859 = vmul.f32 %v815, %v3856
        %v3860 = vmul.f32 %v816, %v3856
        %v3861 = vmul.f32 %v817, %v3856
        %v3862 = vmul.f32 %v818, %v3856
        %v3863 = vmul.f32 %v819, %v3856
        %v3864 = vmul.f32 %v820, %v3856
        %v3865 = vadd.f32 %v3844, %v3857
        %v3866 = vadd.f32 %v3845, %v3858
        %v3867 = vadd.f32 %v3846, %v3859
        %v3868 = vadd.f32 %v3847, %v3860
        %v3869 = vadd.f32 %v3848, %v3861
        %v3870 = vadd.f32 %v3849, %v3862
        %v3871 = vadd.f32 %v3850, %v3863
        %v3872 = vadd.f32 %v3851, %v3864
        %v3873 = vld [vmem:[%s7 + $0x4b] sm:$0x1]
        %v3874 = vlaneseq
        %v3875 = vshrl.u32 %v3874, 7
        %v3876 = vsub.s32 0, %v3875
        %v3877 = vrot.slane %v3873, %v3876
        %v3878 = vmul.f32 %v814, %v3877
        %v3879 = vmul.f32 %v815, %v3877
        %v3880 = vmul.f32 %v816, %v3877
        %v3881 = vmul.f32 %v817, %v3877
        %v3882 = vmul.f32 %v818, %v3877
        %v3883 = vmul.f32 %v819, %v3877
        %v3884 = vmul.f32 %v820, %v3877
        %v3885 = vmul.f32 %v821, %v3877
        %v3886 = vadd.f32 %v3865, %v3878
        %v3887 = vadd.f32 %v3866, %v3879
        %v3888 = vadd.f32 %v3867, %v3880
        %v3889 = vadd.f32 %v3868, %v3881
        %v3890 = vadd.f32 %v3869, %v3882
        %v3891 = vadd.f32 %v3870, %v3883
        %v3892 = vadd.f32 %v3871, %v3884
        %v3893 = vadd.f32 %v3872, %v3885
        %v3894 = vld [vmem:[%s7 + $0x4] sm:$0x1]
        %v3895 = vlaneseq
        %v3896 = vshrl.u32 %v3895, 7
        %v3897 = vsub.s32 0, %v3896
        %v3898 = vrot.slane %v3894, %v3897
        %v3899 = vmul.f32 %v885, %v3898
        %v3900 = vmul.f32 %v886, %v3898
        %v3901 = vmul.f32 %v887, %v3898
        %v3902 = vmul.f32 %v888, %v3898
        %v3903 = vmul.f32 %v889, %v3898
        %v3904 = vmul.f32 %v890, %v3898
        %v3905 = vmul.f32 %v891, %v3898
        %v3906 = vmul.f32 %v892, %v3898
        %v3907 = vadd.f32 %v3886, %v3899
        %v3908 = vadd.f32 %v3887, %v3900
        %v3909 = vadd.f32 %v3888, %v3901
        %v3910 = vadd.f32 %v3889, %v3902
        %v3911 = vadd.f32 %v3890, %v3903
        %v3912 = vadd.f32 %v3891, %v3904
        %v3913 = vadd.f32 %v3892, %v3905
        %v3914 = vadd.f32 %v3893, %v3906
        %v3915 = vld [vmem:[%s7 + $0xd] sm:$0x1]
        %v3916 = vlaneseq
        %v3917 = vshrl.u32 %v3916, 7
        %v3918 = vsub.s32 0, %v3917
        %v3919 = vrot.slane %v3915, %v3918
        %v3920 = vmul.f32 %v886, %v3919
        %v3921 = vmul.f32 %v887, %v3919
        %v3922 = vmul.f32 %v888, %v3919
        %v3923 = vmul.f32 %v889, %v3919
        %v3924 = vmul.f32 %v890, %v3919
        %v3925 = vmul.f32 %v891, %v3919
        %v3926 = vmul.f32 %v892, %v3919
        %v3927 = vmul.f32 %v893, %v3919
        %v3928 = vadd.f32 %v3907, %v3920
        %v3929 = vadd.f32 %v3908, %v3921
        %v3930 = vadd.f32 %v3909, %v3922
        %v3931 = vadd.f32 %v3910, %v3923
        %v3932 = vadd.f32 %v3911, %v3924
        %v3933 = vadd.f32 %v3912, %v3925
        %v3934 = vadd.f32 %v3913, %v3926
        %v3935 = vadd.f32 %v3914, %v3927
        %v3936 = vld [vmem:[%s7 + $0x16] sm:$0x1]
        %v3937 = vlaneseq
        %v3938 = vshrl.u32 %v3937, 7
        %v3939 = vsub.s32 0, %v3938
        %v3940 = vrot.slane %v3936, %v3939
        %v3941 = vmul.f32 %v887, %v3940
        %v3942 = vmul.f32 %v888, %v3940
        %v3943 = vmul.f32 %v889, %v3940
        %v3944 = vmul.f32 %v890, %v3940
        %v3945 = vmul.f32 %v891, %v3940
        %v3946 = vmul.f32 %v892, %v3940
        %v3947 = vmul.f32 %v893, %v3940
        %v3948 = vmul.f32 %v894, %v3940
        %v3949 = vadd.f32 %v3928, %v3941
        %v3950 = vadd.f32 %v3929, %v3942
        %v3951 = vadd.f32 %v3930, %v3943
        %v3952 = vadd.f32 %v3931, %v3944
        %v3953 = vadd.f32 %v3932, %v3945
        %v3954 = vadd.f32 %v3933, %v3946
        %v3955 = vadd.f32 %v3934, %v3947
        %v3956 = vadd.f32 %v3935, %v3948
        %v3957 = vld [vmem:[%s7 + $0x1f] sm:$0x1]
        %v3958 = vlaneseq
        %v3959 = vshrl.u32 %v3958, 7
        %v3960 = vsub.s32 0, %v3959
        %v3961 = vrot.slane %v3957, %v3960
        %v3962 = vmul.f32 %v888, %v3961
        %v3963 = vmul.f32 %v889, %v3961
        %v3964 = vmul.f32 %v890, %v3961
        %v3965 = vmul.f32 %v891, %v3961
        %v3966 = vmul.f32 %v892, %v3961
        %v3967 = vmul.f32 %v893, %v3961
        %v3968 = vmul.f32 %v894, %v3961
        %v3969 = vmul.f32 %v895, %v3961
        %v3970 = vadd.f32 %v3949, %v3962
        %v3971 = vadd.f32 %v3950, %v3963
        %v3972 = vadd.f32 %v3951, %v3964
        %v3973 = vadd.f32 %v3952, %v3965
        %v3974 = vadd.f32 %v3953, %v3966
        %v3975 = vadd.f32 %v3954, %v3967
        %v3976 = vadd.f32 %v3955, %v3968
        %v3977 = vadd.f32 %v3956, %v3969
        %v3978 = vld [vmem:[%s7 + $0x28] sm:$0x1]
        %v3979 = vlaneseq
        %v3980 = vshrl.u32 %v3979, 7
        %v3981 = vsub.s32 0, %v3980
        %v3982 = vrot.slane %v3978, %v3981
        %v3983 = vmul.f32 %v889, %v3982
        %v3984 = vmul.f32 %v890, %v3982
        %v3985 = vmul.f32 %v891, %v3982
        %v3986 = vmul.f32 %v892, %v3982
        %v3987 = vmul.f32 %v893, %v3982
        %v3988 = vmul.f32 %v894, %v3982
        %v3989 = vmul.f32 %v895, %v3982
        %v3990 = vmul.f32 %v896, %v3982
        %v3991 = vadd.f32 %v3970, %v3983
        %v3992 = vadd.f32 %v3971, %v3984
        %v3993 = vadd.f32 %v3972, %v3985
        %v3994 = vadd.f32 %v3973, %v3986
        %v3995 = vadd.f32 %v3974, %v3987
        %v3996 = vadd.f32 %v3975, %v3988
        %v3997 = vadd.f32 %v3976, %v3989
        %v3998 = vadd.f32 %v3977, %v3990
        %v3999 = vld [vmem:[%s7 + $0x31] sm:$0x1]
        %v4000 = vlaneseq
        %v4001 = vshrl.u32 %v4000, 7
        %v4002 = vsub.s32 0, %v4001
        %v4003 = vrot.slane %v3999, %v4002
        %v4004 = vmul.f32 %v890, %v4003
        %v4005 = vmul.f32 %v891, %v4003
        %v4006 = vmul.f32 %v892, %v4003
        %v4007 = vmul.f32 %v893, %v4003
        %v4008 = vmul.f32 %v894, %v4003
        %v4009 = vmul.f32 %v895, %v4003
        %v4010 = vmul.f32 %v896, %v4003
        %v4011 = vmul.f32 %v897, %v4003
        %v4012 = vadd.f32 %v3991, %v4004
        %v4013 = vadd.f32 %v3992, %v4005
        %v4014 = vadd.f32 %v3993, %v4006
        %v4015 = vadd.f32 %v3994, %v4007
        %v4016 = vadd.f32 %v3995, %v4008
        %v4017 = vadd.f32 %v3996, %v4009
        %v4018 = vadd.f32 %v3997, %v4010
        %v4019 = vadd.f32 %v3998, %v4011
        %v4020 = vld [vmem:[%s7 + $0x3a] sm:$0x1]
        %v4021 = vlaneseq
        %v4022 = vshrl.u32 %v4021, 7
        %v4023 = vsub.s32 0, %v4022
        %v4024 = vrot.slane %v4020, %v4023
        %v4025 = vmul.f32 %v891, %v4024
        %v4026 = vmul.f32 %v892, %v4024
        %v4027 = vmul.f32 %v893, %v4024
        %v4028 = vmul.f32 %v894, %v4024
        %v4029 = vmul.f32 %v895, %v4024
        %v4030 = vmul.f32 %v896, %v4024
        %v4031 = vmul.f32 %v897, %v4024
        %v4032 = vmul.f32 %v898, %v4024
        %v4033 = vadd.f32 %v4012, %v4025
        %v4034 = vadd.f32 %v4013, %v4026
        %v4035 = vadd.f32 %v4014, %v4027
        %v4036 = vadd.f32 %v4015, %v4028
        %v4037 = vadd.f32 %v4016, %v4029
        %v4038 = vadd.f32 %v4017, %v4030
        %v4039 = vadd.f32 %v4018, %v4031
        %v4040 = vadd.f32 %v4019, %v4032
        %v4041 = vld [vmem:[%s7 + $0x43] sm:$0x1]
        %v4042 = vlaneseq
        %v4043 = vshrl.u32 %v4042, 7
        %v4044 = vsub.s32 0, %v4043
        %v4045 = vrot.slane %v4041, %v4044
        %v4046 = vmul.f32 %v892, %v4045
        %v4047 = vmul.f32 %v893, %v4045
        %v4048 = vmul.f32 %v894, %v4045
        %v4049 = vmul.f32 %v895, %v4045
        %v4050 = vmul.f32 %v896, %v4045
        %v4051 = vmul.f32 %v897, %v4045
        %v4052 = vmul.f32 %v898, %v4045
        %v4053 = vmul.f32 %v899, %v4045
        %v4054 = vadd.f32 %v4033, %v4046
        %v4055 = vadd.f32 %v4034, %v4047
        %v4056 = vadd.f32 %v4035, %v4048
        %v4057 = vadd.f32 %v4036, %v4049
        %v4058 = vadd.f32 %v4037, %v4050
        %v4059 = vadd.f32 %v4038, %v4051
        %v4060 = vadd.f32 %v4039, %v4052
        %v4061 = vadd.f32 %v4040, %v4053
        %v4062 = vld [vmem:[%s7 + $0x4c] sm:$0x1]
        %v4063 = vlaneseq
        %v4064 = vshrl.u32 %v4063, 7
        %v4065 = vsub.s32 0, %v4064
        %v4066 = vrot.slane %v4062, %v4065
        %v4067 = vmul.f32 %v893, %v4066
        %v4068 = vmul.f32 %v894, %v4066
        %v4069 = vmul.f32 %v895, %v4066
        %v4070 = vmul.f32 %v896, %v4066
        %v4071 = vmul.f32 %v897, %v4066
        %v4072 = vmul.f32 %v898, %v4066
        %v4073 = vmul.f32 %v899, %v4066
        %v4074 = vmul.f32 %v900, %v4066
        %v4075 = vadd.f32 %v4054, %v4067
        %v4076 = vadd.f32 %v4055, %v4068
        %v4077 = vadd.f32 %v4056, %v4069
        %v4078 = vadd.f32 %v4057, %v4070
        %v4079 = vadd.f32 %v4058, %v4071
        %v4080 = vadd.f32 %v4059, %v4072
        %v4081 = vadd.f32 %v4060, %v4073
        %v4082 = vadd.f32 %v4061, %v4074
        %v4083 = vld [vmem:[%s7 + $0x5] sm:$0x1]
        %v4084 = vlaneseq
        %v4085 = vshrl.u32 %v4084, 7
        %v4086 = vsub.s32 0, %v4085
        %v4087 = vrot.slane %v4083, %v4086
        %v4088 = vmul.f32 %v964, %v4087
        %v4089 = vmul.f32 %v965, %v4087
        %v4090 = vmul.f32 %v966, %v4087
        %v4091 = vmul.f32 %v967, %v4087
        %v4092 = vmul.f32 %v968, %v4087
        %v4093 = vmul.f32 %v969, %v4087
        %v4094 = vmul.f32 %v970, %v4087
        %v4095 = vmul.f32 %v971, %v4087
        %v4096 = vadd.f32 %v4075, %v4088
        %v4097 = vadd.f32 %v4076, %v4089
        %v4098 = vadd.f32 %v4077, %v4090
        %v4099 = vadd.f32 %v4078, %v4091
        %v4100 = vadd.f32 %v4079, %v4092
        %v4101 = vadd.f32 %v4080, %v4093
        %v4102 = vadd.f32 %v4081, %v4094
        %v4103 = vadd.f32 %v4082, %v4095
        %v4104 = vld [vmem:[%s7 + $0xe] sm:$0x1]
        %v4105 = vlaneseq
        %v4106 = vshrl.u32 %v4105, 7
        %v4107 = vsub.s32 0, %v4106
        %v4108 = vrot.slane %v4104, %v4107
        %v4109 = vmul.f32 %v965, %v4108
        %v4110 = vmul.f32 %v966, %v4108
        %v4111 = vmul.f32 %v967, %v4108
        %v4112 = vmul.f32 %v968, %v4108
        %v4113 = vmul.f32 %v969, %v4108
        %v4114 = vmul.f32 %v970, %v4108
        %v4115 = vmul.f32 %v971, %v4108
        %v4116 = vmul.f32 %v972, %v4108
        %v4117 = vadd.f32 %v4096, %v4109
        %v4118 = vadd.f32 %v4097, %v4110
        %v4119 = vadd.f32 %v4098, %v4111
        %v4120 = vadd.f32 %v4099, %v4112
        %v4121 = vadd.f32 %v4100, %v4113
        %v4122 = vadd.f32 %v4101, %v4114
        %v4123 = vadd.f32 %v4102, %v4115
        %v4124 = vadd.f32 %v4103, %v4116
        %v4125 = vld [vmem:[%s7 + $0x17] sm:$0x1]
        %v4126 = vlaneseq
        %v4127 = vshrl.u32 %v4126, 7
        %v4128 = vsub.s32 0, %v4127
        %v4129 = vrot.slane %v4125, %v4128
        %v4130 = vmul.f32 %v966, %v4129
        %v4131 = vmul.f32 %v967, %v4129
        %v4132 = vmul.f32 %v968, %v4129
        %v4133 = vmul.f32 %v969, %v4129
        %v4134 = vmul.f32 %v970, %v4129
        %v4135 = vmul.f32 %v971, %v4129
        %v4136 = vmul.f32 %v972, %v4129
        %v4137 = vmul.f32 %v973, %v4129
        %v4138 = vadd.f32 %v4117, %v4130
        %v4139 = vadd.f32 %v4118, %v4131
        %v4140 = vadd.f32 %v4119, %v4132
        %v4141 = vadd.f32 %v4120, %v4133
        %v4142 = vadd.f32 %v4121, %v4134
        %v4143 = vadd.f32 %v4122, %v4135
        %v4144 = vadd.f32 %v4123, %v4136
        %v4145 = vadd.f32 %v4124, %v4137
        %v4146 = vld [vmem:[%s7 + $0x20] sm:$0x1]
        %v4147 = vlaneseq
        %v4148 = vshrl.u32 %v4147, 7
        %v4149 = vsub.s32 0, %v4148
        %v4150 = vrot.slane %v4146, %v4149
        %v4151 = vmul.f32 %v967, %v4150
        %v4152 = vmul.f32 %v968, %v4150
        %v4153 = vmul.f32 %v969, %v4150
        %v4154 = vmul.f32 %v970, %v4150
        %v4155 = vmul.f32 %v971, %v4150
        %v4156 = vmul.f32 %v972, %v4150
        %v4157 = vmul.f32 %v973, %v4150
        %v4158 = vmul.f32 %v974, %v4150
        %v4159 = vadd.f32 %v4138, %v4151
        %v4160 = vadd.f32 %v4139, %v4152
        %v4161 = vadd.f32 %v4140, %v4153
        %v4162 = vadd.f32 %v4141, %v4154
        %v4163 = vadd.f32 %v4142, %v4155
        %v4164 = vadd.f32 %v4143, %v4156
        %v4165 = vadd.f32 %v4144, %v4157
        %v4166 = vadd.f32 %v4145, %v4158
        %v4167 = vld [vmem:[%s7 + $0x29] sm:$0x1]
        %v4168 = vlaneseq
        %v4169 = vshrl.u32 %v4168, 7
        %v4170 = vsub.s32 0, %v4169
        %v4171 = vrot.slane %v4167, %v4170
        %v4172 = vmul.f32 %v968, %v4171
        %v4173 = vmul.f32 %v969, %v4171
        %v4174 = vmul.f32 %v970, %v4171
        %v4175 = vmul.f32 %v971, %v4171
        %v4176 = vmul.f32 %v972, %v4171
        %v4177 = vmul.f32 %v973, %v4171
        %v4178 = vmul.f32 %v974, %v4171
        %v4179 = vmul.f32 %v975, %v4171
        %v4180 = vadd.f32 %v4159, %v4172
        %v4181 = vadd.f32 %v4160, %v4173
        %v4182 = vadd.f32 %v4161, %v4174
        %v4183 = vadd.f32 %v4162, %v4175
        %v4184 = vadd.f32 %v4163, %v4176
        %v4185 = vadd.f32 %v4164, %v4177
        %v4186 = vadd.f32 %v4165, %v4178
        %v4187 = vadd.f32 %v4166, %v4179
        %v4188 = vld [vmem:[%s7 + $0x32] sm:$0x1]
        %v4189 = vlaneseq
        %v4190 = vshrl.u32 %v4189, 7
        %v4191 = vsub.s32 0, %v4190
        %v4192 = vrot.slane %v4188, %v4191
        %v4193 = vmul.f32 %v969, %v4192
        %v4194 = vmul.f32 %v970, %v4192
        %v4195 = vmul.f32 %v971, %v4192
        %v4196 = vmul.f32 %v972, %v4192
        %v4197 = vmul.f32 %v973, %v4192
        %v4198 = vmul.f32 %v974, %v4192
        %v4199 = vmul.f32 %v975, %v4192
        %v4200 = vmul.f32 %v976, %v4192
        %v4201 = vadd.f32 %v4180, %v4193
        %v4202 = vadd.f32 %v4181, %v4194
        %v4203 = vadd.f32 %v4182, %v4195
        %v4204 = vadd.f32 %v4183, %v4196
        %v4205 = vadd.f32 %v4184, %v4197
        %v4206 = vadd.f32 %v4185, %v4198
        %v4207 = vadd.f32 %v4186, %v4199
        %v4208 = vadd.f32 %v4187, %v4200
        %v4209 = vld [vmem:[%s7 + $0x3b] sm:$0x1]
        %v4210 = vlaneseq
        %v4211 = vshrl.u32 %v4210, 7
        %v4212 = vsub.s32 0, %v4211
        %v4213 = vrot.slane %v4209, %v4212
        %v4214 = vmul.f32 %v970, %v4213
        %v4215 = vmul.f32 %v971, %v4213
        %v4216 = vmul.f32 %v972, %v4213
        %v4217 = vmul.f32 %v973, %v4213
        %v4218 = vmul.f32 %v974, %v4213
        %v4219 = vmul.f32 %v975, %v4213
        %v4220 = vmul.f32 %v976, %v4213
        %v4221 = vmul.f32 %v977, %v4213
        %v4222 = vadd.f32 %v4201, %v4214
        %v4223 = vadd.f32 %v4202, %v4215
        %v4224 = vadd.f32 %v4203, %v4216
        %v4225 = vadd.f32 %v4204, %v4217
        %v4226 = vadd.f32 %v4205, %v4218
        %v4227 = vadd.f32 %v4206, %v4219
        %v4228 = vadd.f32 %v4207, %v4220
        %v4229 = vadd.f32 %v4208, %v4221
        %v4230 = vld [vmem:[%s7 + $0x44] sm:$0x1]
        %v4231 = vlaneseq
        %v4232 = vshrl.u32 %v4231, 7
        %v4233 = vsub.s32 0, %v4232
        %v4234 = vrot.slane %v4230, %v4233
        %v4235 = vmul.f32 %v971, %v4234
        %v4236 = vmul.f32 %v972, %v4234
        %v4237 = vmul.f32 %v973, %v4234
        %v4238 = vmul.f32 %v974, %v4234
        %v4239 = vmul.f32 %v975, %v4234
        %v4240 = vmul.f32 %v976, %v4234
        %v4241 = vmul.f32 %v977, %v4234
        %v4242 = vmul.f32 %v978, %v4234
        %v4243 = vadd.f32 %v4222, %v4235
        %v4244 = vadd.f32 %v4223, %v4236
        %v4245 = vadd.f32 %v4224, %v4237
        %v4246 = vadd.f32 %v4225, %v4238
        %v4247 = vadd.f32 %v4226, %v4239
        %v4248 = vadd.f32 %v4227, %v4240
        %v4249 = vadd.f32 %v4228, %v4241
        %v4250 = vadd.f32 %v4229, %v4242
        %v4251 = vld [vmem:[%s7 + $0x4d] sm:$0x1]
        %v4252 = vlaneseq
        %v4253 = vshrl.u32 %v4252, 7
        %v4254 = vsub.s32 0, %v4253
        %v4255 = vrot.slane %v4251, %v4254
        %v4256 = vmul.f32 %v972, %v4255
        %v4257 = vmul.f32 %v973, %v4255
        %v4258 = vmul.f32 %v974, %v4255
        %v4259 = vmul.f32 %v975, %v4255
        %v4260 = vmul.f32 %v976, %v4255
        %v4261 = vmul.f32 %v977, %v4255
        %v4262 = vmul.f32 %v978, %v4255
        %v4263 = vmul.f32 %v979, %v4255
        %v4264 = vadd.f32 %v4243, %v4256
        %v4265 = vadd.f32 %v4244, %v4257
        %v4266 = vadd.f32 %v4245, %v4258
        %v4267 = vadd.f32 %v4246, %v4259
        %v4268 = vadd.f32 %v4247, %v4260
        %v4269 = vadd.f32 %v4248, %v4261
        %v4270 = vadd.f32 %v4249, %v4262
        %v4271 = vadd.f32 %v4250, %v4263
        %v4272 = vld [vmem:[%s7 + $0x6] sm:$0x1]
        %v4273 = vlaneseq
        %v4274 = vshrl.u32 %v4273, 7
        %v4275 = vsub.s32 0, %v4274
        %v4276 = vrot.slane %v4272, %v4275
        %v4277 = vmul.f32 %v1632, %v4276
        %v4278 = vmul.f32 %v1633, %v4276
        %v4279 = vmul.f32 %v1634, %v4276
        %v4280 = vmul.f32 %v1635, %v4276
        %v4281 = vmul.f32 %v1636, %v4276
        %v4282 = vmul.f32 %v1637, %v4276
        %v4283 = vmul.f32 %v1638, %v4276
        %v4284 = vmul.f32 %v1639, %v4276
        %v4285 = vadd.f32 %v4264, %v4277
        %v4286 = vadd.f32 %v4265, %v4278
        %v4287 = vadd.f32 %v4266, %v4279
        %v4288 = vadd.f32 %v4267, %v4280
        %v4289 = vadd.f32 %v4268, %v4281
        %v4290 = vadd.f32 %v4269, %v4282
        %v4291 = vadd.f32 %v4270, %v4283
        %v4292 = vadd.f32 %v4271, %v4284
        %v4293 = vld [vmem:[%s7 + $0xf] sm:$0x1]
        %v4294 = vlaneseq
        %v4295 = vshrl.u32 %v4294, 7
        %v4296 = vsub.s32 0, %v4295
        %v4297 = vrot.slane %v4293, %v4296
        %v4298 = vmul.f32 %v1633, %v4297
        %v4299 = vmul.f32 %v1634, %v4297
        %v4300 = vmul.f32 %v1635, %v4297
        %v4301 = vmul.f32 %v1636, %v4297
        %v4302 = vmul.f32 %v1637, %v4297
        %v4303 = vmul.f32 %v1638, %v4297
        %v4304 = vmul.f32 %v1639, %v4297
        %v4305 = vmul.f32 %v1640, %v4297
        %v4306 = vadd.f32 %v4285, %v4298
        %v4307 = vadd.f32 %v4286, %v4299
        %v4308 = vadd.f32 %v4287, %v4300
        %v4309 = vadd.f32 %v4288, %v4301
        %v4310 = vadd.f32 %v4289, %v4302
        %v4311 = vadd.f32 %v4290, %v4303
        %v4312 = vadd.f32 %v4291, %v4304
        %v4313 = vadd.f32 %v4292, %v4305
        %v4314 = vld [vmem:[%s7 + $0x18] sm:$0x1]
        %v4315 = vlaneseq
        %v4316 = vshrl.u32 %v4315, 7
        %v4317 = vsub.s32 0, %v4316
        %v4318 = vrot.slane %v4314, %v4317
        %v4319 = vmul.f32 %v1634, %v4318
        %v4320 = vmul.f32 %v1635, %v4318
        %v4321 = vmul.f32 %v1636, %v4318
        %v4322 = vmul.f32 %v1637, %v4318
        %v4323 = vmul.f32 %v1638, %v4318
        %v4324 = vmul.f32 %v1639, %v4318
        %v4325 = vmul.f32 %v1640, %v4318
        %v4326 = vmul.f32 %v1641, %v4318
        %v4327 = vadd.f32 %v4306, %v4319
        %v4328 = vadd.f32 %v4307, %v4320
        %v4329 = vadd.f32 %v4308, %v4321
        %v4330 = vadd.f32 %v4309, %v4322
        %v4331 = vadd.f32 %v4310, %v4323
        %v4332 = vadd.f32 %v4311, %v4324
        %v4333 = vadd.f32 %v4312, %v4325
        %v4334 = vadd.f32 %v4313, %v4326
        %v4335 = vld [vmem:[%s7 + $0x21] sm:$0x1]
        %v4336 = vlaneseq
        %v4337 = vshrl.u32 %v4336, 7
        %v4338 = vsub.s32 0, %v4337
        %v4339 = vrot.slane %v4335, %v4338
        %v4340 = vmul.f32 %v1635, %v4339
        %v4341 = vmul.f32 %v1636, %v4339
        %v4342 = vmul.f32 %v1637, %v4339
        %v4343 = vmul.f32 %v1638, %v4339
        %v4344 = vmul.f32 %v1639, %v4339
        %v4345 = vmul.f32 %v1640, %v4339
        %v4346 = vmul.f32 %v1641, %v4339
        %v4347 = vmul.f32 %v1642, %v4339
        %v4348 = vadd.f32 %v4327, %v4340
        %v4349 = vadd.f32 %v4328, %v4341
        %v4350 = vadd.f32 %v4329, %v4342
        %v4351 = vadd.f32 %v4330, %v4343
        %v4352 = vadd.f32 %v4331, %v4344
        %v4353 = vadd.f32 %v4332, %v4345
        %v4354 = vadd.f32 %v4333, %v4346
        %v4355 = vadd.f32 %v4334, %v4347
        %v4356 = vld [vmem:[%s7 + $0x2a] sm:$0x1]
        %v4357 = vlaneseq
        %v4358 = vshrl.u32 %v4357, 7
        %v4359 = vsub.s32 0, %v4358
        %v4360 = vrot.slane %v4356, %v4359
        %v4361 = vmul.f32 %v1636, %v4360
        %v4362 = vmul.f32 %v1637, %v4360
        %v4363 = vmul.f32 %v1638, %v4360
        %v4364 = vmul.f32 %v1639, %v4360
        %v4365 = vmul.f32 %v1640, %v4360
        %v4366 = vmul.f32 %v1641, %v4360
        %v4367 = vmul.f32 %v1642, %v4360
        %v4368 = vmul.f32 %v1643, %v4360
        %v4369 = vadd.f32 %v4348, %v4361
        %v4370 = vadd.f32 %v4349, %v4362
        %v4371 = vadd.f32 %v4350, %v4363
        %v4372 = vadd.f32 %v4351, %v4364
        %v4373 = vadd.f32 %v4352, %v4365
        %v4374 = vadd.f32 %v4353, %v4366
        %v4375 = vadd.f32 %v4354, %v4367
        %v4376 = vadd.f32 %v4355, %v4368
        %v4377 = vld [vmem:[%s7 + $0x33] sm:$0x1]
        %v4378 = vlaneseq
        %v4379 = vshrl.u32 %v4378, 7
        %v4380 = vsub.s32 0, %v4379
        %v4381 = vrot.slane %v4377, %v4380
        %v4382 = vmul.f32 %v1637, %v4381
        %v4383 = vmul.f32 %v1638, %v4381
        %v4384 = vmul.f32 %v1639, %v4381
        %v4385 = vmul.f32 %v1640, %v4381
        %v4386 = vmul.f32 %v1641, %v4381
        %v4387 = vmul.f32 %v1642, %v4381
        %v4388 = vmul.f32 %v1643, %v4381
        %v4389 = vmul.f32 %v1644, %v4381
        %v4390 = vadd.f32 %v4369, %v4382
        %v4391 = vadd.f32 %v4370, %v4383
        %v4392 = vadd.f32 %v4371, %v4384
        %v4393 = vadd.f32 %v4372, %v4385
        %v4394 = vadd.f32 %v4373, %v4386
        %v4395 = vadd.f32 %v4374, %v4387
        %v4396 = vadd.f32 %v4375, %v4388
        %v4397 = vadd.f32 %v4376, %v4389
        %v4398 = vld [vmem:[%s7 + $0x3c] sm:$0x1]
        %v4399 = vlaneseq
        %v4400 = vshrl.u32 %v4399, 7
        %v4401 = vsub.s32 0, %v4400
        %v4402 = vrot.slane %v4398, %v4401
        %v4403 = vmul.f32 %v1638, %v4402
        %v4404 = vmul.f32 %v1639, %v4402
        %v4405 = vmul.f32 %v1640, %v4402
        %v4406 = vmul.f32 %v1641, %v4402
        %v4407 = vmul.f32 %v1642, %v4402
        %v4408 = vmul.f32 %v1643, %v4402
        %v4409 = vmul.f32 %v1644, %v4402
        %v4410 = vmul.f32 %v1645, %v4402
        %v4411 = vadd.f32 %v4390, %v4403
        %v4412 = vadd.f32 %v4391, %v4404
        %v4413 = vadd.f32 %v4392, %v4405
        %v4414 = vadd.f32 %v4393, %v4406
        %v4415 = vadd.f32 %v4394, %v4407
        %v4416 = vadd.f32 %v4395, %v4408
        %v4417 = vadd.f32 %v4396, %v4409
        %v4418 = vadd.f32 %v4397, %v4410
        %v4419 = vld [vmem:[%s7 + $0x45] sm:$0x1]
        %v4420 = vlaneseq
        %v4421 = vshrl.u32 %v4420, 7
        %v4422 = vsub.s32 0, %v4421
        %v4423 = vrot.slane %v4419, %v4422
        %v4424 = vmul.f32 %v1639, %v4423
        %v4425 = vmul.f32 %v1640, %v4423
        %v4426 = vmul.f32 %v1641, %v4423
        %v4427 = vmul.f32 %v1642, %v4423
        %v4428 = vmul.f32 %v1643, %v4423
        %v4429 = vmul.f32 %v1644, %v4423
        %v4430 = vmul.f32 %v1645, %v4423
        %v4431 = vmul.f32 %v1646, %v4423
        %v4432 = vadd.f32 %v4411, %v4424
        %v4433 = vadd.f32 %v4412, %v4425
        %v4434 = vadd.f32 %v4413, %v4426
        %v4435 = vadd.f32 %v4414, %v4427
        %v4436 = vadd.f32 %v4415, %v4428
        %v4437 = vadd.f32 %v4416, %v4429
        %v4438 = vadd.f32 %v4417, %v4430
        %v4439 = vadd.f32 %v4418, %v4431
        %v4440 = vld [vmem:[%s7 + $0x4e] sm:$0x1]
        %v4441 = vlaneseq
        %v4442 = vshrl.u32 %v4441, 7
        %v4443 = vsub.s32 0, %v4442
        %v4444 = vrot.slane %v4440, %v4443
        %v4445 = vmul.f32 %v1640, %v4444
        %v4446 = vmul.f32 %v1641, %v4444
        %v4447 = vmul.f32 %v1642, %v4444
        %v4448 = vmul.f32 %v1643, %v4444
        %v4449 = vmul.f32 %v1644, %v4444
        %v4450 = vmul.f32 %v1645, %v4444
        %v4451 = vmul.f32 %v1646, %v4444
        %v4452 = vmul.f32 %v1647, %v4444
        %v4453 = vadd.f32 %v4432, %v4445
        %v4454 = vadd.f32 %v4433, %v4446
        %v4455 = vadd.f32 %v4434, %v4447
        %v4456 = vadd.f32 %v4435, %v4448
        %v4457 = vadd.f32 %v4436, %v4449
        %v4458 = vadd.f32 %v4437, %v4450
        %v4459 = vadd.f32 %v4438, %v4451
        %v4460 = vadd.f32 %v4439, %v4452
        %v4461 = vld [vmem:[%s7 + $0x7] sm:$0x1]
        %v4462 = vlaneseq
        %v4463 = vshrl.u32 %v4462, 7
        %v4464 = vsub.s32 0, %v4463
        %v4465 = vrot.slane %v4461, %v4464
        %v4466 = vmul.f32 %v2805, %v4465
        %v4467 = vmul.f32 %v2806, %v4465
        %v4468 = vmul.f32 %v2807, %v4465
        %v4469 = vmul.f32 %v2808, %v4465
        %v4470 = vmul.f32 %v2809, %v4465
        %v4471 = vmul.f32 %v2810, %v4465
        %v4472 = vmul.f32 %v2811, %v4465
        %v4473 = vmul.f32 %v2812, %v4465
        %v4474 = vadd.f32 %v4453, %v4466
        %v4475 = vadd.f32 %v4454, %v4467
        %v4476 = vadd.f32 %v4455, %v4468
        %v4477 = vadd.f32 %v4456, %v4469
        %v4478 = vadd.f32 %v4457, %v4470
        %v4479 = vadd.f32 %v4458, %v4471
        %v4480 = vadd.f32 %v4459, %v4472
        %v4481 = vadd.f32 %v4460, %v4473
        %v4482 = vld [vmem:[%s7 + $0x10] sm:$0x1]
        %v4483 = vlaneseq
        %v4484 = vshrl.u32 %v4483, 7
        %v4485 = vsub.s32 0, %v4484
        %v4486 = vrot.slane %v4482, %v4485
        %v4487 = vmul.f32 %v2806, %v4486
        %v4488 = vmul.f32 %v2807, %v4486
        %v4489 = vmul.f32 %v2808, %v4486
        %v4490 = vmul.f32 %v2809, %v4486
        %v4491 = vmul.f32 %v2810, %v4486
        %v4492 = vmul.f32 %v2811, %v4486
        %v4493 = vmul.f32 %v2812, %v4486
        %v4494 = vmul.f32 %v2813, %v4486
        %v4495 = vadd.f32 %v4474, %v4487
        %v4496 = vadd.f32 %v4475, %v4488
        %v4497 = vadd.f32 %v4476, %v4489
        %v4498 = vadd.f32 %v4477, %v4490
        %v4499 = vadd.f32 %v4478, %v4491
        %v4500 = vadd.f32 %v4479, %v4492
        %v4501 = vadd.f32 %v4480, %v4493
        %v4502 = vadd.f32 %v4481, %v4494
        %v4503 = vld [vmem:[%s7 + $0x19] sm:$0x1]
        %v4504 = vlaneseq
        %v4505 = vshrl.u32 %v4504, 7
        %v4506 = vsub.s32 0, %v4505
        %v4507 = vrot.slane %v4503, %v4506
        %v4508 = vmul.f32 %v2807, %v4507
        %v4509 = vmul.f32 %v2808, %v4507
        %v4510 = vmul.f32 %v2809, %v4507
        %v4511 = vmul.f32 %v2810, %v4507
        %v4512 = vmul.f32 %v2811, %v4507
        %v4513 = vmul.f32 %v2812, %v4507
        %v4514 = vmul.f32 %v2813, %v4507
        %v4515 = vmul.f32 %v2814, %v4507
        %v4516 = vadd.f32 %v4495, %v4508
        %v4517 = vadd.f32 %v4496, %v4509
        %v4518 = vadd.f32 %v4497, %v4510
        %v4519 = vadd.f32 %v4498, %v4511
        %v4520 = vadd.f32 %v4499, %v4512
        %v4521 = vadd.f32 %v4500, %v4513
        %v4522 = vadd.f32 %v4501, %v4514
        %v4523 = vadd.f32 %v4502, %v4515
        %v4524 = vld [vmem:[%s7 + $0x22] sm:$0x1]
        %v4525 = vlaneseq
        %v4526 = vshrl.u32 %v4525, 7
        %v4527 = vsub.s32 0, %v4526
        %v4528 = vrot.slane %v4524, %v4527
        %v4529 = vmul.f32 %v2808, %v4528
        %v4530 = vmul.f32 %v2809, %v4528
        %v4531 = vmul.f32 %v2810, %v4528
        %v4532 = vmul.f32 %v2811, %v4528
        %v4533 = vmul.f32 %v2812, %v4528
        %v4534 = vmul.f32 %v2813, %v4528
        %v4535 = vmul.f32 %v2814, %v4528
        %v4536 = vmul.f32 %v2815, %v4528
        %v4537 = vadd.f32 %v4516, %v4529
        %v4538 = vadd.f32 %v4517, %v4530
        %v4539 = vadd.f32 %v4518, %v4531
        %v4540 = vadd.f32 %v4519, %v4532
        %v4541 = vadd.f32 %v4520, %v4533
        %v4542 = vadd.f32 %v4521, %v4534
        %v4543 = vadd.f32 %v4522, %v4535
        %v4544 = vadd.f32 %v4523, %v4536
        %v4545 = vld [vmem:[%s7 + $0x2b] sm:$0x1]
        %v4546 = vlaneseq
        %v4547 = vshrl.u32 %v4546, 7
        %v4548 = vsub.s32 0, %v4547
        %v4549 = vrot.slane %v4545, %v4548
        %v4550 = vmul.f32 %v2809, %v4549
        %v4551 = vmul.f32 %v2810, %v4549
        %v4552 = vmul.f32 %v2811, %v4549
        %v4553 = vmul.f32 %v2812, %v4549
        %v4554 = vmul.f32 %v2813, %v4549
        %v4555 = vmul.f32 %v2814, %v4549
        %v4556 = vmul.f32 %v2815, %v4549
        %v4557 = vmul.f32 %v2816, %v4549
        %v4558 = vadd.f32 %v4537, %v4550
        %v4559 = vadd.f32 %v4538, %v4551
        %v4560 = vadd.f32 %v4539, %v4552
        %v4561 = vadd.f32 %v4540, %v4553
        %v4562 = vadd.f32 %v4541, %v4554
        %v4563 = vadd.f32 %v4542, %v4555
        %v4564 = vadd.f32 %v4543, %v4556
        %v4565 = vadd.f32 %v4544, %v4557
        %v4566 = vld [vmem:[%s7 + $0x34] sm:$0x1]
        %v4567 = vlaneseq
        %v4568 = vshrl.u32 %v4567, 7
        %v4569 = vsub.s32 0, %v4568
        %v4570 = vrot.slane %v4566, %v4569
        %v4571 = vmul.f32 %v2810, %v4570
        %v4572 = vmul.f32 %v2811, %v4570
        %v4573 = vmul.f32 %v2812, %v4570
        %v4574 = vmul.f32 %v2813, %v4570
        %v4575 = vmul.f32 %v2814, %v4570
        %v4576 = vmul.f32 %v2815, %v4570
        %v4577 = vmul.f32 %v2816, %v4570
        %v4578 = vmul.f32 %v2817, %v4570
        %v4579 = vadd.f32 %v4558, %v4571
        %v4580 = vadd.f32 %v4559, %v4572
        %v4581 = vadd.f32 %v4560, %v4573
        %v4582 = vadd.f32 %v4561, %v4574
        %v4583 = vadd.f32 %v4562, %v4575
        %v4584 = vadd.f32 %v4563, %v4576
        %v4585 = vadd.f32 %v4564, %v4577
        %v4586 = vadd.f32 %v4565, %v4578
        %v4587 = vld [vmem:[%s7 + $0x3d] sm:$0x1]
        %v4588 = vlaneseq
        %v4589 = vshrl.u32 %v4588, 7
        %v4590 = vsub.s32 0, %v4589
        %v4591 = vrot.slane %v4587, %v4590
        %v4592 = vmul.f32 %v2811, %v4591
        %v4593 = vmul.f32 %v2812, %v4591
        %v4594 = vmul.f32 %v2813, %v4591
        %v4595 = vmul.f32 %v2814, %v4591
        %v4596 = vmul.f32 %v2815, %v4591
        %v4597 = vmul.f32 %v2816, %v4591
        %v4598 = vmul.f32 %v2817, %v4591
        %v4599 = vmul.f32 %v2818, %v4591
        %v4600 = vadd.f32 %v4579, %v4592
        %v4601 = vadd.f32 %v4580, %v4593
        %v4602 = vadd.f32 %v4581, %v4594
        %v4603 = vadd.f32 %v4582, %v4595
        %v4604 = vadd.f32 %v4583, %v4596
        %v4605 = vadd.f32 %v4584, %v4597
        %v4606 = vadd.f32 %v4585, %v4598
        %v4607 = vadd.f32 %v4586, %v4599
        %v4608 = vld [vmem:[%s7 + $0x46] sm:$0x1]
        %v4609 = vlaneseq
        %v4610 = vshrl.u32 %v4609, 7
        %v4611 = vsub.s32 0, %v4610
        %v4612 = vrot.slane %v4608, %v4611
        %v4613 = vmul.f32 %v2812, %v4612
        %v4614 = vmul.f32 %v2813, %v4612
        %v4615 = vmul.f32 %v2814, %v4612
        %v4616 = vmul.f32 %v2815, %v4612
        %v4617 = vmul.f32 %v2816, %v4612
        %v4618 = vmul.f32 %v2817, %v4612
        %v4619 = vmul.f32 %v2818, %v4612
        %v4620 = vmul.f32 %v2819, %v4612
        %v4621 = vadd.f32 %v4600, %v4613
        %v4622 = vadd.f32 %v4601, %v4614
        %v4623 = vadd.f32 %v4602, %v4615
        %v4624 = vadd.f32 %v4603, %v4616
        %v4625 = vadd.f32 %v4604, %v4617
        %v4626 = vadd.f32 %v4605, %v4618
        %v4627 = vadd.f32 %v4606, %v4619
        %v4628 = vadd.f32 %v4607, %v4620
        %v4629 = vld [vmem:[%s7 + $0x4f] sm:$0x1]
        %v4630 = vlaneseq
        %v4631 = vshrl.u32 %v4630, 7
        %v4632 = vsub.s32 0, %v4631
        %v4633 = vrot.slane %v4629, %v4632
        %v4634 = vmul.f32 %v2813, %v4633
        %v4635 = vmul.f32 %v2814, %v4633
        %v4636 = vmul.f32 %v2815, %v4633
        %v4637 = vmul.f32 %v2816, %v4633
        %v4638 = vmul.f32 %v2817, %v4633
        %v4639 = vmul.f32 %v2818, %v4633
        %v4640 = vmul.f32 %v2819, %v4633
        %v4641 = vmul.f32 %v2820, %v4633
        %v4642 = vadd.f32 %v4621, %v4634
        %v4643 = vadd.f32 %v4622, %v4635
        %v4644 = vadd.f32 %v4623, %v4636
        %v4645 = vadd.f32 %v4624, %v4637
        %v4646 = vadd.f32 %v4625, %v4638
        %v4647 = vadd.f32 %v4626, %v4639
        %v4648 = vadd.f32 %v4627, %v4640
        %v4649 = vadd.f32 %v4628, %v4641
        %v4650 = vld [vmem:[#allocation2 + $0x8] sm:$0xff]
        %v4651 = vld [vmem:[#allocation2 + $0x18] sm:$0xff]
        %v4652 = vld [vmem:[#allocation2 + $0x28] sm:$0xff]
        %v4653 = vld [vmem:[#allocation2 + $0x38] sm:$0xff]
        %v4654 = vld [vmem:[#allocation2 + $0x48] sm:$0xff]
        %v4655 = vld [vmem:[#allocation2 + $0x58] sm:$0xff]
        %v4656 = vld [vmem:[#allocation2 + $0x68] sm:$0xff]
        %v4657 = vld [vmem:[#allocation2 + $0x78] sm:$0xff]
        %v4658 = vld [vmem:[#allocation2 + $0x88] sm:$0xff]
        %v4659 = vld [vmem:[#allocation2 + $0x98] sm:$0xff]
        %v4660 = vld [vmem:[#allocation2 + $0xa8] sm:$0xff]
        %v4661 = vld [vmem:[#allocation2 + $0xb8] sm:$0xff]
        %v4662 = vld [vmem:[#allocation2 + $0xc8] sm:$0xff]
        %v4663 = vld [vmem:[#allocation2 + $0xd8] sm:$0xff]
        %v4664 = vld [vmem:[#allocation2 + $0xe8] sm:$0xff]
        %v4665 = vld [vmem:[#allocation2 + $0xf8] sm:$0xff]
        %v4666 = vld [vmem:[%s7 + $0x8] sm:$0x1]
        %v4667 = vlaneseq
        %v4668 = vshrl.u32 %v4667, 7
        %v4669 = vsub.s32 0, %v4668
        %v4670 = vrot.slane %v4666, %v4669
        %v4671 = vmul.f32 %v4650, %v4670
        %v4672 = vmul.f32 %v4651, %v4670
        %v4673 = vmul.f32 %v4652, %v4670
        %v4674 = vmul.f32 %v4653, %v4670
        %v4675 = vmul.f32 %v4654, %v4670
        %v4676 = vmul.f32 %v4655, %v4670
        %v4677 = vmul.f32 %v4656, %v4670
        %v4678 = vmul.f32 %v4657, %v4670
        %v4679 = vadd.f32 %v4642, %v4671
        %v4680 = vadd.f32 %v4643, %v4672
        %v4681 = vadd.f32 %v4644, %v4673
        %v4682 = vadd.f32 %v4645, %v4674
        %v4683 = vadd.f32 %v4646, %v4675
        %v4684 = vadd.f32 %v4647, %v4676
        %v4685 = vadd.f32 %v4648, %v4677
        %v4686 = vadd.f32 %v4649, %v4678
        %v4687 = vld [vmem:[%s7 + $0x11] sm:$0x1]
        %v4688 = vlaneseq
        %v4689 = vshrl.u32 %v4688, 7
        %v4690 = vsub.s32 0, %v4689
        %v4691 = vrot.slane %v4687, %v4690
        %v4692 = vmul.f32 %v4651, %v4691
        %v4693 = vmul.f32 %v4652, %v4691
        %v4694 = vmul.f32 %v4653, %v4691
        %v4695 = vmul.f32 %v4654, %v4691
        %v4696 = vmul.f32 %v4655, %v4691
        %v4697 = vmul.f32 %v4656, %v4691
        %v4698 = vmul.f32 %v4657, %v4691
        %v4699 = vmul.f32 %v4658, %v4691
        %v4700 = vadd.f32 %v4679, %v4692
        %v4701 = vadd.f32 %v4680, %v4693
        %v4702 = vadd.f32 %v4681, %v4694
        %v4703 = vadd.f32 %v4682, %v4695
        %v4704 = vadd.f32 %v4683, %v4696
        %v4705 = vadd.f32 %v4684, %v4697
        %v4706 = vadd.f32 %v4685, %v4698
        %v4707 = vadd.f32 %v4686, %v4699
        %v4708 = vld [vmem:[%s7 + $0x1a] sm:$0x1]
        %v4709 = vlaneseq
        %v4710 = vshrl.u32 %v4709, 7
        %v4711 = vsub.s32 0, %v4710
        %v4712 = vrot.slane %v4708, %v4711
        %v4713 = vmul.f32 %v4652, %v4712
        %v4714 = vmul.f32 %v4653, %v4712
        %v4715 = vmul.f32 %v4654, %v4712
        %v4716 = vmul.f32 %v4655, %v4712
        %v4717 = vmul.f32 %v4656, %v4712
        %v4718 = vmul.f32 %v4657, %v4712
        %v4719 = vmul.f32 %v4658, %v4712
        %v4720 = vmul.f32 %v4659, %v4712
        %v4721 = vadd.f32 %v4700, %v4713
        %v4722 = vadd.f32 %v4701, %v4714
        %v4723 = vadd.f32 %v4702, %v4715
        %v4724 = vadd.f32 %v4703, %v4716
        %v4725 = vadd.f32 %v4704, %v4717
        %v4726 = vadd.f32 %v4705, %v4718
        %v4727 = vadd.f32 %v4706, %v4719
        %v4728 = vadd.f32 %v4707, %v4720
        %v4729 = vld [vmem:[%s7 + $0x23] sm:$0x1]
        %v4730 = vlaneseq
        %v4731 = vshrl.u32 %v4730, 7
        %v4732 = vsub.s32 0, %v4731
        %v4733 = vrot.slane %v4729, %v4732
        %v4734 = vmul.f32 %v4653, %v4733
        %v4735 = vmul.f32 %v4654, %v4733
        %v4736 = vmul.f32 %v4655, %v4733
        %v4737 = vmul.f32 %v4656, %v4733
        %v4738 = vmul.f32 %v4657, %v4733
        %v4739 = vmul.f32 %v4658, %v4733
        %v4740 = vmul.f32 %v4659, %v4733
        %v4741 = vmul.f32 %v4660, %v4733
        %v4742 = vadd.f32 %v4721, %v4734
        %v4743 = vadd.f32 %v4722, %v4735
        %v4744 = vadd.f32 %v4723, %v4736
        %v4745 = vadd.f32 %v4724, %v4737
        %v4746 = vadd.f32 %v4725, %v4738
        %v4747 = vadd.f32 %v4726, %v4739
        %v4748 = vadd.f32 %v4727, %v4740
        %v4749 = vadd.f32 %v4728, %v4741
        %v4750 = vld [vmem:[%s7 + $0x2c] sm:$0x1]
        %v4751 = vlaneseq
        %v4752 = vshrl.u32 %v4751, 7
        %v4753 = vsub.s32 0, %v4752
        %v4754 = vrot.slane %v4750, %v4753
        %v4755 = vmul.f32 %v4654, %v4754
        %v4756 = vmul.f32 %v4655, %v4754
        %v4757 = vmul.f32 %v4656, %v4754
        %v4758 = vmul.f32 %v4657, %v4754
        %v4759 = vmul.f32 %v4658, %v4754
        %v4760 = vmul.f32 %v4659, %v4754
        %v4761 = vmul.f32 %v4660, %v4754
        %v4762 = vmul.f32 %v4661, %v4754
        %v4763 = vadd.f32 %v4742, %v4755
        %v4764 = vadd.f32 %v4743, %v4756
        %v4765 = vadd.f32 %v4744, %v4757
        %v4766 = vadd.f32 %v4745, %v4758
        %v4767 = vadd.f32 %v4746, %v4759
        %v4768 = vadd.f32 %v4747, %v4760
        %v4769 = vadd.f32 %v4748, %v4761
        %v4770 = vadd.f32 %v4749, %v4762
        %v4771 = vld [vmem:[%s7 + $0x35] sm:$0x1]
        %v4772 = vlaneseq
        %v4773 = vshrl.u32 %v4772, 7
        %v4774 = vsub.s32 0, %v4773
        %v4775 = vrot.slane %v4771, %v4774
        %v4776 = vmul.f32 %v4655, %v4775
        %v4777 = vmul.f32 %v4656, %v4775
        %v4778 = vmul.f32 %v4657, %v4775
        %v4779 = vmul.f32 %v4658, %v4775
        %v4780 = vmul.f32 %v4659, %v4775
        %v4781 = vmul.f32 %v4660, %v4775
        %v4782 = vmul.f32 %v4661, %v4775
        %v4783 = vmul.f32 %v4662, %v4775
        %v4784 = vadd.f32 %v4763, %v4776
        %v4785 = vadd.f32 %v4764, %v4777
        %v4786 = vadd.f32 %v4765, %v4778
        %v4787 = vadd.f32 %v4766, %v4779
        %v4788 = vadd.f32 %v4767, %v4780
        %v4789 = vadd.f32 %v4768, %v4781
        %v4790 = vadd.f32 %v4769, %v4782
        %v4791 = vadd.f32 %v4770, %v4783
        %v4792 = vld [vmem:[%s7 + $0x3e] sm:$0x1]
        %v4793 = vlaneseq
        %v4794 = vshrl.u32 %v4793, 7
        %v4795 = vsub.s32 0, %v4794
        %v4796 = vrot.slane %v4792, %v4795
        %v4797 = vmul.f32 %v4656, %v4796
        %v4798 = vmul.f32 %v4657, %v4796
        %v4799 = vmul.f32 %v4658, %v4796
        %v4800 = vmul.f32 %v4659, %v4796
        %v4801 = vmul.f32 %v4660, %v4796
        %v4802 = vmul.f32 %v4661, %v4796
        %v4803 = vmul.f32 %v4662, %v4796
        %v4804 = vmul.f32 %v4663, %v4796
        %v4805 = vadd.f32 %v4784, %v4797
        %v4806 = vadd.f32 %v4785, %v4798
        %v4807 = vadd.f32 %v4786, %v4799
        %v4808 = vadd.f32 %v4787, %v4800
        %v4809 = vadd.f32 %v4788, %v4801
        %v4810 = vadd.f32 %v4789, %v4802
        %v4811 = vadd.f32 %v4790, %v4803
        %v4812 = vadd.f32 %v4791, %v4804
        %v4813 = vld [vmem:[%s7 + $0x47] sm:$0x1]
        %v4814 = vlaneseq
        %v4815 = vshrl.u32 %v4814, 7
        %v4816 = vsub.s32 0, %v4815
        %v4817 = vrot.slane %v4813, %v4816
        %v4818 = vmul.f32 %v4657, %v4817
        %v4819 = vmul.f32 %v4658, %v4817
        %v4820 = vmul.f32 %v4659, %v4817
        %v4821 = vmul.f32 %v4660, %v4817
        %v4822 = vmul.f32 %v4661, %v4817
        %v4823 = vmul.f32 %v4662, %v4817
        %v4824 = vmul.f32 %v4663, %v4817
        %v4825 = vmul.f32 %v4664, %v4817
        %v4826 = vadd.f32 %v4805, %v4818
        %v4827 = vadd.f32 %v4806, %v4819
        %v4828 = vadd.f32 %v4807, %v4820
        %v4829 = vadd.f32 %v4808, %v4821
        %v4830 = vadd.f32 %v4809, %v4822
        %v4831 = vadd.f32 %v4810, %v4823
        %v4832 = vadd.f32 %v4811, %v4824
        %v4833 = vadd.f32 %v4812, %v4825
        %v4834 = vld [vmem:[%s7 + $0x50] sm:$0x1]
        %v4835 = vlaneseq
        %v4836 = vshrl.u32 %v4835, 7
        %v4837 = vsub.s32 0, %v4836
        %v4838 = vrot.slane %v4834, %v4837
        %v4839 = vmul.f32 %v4658, %v4838
        %v4840 = vmul.f32 %v4659, %v4838
        %v4841 = vmul.f32 %v4660, %v4838
        %v4842 = vmul.f32 %v4661, %v4838
        %v4843 = vmul.f32 %v4662, %v4838
        %v4844 = vmul.f32 %v4663, %v4838
        %v4845 = vmul.f32 %v4664, %v4838
        %v4846 = vmul.f32 %v4665, %v4838
        %v4847 = vadd.f32 %v4826, %v4839
        %v4848 = vadd.f32 %v4827, %v4840
        %v4849 = vadd.f32 %v4828, %v4841
        %v4850 = vadd.f32 %v4829, %v4842
        %v4851 = vadd.f32 %v4830, %v4843
        %v4852 = vadd.f32 %v4831, %v4844
        %v4853 = vadd.f32 %v4832, %v4845
        %v4854 = vadd.f32 %v4833, %v4846
        %v4855 = vld [vmem:[%s8 + $0x3] sm:$0x1]
        %v4856 = vlaneseq
        %v4857 = vshrl.u32 %v4856, 7
        %v4858 = vsub.s32 0, %v4857
        %v4859 = vrot.slane %v4855, %v4858
        %v4860 = vadd.f32 %v4847, %v4859
        %v4861 = vadd.f32 %v4848, %v4859
        %v4862 = vadd.f32 %v4849, %v4859
        %v4863 = vadd.f32 %v4850, %v4859
        %v4864 = vadd.f32 %v4851, %v4859
        %v4865 = vadd.f32 %v4852, %v4859
        %v4866 = vadd.f32 %v4853, %v4859
        %v4867 = vadd.f32 %v4854, %v4859
        %v4868 = vpack.c.bf16 %v4861, %v4860
        %v4869 = vpack.c.bf16 %v4863, %v4862
        %v4870 = vpack.c.bf16 %v4865, %v4864
        %v4871 = vpack.c.bf16 %v4867, %v4866
        %s4872 = scalar_lea.vmem %s9, 96
        %v4873 = vld [vmem:[%s4872] sm:$0xf]
        %v4874 = vld [vmem:[%s4872 + $0x4] sm:$0xf]
        %v4875 = vld [vmem:[%s4872 + $0x8] sm:$0xf]
        %v4876 = vld [vmem:[%s4872 + $0xc] sm:$0xf]
        %v4877 = vld [vmem:[%s4872 + $0x10] sm:$0xf]
        %v4878 = vld [vmem:[%s4872 + $0x14] sm:$0xf]
        %v4879 = vld [vmem:[%s4872 + $0x18] sm:$0xf]
        %v4880 = vld [vmem:[%s4872 + $0x1c] sm:$0xf]
        %v4881 = vld [vmem:[%s10 + $0x3] sm:$0x1]
        %v4882 = vlaneseq
        %v4883 = vshrl.u32 %v4882, 7
        %v4884 = vsub.s32 0, %v4883
        %v4885 = vrot.slane %v4881, %v4884
        %v4894 = vunpack.c.l.b16 %v4873
        %v4895 = vunpack.c.l.b16 %v4874
        %v4896 = vunpack.c.l.b16 %v4875
        %v4897 = vunpack.c.l.b16 %v4876
        %v4898 = vunpack.c.l.b16 %v4877
        %v4899 = vunpack.c.l.b16 %v4878
        %v4900 = vunpack.c.l.b16 %v4879
        %v4901 = vunpack.c.l.b16 %v4880
        %v4902 = vpack.c.b16 %v4895, %v4894
        %v4903 = vpack.c.b16 %v4897, %v4896
        %v4904 = vpack.c.b16 %v4899, %v4898
        %v4905 = vpack.c.b16 %v4901, %v4900
        %v4911 = vsel %vm764, %v4868, 0
        %v4914 = vsel %vm764, %v4869, 0
        %v4917 = vsel %vm764, %v4870, 0
        %v4920 = vsel %vm764, %v4871, 0
        %4922 = vmatprep.subr.bf16.mxu0 0
        %4923 = vmatpush1.bf16.msra.mxu0 %v4902
        %4924 = vmatprep.subr.bf16.mxu0 0
        %4925 = vmatpush1.bf16.msra.mxu0 %v4903
        %4926 = vmatprep.subr.bf16.mxu0 0
        %4927 = vmatpush1.bf16.msra.mxu0 %v4904
        %4928 = vmatprep.subr.bf16.mxu0 0
        %4929 = vmatpush1.bf16.msra.mxu0 %v4905
        %4930 = vmatprep.subr.bf16.mxu0 0
        %4931 = vmatpush1.bf16.msra.mxu0 0
        %4932 = vmatprep.subr.bf16.mxu0 0
        %4933 = vmatpush1.bf16.msra.mxu0 0
        %4934 = vmatprep.subr.bf16.mxu0 0
        %4935 = vmatpush1.bf16.msra.mxu0 0
        %4936 = vmatprep.subr.bf16.mxu0 0
        %4937 = vmatpush1.bf16.msra.mxu0 0
        %4938 = vmatprep.subr.bf16.mxu0 0
        %4939 = vmatpush1.bf16.msra.mxu0 0
        %4940 = vmatprep.subr.bf16.mxu0 0
        %4941 = vmatpush1.bf16.msra.mxu0 0
        %4942 = vmatprep.subr.bf16.mxu0 0
        %4943 = vmatpush1.bf16.msra.mxu0 0
        %4944 = vmatprep.subr.bf16.mxu0 0
        %4945 = vmatpush1.bf16.msra.mxu0 0
        %4946 = vmatprep.subr.bf16.mxu0 0
        %4947 = vmatpush1.bf16.msra.mxu0 0
        %4948 = vmatprep.subr.bf16.mxu0 0
        %4949 = vmatpush1.bf16.msra.mxu0 0
        %4950 = vmatprep.subr.bf16.mxu0 0
        %4951 = vmatpush1.bf16.msra.mxu0 0
        %4952 = vmatprep.subr.bf16.mxu0 0
        %4953 = vmatpush1.bf16.msra.mxu0 0
        %4954 = vmatprep.mubr.bf16.mxu0 0
        %4955 = vmatmul.mubr.bf16.gmra.mrb[0].mxu0 %v4911
        %v4956 = vpop.f32.mrb[0].mxu0
        %v4957 = vadd.f32 %v4885, %v4956
        %v4958 = vpop.f32.mrb[0].mxu0
        %v4959 = vpop.f32.mrb[0].mxu0
        %v4960 = vadd.f32 %v4885, %v4959
        %v4961 = vpop.f32.mrb[0].mxu0
        %4962 = vmatprep.mubr.bf16.mxu0 0
        %4963 = vmatmul.mubr.bf16.gmra.mrb[0].mxu0 %v4914
        %v4964 = vpop.f32.mrb[0].mxu0
        %v4965 = vadd.f32 %v4885, %v4964
        %v4966 = vpop.f32.mrb[0].mxu0
        %v4967 = vpop.f32.mrb[0].mxu0
        %v4968 = vadd.f32 %v4885, %v4967
        %v4969 = vpop.f32.mrb[0].mxu0
        %4970 = vmatprep.mubr.bf16.mxu0 0
        %4971 = vmatmul.mubr.bf16.gmra.mrb[0].mxu0 %v4917
        %v4972 = vpop.f32.mrb[0].mxu0
        %v4973 = vadd.f32 %v4885, %v4972
        %v4974 = vpop.f32.mrb[0].mxu0
        %v4975 = vpop.f32.mrb[0].mxu0
        %v4976 = vadd.f32 %v4885, %v4975
        %v4977 = vpop.f32.mrb[0].mxu0
        %4978 = vmatprep.mubr.bf16.mxu0 0
        %4979 = vmatmul.mubr.bf16.gmra.mrb[0].mxu0 %v4920
        %v4980 = vpop.f32.mrb[0].mxu0
        %v4981 = vadd.f32 %v4885, %v4980
        %v4982 = vpop.f32.mrb[0].mxu0
        %v4983 = vpop.f32.mrb[0].mxu0
        %v4984 = vadd.f32 %v4885, %v4983
        %v4985 = vpop.f32.mrb[0].mxu0
        %4986 = vdwg.mxu0
        %v4987 = vsel %vm648, %v4957, 0.0
        %v4988 = vsel %vm648, %v4960, 0.0
        %v4989 = vadd.f32 %v4987, %v4988
        %v4990 = vsel %vm648, %v4965, 0.0
        %v4991 = vadd.f32 %v4989, %v4990
        %v4992 = vsel %vm648, %v4968, 0.0
        %v4993 = vadd.f32 %v4991, %v4992
        %v4994 = vsel %vm648, %v4973, 0.0
        %v4995 = vadd.f32 %v4993, %v4994
        %v4996 = vsel %vm648, %v4976, 0.0
        %v4997 = vadd.f32 %v4995, %v4996
        %v4998 = vsel %vm648, %v4981, 0.0
        %v4999 = vadd.f32 %v4997, %v4998
        %v5000 = vsel %vm648, %v4984, 0.0
        %v5001 = vadd.f32 %v4999, %v5000
        %v5002 = vrot.slane %v5001, 4
        %v5003 = vadd.f32 %v5001, %v5002
        %v5004 = vrot.slane %v5003, 2
        %v5005 = vadd.f32 %v5003, %v5004
        %v5006 = vrot.slane %v5005, 1
        %v5007 = vadd.f32 %v5005, %v5006
        %v5008 = vmul.f32 %v5007, 0.015625
        %vm5009 = vcmask 1040384
        %v5010 = vsel %vm5009, %v1195, %v1906
        %vm5011 = vcmask 1041408
        %v5012 = vsel %vm5011, %v5010, %v3121
        %vm5013 = vcmask 1042432
        %v5014 = vsel %vm5013, %v5012, %v5008
        %v5015 = vld [vmem:[%s11] sm:$0xff]
        %v5016 = vld [vmem:[%s11 + $0x8] sm:$0xff]
        %v5017 = vld [vmem:[%s12] sm:$0x1]
        %v5019 = vlaneseq
        %v5020 = vshrl.u32 %v5019, 7
        %v5021 = vsub.s32 0, %v5020
        %v5022 = vrot.slane %v5017, %v5021
        %v5025 = vsel %vm648, %v5014, 0
        %5027 = vmatprep.subr.mxu0 0.0
        %5028 = vmatpush1.msra.mxu0 %v5015
        %5029 = vmatprep.subr.mxu0 0.0
        %5030 = vmatpush1.msra.mxu0 %v5016
        %5031 = vmatprep.subr.mxu0 0.0
        %5032 = vmatpush1.msra.mxu0 0.0
        %5033 = vmatprep.subr.mxu0 0.0
        %5034 = vmatpush1.msra.mxu0 0.0
        %5035 = vmatprep.subr.mxu0 0.0
        %5036 = vmatpush1.msra.mxu0 0.0
        %5037 = vmatprep.subr.mxu0 0.0
        %5038 = vmatpush1.msra.mxu0 0.0
        %5039 = vmatprep.subr.mxu0 0.0
        %5040 = vmatpush1.msra.mxu0 0.0
        %5041 = vmatprep.subr.mxu0 0.0
        %5042 = vmatpush1.msra.mxu0 0.0
        %5043 = vmatprep.subr.mxu0 0.0
        %5044 = vmatpush1.msra.mxu0 0.0
        %5045 = vmatprep.subr.mxu0 0.0
        %5046 = vmatpush1.msra.mxu0 0.0
        %5047 = vmatprep.subr.mxu0 0.0
        %5048 = vmatpush1.msra.mxu0 0.0
        %5049 = vmatprep.subr.mxu0 0.0
        %5050 = vmatpush1.msra.mxu0 0.0
        %5051 = vmatprep.subr.mxu0 0.0
        %5052 = vmatpush1.msra.mxu0 0.0
        %5053 = vmatprep.subr.mxu0 0.0
        %5054 = vmatpush1.msra.mxu0 0.0
        %5055 = vmatprep.subr.mxu0 0.0
        %5056 = vmatpush1.msra.mxu0 0.0
        %5057 = vmatprep.subr.mxu0 0.0
        %5058 = vmatpush1.msra.mxu0 0.0
        %5059 = vmatprep.subr.mxu0 0.0
        %5060 = vmatpush1.msra.mxu0 0.0
        %5061 = vmatprep.subr.mxu0 0.0
        %5062 = vmatpush1.msra.mxu0 0.0
        %5063 = vmatprep.subr.mxu0 0.0
        %5064 = vmatpush1.msra.mxu0 0.0
        %5065 = vmatprep.subr.mxu0 0.0
        %5066 = vmatpush1.msra.mxu0 0.0
        %5067 = vmatprep.subr.mxu0 0.0
        %5068 = vmatpush1.msra.mxu0 0.0
        %5069 = vmatprep.subr.mxu0 0.0
        %5070 = vmatpush1.msra.mxu0 0.0
        %5071 = vmatprep.subr.mxu0 0.0
        %5072 = vmatpush1.msra.mxu0 0.0
        %5073 = vmatprep.subr.mxu0 0.0
        %5074 = vmatpush1.msra.mxu0 0.0
        %5075 = vmatprep.subr.mxu0 0.0
        %5076 = vmatpush1.msra.mxu0 0.0
        %5077 = vmatprep.subr.mxu0 0.0
        %5078 = vmatpush1.msra.mxu0 0.0
        %5079 = vmatprep.subr.mxu0 0.0
        %5080 = vmatpush1.msra.mxu0 0.0
        %5081 = vmatprep.subr.mxu0 0.0
        %5082 = vmatpush1.msra.mxu0 0.0
        %5083 = vmatprep.subr.mxu0 0.0
        %5084 = vmatpush1.msra.mxu0 0.0
        %5085 = vmatprep.subr.mxu0 0.0
        %5086 = vmatpush1.msra.mxu0 0.0
        %5087 = vmatprep.subr.mxu0 0.0
        %5088 = vmatpush1.msra.mxu0 0.0
        %5089 = vmatprep.subr.mxu0 0.0
        %5090 = vmatpush1.msra.mxu0 0.0
        %5091 = vmatprep.mubr.f32.mxu0 0.0
        %5092 = vmatmul.mubr.f32.gmra.mrb[0].mxu0 %v5025
        %v5093 = vpop.f32.mrb[0].mxu0
        %v5094 = vadd.f32 %v5022, %v5093
        %v5095 = vpop.f32.mrb[0].mxu0
        %5096 = vdwg.mxu0
        %v5097 = vmax.f32 %v5094, 0.0
        %v5098 = vld [vmem:[%s13] sm:$0xf]
        %v5099 = vld [vmem:[%s14] sm:$0x1]
        %v5101 = vlaneseq
        %v5102 = vshrl.u32 %v5101, 7
        %v5103 = vsub.s32 0, %v5102
        %v5104 = vrot.slane %v5099, %v5103
        %vm5106 = vcmask 31744
        %v5108 = vsel %vm5106, %v5097, 0
        %vm5110 = vcmask 1043456
        %v5112 = vsel %vm5110, %v5098, 0
        %5114 = vmatprep.subr.mxu0 0.0
        %5115 = vmatpush1.msra.mxu0 %v5112
        %5116 = vmatprep.subr.mxu0 0.0
        %5117 = vmatpush1.msra.mxu0 0.0
        %5118 = vmatprep.subr.mxu0 0.0
        %5119 = vmatpush1.msra.mxu0 0.0
        %5120 = vmatprep.subr.mxu0 0.0
        %5121 = vmatpush1.msra.mxu0 0.0
        %5122 = vmatprep.subr.mxu0 0.0
        %5123 = vmatpush1.msra.mxu0 0.0
        %5124 = vmatprep.subr.mxu0 0.0
        %5125 = vmatpush1.msra.mxu0 0.0
        %5126 = vmatprep.subr.mxu0 0.0
        %5127 = vmatpush1.msra.mxu0 0.0
        %5128 = vmatprep.subr.mxu0 0.0
        %5129 = vmatpush1.msra.mxu0 0.0
        %5130 = vmatprep.subr.mxu0 0.0
        %5131 = vmatpush1.msra.mxu0 0.0
        %5132 = vmatprep.subr.mxu0 0.0
        %5133 = vmatpush1.msra.mxu0 0.0
        %5134 = vmatprep.subr.mxu0 0.0
        %5135 = vmatpush1.msra.mxu0 0.0
        %5136 = vmatprep.subr.mxu0 0.0
        %5137 = vmatpush1.msra.mxu0 0.0
        %5138 = vmatprep.subr.mxu0 0.0
        %5139 = vmatpush1.msra.mxu0 0.0
        %5140 = vmatprep.subr.mxu0 0.0
        %5141 = vmatpush1.msra.mxu0 0.0
        %5142 = vmatprep.subr.mxu0 0.0
        %5143 = vmatpush1.msra.mxu0 0.0
        %5144 = vmatprep.subr.mxu0 0.0
        %5145 = vmatpush1.msra.mxu0 0.0
        %5146 = vmatprep.subr.mxu0 0.0
        %5147 = vmatpush1.msra.mxu0 0.0
        %5148 = vmatprep.subr.mxu0 0.0
        %5149 = vmatpush1.msra.mxu0 0.0
        %5150 = vmatprep.subr.mxu0 0.0
        %5151 = vmatpush1.msra.mxu0 0.0
        %5152 = vmatprep.subr.mxu0 0.0
        %5153 = vmatpush1.msra.mxu0 0.0
        %5154 = vmatprep.subr.mxu0 0.0
        %5155 = vmatpush1.msra.mxu0 0.0
        %5156 = vmatprep.subr.mxu0 0.0
        %5157 = vmatpush1.msra.mxu0 0.0
        %5158 = vmatprep.subr.mxu0 0.0
        %5159 = vmatpush1.msra.mxu0 0.0
        %5160 = vmatprep.subr.mxu0 0.0
        %5161 = vmatpush1.msra.mxu0 0.0
        %5162 = vmatprep.subr.mxu0 0.0
        %5163 = vmatpush1.msra.mxu0 0.0
        %5164 = vmatprep.subr.mxu0 0.0
        %5165 = vmatpush1.msra.mxu0 0.0
        %5166 = vmatprep.subr.mxu0 0.0
        %5167 = vmatpush1.msra.mxu0 0.0
        %5168 = vmatprep.subr.mxu0 0.0
        %5169 = vmatpush1.msra.mxu0 0.0
        %5170 = vmatprep.subr.mxu0 0.0
        %5171 = vmatpush1.msra.mxu0 0.0
        %5172 = vmatprep.subr.mxu0 0.0
        %5173 = vmatpush1.msra.mxu0 0.0
        %5174 = vmatprep.subr.mxu0 0.0
        %5175 = vmatpush1.msra.mxu0 0.0
        %5176 = vmatprep.subr.mxu0 0.0
        %5177 = vmatpush1.msra.mxu0 0.0
        %5178 = vmatprep.mubr.f32.mxu0 0.0
        %5179 = vmatmul.mubr.f32.gmra.mrb[0].mxu0 %v5108
        %v5180 = vpop.f32.mrb[0].mxu0
        %v5181 = vadd.f32 %v5104, %v5180
        %v5182 = vpop.f32.mrb[0].mxu0
        %5183 = vdwg.mxu0
        %v5184 = vsub.f32 0.0, %v5181
        %v5185 = vmul.f32 %v5184, 1.442695
        %v5186 = vpow.pop %v5185
        %v5187 = vadd.f32 %v5186, 1.0
        %v5188 = vrcp.pop %v5187
        %v5189 = vmul.f32 1.0, %v5188
        %v5191 = vrot.slane %v5189, 1
        %v5193 = vmax.f32 %v5189, %v5191
        %v5195 = vrot.slane %v5193, 2
        %v5197 = vmax.f32 %v5193, %v5195
        %v5198 = vsub.f32 %v5189, %v5197
        %v5199 = vmul.f32 %v5198, 1.442695
        %v5200 = vpow.pop %v5199
        %v5202 = vrot.slane %v5197, 7
        %v5204 = vsub.f32 %v5189, %v5202
        %v5205 = vmul.f32 %v5204, 1.442695
        %v5206 = vpow.pop %v5205
        %v5207 = vrot.slane %v5197, 6
        %v5209 = vsub.f32 %v5189, %v5207
        %v5210 = vmul.f32 %v5209, 1.442695
        %v5211 = vpow.pop %v5210
        %v5212 = vrot.slane %v5197, 5
        %v5214 = vsub.f32 %v5189, %v5212
        %v5215 = vmul.f32 %v5214, 1.442695
        %v5216 = vpow.pop %v5215
        %v5218 = vrot.slane %v5206, 1
        %v5220 = vadd.f32 %v5200, %v5218
        %v5222 = vrot.slane %v5211, 2
        %v5224 = vadd.f32 %v5220, %v5222
        %v5226 = vrot.slane %v5216, 3
        %v5228 = vadd.f32 %v5224, %v5226
        %v5229 = vrcp.pop %v5228
        %v5230 = vmul.f32 1.0, %v5229
        %v5231 = vmul.f32 %v5200, %v5230
        %v5233 = vrot.slane %v5230, 7
        %v5235 = vmul.f32 %v5206, %v5233
        %v5236 = vrot.slane %v5230, 6
        %v5238 = vmul.f32 %v5211, %v5236
        %v5239 = vrot.slane %v5230, 5
        %v5241 = vmul.f32 %v5216, %v5239
        %v5242 = vlaneseq
        %v5243 = vshrl.u32 %v5242, 7
        %v5244 = vsub.s32 0, %v5243
        %v5245 = vrot.slane %v5231, %v5244
        %v5246 = vmul.f32 %v1144, %v5245
        %v5247 = vmul.f32 %v1147, %v5245
        %v5248 = vmul.f32 %v1152, %v5245
        %v5249 = vmul.f32 %v1155, %v5245
        %v5250 = vmul.f32 %v1160, %v5245
        %v5251 = vmul.f32 %v1163, %v5245
        %v5252 = vmul.f32 %v1168, %v5245
        %v5253 = vmul.f32 %v1171, %v5245
        %v5254 = vld [vmem:[%s15] sm:$0x1]
        %v5255 = vlaneseq
        %v5256 = vshrl.u32 %v5255, 7
        %v5257 = vsub.s32 0, %v5256
        %v5258 = vrot.slane %v5254, %v5257
        %v5259 = vmul.f32 %v5246, %v5258
        %v5260 = vmul.f32 %v5247, %v5258
        %v5261 = vmul.f32 %v5248, %v5258
        %v5262 = vmul.f32 %v5249, %v5258
        %v5263 = vmul.f32 %v5250, %v5258
        %v5264 = vmul.f32 %v5251, %v5258
        %v5265 = vmul.f32 %v5252, %v5258
        %v5266 = vmul.f32 %v5253, %v5258
        %v5267 = vld [vmem:[%s16] sm:$0x1]
        %v5268 = vlaneseq
        %v5269 = vshrl.u32 %v5268, 7
        %v5270 = vsub.s32 0, %v5269
        %v5271 = vrot.slane %v5267, %v5270
        %v5272 = vadd.f32 %v5259, %v5271
        %v5273 = vadd.f32 %v5260, %v5271
        %v5274 = vadd.f32 %v5261, %v5271
        %v5275 = vadd.f32 %v5262, %v5271
        %v5276 = vadd.f32 %v5263, %v5271
        %v5277 = vadd.f32 %v5264, %v5271
        %v5278 = vadd.f32 %v5265, %v5271
        %v5279 = vadd.f32 %v5266, %v5271
        %v5280 = vmax.f32 %v5272, 0.0
        %v5281 = vmax.f32 %v5273, 0.0
        %v5282 = vmax.f32 %v5274, 0.0
        %v5283 = vmax.f32 %v5275, 0.0
        %v5284 = vmax.f32 %v5276, 0.0
        %v5285 = vmax.f32 %v5277, 0.0
        %v5286 = vmax.f32 %v5278, 0.0
        %v5287 = vmax.f32 %v5279, 0.0
        %v5288 = vpack.c.bf16 %v5281, %v5280
        %v5289 = vpack.c.bf16 %v5283, %v5282
        %v5290 = vpack.c.bf16 %v5285, %v5284
        %v5291 = vpack.c.bf16 %v5287, %v5286
        %v5292 = vld [vmem:[%s17] sm:$0xf]
        %v5293 = vld [vmem:[%s17 + $0x4] sm:$0xf]
        %v5294 = vlaneseq
        %v5295 = vshrl.u32 %v5294, 7
        %v5296 = vsub.s32 1, %v5295
        %v5297 = vrot.slane %v5235, %v5296
        %v5298 = vmul.f32 %v1855, %v5297
        %v5299 = vmul.f32 %v1858, %v5297
        %v5300 = vmul.f32 %v1863, %v5297
        %v5301 = vmul.f32 %v1866, %v5297
        %v5302 = vmul.f32 %v1871, %v5297
        %v5303 = vmul.f32 %v1874, %v5297
        %v5304 = vmul.f32 %v1879, %v5297
        %v5305 = vmul.f32 %v1882, %v5297
        %v5306 = vld [vmem:[%s15 + $0x1] sm:$0x1]
        %v5307 = vlaneseq
        %v5308 = vshrl.u32 %v5307, 7
        %v5309 = vsub.s32 0, %v5308
        %v5310 = vrot.slane %v5306, %v5309
        %v5311 = vmul.f32 %v5298, %v5310
        %v5312 = vmul.f32 %v5299, %v5310
        %v5313 = vmul.f32 %v5300, %v5310
        %v5314 = vmul.f32 %v5301, %v5310
        %v5315 = vmul.f32 %v5302, %v5310
        %v5316 = vmul.f32 %v5303, %v5310
        %v5317 = vmul.f32 %v5304, %v5310
        %v5318 = vmul.f32 %v5305, %v5310
        %v5319 = vld [vmem:[%s16 + $0x1] sm:$0x1]
        %v5320 = vlaneseq
        %v5321 = vshrl.u32 %v5320, 7
        %v5322 = vsub.s32 0, %v5321
        %v5323 = vrot.slane %v5319, %v5322
        %v5324 = vadd.f32 %v5311, %v5323
        %v5325 = vadd.f32 %v5312, %v5323
        %v5326 = vadd.f32 %v5313, %v5323
        %v5327 = vadd.f32 %v5314, %v5323
        %v5328 = vadd.f32 %v5315, %v5323
        %v5329 = vadd.f32 %v5316, %v5323
        %v5330 = vadd.f32 %v5317, %v5323
        %v5331 = vadd.f32 %v5318, %v5323
        %v5332 = vmax.f32 %v5324, 0.0
        %v5333 = vmax.f32 %v5325, 0.0
        %v5334 = vmax.f32 %v5326, 0.0
        %v5335 = vmax.f32 %v5327, 0.0
        %v5336 = vmax.f32 %v5328, 0.0
        %v5337 = vmax.f32 %v5329, 0.0
        %v5338 = vmax.f32 %v5330, 0.0
        %v5339 = vmax.f32 %v5331, 0.0
        %v5340 = vpack.c.bf16 %v5333, %v5332
        %v5341 = vpack.c.bf16 %v5335, %v5334
        %v5342 = vpack.c.bf16 %v5337, %v5336
        %v5343 = vpack.c.bf16 %v5339, %v5338
        %s5344 = scalar_lea.vmem %s17, 8
        %v5345 = vld [vmem:[%s5344] sm:$0xf]
        %v5346 = vld [vmem:[%s5344 + $0x4] sm:$0xf]
        %v5349 = vunpack.c.l.b16 %v5345
        %v5350 = vunpack.c.l.b16 %v5346
        %v5351 = vpack.c.b16 %v5350, %v5349
        %v5354 = vsel %vm648, %v5340, 0
        %v5357 = vsel %vm648, %v5341, 0
        %v5360 = vsel %vm648, %v5342, 0
        %v5363 = vsel %vm648, %v5343, 0
        %5365 = vmatprep.subr.bf16.mxu0 0
        %5366 = vmatpush1.bf16.msra.mxu0 %v5351
        %5367 = vmatprep.subr.bf16.mxu0 0
        %5368 = vmatpush1.bf16.msra.mxu0 0
        %5369 = vmatprep.subr.bf16.mxu0 0
        %5370 = vmatpush1.bf16.msra.mxu0 0
        %5371 = vmatprep.subr.bf16.mxu0 0
        %5372 = vmatpush1.bf16.msra.mxu0 0
        %5373 = vmatprep.subr.bf16.mxu0 0
        %5374 = vmatpush1.bf16.msra.mxu0 0
        %5375 = vmatprep.subr.bf16.mxu0 0
        %5376 = vmatpush1.bf16.msra.mxu0 0
        %5377 = vmatprep.subr.bf16.mxu0 0
        %5378 = vmatpush1.bf16.msra.mxu0 0
        %5379 = vmatprep.subr.bf16.mxu0 0
        %5380 = vmatpush1.bf16.msra.mxu0 0
        %5381 = vmatprep.subr.bf16.mxu0 0
        %5382 = vmatpush1.bf16.msra.mxu0 0
        %5383 = vmatprep.subr.bf16.mxu0 0
        %5384 = vmatpush1.bf16.msra.mxu0 0
        %5385 = vmatprep.subr.bf16.mxu0 0
        %5386 = vmatpush1.bf16.msra.mxu0 0
        %5387 = vmatprep.subr.bf16.mxu0 0
        %5388 = vmatpush1.bf16.msra.mxu0 0
        %5389 = vmatprep.subr.bf16.mxu0 0
        %5390 = vmatpush1.bf16.msra.mxu0 0
        %5391 = vmatprep.subr.bf16.mxu0 0
        %5392 = vmatpush1.bf16.msra.mxu0 0
        %5393 = vmatprep.subr.bf16.mxu0 0
        %5394 = vmatpush1.bf16.msra.mxu0 0
        %5395 = vmatprep.subr.bf16.mxu0 0
        %5396 = vmatpush1.bf16.msra.mxu0 0
        %5397 = vmatprep.mubr.bf16.mxu0 0
        %5398 = vmatmul.mubr.bf16.gmra.mrb[0].mxu0 %v5354
        %v5399 = vpop.f32.mrb[0].mxu0
        %v5400 = vadd.f32 0.0, %v5399
        %v5401 = vpop.f32.mrb[0].mxu0
        %v5402 = vpop.f32.mrb[0].mxu0
        %v5403 = vadd.f32 0.0, %v5402
        %v5404 = vpop.f32.mrb[0].mxu0
        %5405 = vmatprep.mubr.bf16.mxu0 0
        %5406 = vmatmul.mubr.bf16.gmra.mrb[0].mxu0 %v5357
        %v5407 = vpop.f32.mrb[0].mxu0
        %v5408 = vadd.f32 0.0, %v5407
        %v5409 = vpop.f32.mrb[0].mxu0
        %v5410 = vpop.f32.mrb[0].mxu0
        %v5411 = vadd.f32 0.0, %v5410
        %v5412 = vpop.f32.mrb[0].mxu0
        %5413 = vmatprep.mubr.bf16.mxu0 0
        %5414 = vmatmul.mubr.bf16.gmra.mrb[0].mxu0 %v5360
        %v5415 = vpop.f32.mrb[0].mxu0
        %v5416 = vadd.f32 0.0, %v5415
        %v5417 = vpop.f32.mrb[0].mxu0
        %v5418 = vpop.f32.mrb[0].mxu0
        %v5419 = vadd.f32 0.0, %v5418
        %v5420 = vpop.f32.mrb[0].mxu0
        %5421 = vmatprep.mubr.bf16.mxu0 0
        %5422 = vmatmul.mubr.bf16.gmra.mrb[0].mxu0 %v5363
        %v5423 = vpop.f32.mrb[0].mxu0
        %v5424 = vadd.f32 0.0, %v5423
        %v5425 = vpop.f32.mrb[0].mxu0
        %v5426 = vpop.f32.mrb[0].mxu0
        %v5427 = vadd.f32 0.0, %v5426
        %v5428 = vpop.f32.mrb[0].mxu0
        %5429 = vdwg.mxu0
        %v5432 = vunpack.c.l.b16 %v5292
        %v5433 = vunpack.c.l.b16 %v5293
        %v5434 = vpack.c.b16 %v5433, %v5432
        %v5437 = vsel %vm648, %v5288, 0
        %v5440 = vsel %vm648, %v5289, 0
        %v5443 = vsel %vm648, %v5290, 0
        %v5446 = vsel %vm648, %v5291, 0
        %5448 = vmatprep.subr.bf16.mxu0 0
        %5449 = vmatpush1.bf16.msra.mxu0 %v5434
        %5450 = vmatprep.subr.bf16.mxu0 0
        %5451 = vmatpush1.bf16.msra.mxu0 0
        %5452 = vmatprep.subr.bf16.mxu0 0
        %5453 = vmatpush1.bf16.msra.mxu0 0
        %5454 = vmatprep.subr.bf16.mxu0 0
        %5455 = vmatpush1.bf16.msra.mxu0 0
        %5456 = vmatprep.subr.bf16.mxu0 0
        %5457 = vmatpush1.bf16.msra.mxu0 0
        %5458 = vmatprep.subr.bf16.mxu0 0
        %5459 = vmatpush1.bf16.msra.mxu0 0
        %5460 = vmatprep.subr.bf16.mxu0 0
        %5461 = vmatpush1.bf16.msra.mxu0 0
        %5462 = vmatprep.subr.bf16.mxu0 0
        %5463 = vmatpush1.bf16.msra.mxu0 0
        %5464 = vmatprep.subr.bf16.mxu0 0
        %5465 = vmatpush1.bf16.msra.mxu0 0
        %5466 = vmatprep.subr.bf16.mxu0 0
        %5467 = vmatpush1.bf16.msra.mxu0 0
        %5468 = vmatprep.subr.bf16.mxu0 0
        %5469 = vmatpush1.bf16.msra.mxu0 0
        %5470 = vmatprep.subr.bf16.mxu0 0
        %5471 = vmatpush1.bf16.msra.mxu0 0
        %5472 = vmatprep.subr.bf16.mxu0 0
        %5473 = vmatpush1.bf16.msra.mxu0 0
        %5474 = vmatprep.subr.bf16.mxu0 0
        %5475 = vmatpush1.bf16.msra.mxu0 0
        %5476 = vmatprep.subr.bf16.mxu0 0
        %5477 = vmatpush1.bf16.msra.mxu0 0
        %5478 = vmatprep.subr.bf16.mxu0 0
        %5479 = vmatpush1.bf16.msra.mxu0 0
        %5480 = vmatprep.mubr.bf16.mxu0 0
        %5481 = vmatmul.mubr.bf16.gmra.mrb[0].mxu0 %v5437
        %v5482 = vpop.f32.mrb[0].mxu0
        %v5483 = vadd.f32 %v5400, %v5482
        %v5484 = vpop.f32.mrb[0].mxu0
        %v5485 = vpop.f32.mrb[0].mxu0
        %v5486 = vadd.f32 %v5403, %v5485
        %v5487 = vpop.f32.mrb[0].mxu0
        %5488 = vmatprep.mubr.bf16.mxu0 0
        %5489 = vmatmul.mubr.bf16.gmra.mrb[0].mxu0 %v5440
        %v5490 = vpop.f32.mrb[0].mxu0
        %v5491 = vadd.f32 %v5408, %v5490
        %v5492 = vpop.f32.mrb[0].mxu0
        %v5493 = vpop.f32.mrb[0].mxu0
        %v5494 = vadd.f32 %v5411, %v5493
        %v5495 = vpop.f32.mrb[0].mxu0
        %5496 = vmatprep.mubr.bf16.mxu0 0
        %5497 = vmatmul.mubr.bf16.gmra.mrb[0].mxu0 %v5443
        %v5498 = vpop.f32.mrb[0].mxu0
        %v5499 = vadd.f32 %v5416, %v5498
        %v5500 = vpop.f32.mrb[0].mxu0
        %v5501 = vpop.f32.mrb[0].mxu0
        %v5502 = vadd.f32 %v5419, %v5501
        %v5503 = vpop.f32.mrb[0].mxu0
        %5504 = vmatprep.mubr.bf16.mxu0 0
        %5505 = vmatmul.mubr.bf16.gmra.mrb[0].mxu0 %v5446
        %v5506 = vpop.f32.mrb[0].mxu0
        %v5507 = vadd.f32 %v5424, %v5506
        %v5508 = vpop.f32.mrb[0].mxu0
        %v5509 = vpop.f32.mrb[0].mxu0
        %v5510 = vadd.f32 %v5427, %v5509
        %v5511 = vpop.f32.mrb[0].mxu0
        %5512 = vdwg.mxu0
        %v5513 = vlaneseq
        %v5514 = vshrl.u32 %v5513, 7
        %v5515 = vsub.s32 2, %v5514
        %v5516 = vrot.slane %v5238, %v5515
        %v5517 = vmul.f32 %v3070, %v5516
        %v5518 = vmul.f32 %v3073, %v5516
        %v5519 = vmul.f32 %v3078, %v5516
        %v5520 = vmul.f32 %v3081, %v5516
        %v5521 = vmul.f32 %v3086, %v5516
        %v5522 = vmul.f32 %v3089, %v5516
        %v5523 = vmul.f32 %v3094, %v5516
        %v5524 = vmul.f32 %v3097, %v5516
        %v5525 = vld [vmem:[%s15 + $0x2] sm:$0x1]
        %v5526 = vlaneseq
        %v5527 = vshrl.u32 %v5526, 7
        %v5528 = vsub.s32 0, %v5527
        %v5529 = vrot.slane %v5525, %v5528
        %v5530 = vmul.f32 %v5517, %v5529
        %v5531 = vmul.f32 %v5518, %v5529
        %v5532 = vmul.f32 %v5519, %v5529
        %v5533 = vmul.f32 %v5520, %v5529
        %v5534 = vmul.f32 %v5521, %v5529
        %v5535 = vmul.f32 %v5522, %v5529
        %v5536 = vmul.f32 %v5523, %v5529
        %v5537 = vmul.f32 %v5524, %v5529
        %v5538 = vld [vmem:[%s16 + $0x2] sm:$0x1]
        %v5539 = vlaneseq
        %v5540 = vshrl.u32 %v5539, 7
        %v5541 = vsub.s32 0, %v5540
        %v5542 = vrot.slane %v5538, %v5541
        %v5543 = vadd.f32 %v5530, %v5542
        %v5544 = vadd.f32 %v5531, %v5542
        %v5545 = vadd.f32 %v5532, %v5542
        %v5546 = vadd.f32 %v5533, %v5542
        %v5547 = vadd.f32 %v5534, %v5542
        %v5548 = vadd.f32 %v5535, %v5542
        %v5549 = vadd.f32 %v5536, %v5542
        %v5550 = vadd.f32 %v5537, %v5542
        %v5551 = vmax.f32 %v5543, 0.0
        %v5552 = vmax.f32 %v5544, 0.0
        %v5553 = vmax.f32 %v5545, 0.0
        %v5554 = vmax.f32 %v5546, 0.0
        %v5555 = vmax.f32 %v5547, 0.0
        %v5556 = vmax.f32 %v5548, 0.0
        %v5557 = vmax.f32 %v5549, 0.0
        %v5558 = vmax.f32 %v5550, 0.0
        %v5559 = vpack.c.bf16 %v5552, %v5551
        %v5560 = vpack.c.bf16 %v5554, %v5553
        %v5561 = vpack.c.bf16 %v5556, %v5555
        %v5562 = vpack.c.bf16 %v5558, %v5557
        %s5563 = scalar_lea.vmem %s17, 16
        %v5564 = vld [vmem:[%s5563] sm:$0xf]
        %v5565 = vld [vmem:[%s5563 + $0x4] sm:$0xf]
        %v5568 = vunpack.c.l.b16 %v5564
        %v5569 = vunpack.c.l.b16 %v5565
        %v5570 = vpack.c.b16 %v5569, %v5568
        %v5573 = vsel %vm648, %v5559, 0
        %v5576 = vsel %vm648, %v5560, 0
        %v5579 = vsel %vm648, %v5561, 0
        %v5582 = vsel %vm648, %v5562, 0
        %5584 = vmatprep.subr.bf16.mxu0 0
        %5585 = vmatpush1.bf16.msra.mxu0 %v5570
        %5586 = vmatprep.subr.bf16.mxu0 0
        %5587 = vmatpush1.bf16.msra.mxu0 0
        %5588 = vmatprep.subr.bf16.mxu0 0
        %5589 = vmatpush1.bf16.msra.mxu0 0
        %5590 = vmatprep.subr.bf16.mxu0 0
        %5591 = vmatpush1.bf16.msra.mxu0 0
        %5592 = vmatprep.subr.bf16.mxu0 0
        %5593 = vmatpush1.bf16.msra.mxu0 0
        %5594 = vmatprep.subr.bf16.mxu0 0
        %5595 = vmatpush1.bf16.msra.mxu0 0
        %5596 = vmatprep.subr.bf16.mxu0 0
        %5597 = vmatpush1.bf16.msra.mxu0 0
        %5598 = vmatprep.subr.bf16.mxu0 0
        %5599 = vmatpush1.bf16.msra.mxu0 0
        %5600 = vmatprep.subr.bf16.mxu0 0
        %5601 = vmatpush1.bf16.msra.mxu0 0
        %5602 = vmatprep.subr.bf16.mxu0 0
        %5603 = vmatpush1.bf16.msra.mxu0 0
        %5604 = vmatprep.subr.bf16.mxu0 0
        %5605 = vmatpush1.bf16.msra.mxu0 0
        %5606 = vmatprep.subr.bf16.mxu0 0
        %5607 = vmatpush1.bf16.msra.mxu0 0
        %5608 = vmatprep.subr.bf16.mxu0 0
        %5609 = vmatpush1.bf16.msra.mxu0 0
        %5610 = vmatprep.subr.bf16.mxu0 0
        %5611 = vmatpush1.bf16.msra.mxu0 0
        %5612 = vmatprep.subr.bf16.mxu0 0
        %5613 = vmatpush1.bf16.msra.mxu0 0
        %5614 = vmatprep.subr.bf16.mxu0 0
        %5615 = vmatpush1.bf16.msra.mxu0 0
        %5616 = vmatprep.mubr.bf16.mxu0 0
        %5617 = vmatmul.mubr.bf16.gmra.mrb[0].mxu0 %v5573
        %v5618 = vpop.f32.mrb[0].mxu0
        %v5619 = vadd.f32 0.0, %v5618
        %v5620 = vpop.f32.mrb[0].mxu0
        %v5621 = vpop.f32.mrb[0].mxu0
        %v5622 = vadd.f32 0.0, %v5621
        %v5623 = vpop.f32.mrb[0].mxu0
        %5624 = vmatprep.mubr.bf16.mxu0 0
        %5625 = vmatmul.mubr.bf16.gmra.mrb[0].mxu0 %v5576
        %v5626 = vpop.f32.mrb[0].mxu0
        %v5627 = vadd.f32 0.0, %v5626
        %v5628 = vpop.f32.mrb[0].mxu0
        %v5629 = vpop.f32.mrb[0].mxu0
        %v5630 = vadd.f32 0.0, %v5629
        %v5631 = vpop.f32.mrb[0].mxu0
        %5632 = vmatprep.mubr.bf16.mxu0 0
        %5633 = vmatmul.mubr.bf16.gmra.mrb[0].mxu0 %v5579
        %v5634 = vpop.f32.mrb[0].mxu0
        %v5635 = vadd.f32 0.0, %v5634
        %v5636 = vpop.f32.mrb[0].mxu0
        %v5637 = vpop.f32.mrb[0].mxu0
        %v5638 = vadd.f32 0.0, %v5637
        %v5639 = vpop.f32.mrb[0].mxu0
        %5640 = vmatprep.mubr.bf16.mxu0 0
        %5641 = vmatmul.mubr.bf16.gmra.mrb[0].mxu0 %v5582
        %v5642 = vpop.f32.mrb[0].mxu0
        %v5643 = vadd.f32 0.0, %v5642
        %v5644 = vpop.f32.mrb[0].mxu0
        %v5645 = vpop.f32.mrb[0].mxu0
        %v5646 = vadd.f32 0.0, %v5645
        %v5647 = vpop.f32.mrb[0].mxu0
        %5648 = vdwg.mxu0
        %v5649 = vadd.f32 %v5483, %v5619
        %v5650 = vadd.f32 %v5486, %v5622
        %v5651 = vadd.f32 %v5491, %v5627
        %v5652 = vadd.f32 %v5494, %v5630
        %v5653 = vadd.f32 %v5499, %v5635
        %v5654 = vadd.f32 %v5502, %v5638
        %v5655 = vadd.f32 %v5507, %v5643
        %v5656 = vadd.f32 %v5510, %v5646
        %v5657 = vlaneseq
        %v5658 = vshrl.u32 %v5657, 7
        %v5659 = vsub.s32 3, %v5658
        %v5660 = vrot.slane %v5241, %v5659
        %v5661 = vmul.f32 %v4957, %v5660
        %v5662 = vmul.f32 %v4960, %v5660
        %v5663 = vmul.f32 %v4965, %v5660
        %v5664 = vmul.f32 %v4968, %v5660
        %v5665 = vmul.f32 %v4973, %v5660
        %v5666 = vmul.f32 %v4976, %v5660
        %v5667 = vmul.f32 %v4981, %v5660
        %v5668 = vmul.f32 %v4984, %v5660
        %v5669 = vld [vmem:[%s15 + $0x3] sm:$0x1]
        %v5670 = vlaneseq
        %v5671 = vshrl.u32 %v5670, 7
        %v5672 = vsub.s32 0, %v5671
        %v5673 = vrot.slane %v5669, %v5672
        %v5674 = vmul.f32 %v5661, %v5673
        %v5675 = vmul.f32 %v5662, %v5673
        %v5676 = vmul.f32 %v5663, %v5673
        %v5677 = vmul.f32 %v5664, %v5673
        %v5678 = vmul.f32 %v5665, %v5673
        %v5679 = vmul.f32 %v5666, %v5673
        %v5680 = vmul.f32 %v5667, %v5673
        %v5681 = vmul.f32 %v5668, %v5673
        %v5682 = vld [vmem:[%s16 + $0x3] sm:$0x1]
        %v5683 = vlaneseq
        %v5684 = vshrl.u32 %v5683, 7
        %v5685 = vsub.s32 0, %v5684
        %v5686 = vrot.slane %v5682, %v5685
        %v5687 = vadd.f32 %v5674, %v5686
        %v5688 = vadd.f32 %v5675, %v5686
        %v5689 = vadd.f32 %v5676, %v5686
        %v5690 = vadd.f32 %v5677, %v5686
        %v5691 = vadd.f32 %v5678, %v5686
        %v5692 = vadd.f32 %v5679, %v5686
        %v5693 = vadd.f32 %v5680, %v5686
        %v5694 = vadd.f32 %v5681, %v5686
        %v5695 = vmax.f32 %v5687, 0.0
        %v5696 = vmax.f32 %v5688, 0.0
        %v5697 = vmax.f32 %v5689, 0.0
        %v5698 = vmax.f32 %v5690, 0.0
        %v5699 = vmax.f32 %v5691, 0.0
        %v5700 = vmax.f32 %v5692, 0.0
        %v5701 = vmax.f32 %v5693, 0.0
        %v5702 = vmax.f32 %v5694, 0.0
        %v5703 = vpack.c.bf16 %v5696, %v5695
        %v5704 = vpack.c.bf16 %v5698, %v5697
        %v5705 = vpack.c.bf16 %v5700, %v5699
        %v5706 = vpack.c.bf16 %v5702, %v5701
        %s5707 = scalar_lea.vmem %s17, 24
        %v5708 = vld [vmem:[%s5707] sm:$0xf]
        %v5709 = vld [vmem:[%s5707 + $0x4] sm:$0xf]
        %v5712 = vunpack.c.l.b16 %v5708
        %v5713 = vunpack.c.l.b16 %v5709
        %v5714 = vpack.c.b16 %v5713, %v5712
        %v5717 = vsel %vm648, %v5703, 0
        %v5720 = vsel %vm648, %v5704, 0
        %v5723 = vsel %vm648, %v5705, 0
        %v5726 = vsel %vm648, %v5706, 0
        %5728 = vmatprep.subr.bf16.mxu0 0
        %5729 = vmatpush1.bf16.msra.mxu0 %v5714
        %5730 = vmatprep.subr.bf16.mxu0 0
        %5731 = vmatpush1.bf16.msra.mxu0 0
        %5732 = vmatprep.subr.bf16.mxu0 0
        %5733 = vmatpush1.bf16.msra.mxu0 0
        %5734 = vmatprep.subr.bf16.mxu0 0
        %5735 = vmatpush1.bf16.msra.mxu0 0
        %5736 = vmatprep.subr.bf16.mxu0 0
        %5737 = vmatpush1.bf16.msra.mxu0 0
        %5738 = vmatprep.subr.bf16.mxu0 0
        %5739 = vmatpush1.bf16.msra.mxu0 0
        %5740 = vmatprep.subr.bf16.mxu0 0
        %5741 = vmatpush1.bf16.msra.mxu0 0
        %5742 = vmatprep.subr.bf16.mxu0 0
        %5743 = vmatpush1.bf16.msra.mxu0 0
        %5744 = vmatprep.subr.bf16.mxu0 0
        %5745 = vmatpush1.bf16.msra.mxu0 0
        %5746 = vmatprep.subr.bf16.mxu0 0
        %5747 = vmatpush1.bf16.msra.mxu0 0
        %5748 = vmatprep.subr.bf16.mxu0 0
        %5749 = vmatpush1.bf16.msra.mxu0 0
        %5750 = vmatprep.subr.bf16.mxu0 0
        %5751 = vmatpush1.bf16.msra.mxu0 0
        %5752 = vmatprep.subr.bf16.mxu0 0
        %5753 = vmatpush1.bf16.msra.mxu0 0
        %5754 = vmatprep.subr.bf16.mxu0 0
        %5755 = vmatpush1.bf16.msra.mxu0 0
        %5756 = vmatprep.subr.bf16.mxu0 0
        %5757 = vmatpush1.bf16.msra.mxu0 0
        %5758 = vmatprep.subr.bf16.mxu0 0
        %5759 = vmatpush1.bf16.msra.mxu0 0
        %5760 = vmatprep.mubr.bf16.mxu0 0
        %5761 = vmatmul.mubr.bf16.gmra.mrb[0].mxu0 %v5717
        %v5762 = vpop.f32.mrb[0].mxu0
        %v5763 = vadd.f32 0.0, %v5762
        %v5764 = vpop.f32.mrb[0].mxu0
        %v5765 = vpop.f32.mrb[0].mxu0
        %v5766 = vadd.f32 0.0, %v5765
        %v5767 = vpop.f32.mrb[0].mxu0
        %5768 = vmatprep.mubr.bf16.mxu0 0
        %5769 = vmatmul.mubr.bf16.gmra.mrb[0].mxu0 %v5720
        %v5770 = vpop.f32.mrb[0].mxu0
        %v5771 = vadd.f32 0.0, %v5770
        %v5772 = vpop.f32.mrb[0].mxu0
        %v5773 = vpop.f32.mrb[0].mxu0
        %v5774 = vadd.f32 0.0, %v5773
        %v5775 = vpop.f32.mrb[0].mxu0
        %5776 = vmatprep.mubr.bf16.mxu0 0
        %5777 = vmatmul.mubr.bf16.gmra.mrb[0].mxu0 %v5723
        %v5778 = vpop.f32.mrb[0].mxu0
        %v5779 = vadd.f32 0.0, %v5778
        %v5780 = vpop.f32.mrb[0].mxu0
        %v5781 = vpop.f32.mrb[0].mxu0
        %v5782 = vadd.f32 0.0, %v5781
        %v5783 = vpop.f32.mrb[0].mxu0
        %5784 = vmatprep.mubr.bf16.mxu0 0
        %5785 = vmatmul.mubr.bf16.gmra.mrb[0].mxu0 %v5726
        %v5786 = vpop.f32.mrb[0].mxu0
        %v5787 = vadd.f32 0.0, %v5786
        %v5788 = vpop.f32.mrb[0].mxu0
        %v5789 = vpop.f32.mrb[0].mxu0
        %v5790 = vadd.f32 0.0, %v5789
        %v5791 = vpop.f32.mrb[0].mxu0
        %5792 = vdwg.mxu0
        %v5793 = vadd.f32 %v5649, %v5763
        %v5794 = vadd.f32 %v5650, %v5766
        %v5795 = vadd.f32 %v5651, %v5771
        %v5796 = vadd.f32 %v5652, %v5774
        %v5797 = vadd.f32 %v5653, %v5779
        %v5798 = vadd.f32 %v5654, %v5782
        %v5799 = vadd.f32 %v5655, %v5787
        %v5800 = vadd.f32 %v5656, %v5790
        %v5801 = vld [vmem:[%s18] sm:$0x1]
        %v5803 = vlaneseq
        %v5804 = vshrl.u32 %v5803, 7
        %v5805 = vsub.s32 0, %v5804
        %v5806 = vrot.slane %v5801, %v5805
        %v5808 = vadd.f32 %v5793, %v5806
        %v5809 = vadd.f32 %v5794, %v5806
        %v5810 = vadd.f32 %v5795, %v5806
        %v5811 = vadd.f32 %v5796, %v5806
        %v5812 = vadd.f32 %v5797, %v5806
        %v5813 = vadd.f32 %v5798, %v5806
        %v5814 = vadd.f32 %v5799, %v5806
        %v5815 = vadd.f32 %v5800, %v5806
        %5816 = vxpose.xlu0.b32.start [1/16] %v5808, 128
        %5817 = vxpose.xlu0.b32.cont [2/16] %v5809, 128
        %5818 = vxpose.xlu0.b32.cont [3/16] %v5810, 128
        %5819 = vxpose.xlu0.b32.cont [4/16] %v5811, 128
        %5820 = vxpose.xlu0.b32.cont [5/16] %v5812, 128
        %5821 = vxpose.xlu0.b32.cont [6/16] %v5813, 128
        %5822 = vxpose.xlu0.b32.cont [7/16] %v5814, 128
        %5823 = vxpose.xlu0.b32.cont [8/16] %v5815, 128
        %5824 = vxpose.xlu0.b32.cont [9/16] 0.0, 128
        %5825 = vxpose.xlu0.b32.cont [10/16] 0.0, 128
        %5826 = vxpose.xlu0.b32.cont [11/16] 0.0, 128
        %5827 = vxpose.xlu0.b32.cont [12/16] 0.0, 128
        %5828 = vxpose.xlu0.b32.cont [13/16] 0.0, 128
        %5829 = vxpose.xlu0.b32.cont [14/16] 0.0, 128
        %5830 = vxpose.xlu0.b32.cont [15/16] 0.0, 128
        %5831 = vxpose.xlu0.b32.end [16/16] 0.0, 128
        %v5832 = vpop.trf.xlu0
        %v5833 = vpop.trf.xlu0
        %v5834 = vpop.trf.xlu0
        %v5835 = vpop.trf.xlu0
        %v5836 = vpop.trf.xlu0
        %v5837 = vpop.trf.xlu0
        %v5838 = vpop.trf.xlu0
        %v5839 = vpop.trf.xlu0
        %v5840 = vpop.trf.xlu0
        %v5841 = vpop.trf.xlu0
        %v5842 = vpop.trf.xlu0
        %v5843 = vpop.trf.xlu0
        %v5844 = vpop.trf.xlu0
        %v5845 = vpop.trf.xlu0
        %v5846 = vpop.trf.xlu0
        %v5847 = vpop.trf.xlu0
        %v5848 = vadd.f32 %v5832, %v602
        %v5849 = vadd.f32 %v5833, %v603
        %v5850 = vmax.f32 %v5848, 0.0
        %v5851 = vmax.f32 %v5849, 0.0
        %5852 = vst.msk [vmem:[%s595] sm:$0xff] %vm764, %v5850
        %5853 = vst.msk [vmem:[%s595 + $0x8] sm:$0xff] %vm764, %v5851
        %s5854 = sand.u32 %s445, 1
        %s5855 = scalar_lea.sflag [#allocation4], %s5854
        %s5856 = sand.u32 %s445, 1
        %s5857 = smul.addr %s5856, 16
        %s5858 = scalar_lea.vmem [#allocation3], %s5857
        // Predicated region
        $region97: #{tpu_custom_call.1} parent=95 // pred_check
          %p5859 = pneg %p455
        $region98: #{tpu_custom_call.1} parent=95 // pred_check_branch
          %5861 = sbr.rel (%p5859) target = $region100
        $region99: #{tpu_custom_call.1} parent=95 // pred_region
          %s5863 = ssub.s32 256, 256
          %5864 = vsyncadd %s5855, %s5863
          %s5865 = smul.addr %s33, 2
          %s5866 = smul.addr %s5865, 128
          %s5867 = scalar_lea.hbm %s19, %s5866
          %s5868 = sshll.u32 %s5858, 4
          %s5869 = int_to_ptr.vmem [resolvable:$true] %s5868
          %5874 = dma.vmem_to_hbm [thread:$0]  %s5869, 256, %s5867, %s5855, 128, 128, 8
        $region100: #{tpu_custom_call.1} parent=95 // pred_fallthru
          _
      $region96: #{tpu_custom_call.1} parent=5 // pred_fallthru
        _
      %p5875 = scmp.le.s32.totalorder 2, %s28
      // Predicated region
      $region101: #{tpu_custom_call.1} parent=5 // pred_check
        %p5876 = pneg %p5875
      $region102: #{tpu_custom_call.1} parent=5 // pred_check_branch
        %5878 = sbr.rel (%p5876) target = $region104
      $region103: #{tpu_custom_call.1} parent=5 // pred_region
        %s5879 = ssub.s32 %s28, 2
        // Predicated region
        $region105: #{tpu_custom_call.1} parent=103 // pred_check
          %p5880 = pneg %p461
        $region106: #{tpu_custom_call.1} parent=103 // pred_check_branch
          %5882 = sbr.rel (%p5880) target = $region108
        $region107: #{tpu_custom_call.1} parent=103 // pred_region
          %s5883 = sand.u32 %s446, 1
          %s5884 = scalar_lea.sflag [#allocation4], %s5883
          %s5885 = sand.u32 %s446, 1
          %s5886 = smul.addr %s5885, 16
          %s5887 = scalar_lea.vmem [#allocation3], %s5886
          %5888 = dma.done %s5884, 256
        $region108: #{tpu_custom_call.1} parent=103 // pred_fallthru
          _
      $region104: #{tpu_custom_call.1} parent=5 // pred_fallthru
        _
    $region6: #{tpu_custom_call.1} parent=1 // loop_footer
      %s32 = sadd.s32 1, %s28
    $region7: #{tpu_custom_call.1} parent=1 // loop_footer_branch
      %27 = sbr.rel target = $region3
    $region8: #{tpu_custom_call.1} parent=1 // loop_exit
      _
    %5889 = vsyncpa [#allocation4], 1
    %s5890 = scalar_lea.sflag [#allocation4], 1
    %5891 = vsyncpa %s5890, 1

</llo_original>
